<compile_context>
chip_gen: v7x
topology: tpu7x:2x2x1
jax: 0.10.0
libtpu: 0.0.40
codegen_flags: <defaults>
</compile_context>

<pallas_src>
import functools

import numpy as np
import jax
import jax.numpy as jnp
from jax.experimental import pallas as pl
from jax.experimental.pallas import tpu as pltpu

ACT_DTYPE = jnp.bfloat16       # activation / matmul operand dtype (fp32 accum)


# ----------------------------------------------------------------------------
# helpers
# ----------------------------------------------------------------------------
def _largest_divisor(n, cap):
    d = min(n, cap)
    while n % d:
        d -= 1
    return d


def _pick_row_block(total, cap):
    """Row-block that divides `total` and is a multiple of 8 (or == total)."""
    if total <= cap:
        return total
    d = cap - (cap % 8)
    while d >= 8:
        if total % d == 0:
            return d
        d -= 8
    return total


# ----------------------------------------------------------------------------
# Tiled linear (1x1 conv on flattened channels-last rows)
# ----------------------------------------------------------------------------
def _linear_kernel(x_ref, w_ref, b_ref, o_ref, *, relu):
    acc = jnp.dot(x_ref[...], w_ref[...], preferred_element_type=jnp.float32)
    acc = acc + b_ref[...]
    if relu:
        acc = jnp.maximum(acc, 0.0)
    o_ref[...] = acc.astype(o_ref.dtype)


def linear(x, w, b=None, relu=False, out_dtype=jnp.float32, block_m=2048):
    """x: (M, K), w: (K, N), b: (1, N).  Tiled over M, weight/bias resident."""
    M, K = x.shape
    N = w.shape[1]
    if b is None:
        b = jnp.zeros((1, N), jnp.float32)
    b2 = b.reshape(1, N).astype(jnp.float32)

    tm = M if M <= block_m else block_m          # block_m is a multiple of 8
    grid_m = pl.cdiv(M, tm)

    cost = pl.CostEstimate(
        flops=2 * M * K * N,
        transcendentals=0,
        bytes_accessed=(M * K * x.dtype.itemsize + K * N * w.dtype.itemsize
                        + M * N * jnp.dtype(out_dtype).itemsize))

    return pl.pallas_call(
        functools.partial(_linear_kernel, relu=relu),
        out_shape=jax.ShapeDtypeStruct((M, N), out_dtype),
        grid=(grid_m,),
        in_specs=[
            pl.BlockSpec((tm, K), lambda i: (i, 0)),
            pl.BlockSpec((K, N), lambda i: (0, 0)),   # resident across M tiles
            pl.BlockSpec((1, N), lambda i: (0, 0)),
        ],
        out_specs=pl.BlockSpec((tm, N), lambda i: (i, 0)),
        compiler_params=pltpu.CompilerParams(
            dimension_semantics=("parallel",),
            vmem_limit_bytes=48 * 1024 * 1024),
        cost_estimate=cost,
    )(x, w, b2)


# ----------------------------------------------------------------------------
# Fused 2x2 average pool + 1x1 conv (+ ReLU), channels-last
#   pooling = lane-preserving reshapes + VPU adds (no pooling-matrix matmul),
#   one hoisted (th*Wo, Cin)@(Cin, Cout) GEMM per grid step.
# ----------------------------------------------------------------------------
def _pool_conv_kernel(x_ref, w_ref, b_ref, o_ref, *, th, wo, relu):
    x = x_ref[...].astype(jnp.float32)                          # (2*th, 2*wo, Cin)
    cin = x.shape[-1]
    # vertical pool over H (leading-dim split, pure vreg adds)
    v = jnp.sum(x.reshape(th, 2, 2 * wo, cin), axis=1)          # (th, 2*wo, Cin)
    # horizontal pool over W (second-minor split, lane dim untouched)
    pooled = jnp.sum(v.reshape(th, wo, 2, cin), axis=2) * 0.25  # (th, wo, Cin)
    acc = jnp.dot(pooled.reshape(th * wo, cin).astype(w_ref.dtype), w_ref[...],
                  preferred_element_type=jnp.float32) + b_ref[...]
    if relu:
        acc = jnp.maximum(acc, 0.0)
    o_ref[...] = acc.reshape(th, wo, -1).astype(o_ref.dtype)


def pool_conv(x_flat, w, b, *, batch, relu=True, out_dtype=ACT_DTYPE, row_cap=32):
    """x_flat: (B*H, W, Cin) channels-last -> (B*H/2, W/2, Cout)."""
    BH, W, Cin = x_flat.shape
    assert BH % batch == 0
    H = BH // batch
    assert H % 2 == 0 and W % 2 == 0
    Ho, Wo = H // 2, W // 2
    Cout = w.shape[1]

    th = _largest_divisor(Ho, row_cap)         # output rows per grid step
    grid = (batch * Ho // th,)
    b2 = b.reshape(1, Cout).astype(jnp.float32)

    return pl.pallas_call(
        functools.partial(_pool_conv_kernel, th=th, wo=Wo, relu=relu),
        out_shape=jax.ShapeDtypeStruct((batch * Ho, Wo, Cout), out_dtype),
        grid=grid,
        in_specs=[
            pl.BlockSpec((2 * th, W, Cin), lambda i: (i, 0, 0)),
            pl.BlockSpec((Cin, Cout), lambda i: (0, 0)),
            pl.BlockSpec((1, Cout), lambda i: (0, 0)),
        ],
        out_specs=pl.BlockSpec((th, Wo, Cout), lambda i: (i, 0, 0)),
        compiler_params=pltpu.CompilerParams(
            dimension_semantics=("parallel",),
            vmem_limit_bytes=48 * 1024 * 1024),
    )(x_flat, w, b2)


# ----------------------------------------------------------------------------
# Stage-4 1x1 conv fused with global-average-pool (SimSiam GAP)
# ----------------------------------------------------------------------------
def _linear_gap_kernel(x_ref, w_ref, b_ref, o_ref, g_ref, acc_ref, *, inv_s, relu):
    t = pl.program_id(1)

    @pl.when(t == 0)
    def _():
        acc_ref[...] = jnp.zeros_like(acc_ref)

    acc = jnp.dot(x_ref[0], w_ref[...], preferred_element_type=jnp.float32)
    acc = acc + b_ref[...]
    if relu:
        acc = jnp.maximum(acc, 0.0)
    o_ref[0] = acc.astype(o_ref.dtype)
    acc_ref[...] += jnp.sum(acc, axis=0, keepdims=True)

    @pl.when(t == pl.num_programs(1) - 1)
    def _():
        g_ref[0] = (acc_ref[...] * inv_s).astype(g_ref.dtype)


def _gap_only_kernel(x_ref, w_ref, b_ref, g_ref, acc_ref, *, inv_s, relu):
    t = pl.program_id(1)

    @pl.when(t == 0)
    def _():
        acc_ref[...] = jnp.zeros_like(acc_ref)

    acc = jnp.dot(x_ref[0], w_ref[...], preferred_element_type=jnp.float32)
    acc = acc + b_ref[...]
    if relu:
        acc = jnp.maximum(acc, 0.0)
    acc_ref[...] += jnp.sum(acc, axis=0, keepdims=True)

    @pl.when(t == pl.num_programs(1) - 1)
    def _():
        g_ref[0] = (acc_ref[...] * inv_s).astype(g_ref.dtype)


def linear_with_gap(x_bsc, w, b, relu=True, out_dtype=ACT_DTYPE, block_rows=1024):
    """x: (B, S, K) -> (x4 (B, S, N), gap (B, N) = per-sample mean of x4)."""
    B, S, K = x_bsc.shape
    N = w.shape[1]
    ts = _pick_row_block(S, block_rows)
    T = S // ts
    b2 = b.reshape(1, N).astype(jnp.float32)

    x4, gap = pl.pallas_call(
        functools.partial(_linear_gap_kernel, inv_s=1.0 / S, relu=relu),
        out_shape=(jax.ShapeDtypeStruct((B, S, N), out_dtype),
                   jax.ShapeDtypeStruct((B, 1, N), jnp.float32)),
        grid=(B, T),
        in_specs=[
            pl.BlockSpec((1, ts, K), lambda bi, ti: (bi, ti, 0)),
            pl.BlockSpec((K, N), lambda bi, ti: (0, 0)),
            pl.BlockSpec((1, N), lambda bi, ti: (0, 0)),
        ],
        out_specs=(pl.BlockSpec((1, ts, N), lambda bi, ti: (bi, ti, 0)),
                   pl.BlockSpec((1, 1, N), lambda bi, ti: (bi, 0, 0))),
        scratch_shapes=[pltpu.VMEM((1, N), jnp.float32)],
        compiler_params=pltpu.CompilerParams(
            dimension_semantics=("parallel", "arbitrary"),
            vmem_limit_bytes=48 * 1024 * 1024),
    )(x_bsc, w, b2)
    return x4, gap.reshape(B, N)


def linear_gap_only(x_bsc, w, b, relu=True, block_rows=1024):
    """Same as linear_with_gap but never writes the (B, S, N) activation."""
    B, S, K = x_bsc.shape
    N = w.shape[1]
    ts = _pick_row_block(S, block_rows)
    T = S // ts
    b2 = b.reshape(1, N).astype(jnp.float32)

    gap = pl.pallas_call(
        functools.partial(_gap_only_kernel, inv_s=1.0 / S, relu=relu),
        out_shape=jax.ShapeDtypeStruct((B, 1, N), jnp.float32),
        grid=(B, T),
        in_specs=[
            pl.BlockSpec((1, ts, K), lambda bi, ti: (bi, ti, 0)),
            pl.BlockSpec((K, N), lambda bi, ti: (0, 0)),
            pl.BlockSpec((1, N), lambda bi, ti: (0, 0)),
        ],
        out_specs=pl.BlockSpec((1, 1, N), lambda bi, ti: (bi, 0, 0)),
        scratch_shapes=[pltpu.VMEM((1, N), jnp.float32)],
        compiler_params=pltpu.CompilerParams(
            dimension_semantics=("parallel", "arbitrary"),
            vmem_limit_bytes=48 * 1024 * 1024),
    )(x_bsc, w, b2)
    return gap.reshape(B, N)


# ----------------------------------------------------------------------------
# Fused SimSiam heads on the pooled features (single launch, M = 2B rows)
#   encoder MLP -> predictor MLP -> both L2 norms
# ----------------------------------------------------------------------------
def _heads_kernel(g_ref, we1_ref, be1_ref, we2_ref, be2_ref,
                  wp1_ref, bp1_ref, wp2_ref, bp2_ref, z_ref, q_ref):
    g = g_ref[...]                                                   # (M, C) fp32
    h = jnp.maximum(jnp.dot(g.astype(we1_ref.dtype), we1_ref[...],
                            preferred_element_type=jnp.float32) + be1_ref[...], 0.0)
    z = jnp.dot(h.astype(we2_ref.dtype), we2_ref[...],
                preferred_element_type=jnp.float32) + be2_ref[...]
    # predictor runs on the un-normalized z (as in the reference)
    hp = jnp.maximum(jnp.dot(z.astype(wp1_ref.dtype), wp1_ref[...],
                             preferred_element_type=jnp.float32) + bp1_ref[...], 0.0)
    q = jnp.dot(hp.astype(wp2_ref.dtype), wp2_ref[...],
                preferred_element_type=jnp.float32) + bp2_ref[...]
    # F.normalize(dim=1): x / max(||x||, 1e-12)
    zn = jnp.sqrt(jnp.sum(z * z, axis=1, keepdims=True))
    qn = jnp.sqrt(jnp.sum(q * q, axis=1, keepdims=True))
    z_ref[...] = (z / jnp.maximum(zn, 1e-12)).astype(z_ref.dtype)
    q_ref[...] = (q / jnp.maximum(qn, 1e-12)).astype(q_ref.dtype)


def simsiam_heads(p, gap_all):
    """gap_all: (M, C4) fp32 -> (normalized z (M, 128), normalized q (M, 128))."""
    M = gap_all.shape[0]
    out_ch = p["enc2_w"].shape[1]
    return pl.pallas_call(
        _heads_kernel,
        out_shape=(jax.ShapeDtypeStruct((M, out_ch), jnp.float32),
                   jax.ShapeDtypeStruct((M, out_ch), jnp.float32)),
    )(gap_all, p["enc1_w"], p["enc1_b"], p["enc2_w"], p["enc2_b"],
      p["pred1_w"], p["pred1_b"], p["pred2_w"], p["pred2_b"])


# ----------------------------------------------------------------------------
# Batched bilinear resize (align_corners=False): all classes per grid step,
# tiled over out_h, bf16 interpolation matrices with fp32 accumulation.
# ----------------------------------------------------------------------------
def _bilinear_matrix_np(out_size, in_size):
    scale = in_size / out_size
    i = np.arange(out_size)
    src = (i + 0.5) * scale - 0.5
    src = np.maximum(src, 0.0)                       # PyTorch clamps negative src
    i0 = np.minimum(np.floor(src).astype(np.int64), in_size - 1)
    i1 = np.minimum(i0 + 1, in_size - 1)
    lam = np.clip(src - i0, 0.0, 1.0)
    M = np.zeros((out_size, in_size), np.float32)
    np.add.at(M, (np.arange(out_size), i0), 1.0 - lam)
    np.add.at(M, (np.arange(out_size), i1), lam)
    return M


def _resize_kernel(x_ref, wh_ref, wwt_ref, o_ref, *, nc):
    wh = wh_ref[...]                                   # (tho, Hi) bf16
    wwt = wwt_ref[...]                                 # (Wi, Wo)  bf16
    for c in range(nc):                                # unrolled over all classes
        xc = x_ref[0, c].astype(wh.dtype)              # (Hi, Wi)
        t = jnp.dot(wh, xc, preferred_element_type=jnp.float32)        # (tho, Wi)
        o_ref[0, c] = jnp.dot(t.astype(wwt.dtype), wwt,
                              preferred_element_type=jnp.float32).astype(o_ref.dtype)


def bilinear_resize_nchw(x_nchw, out_h, out_w, row_cap=128):
    """x: (B, C, Hi, Wi) fp32 -> (B, C, out_h, out_w) fp32."""
    B, C, Hi, Wi = x_nchw.shape
    Wh = jnp.asarray(_bilinear_matrix_np(out_h, Hi), dtype=ACT_DTYPE)      # (Ho, Hi)
    WwT = jnp.asarray(_bilinear_matrix_np(out_w, Wi).T, dtype=ACT_DTYPE)   # (Wi, Wo)
    tho = _pick_row_block(out_h, row_cap)
    grid = (B, out_h // tho)

    return pl.pallas_call(
        functools.partial(_resize_kernel, nc=C),
        out_shape=jax.ShapeDtypeStruct((B, C, out_h, out_w), jnp.float32),
        grid=grid,
        in_specs=[
            pl.BlockSpec((1, C, Hi, Wi), lambda b, j: (b, 0, 0, 0)),
            pl.BlockSpec((tho, Hi), lambda b, j: (j, 0)),
            pl.BlockSpec((Wi, out_w), lambda b, j: (0, 0)),
        ],
        out_specs=pl.BlockSpec((1, C, tho, out_w), lambda b, j: (b, 0, j, 0)),
        compiler_params=pltpu.CompilerParams(
            dimension_semantics=("parallel", "parallel"),
            vmem_limit_bytes=48 * 1024 * 1024),
    )(x_nchw, Wh, WwT)


# ----------------------------------------------------------------------------
# Synthetic sub-modules (backbone / classifier / EncoderHead / PredictorHead)
# ----------------------------------------------------------------------------
def init_params(key, in_ch=3, feat_channels=(32, 64, 128, 128), num_classes=21,
                num_classes_padded=128, out_channel=128, pred_hidden=64):
    c1, c2, c3, c4 = feat_channels
    keys = jax.random.split(key, 9)

    def lin(k, fi, fo, w_dtype=ACT_DTYPE):
        kw, kb = jax.random.split(k)
        w = (jax.random.normal(kw, (fi, fo), jnp.float32) / np.sqrt(fi)).astype(w_dtype)
        b = 0.01 * jax.random.normal(kb, (1, fo), jnp.float32)
        return w, b

    p = {}
    # backbone (bf16 matmul weights, fp32 bias / epilogue)
    p["bb1_w"], p["bb1_b"] = lin(keys[0], in_ch, c1)
    p["bb2_w"], p["bb2_b"] = lin(keys[1], c1, c2)
    p["bb3_w"], p["bb3_b"] = lin(keys[2], c2, c3)
    p["bb4_w"], p["bb4_b"] = lin(keys[3], c3, c4)
    # classifier: zero-pad to a lane-dense width (real classes in [:num_classes])
    w_cls, b_cls = lin(keys[4], c4, num_classes)
    pad = num_classes_padded - num_classes
    p["cls_w"] = jnp.pad(w_cls, ((0, 0), (0, pad)))
    p["cls_b"] = jnp.pad(b_cls, ((0, 0), (0, pad)))
    # EncoderHead(feat_out_channels=[c4], out_channel): GAP -> Linear -> ReLU -> Linear
    p["enc1_w"], p["enc1_b"] = lin(keys[5], c4, out_channel)
    p["enc2_w"], p["enc2_b"] = lin(keys[6], out_channel, out_channel)
    # PredictorHead: Linear -> ReLU -> Linear
    p["pred1_w"], p["pred1_b"] = lin(keys[7], out_channel, pred_hidden)
    p["pred2_w"], p["pred2_b"] = lin(keys[8], pred_hidden, out_channel)
    return p


def backbone_features(p, x_nchw):
    """Synthetic backbone stages 1-3: fused (2x2 avgpool + 1x1 conv + ReLU)."""
    B, Cin, H, W = x_nchw.shape
    # TODO(synk): fuse this NCHW->NHWC transpose + bf16 cast into the stage-1 kernel.
    xh = jnp.transpose(x_nchw, (0, 2, 3, 1)).astype(ACT_DTYPE).reshape(B * H, W, Cin)
    x1 = pool_conv(xh, p["bb1_w"], p["bb1_b"], batch=B, relu=True)    # H/2
    x2 = pool_conv(x1, p["bb2_w"], p["bb2_b"], batch=B, relu=True)    # H/4
    x3 = pool_conv(x2, p["bb3_w"], p["bb3_b"], batch=B, relu=True)    # H/8
    return x1, x2, x3


# ----------------------------------------------------------------------------
# _SegmentationSimSiamModel.forward
# ----------------------------------------------------------------------------
@functools.partial(jax.jit, static_argnames=("proj", "dual", "train_head",
                                             "similarity", "num_classes"))
def segmentation_simsiam_forward(p, x, y=None, proj=False, dual=False,
                                 train_head=False, similarity=False,
                                 num_classes=21):
    if train_head or similarity:
        raise NotImplementedError

    B, _, H, W = x.shape
    assert H % 8 == 0 and W % 8 == 0

    x1, x2, x3 = backbone_features(p, x)
    H3, W3 = H // 8, W // 8
    S3 = H3 * W3
    C3 = x3.shape[-1]
    # stage-4 1x1 conv fused with the SimSiam GAP (x4 kept for the classifier)
    x4, gap_x = linear_with_gap(x3.reshape(B, S3, C3),
                                p["bb4_w"], p["bb4_b"], relu=True)

    feat_z0 = feat_z1 = feat_q0 = feat_q1 = None
    if y is not None:
        _, _, y3 = backbone_features(p, y)
        # y4 is only consumed through its GAP -> never materialized in HBM
        gap_y = linear_gap_only(y3.reshape(B, S3, C3),
                                p["bb4_w"], p["bb4_b"], relu=True)
        z_all, q_all = simsiam_heads(p, jnp.concatenate([gap_x, gap_y], axis=0))
        feat_z0, feat_z1 = [z_all[:B]], [z_all[B:]]    # detach() is a no-op (inference)
        feat_q0, feat_q1 = [q_all[:B]], [q_all[B:]]

    # classifier (1x1 conv on x4, lane-dense padded width) -> slice -> fused resize
    C4 = x4.shape[-1]
    logits = linear(x4.reshape(B * S3, C4), p["cls_w"], p["cls_b"],
                    relu=False, out_dtype=jnp.float32)               # (B*S3, 128)
    logits_nchw = (logits.reshape(B, H3, W3, -1)[..., :num_classes]
                   .transpose(0, 3, 1, 2))                           # (B, ncls, H3, W3)
    output = bilinear_resize_nchw(logits_nchw, H, W)                 # (B, ncls, H, W)

    if proj:
        C1 = x1.shape[-1]
        x1_nchw = (x1.reshape(B, H // 2, W // 2, C1)
                   .transpose(0, 3, 1, 2).astype(jnp.float32))
        return output, x1_nchw
    if y is not None:
        if dual:
            return output, feat_q1, feat_z0, feat_q0, feat_z1
        return output, feat_q1, feat_z0
    return output


# ----------------------------------------------------------------------------
# main
# ----------------------------------------------------------------------------
if __name__ == "__main__":
    key = jax.random.PRNGKey(0)
    kp, kx, ky = jax.random.split(key, 3)

    B, C_in, H, W = 2, 3, 16, 16
    x = jax.random.normal(kx, (B, C_in, H, W), jnp.float32)
    y = jax.random.normal(ky, (B, C_in, H, W), jnp.float32)

    params = init_params(kp, in_ch=C_in)

    # SimSiam path (x + y)
    output, feat_q1, feat_z0 = segmentation_simsiam_forward(params, x, y=y)
    # plain segmentation path (x only)
    output_only = segmentation_simsiam_forward(params, x)

    jax.block_until_ready((output, feat_q1, feat_z0, output_only))

    assert output.shape == (B, 21, H, W)
    assert output_only.shape == (B, 21, H, W)
    assert feat_q1[0].shape == (B, 128)
    assert feat_z0[0].shape == (B, 128)
    assert bool(jnp.all(jnp.isfinite(output)))
    print("KERNEL_OK")
</pallas_src>

<mosaic_0001>
module attributes {stable_mosaic.version = 11 : i64} {
  func.func @_pool_conv_kernel(%arg0: i32, %arg1: memref<8x8x32xbf16, #tpu.memory_space<vmem>>, %arg2: memref<32x64xbf16, #tpu.memory_space<vmem>>, %arg3: memref<1x64xf32, #tpu.memory_space<vmem>>, %arg4: memref<4x4x64xbf16, #tpu.memory_space<vmem>>) attributes {dimension_semantics = [#tpu.dimension_semantics<parallel>], iteration_bounds = array<i64: 2>, scalar_prefetch = 0 : i64, scratch_operands = 0 : i64, tpu.core_type = #tpu.core_type<tc>, window_params = [{transform_indices = @transform_0, window_bounds = array<i64: 8, 8, 32>}, {pipeline_mode = #tpu.pipeline_mode<synchronous>, transform_indices = @transform_1, window_bounds = array<i64: 32, 64>}, {pipeline_mode = #tpu.pipeline_mode<synchronous>, transform_indices = @transform_2, window_bounds = array<i64: 1, 64>}, {transform_indices = @transform_3, window_bounds = array<i64: 4, 4, 64>}]} {
    %c0 = arith.constant 0 : index
    %c0_0 = arith.constant 0 : index
    %c0_1 = arith.constant 0 : index
    %0 = vector.load %arg1[%c0, %c0_0, %c0_1] : memref<8x8x32xbf16, #tpu.memory_space<vmem>>, vector<8x8x32xbf16>
    %1 = arith.extf %0 : vector<8x8x32xbf16> to vector<8x8x32xf32>
    %2 = vector.shape_cast %1 : vector<8x8x32xf32> to vector<4x2x8x32xf32>
    %cst = arith.constant dense<0.000000e+00> : vector<4x8x32xf32>
    %3 = vector.multi_reduction <add>, %2, %cst [1] : vector<4x2x8x32xf32> to vector<4x8x32xf32>
    %4 = vector.shape_cast %3 : vector<4x8x32xf32> to vector<4x4x2x32xf32>
    %cst_2 = arith.constant dense<0.000000e+00> : vector<4x4x32xf32>
    %5 = vector.multi_reduction <add>, %4, %cst_2 [2] : vector<4x4x2x32xf32> to vector<4x4x32xf32>
    %cst_3 = arith.constant 2.500000e-01 : f32
    %6 = vector.broadcast %cst_3 : f32 to vector<4x4x32xf32>
    %7 = arith.mulf %5, %6 : vector<4x4x32xf32>
    %8 = vector.shape_cast %7 : vector<4x4x32xf32> to vector<16x32xf32>
    %9 = arith.truncf %8 : vector<16x32xf32> to vector<16x32xbf16>
    %c0_4 = arith.constant 0 : index
    %c0_5 = arith.constant 0 : index
    %10 = vector.load %arg2[%c0_4, %c0_5] : memref<32x64xbf16, #tpu.memory_space<vmem>>, vector<32x64xbf16>
    %cst_6 = arith.constant dense<0.000000e+00> : vector<16x64xf32>
    %11 = tpu.matmul %9, %10, %cst_6 {dimension_numbers = #tpu.dot_dimension_numbers<[1], [0], [0], [1], [0, 0, 1, 1], [], []>} : vector<16x32xbf16>, vector<32x64xbf16>, vector<16x64xf32> -> vector<16x64xf32>
    %c0_7 = arith.constant 0 : index
    %c0_8 = arith.constant 0 : index
    %12 = vector.load %arg3[%c0_7, %c0_8] : memref<1x64xf32, #tpu.memory_space<vmem>>, vector<1x64xf32>
    %13 = vector.broadcast %12 : vector<1x64xf32> to vector<16x64xf32>
    %14 = arith.addf %11, %13 : vector<16x64xf32>
    %cst_9 = arith.constant 0.000000e+00 : f32
    %15 = vector.broadcast %cst_9 : f32 to vector<16x64xf32>
    %16 = arith.maximumf %14, %15 : vector<16x64xf32>
    %17 = vector.shape_cast %16 : vector<16x64xf32> to vector<4x4x64xf32>
    %18 = arith.truncf %17 : vector<4x4x64xf32> to vector<4x4x64xbf16>
    %c0_10 = arith.constant 0 : index
    %c0_11 = arith.constant 0 : index
    %c0_12 = arith.constant 0 : index
    %19 = vector.load %arg4[%c0_10, %c0_11, %c0_12] : memref<4x4x64xbf16, #tpu.memory_space<vmem>>, vector<4x4x64xbf16>
    tpu.vector_store %arg4[%c0_10, %c0_11, %c0_12], %18 {strides = array<i32>} : memref<4x4x64xbf16, #tpu.memory_space<vmem>>, vector<4x4x64xbf16>,
    return
  }
  func.func @transform_0(%arg0: i32) -> (i32, i32, i32) {
    %c0_i32 = arith.constant 0 : i32
    %c0_i32_0 = arith.constant 0 : i32
    %c0_i32_1 = arith.constant 0 : i32
    return %arg0, %c0_i32, %c0_i32_0 : i32, i32, i32
  }
  func.func @transform_1(%arg0: i32) -> (i32, i32) {
    %c0_i32 = arith.constant 0 : i32
    %c0_i32_0 = arith.constant 0 : i32
    %c0_i32_1 = arith.constant 0 : i32
    return %c0_i32, %c0_i32_0 : i32, i32
  }
  func.func @transform_2(%arg0: i32) -> (i32, i32) {
    %c0_i32 = arith.constant 0 : i32
    %c0_i32_0 = arith.constant 0 : i32
    %c0_i32_1 = arith.constant 0 : i32
    return %c0_i32, %c0_i32_0 : i32, i32
  }
  func.func @transform_3(%arg0: i32) -> (i32, i32, i32) {
    %c0_i32 = arith.constant 0 : i32
    %c0_i32_0 = arith.constant 0 : i32
    %c0_i32_1 = arith.constant 0 : i32
    return %arg0, %c0_i32, %c0_i32_0 : i32, i32, i32
  }
}

module attributes {stable_mosaic.version = 11 : i64} {
  func.func @_pool_conv_kernel(%arg0: i32, %arg1: memref<16x16x3xbf16, #tpu.memory_space<vmem>>, %arg2: memref<3x32xbf16, #tpu.memory_space<vmem>>, %arg3: memref<1x32xf32, #tpu.memory_space<vmem>>, %arg4: memref<8x8x32xbf16, #tpu.memory_space<vmem>>) attributes {dimension_semantics = [#tpu.dimension_semantics<parallel>], iteration_bounds = array<i64: 2>, scalar_prefetch = 0 : i64, scratch_operands = 0 : i64, tpu.core_type = #tpu.core_type<tc>, window_params = [{transform_indices = @transform_0, window_bounds = array<i64: 16, 16, 3>}, {pipeline_mode = #tpu.pipeline_mode<synchronous>, transform_indices = @transform_1, window_bounds = array<i64: 3, 32>}, {pipeline_mode = #tpu.pipeline_mode<synchronous>, transform_indices = @transform_2, window_bounds = array<i64: 1, 32>}, {transform_indices = @transform_3, window_bounds = array<i64: 8, 8, 32>}]} {
    %c0 = arith.constant 0 : index
    %c0_0 = arith.constant 0 : index
    %c0_1 = arith.constant 0 : index
    %0 = vector.load %arg1[%c0, %c0_0, %c0_1] : memref<16x16x3xbf16, #tpu.memory_space<vmem>>, vector<16x16x3xbf16>
    %1 = arith.extf %0 : vector<16x16x3xbf16> to vector<16x16x3xf32>
    %2 = vector.shape_cast %1 : vector<16x16x3xf32> to vector<8x2x16x3xf32>
    %cst = arith.constant dense<0.000000e+00> : vector<8x16x3xf32>
    %3 = vector.multi_reduction <add>, %2, %cst [1] : vector<8x2x16x3xf32> to vector<8x16x3xf32>
    %4 = vector.shape_cast %3 : vector<8x16x3xf32> to vector<8x8x2x3xf32>
    %cst_2 = arith.constant dense<0.000000e+00> : vector<8x8x3xf32>
    %5 = vector.multi_reduction <add>, %4, %cst_2 [2] : vector<8x8x2x3xf32> to vector<8x8x3xf32>
    %cst_3 = arith.constant 2.500000e-01 : f32
    %6 = vector.broadcast %cst_3 : f32 to vector<8x8x3xf32>
    %7 = arith.mulf %5, %6 : vector<8x8x3xf32>
    %8 = vector.shape_cast %7 : vector<8x8x3xf32> to vector<64x3xf32>
    %9 = arith.truncf %8 : vector<64x3xf32> to vector<64x3xbf16>
    %c0_4 = arith.constant 0 : index
    %c0_5 = arith.constant 0 : index
    %10 = vector.load %arg2[%c0_4, %c0_5] : memref<3x32xbf16, #tpu.memory_space<vmem>>, vector<3x32xbf16>
    %cst_6 = arith.constant dense<0.000000e+00> : vector<64x32xf32>
    %11 = tpu.matmul %9, %10, %cst_6 {dimension_numbers = #tpu.dot_dimension_numbers<[1], [0], [0], [1], [0, 0, 1, 1], [], []>} : vector<64x3xbf16>, vector<3x32xbf16>, vector<64x32xf32> -> vector<64x32xf32>
    %c0_7 = arith.constant 0 : index
    %c0_8 = arith.constant 0 : index
    %12 = vector.load %arg3[%c0_7, %c0_8] : memref<1x32xf32, #tpu.memory_space<vmem>>, vector<1x32xf32>
    %13 = vector.broadcast %12 : vector<1x32xf32> to vector<64x32xf32>
    %14 = arith.addf %11, %13 : vector<64x32xf32>
    %cst_9 = arith.constant 0.000000e+00 : f32
    %15 = vector.broadcast %cst_9 : f32 to vector<64x32xf32>
    %16 = arith.maximumf %14, %15 : vector<64x32xf32>
    %17 = vector.shape_cast %16 : vector<64x32xf32> to vector<8x8x32xf32>
    %18 = arith.truncf %17 : vector<8x8x32xf32> to vector<8x8x32xbf16>
    %c0_10 = arith.constant 0 : index
    %c0_11 = arith.constant 0 : index
    %c0_12 = arith.constant 0 : index
    %19 = vector.load %arg4[%c0_10, %c0_11, %c0_12] : memref<8x8x32xbf16, #tpu.memory_space<vmem>>, vector<8x8x32xbf16>
    tpu.vector_store %arg4[%c0_10, %c0_11, %c0_12], %18 {strides = array<i32>} : memref<8x8x32xbf16, #tpu.memory_space<vmem>>, vector<8x8x32xbf16>,
    return
  }
  func.func @transform_0(%arg0: i32) -> (i32, i32, i32) {
    %c0_i32 = arith.constant 0 : i32
    %c0_i32_0 = arith.constant 0 : i32
    %c0_i32_1 = arith.constant 0 : i32
    return %arg0, %c0_i32, %c0_i32_0 : i32, i32, i32
  }
  func.func @transform_1(%arg0: i32) -> (i32, i32) {
    %c0_i32 = arith.constant 0 : i32
    %c0_i32_0 = arith.constant 0 : i32
    %c0_i32_1 = arith.constant 0 : i32
    return %c0_i32, %c0_i32_0 : i32, i32
  }
  func.func @transform_2(%arg0: i32) -> (i32, i32) {
    %c0_i32 = arith.constant 0 : i32
    %c0_i32_0 = arith.constant 0 : i32
    %c0_i32_1 = arith.constant 0 : i32
    return %c0_i32, %c0_i32_0 : i32, i32
  }
  func.func @transform_3(%arg0: i32) -> (i32, i32, i32) {
    %c0_i32 = arith.constant 0 : i32
    %c0_i32_0 = arith.constant 0 : i32
    %c0_i32_1 = arith.constant 0 : i32
    return %arg0, %c0_i32, %c0_i32_0 : i32, i32, i32
  }
}

module attributes {stable_mosaic.version = 11 : i64} {
  func.func @_pool_conv_kernel(%arg0: i32, %arg1: memref<4x4x64xbf16, #tpu.memory_space<vmem>>, %arg2: memref<64x128xbf16, #tpu.memory_space<vmem>>, %arg3: memref<1x128xf32, #tpu.memory_space<vmem>>, %arg4: memref<2x2x128xbf16, #tpu.memory_space<vmem>>) attributes {dimension_semantics = [#tpu.dimension_semantics<parallel>], iteration_bounds = array<i64: 2>, scalar_prefetch = 0 : i64, scratch_operands = 0 : i64, tpu.core_type = #tpu.core_type<tc>, window_params = [{transform_indices = @transform_0, window_bounds = array<i64: 4, 4, 64>}, {pipeline_mode = #tpu.pipeline_mode<synchronous>, transform_indices = @transform_1, window_bounds = array<i64: 64, 128>}, {pipeline_mode = #tpu.pipeline_mode<synchronous>, transform_indices = @transform_2, window_bounds = array<i64: 1, 128>}, {transform_indices = @transform_3, window_bounds = array<i64: 2, 2, 128>}]} {
    %c0 = arith.constant 0 : index
    %c0_0 = arith.constant 0 : index
    %c0_1 = arith.constant 0 : index
    %0 = vector.load %arg1[%c0, %c0_0, %c0_1] : memref<4x4x64xbf16, #tpu.memory_space<vmem>>, vector<4x4x64xbf16>
    %1 = arith.extf %0 : vector<4x4x64xbf16> to vector<4x4x64xf32>
    %2 = vector.shape_cast %1 : vector<4x4x64xf32> to vector<2x2x4x64xf32>
    %cst = arith.constant dense<0.000000e+00> : vector<2x4x64xf32>
    %3 = vector.multi_reduction <add>, %2, %cst [1] : vector<2x2x4x64xf32> to vector<2x4x64xf32>
    %4 = vector.shape_cast %3 : vector<2x4x64xf32> to vector<2x2x2x64xf32>
    %cst_2 = arith.constant dense<0.000000e+00> : vector<2x2x64xf32>
    %5 = vector.multi_reduction <add>, %4, %cst_2 [2] : vector<2x2x2x64xf32> to vector<2x2x64xf32>
    %cst_3 = arith.constant 2.500000e-01 : f32
    %6 = vector.broadcast %cst_3 : f32 to vector<2x2x64xf32>
    %7 = arith.mulf %5, %6 : vector<2x2x64xf32>
    %8 = vector.shape_cast %7 : vector<2x2x64xf32> to vector<4x64xf32>
    %9 = arith.truncf %8 : vector<4x64xf32> to vector<4x64xbf16>
    %c0_4 = arith.constant 0 : index
    %c0_5 = arith.constant 0 : index
    %10 = vector.load %arg2[%c0_4, %c0_5] : memref<64x128xbf16, #tpu.memory_space<vmem>>, vector<64x128xbf16>
    %cst_6 = arith.constant dense<0.000000e+00> : vector<4x128xf32>
    %11 = tpu.matmul %9, %10, %cst_6 {dimension_numbers = #tpu.dot_dimension_numbers<[1], [0], [0], [1], [0, 0, 1, 1], [], []>} : vector<4x64xbf16>, vector<64x128xbf16>, vector<4x128xf32> -> vector<4x128xf32>
    %c0_7 = arith.constant 0 : index
    %c0_8 = arith.constant 0 : index
    %12 = vector.load %arg3[%c0_7, %c0_8] : memref<1x128xf32, #tpu.memory_space<vmem>>, vector<1x128xf32>
    %13 = vector.broadcast %12 : vector<1x128xf32> to vector<4x128xf32>
    %14 = arith.addf %11, %13 : vector<4x128xf32>
    %cst_9 = arith.constant 0.000000e+00 : f32
    %15 = vector.broadcast %cst_9 : f32 to vector<4x128xf32>
    %16 = arith.maximumf %14, %15 : vector<4x128xf32>
    %17 = vector.shape_cast %16 : vector<4x128xf32> to vector<2x2x128xf32>
    %18 = arith.truncf %17 : vector<2x2x128xf32> to vector<2x2x128xbf16>
    %c0_10 = arith.constant 0 : index
    %c0_11 = arith.constant 0 : index
    %c0_12 = arith.constant 0 : index
    %19 = vector.load %arg4[%c0_10, %c0_11, %c0_12] : memref<2x2x128xbf16, #tpu.memory_space<vmem>>, vector<2x2x128xbf16>
    tpu.vector_store %arg4[%c0_10, %c0_11, %c0_12], %18 {strides = array<i32>} : memref<2x2x128xbf16, #tpu.memory_space<vmem>>, vector<2x2x128xbf16>,
    return
  }
  func.func @transform_0(%arg0: i32) -> (i32, i32, i32) {
    %c0_i32 = arith.constant 0 : i32
    %c0_i32_0 = arith.constant 0 : i32
    %c0_i32_1 = arith.constant 0 : i32
    return %arg0, %c0_i32, %c0_i32_0 : i32, i32, i32
  }
  func.func @transform_1(%arg0: i32) -> (i32, i32) {
    %c0_i32 = arith.constant 0 : i32
    %c0_i32_0 = arith.constant 0 : i32
    %c0_i32_1 = arith.constant 0 : i32
    return %c0_i32, %c0_i32_0 : i32, i32
  }
  func.func @transform_2(%arg0: i32) -> (i32, i32) {
    %c0_i32 = arith.constant 0 : i32
    %c0_i32_0 = arith.constant 0 : i32
    %c0_i32_1 = arith.constant 0 : i32
    return %c0_i32, %c0_i32_0 : i32, i32
  }
  func.func @transform_3(%arg0: i32) -> (i32, i32, i32) {
    %c0_i32 = arith.constant 0 : i32
    %c0_i32_0 = arith.constant 0 : i32
    %c0_i32_1 = arith.constant 0 : i32
    return %arg0, %c0_i32, %c0_i32_0 : i32, i32, i32
  }
}

module attributes {stable_mosaic.version = 11 : i64} {
  func.func @_linear_gap_kernel(%arg0: i32, %arg1: i32, %arg2: memref<1x4x128xbf16, #tpu.memory_space<vmem>>, %arg3: memref<128x128xbf16, #tpu.memory_space<vmem>>, %arg4: memref<1x128xf32, #tpu.memory_space<vmem>>, %arg5: memref<1x4x128xbf16, #tpu.memory_space<vmem>>, %arg6: memref<1x1x128xf32, #tpu.memory_space<vmem>>, %arg7: memref<1x128xf32, #tpu.memory_space<vmem>>) attributes {dimension_semantics = [#tpu.dimension_semantics<parallel>, #tpu.dimension_semantics<arbitrary>], iteration_bounds = array<i64: 2, 1>, scalar_prefetch = 0 : i64, scratch_operands = 1 : i64, tpu.core_type = #tpu.core_type<tc>, window_params = [{transform_indices = @transform_0, window_bounds = array<i64: 1, 4, 128>}, {pipeline_mode = #tpu.pipeline_mode<synchronous>, transform_indices = @transform_1, window_bounds = array<i64: 128, 128>}, {pipeline_mode = #tpu.pipeline_mode<synchronous>, transform_indices = @transform_2, window_bounds = array<i64: 1, 128>}, {transform_indices = @transform_3, window_bounds = array<i64: 1, 4, 128>}, {transform_indices = @transform_4, window_bounds = array<i64: 1, 1, 128>}]} {
    %c0_i32 = arith.constant 0 : i32
    %0 = arith.cmpi eq, %arg1, %c0_i32 : i32
    %1 = arith.extui %0 : i1 to i32
    %c0_i32_0 = arith.constant 0 : i32
    %2 = arith.cmpi ne, %1, %c0_i32_0 : i32
    scf.if %2 {
      %cst_18 = arith.constant 0.000000e+00 : f32
      %24 = vector.broadcast %cst_18 : f32 to vector<1x128xf32>
      %c0_19 = arith.constant 0 : index
      %c0_20 = arith.constant 0 : index
      %25 = vector.load %arg7[%c0_19, %c0_20] : memref<1x128xf32, #tpu.memory_space<vmem>>, vector<1x128xf32>
      tpu.vector_store %arg7[%c0_19, %c0_20], %24 {strides = array<i32>} : memref<1x128xf32, #tpu.memory_space<vmem>>, vector<1x128xf32>,
    } else {
    }
    %c0 = arith.constant 0 : index
    %c0_1 = arith.constant 0 : index
    %c0_2 = arith.constant 0 : index
    %3 = vector.load %arg2[%c0, %c0_1, %c0_2] : memref<1x4x128xbf16, #tpu.memory_space<vmem>>, vector<1x4x128xbf16>
    %4 = vector.shape_cast %3 : vector<1x4x128xbf16> to vector<4x128xbf16>
    %c0_3 = arith.constant 0 : index
    %c0_4 = arith.constant 0 : index
    %5 = vector.load %arg3[%c0_3, %c0_4] : memref<128x128xbf16, #tpu.memory_space<vmem>>, vector<128x128xbf16>
    %cst = arith.constant dense<0.000000e+00> : vector<4x128xf32>
    %6 = tpu.matmul %4, %5, %cst {dimension_numbers = #tpu.dot_dimension_numbers<[1], [0], [0], [1], [0, 0, 1, 1], [], []>} : vector<4x128xbf16>, vector<128x128xbf16>, vector<4x128xf32> -> vector<4x128xf32>
    %c0_5 = arith.constant 0 : index
    %c0_6 = arith.constant 0 : index
    %7 = vector.load %arg4[%c0_5, %c0_6] : memref<1x128xf32, #tpu.memory_space<vmem>>, vector<1x128xf32>
    %8 = vector.broadcast %7 : vector<1x128xf32> to vector<4x128xf32>
    %9 = arith.addf %6, %8 : vector<4x128xf32>
    %cst_7 = arith.constant 0.000000e+00 : f32
    %10 = vector.broadcast %cst_7 : f32 to vector<4x128xf32>
    %11 = arith.maximumf %9, %10 : vector<4x128xf32>
    %12 = arith.truncf %11 : vector<4x128xf32> to vector<4x128xbf16>
    %c0_8 = arith.constant 0 : index
    %c0_9 = arith.constant 0 : index
    %c0_10 = arith.constant 0 : index
    %13 = vector.load %arg5[%c0_8, %c0_9, %c0_10] : memref<1x4x128xbf16, #tpu.memory_space<vmem>>, vector<1x4x128xbf16>
    %14 = vector.shape_cast %13 : vector<1x4x128xbf16> to vector<4x128xbf16>
    %15 = vector.shape_cast %12 : vector<4x128xbf16> to vector<1x4x128xbf16>
    tpu.vector_store %arg5[%c0_8, %c0_9, %c0_10], %15 {strides = array<i32>} : memref<1x4x128xbf16, #tpu.memory_space<vmem>>, vector<1x4x128xbf16>,
    %c0_11 = arith.constant 0 : index
    %c0_12 = arith.constant 0 : index
    %16 = vector.load %arg7[%c0_11, %c0_12] : memref<1x128xf32, #tpu.memory_space<vmem>>, vector<1x128xf32>
    %cst_13 = arith.constant dense<0.000000e+00> : vector<128xf32>
    %17 = vector.multi_reduction <add>, %11, %cst_13 [0] : vector<4x128xf32> to vector<128xf32>
    %18 = vector.shape_cast %17 : vector<128xf32> to vector<1x128xf32>
    %19 = arith.addf %16, %18 : vector<1x128xf32>
    %c0_14 = arith.constant 0 : index
    %c0_15 = arith.constant 0 : index
    %20 = vector.load %arg7[%c0_14, %c0_15] : memref<1x128xf32, #tpu.memory_space<vmem>>, vector<1x128xf32>
    tpu.vector_store %arg7[%c0_14, %c0_15], %19 {strides = array<i32>} : memref<1x128xf32, #tpu.memory_space<vmem>>, vector<1x128xf32>,
    %c0_i32_16 = arith.constant 0 : i32
    %21 = arith.cmpi eq, %arg1, %c0_i32_16 : i32
    %22 = arith.extui %21 : i1 to i32
    %c0_i32_17 = arith.constant 0 : i32
    %23 = arith.cmpi ne, %22, %c0_i32_17 : i32
    scf.if %23 {
      %c0_18 = arith.constant 0 : index
      %c0_19 = arith.constant 0 : index
      %24 = vector.load %arg7[%c0_18, %c0_19] : memref<1x128xf32, #tpu.memory_space<vmem>>, vector<1x128xf32>
      %cst_20 = arith.constant 2.500000e-01 : f32
      %25 = vector.broadcast %cst_20 : f32 to vector<1x128xf32>
      %26 = arith.mulf %24, %25 : vector<1x128xf32>
      %c0_21 = arith.constant 0 : index
      %c0_22 = arith.constant 0 : index
      %c0_23 = arith.constant 0 : index
      %27 = vector.load %arg6[%c0_21, %c0_22, %c0_23] : memref<1x1x128xf32, #tpu.memory_space<vmem>>, vector<1x1x128xf32>
      %28 = vector.shape_cast %27 : vector<1x1x128xf32> to vector<1x128xf32>
      %29 = vector.shape_cast %26 : vector<1x128xf32> to vector<1x1x128xf32>
      tpu.vector_store %arg6[%c0_21, %c0_22, %c0_23], %29 {strides = array<i32>} : memref<1x1x128xf32, #tpu.memory_space<vmem>>, vector<1x1x128xf32>,
    } else {
    }
    return
  }
  func.func @transform_0(%arg0: i32, %arg1: i32) -> (i32, i32, i32) {
    %c0_i32 = arith.constant 0 : i32
    %c0_i32_0 = arith.constant 0 : i32
    return %arg0, %arg1, %c0_i32 : i32, i32, i32
  }
  func.func @transform_1(%arg0: i32, %arg1: i32) -> (i32, i32) {
    %c0_i32 = arith.constant 0 : i32
    %c0_i32_0 = arith.constant 0 : i32
    %c0_i32_1 = arith.constant 0 : i32
    return %c0_i32, %c0_i32_0 : i32, i32
  }
  func.func @transform_2(%arg0: i32, %arg1: i32) -> (i32, i32) {
    %c0_i32 = arith.constant 0 : i32
    %c0_i32_0 = arith.constant 0 : i32
    %c0_i32_1 = arith.constant 0 : i32
    return %c0_i32, %c0_i32_0 : i32, i32
  }
  func.func @transform_3(%arg0: i32, %arg1: i32) -> (i32, i32, i32) {
    %c0_i32 = arith.constant 0 : i32
    %c0_i32_0 = arith.constant 0 : i32
    return %arg0, %arg1, %c0_i32 : i32, i32, i32
  }
  func.func @transform_4(%arg0: i32, %arg1: i32) -> (i32, i32, i32) {
    %c0_i32 = arith.constant 0 : i32
    %c0_i32_0 = arith.constant 0 : i32
    %c0_i32_1 = arith.constant 0 : i32
    return %arg0, %c0_i32, %c0_i32_0 : i32, i32, i32
  }
}

module attributes {stable_mosaic.version = 11 : i64} {
  func.func @_linear_kernel(%arg0: i32, %arg1: memref<8x128xbf16, #tpu.memory_space<vmem>>, %arg2: memref<128x128xbf16, #tpu.memory_space<vmem>>, %arg3: memref<1x128xf32, #tpu.memory_space<vmem>>, %arg4: memref<8x128xf32, #tpu.memory_space<vmem>>) attributes {dimension_semantics = [#tpu.dimension_semantics<parallel>], iteration_bounds = array<i64: 1>, scalar_prefetch = 0 : i64, scratch_operands = 0 : i64, tpu.core_type = #tpu.core_type<tc>, window_params = [{transform_indices = @transform_0, window_bounds = array<i64: 8, 128>}, {pipeline_mode = #tpu.pipeline_mode<synchronous>, transform_indices = @transform_1, window_bounds = array<i64: 128, 128>}, {pipeline_mode = #tpu.pipeline_mode<synchronous>, transform_indices = @transform_2, window_bounds = array<i64: 1, 128>}, {transform_indices = @transform_3, window_bounds = array<i64: 8, 128>}]} {
    %c0 = arith.constant 0 : index
    %c0_0 = arith.constant 0 : index
    %0 = vector.load %arg1[%c0, %c0_0] : memref<8x128xbf16, #tpu.memory_space<vmem>>, vector<8x128xbf16>
    %c0_1 = arith.constant 0 : index
    %c0_2 = arith.constant 0 : index
    %1 = vector.load %arg2[%c0_1, %c0_2] : memref<128x128xbf16, #tpu.memory_space<vmem>>, vector<128x128xbf16>
    %cst = arith.constant dense<0.000000e+00> : vector<8x128xf32>
    %2 = tpu.matmul %0, %1, %cst {dimension_numbers = #tpu.dot_dimension_numbers<[1], [0], [0], [1], [0, 0, 1, 1], [], []>} : vector<8x128xbf16>, vector<128x128xbf16>, vector<8x128xf32> -> vector<8x128xf32>
    %c0_3 = arith.constant 0 : index
    %c0_4 = arith.constant 0 : index
    %3 = vector.load %arg3[%c0_3, %c0_4] : memref<1x128xf32, #tpu.memory_space<vmem>>, vector<1x128xf32>
    %4 = vector.broadcast %3 : vector<1x128xf32> to vector<8x128xf32>
    %5 = arith.addf %2, %4 : vector<8x128xf32>
    %c0_5 = arith.constant 0 : index
    %c0_6 = arith.constant 0 : index
    %6 = vector.load %arg4[%c0_5, %c0_6] : memref<8x128xf32, #tpu.memory_space<vmem>>, vector<8x128xf32>
    tpu.vector_store %arg4[%c0_5, %c0_6], %5 {strides = array<i32>} : memref<8x128xf32, #tpu.memory_space<vmem>>, vector<8x128xf32>,
    return
  }
  func.func @transform_0(%arg0: i32) -> (i32, i32) {
    %c0_i32 = arith.constant 0 : i32
    %c0_i32_0 = arith.constant 0 : i32
    return %arg0, %c0_i32 : i32, i32
  }
  func.func @transform_1(%arg0: i32) -> (i32, i32) {
    %c0_i32 = arith.constant 0 : i32
    %c0_i32_0 = arith.constant 0 : i32
    %c0_i32_1 = arith.constant 0 : i32
    return %c0_i32, %c0_i32_0 : i32, i32
  }
  func.func @transform_2(%arg0: i32) -> (i32, i32) {
    %c0_i32 = arith.constant 0 : i32
    %c0_i32_0 = arith.constant 0 : i32
    %c0_i32_1 = arith.constant 0 : i32
    return %c0_i32, %c0_i32_0 : i32, i32
  }
  func.func @transform_3(%arg0: i32) -> (i32, i32) {
    %c0_i32 = arith.constant 0 : i32
    %c0_i32_0 = arith.constant 0 : i32
    return %arg0, %c0_i32 : i32, i32
  }
}

module attributes {stable_mosaic.version = 11 : i64} {
  func.func @_resize_kernel(%arg0: i32, %arg1: i32, %arg2: memref<1x21x2x2xf32, #tpu.memory_space<vmem>>, %arg3: memref<16x2xbf16, #tpu.memory_space<vmem>>, %arg4: memref<2x16xbf16, #tpu.memory_space<vmem>>, %arg5: memref<1x21x16x16xf32, #tpu.memory_space<vmem>>) attributes {dimension_semantics = [#tpu.dimension_semantics<parallel>, #tpu.dimension_semantics<parallel>], iteration_bounds = array<i64: 2, 1>, scalar_prefetch = 0 : i64, scratch_operands = 0 : i64, tpu.core_type = #tpu.core_type<tc>, window_params = [{transform_indices = @transform_0, window_bounds = array<i64: 1, 21, 2, 2>}, {transform_indices = @transform_1, window_bounds = array<i64: 16, 2>}, {pipeline_mode = #tpu.pipeline_mode<synchronous>, transform_indices = @transform_2, window_bounds = array<i64: 2, 16>}, {transform_indices = @transform_3, window_bounds = array<i64: 1, 21, 16, 16>}]} {
    %c0 = arith.constant 0 : index
    %c0_0 = arith.constant 0 : index
    %0 = vector.load %arg3[%c0, %c0_0] : memref<16x2xbf16, #tpu.memory_space<vmem>>, vector<16x2xbf16>
    %c0_1 = arith.constant 0 : index
    %c0_2 = arith.constant 0 : index
    %1 = vector.load %arg4[%c0_1, %c0_2] : memref<2x16xbf16, #tpu.memory_space<vmem>>, vector<2x16xbf16>
    %c0_3 = arith.constant 0 : index
    %c0_4 = arith.constant 0 : index
    %c0_5 = arith.constant 0 : index
    %c0_6 = arith.constant 0 : index
    %2 = vector.load %arg2[%c0_3, %c0_4, %c0_5, %c0_6] : memref<1x21x2x2xf32, #tpu.memory_space<vmem>>, vector<1x1x2x2xf32>
    %3 = vector.shape_cast %2 : vector<1x1x2x2xf32> to vector<2x2xf32>
    %4 = arith.truncf %3 : vector<2x2xf32> to vector<2x2xbf16>
    %cst = arith.constant dense<0.000000e+00> : vector<16x2xf32>
    %5 = tpu.matmul %0, %4, %cst {dimension_numbers = #tpu.dot_dimension_numbers<[1], [0], [0], [1], [0, 0, 1, 1], [], []>} : vector<16x2xbf16>, vector<2x2xbf16>, vector<16x2xf32> -> vector<16x2xf32>
    %6 = arith.truncf %5 : vector<16x2xf32> to vector<16x2xbf16>
    %cst_7 = arith.constant dense<0.000000e+00> : vector<16x16xf32>
    %7 = tpu.matmul %6, %1, %cst_7 {dimension_numbers = #tpu.dot_dimension_numbers<[1], [0], [0], [1], [0, 0, 1, 1], [], []>} : vector<16x2xbf16>, vector<2x16xbf16>, vector<16x16xf32> -> vector<16x16xf32>
    %c0_8 = arith.constant 0 : index
    %c0_9 = arith.constant 0 : index
    %c0_10 = arith.constant 0 : index
    %c0_11 = arith.constant 0 : index
    %8 = vector.load %arg5[%c0_8, %c0_9, %c0_10, %c0_11] : memref<1x21x16x16xf32, #tpu.memory_space<vmem>>, vector<1x1x16x16xf32>
    %9 = vector.shape_cast %8 : vector<1x1x16x16xf32> to vector<16x16xf32>
    %10 = vector.shape_cast %7 : vector<16x16xf32> to vector<1x1x16x16xf32>
    tpu.vector_store %arg5[%c0_8, %c0_9, %c0_10, %c0_11], %10 {strides = array<i32>} : memref<1x21x16x16xf32, #tpu.memory_space<vmem>>, vector<1x1x16x16xf32>,
    %c0_12 = arith.constant 0 : index
    %c1 = arith.constant 1 : index
    %c0_13 = arith.constant 0 : index
    %c0_14 = arith.constant 0 : index
    %11 = vector.load %arg2[%c0_12, %c1, %c0_13, %c0_14] : memref<1x21x2x2xf32, #tpu.memory_space<vmem>>, vector<1x1x2x2xf32>
    %12 = vector.shape_cast %11 : vector<1x1x2x2xf32> to vector<2x2xf32>
    %13 = arith.truncf %12 : vector<2x2xf32> to vector<2x2xbf16>
    %cst_15 = arith.constant dense<0.000000e+00> : vector<16x2xf32>
    %14 = tpu.matmul %0, %13, %cst_15 {dimension_numbers = #tpu.dot_dimension_numbers<[1], [0], [0], [1], [0, 0, 1, 1], [], []>} : vector<16x2xbf16>, vector<2x2xbf16>, vector<16x2xf32> -> vector<16x2xf32>
    %15 = arith.truncf %14 : vector<16x2xf32> to vector<16x2xbf16>
    %cst_16 = arith.constant dense<0.000000e+00> : vector<16x16xf32>
    %16 = tpu.matmul %15, %1, %cst_16 {dimension_numbers = #tpu.dot_dimension_numbers<[1], [0], [0], [1], [0, 0, 1, 1], [], []>} : vector<16x2xbf16>, vector<2x16xbf16>, vector<16x16xf32> -> vector<16x16xf32>
    %c0_17 = arith.constant 0 : index
    %c1_18 = arith.constant 1 : index
    %c0_19 = arith.constant 0 : index
    %c0_20 = arith.constant 0 : index
    %17 = vector.load %arg5[%c0_17, %c1_18, %c0_19, %c0_20] : memref<1x21x16x16xf32, #tpu.memory_space<vmem>>, vector<1x1x16x16xf32>
    %18 = vector.shape_cast %17 : vector<1x1x16x16xf32> to vector<16x16xf32>
    %19 = vector.shape_cast %16 : vector<16x16xf32> to vector<1x1x16x16xf32>
    tpu.vector_store %arg5[%c0_17, %c1_18, %c0_19, %c0_20], %19 {strides = array<i32>} : memref<1x21x16x16xf32, #tpu.memory_space<vmem>>, vector<1x1x16x16xf32>,
    %c0_21 = arith.constant 0 : index
    %c2 = arith.constant 2 : index
    %c0_22 = arith.constant 0 : index
    %c0_23 = arith.constant 0 : index
    %20 = vector.load %arg2[%c0_21, %c2, %c0_22, %c0_23] : memref<1x21x2x2xf32, #tpu.memory_space<vmem>>, vector<1x1x2x2xf32>
    %21 = vector.shape_cast %20 : vector<1x1x2x2xf32> to vector<2x2xf32>
    %22 = arith.truncf %21 : vector<2x2xf32> to vector<2x2xbf16>
    %cst_24 = arith.constant dense<0.000000e+00> : vector<16x2xf32>
    %23 = tpu.matmul %0, %22, %cst_24 {dimension_numbers = #tpu.dot_dimension_numbers<[1], [0], [0], [1], [0, 0, 1, 1], [], []>} : vector<16x2xbf16>, vector<2x2xbf16>, vector<16x2xf32> -> vector<16x2xf32>
    %24 = arith.truncf %23 : vector<16x2xf32> to vector<16x2xbf16>
    %cst_25 = arith.constant dense<0.000000e+00> : vector<16x16xf32>
    %25 = tpu.matmul %24, %1, %cst_25 {dimension_numbers = #tpu.dot_dimension_numbers<[1], [0], [0], [1], [0, 0, 1, 1], [], []>} : vector<16x2xbf16>, vector<2x16xbf16>, vector<16x16xf32> -> vector<16x16xf32>
    %c0_26 = arith.constant 0 : index
    %c2_27 = arith.constant 2 : index
    %c0_28 = arith.constant 0 : index
    %c0_29 = arith.constant 0 : index
    %26 = vector.load %arg5[%c0_26, %c2_27, %c0_28, %c0_29] : memref<1x21x16x16xf32, #tpu.memory_space<vmem>>, vector<1x1x16x16xf32>
    %27 = vector.shape_cast %26 : vector<1x1x16x16xf32> to vector<16x16xf32>
    %28 = vector.shape_cast %25 : vector<16x16xf32> to vector<1x1x16x16xf32>
    tpu.vector_store %arg5[%c0_26, %c2_27, %c0_28, %c0_29], %28 {strides = array<i32>} : memref<1x21x16x16xf32, #tpu.memory_space<vmem>>, vector<1x1x16x16xf32>,
    %c0_30 = arith.constant 0 : index
    %c3 = arith.constant 3 : index
    %c0_31 = arith.constant 0 : index
    %c0_32 = arith.constant 0 : index
    %29 = vector.load %arg2[%c0_30, %c3, %c0_31, %c0_32] : memref<1x21x2x2xf32, #tpu.memory_space<vmem>>, vector<1x1x2x2xf32>
    %30 = vector.shape_cast %29 : vector<1x1x2x2xf32> to vector<2x2xf32>
    %31 = arith.truncf %30 : vector<2x2xf32> to vector<2x2xbf16>
    %cst_33 = arith.constant dense<0.000000e+00> : vector<16x2xf32>
    %32 = tpu.matmul %0, %31, %cst_33 {dimension_numbers = #tpu.dot_dimension_numbers<[1], [0], [0], [1], [0, 0, 1, 1], [], []>} : vector<16x2xbf16>, vector<2x2xbf16>, vector<16x2xf32> -> vector<16x2xf32>
    %33 = arith.truncf %32 : vector<16x2xf32> to vector<16x2xbf16>
    %cst_34 = arith.constant dense<0.000000e+00> : vector<16x16xf32>
    %34 = tpu.matmul %33, %1, %cst_34 {dimension_numbers = #tpu.dot_dimension_numbers<[1], [0], [0], [1], [0, 0, 1, 1], [], []>} : vector<16x2xbf16>, vector<2x16xbf16>, vector<16x16xf32> -> vector<16x16xf32>
    %c0_35 = arith.constant 0 : index
    %c3_36 = arith.constant 3 : index
    %c0_37 = arith.constant 0 : index
    %c0_38 = arith.constant 0 : index
    %35 = vector.load %arg5[%c0_35, %c3_36, %c0_37, %c0_38] : memref<1x21x16x16xf32, #tpu.memory_space<vmem>>, vector<1x1x16x16xf32>
    %36 = vector.shape_cast %35 : vector<1x1x16x16xf32> to vector<16x16xf32>
    %37 = vector.shape_cast %34 : vector<16x16xf32> to vector<1x1x16x16xf32>
    tpu.vector_store %arg5[%c0_35, %c3_36, %c0_37, %c0_38], %37 {strides = array<i32>} : memref<1x21x16x16xf32, #tpu.memory_space<vmem>>, vector<1x1x16x16xf32>,
    %c0_39 = arith.constant 0 : index
    %c4 = arith.constant 4 : index
    %c0_40 = arith.constant 0 : index
    %c0_41 = arith.constant 0 : index
    %38 = vector.load %arg2[%c0_39, %c4, %c0_40, %c0_41] : memref<1x21x2x2xf32, #tpu.memory_space<vmem>>, vector<1x1x2x2xf32>
    %39 = vector.shape_cast %38 : vector<1x1x2x2xf32> to vector<2x2xf32>
    %40 = arith.truncf %39 : vector<2x2xf32> to vector<2x2xbf16>
    %cst_42 = arith.constant dense<0.000000e+00> : vector<16x2xf32>
    %41 = tpu.matmul %0, %40, %cst_42 {dimension_numbers = #tpu.dot_dimension_numbers<[1], [0], [0], [1], [0, 0, 1, 1], [], []>} : vector<16x2xbf16>, vector<2x2xbf16>, vector<16x2xf32> -> vector<16x2xf32>
    %42 = arith.truncf %41 : vector<16x2xf32> to vector<16x2xbf16>
    %cst_43 = arith.constant dense<0.000000e+00> : vector<16x16xf32>
    %43 = tpu.matmul %42, %1, %cst_43 {dimension_numbers = #tpu.dot_dimension_numbers<[1], [0], [0], [1], [0, 0, 1, 1], [], []>} : vector<16x2xbf16>, vector<2x16xbf16>, vector<16x16xf32> -> vector<16x16xf32>
    %c0_44 = arith.constant 0 : index
    %c4_45 = arith.constant 4 : index
    %c0_46 = arith.constant 0 : index
    %c0_47 = arith.constant 0 : index
    %44 = vector.load %arg5[%c0_44, %c4_45, %c0_46, %c0_47] : memref<1x21x16x16xf32, #tpu.memory_space<vmem>>, vector<1x1x16x16xf32>
    %45 = vector.shape_cast %44 : vector<1x1x16x16xf32> to vector<16x16xf32>
    %46 = vector.shape_cast %43 : vector<16x16xf32> to vector<1x1x16x16xf32>
    tpu.vector_store %arg5[%c0_44, %c4_45, %c0_46, %c0_47], %46 {strides = array<i32>} : memref<1x21x16x16xf32, #tpu.memory_space<vmem>>, vector<1x1x16x16xf32>,
    %c0_48 = arith.constant 0 : index
    %c5 = arith.constant 5 : index
    %c0_49 = arith.constant 0 : index
    %c0_50 = arith.constant 0 : index
    %47 = vector.load %arg2[%c0_48, %c5, %c0_49, %c0_50] : memref<1x21x2x2xf32, #tpu.memory_space<vmem>>, vector<1x1x2x2xf32>
    %48 = vector.shape_cast %47 : vector<1x1x2x2xf32> to vector<2x2xf32>
    %49 = arith.truncf %48 : vector<2x2xf32> to vector<2x2xbf16>
    %cst_51 = arith.constant dense<0.000000e+00> : vector<16x2xf32>
    %50 = tpu.matmul %0, %49, %cst_51 {dimension_numbers = #tpu.dot_dimension_numbers<[1], [0], [0], [1], [0, 0, 1, 1], [], []>} : vector<16x2xbf16>, vector<2x2xbf16>, vector<16x2xf32> -> vector<16x2xf32>
    %51 = arith.truncf %50 : vector<16x2xf32> to vector<16x2xbf16>
    %cst_52 = arith.constant dense<0.000000e+00> : vector<16x16xf32>
    %52 = tpu.matmul %51, %1, %cst_52 {dimension_numbers = #tpu.dot_dimension_numbers<[1], [0], [0], [1], [0, 0, 1, 1], [], []>} : vector<16x2xbf16>, vector<2x16xbf16>, vector<16x16xf32> -> vector<16x16xf32>
    %c0_53 = arith.constant 0 : index
    %c5_54 = arith.constant 5 : index
    %c0_55 = arith.constant 0 : index
    %c0_56 = arith.constant 0 : index
    %53 = vector.load %arg5[%c0_53, %c5_54, %c0_55, %c0_56] : memref<1x21x16x16xf32, #tpu.memory_space<vmem>>, vector<1x1x16x16xf32>
    %54 = vector.shape_cast %53 : vector<1x1x16x16xf32> to vector<16x16xf32>
    %55 = vector.shape_cast %52 : vector<16x16xf32> to vector<1x1x16x16xf32>
    tpu.vector_store %arg5[%c0_53, %c5_54, %c0_55, %c0_56], %55 {strides = array<i32>} : memref<1x21x16x16xf32, #tpu.memory_space<vmem>>, vector<1x1x16x16xf32>,
    %c0_57 = arith.constant 0 : index
    %c6 = arith.constant 6 : index
    %c0_58 = arith.constant 0 : index
    %c0_59 = arith.constant 0 : index
    %56 = vector.load %arg2[%c0_57, %c6, %c0_58, %c0_59] : memref<1x21x2x2xf32, #tpu.memory_space<vmem>>, vector<1x1x2x2xf32>
    %57 = vector.shape_cast %56 : vector<1x1x2x2xf32> to vector<2x2xf32>
    %58 = arith.truncf %57 : vector<2x2xf32> to vector<2x2xbf16>
    %cst_60 = arith.constant dense<0.000000e+00> : vector<16x2xf32>
    %59 = tpu.matmul %0, %58, %cst_60 {dimension_numbers = #tpu.dot_dimension_numbers<[1], [0], [0], [1], [0, 0, 1, 1], [], []>} : vector<16x2xbf16>, vector<2x2xbf16>, vector<16x2xf32> -> vector<16x2xf32>
    %60 = arith.truncf %59 : vector<16x2xf32> to vector<16x2xbf16>
    %cst_61 = arith.constant dense<0.000000e+00> : vector<16x16xf32>
    %61 = tpu.matmul %60, %1, %cst_61 {dimension_numbers = #tpu.dot_dimension_numbers<[1], [0], [0], [1], [0, 0, 1, 1], [], []>} : vector<16x2xbf16>, vector<2x16xbf16>, vector<16x16xf32> -> vector<16x16xf32>
    %c0_62 = arith.constant 0 : index
    %c6_63 = arith.constant 6 : index
    %c0_64 = arith.constant 0 : index
    %c0_65 = arith.constant 0 : index
    %62 = vector.load %arg5[%c0_62, %c6_63, %c0_64, %c0_65] : memref<1x21x16x16xf32, #tpu.memory_space<vmem>>, vector<1x1x16x16xf32>
    %63 = vector.shape_cast %62 : vector<1x1x16x16xf32> to vector<16x16xf32>
    %64 = vector.shape_cast %61 : vector<16x16xf32> to vector<1x1x16x16xf32>
    tpu.vector_store %arg5[%c0_62, %c6_63, %c0_64, %c0_65], %64 {strides = array<i32>} : memref<1x21x16x16xf32, #tpu.memory_space<vmem>>, vector<1x1x16x16xf32>,
    %c0_66 = arith.constant 0 : index
    %c7 = arith.constant 7 : index
    %c0_67 = arith.constant 0 : index
    %c0_68 = arith.constant 0 : index
    %65 = vector.load %arg2[%c0_66, %c7, %c0_67, %c0_68] : memref<1x21x2x2xf32, #tpu.memory_space<vmem>>, vector<1x1x2x2xf32>
    %66 = vector.shape_cast %65 : vector<1x1x2x2xf32> to vector<2x2xf32>
    %67 = arith.truncf %66 : vector<2x2xf32> to vector<2x2xbf16>
    %cst_69 = arith.constant dense<0.000000e+00> : vector<16x2xf32>
    %68 = tpu.matmul %0, %67, %cst_69 {dimension_numbers = #tpu.dot_dimension_numbers<[1], [0], [0], [1], [0, 0, 1, 1], [], []>} : vector<16x2xbf16>, vector<2x2xbf16>, vector<16x2xf32> -> vector<16x2xf32>
    %69 = arith.truncf %68 : vector<16x2xf32> to vector<16x2xbf16>
    %cst_70 = arith.constant dense<0.000000e+00> : vector<16x16xf32>
    %70 = tpu.matmul %69, %1, %cst_70 {dimension_numbers = #tpu.dot_dimension_numbers<[1], [0], [0], [1], [0, 0, 1, 1], [], []>} : vector<16x2xbf16>, vector<2x16xbf16>, vector<16x16xf32> -> vector<16x16xf32>
    %c0_71 = arith.constant 0 : index
    %c7_72 = arith.constant 7 : index
    %c0_73 = arith.constant 0 : index
    %c0_74 = arith.constant 0 : index
    %71 = vector.load %arg5[%c0_71, %c7_72, %c0_73, %c0_74] : memref<1x21x16x16xf32, #tpu.memory_space<vmem>>, vector<1x1x16x16xf32>
    %72 = vector.shape_cast %71 : vector<1x1x16x16xf32> to vector<16x16xf32>
    %73 = vector.shape_cast %70 : vector<16x16xf32> to vector<1x1x16x16xf32>
    tpu.vector_store %arg5[%c0_71, %c7_72, %c0_73, %c0_74], %73 {strides = array<i32>} : memref<1x21x16x16xf32, #tpu.memory_space<vmem>>, vector<1x1x16x16xf32>,
    %c0_75 = arith.constant 0 : index
    %c8 = arith.constant 8 : index
    %c0_76 = arith.constant 0 : index
    %c0_77 = arith.constant 0 : index
    %74 = vector.load %arg2[%c0_75, %c8, %c0_76, %c0_77] : memref<1x21x2x2xf32, #tpu.memory_space<vmem>>, vector<1x1x2x2xf32>
    %75 = vector.shape_cast %74 : vector<1x1x2x2xf32> to vector<2x2xf32>
    %76 = arith.truncf %75 : vector<2x2xf32> to vector<2x2xbf16>
    %cst_78 = arith.constant dense<0.000000e+00> : vector<16x2xf32>
    %77 = tpu.matmul %0, %76, %cst_78 {dimension_numbers = #tpu.dot_dimension_numbers<[1], [0], [0], [1], [0, 0, 1, 1], [], []>} : vector<16x2xbf16>, vector<2x2xbf16>, vector<16x2xf32> -> vector<16x2xf32>
    %78 = arith.truncf %77 : vector<16x2xf32> to vector<16x2xbf16>
    %cst_79 = arith.constant dense<0.000000e+00> : vector<16x16xf32>
    %79 = tpu.matmul %78, %1, %cst_79 {dimension_numbers = #tpu.dot_dimension_numbers<[1], [0], [0], [1], [0, 0, 1, 1], [], []>} : vector<16x2xbf16>, vector<2x16xbf16>, vector<16x16xf32> -> vector<16x16xf32>
    %c0_80 = arith.constant 0 : index
    %c8_81 = arith.constant 8 : index
    %c0_82 = arith.constant 0 : index
    %c0_83 = arith.constant 0 : index
    %80 = vector.load %arg5[%c0_80, %c8_81, %c0_82, %c0_83] : memref<1x21x16x16xf32, #tpu.memory_space<vmem>>, vector<1x1x16x16xf32>
    %81 = vector.shape_cast %80 : vector<1x1x16x16xf32> to vector<16x16xf32>
    %82 = vector.shape_cast %79 : vector<16x16xf32> to vector<1x1x16x16xf32>
    tpu.vector_store %arg5[%c0_80, %c8_81, %c0_82, %c0_83], %82 {strides = array<i32>} : memref<1x21x16x16xf32, #tpu.memory_space<vmem>>, vector<1x1x16x16xf32>,
    %c0_84 = arith.constant 0 : index
    %c9 = arith.constant 9 : index
    %c0_85 = arith.constant 0 : index
    %c0_86 = arith.constant 0 : index
    %83 = vector.load %arg2[%c0_84, %c9, %c0_85, %c0_86] : memref<1x21x2x2xf32, #tpu.memory_space<vmem>>, vector<1x1x2x2xf32>
    %84 = vector.shape_cast %83 : vector<1x1x2x2xf32> to vector<2x2xf32>
    %85 = arith.truncf %84 : vector<2x2xf32> to vector<2x2xbf16>
    %cst_87 = arith.constant dense<0.000000e+00> : vector<16x2xf32>
    %86 = tpu.matmul %0, %85, %cst_87 {dimension_numbers = #tpu.dot_dimension_numbers<[1], [0], [0], [1], [0, 0, 1, 1], [], []>} : vector<16x2xbf16>, vector<2x2xbf16>, vector<16x2xf32> -> vector<16x2xf32>
    %87 = arith.truncf %86 : vector<16x2xf32> to vector<16x2xbf16>
    %cst_88 = arith.constant dense<0.000000e+00> : vector<16x16xf32>
    %88 = tpu.matmul %87, %1, %cst_88 {dimension_numbers = #tpu.dot_dimension_numbers<[1], [0], [0], [1], [0, 0, 1, 1], [], []>} : vector<16x2xbf16>, vector<2x16xbf16>, vector<16x16xf32> -> vector<16x16xf32>
    %c0_89 = arith.constant 0 : index
    %c9_90 = arith.constant 9 : index
    %c0_91 = arith.constant 0 : index
    %c0_92 = arith.constant 0 : index
    %89 = vector.load %arg5[%c0_89, %c9_90, %c0_91, %c0_92] : memref<1x21x16x16xf32, #tpu.memory_space<vmem>>, vector<1x1x16x16xf32>
    %90 = vector.shape_cast %89 : vector<1x1x16x16xf32> to vector<16x16xf32>
    %91 = vector.shape_cast %88 : vector<16x16xf32> to vector<1x1x16x16xf32>
    tpu.vector_store %arg5[%c0_89, %c9_90, %c0_91, %c0_92], %91 {strides = array<i32>} : memref<1x21x16x16xf32, #tpu.memory_space<vmem>>, vector<1x1x16x16xf32>,
    %c0_93 = arith.constant 0 : index
    %c10 = arith.constant 10 : index
    %c0_94 = arith.constant 0 : index
    %c0_95 = arith.constant 0 : index
    %92 = vector.load %arg2[%c0_93, %c10, %c0_94, %c0_95] : memref<1x21x2x2xf32, #tpu.memory_space<vmem>>, vector<1x1x2x2xf32>
    %93 = vector.shape_cast %92 : vector<1x1x2x2xf32> to vector<2x2xf32>
    %94 = arith.truncf %93 : vector<2x2xf32> to vector<2x2xbf16>
    %cst_96 = arith.constant dense<0.000000e+00> : vector<16x2xf32>
    %95 = tpu.matmul %0, %94, %cst_96 {dimension_numbers = #tpu.dot_dimension_numbers<[1], [0], [0], [1], [0, 0, 1, 1], [], []>} : vector<16x2xbf16>, vector<2x2xbf16>, vector<16x2xf32> -> vector<16x2xf32>
    %96 = arith.truncf %95 : vector<16x2xf32> to vector<16x2xbf16>
    %cst_97 = arith.constant dense<0.000000e+00> : vector<16x16xf32>
    %97 = tpu.matmul %96, %1, %cst_97 {dimension_numbers = #tpu.dot_dimension_numbers<[1], [0], [0], [1], [0, 0, 1, 1], [], []>} : vector<16x2xbf16>, vector<2x16xbf16>, vector<16x16xf32> -> vector<16x16xf32>
    %c0_98 = arith.constant 0 : index
    %c10_99 = arith.constant 10 : index
    %c0_100 = arith.constant 0 : index
    %c0_101 = arith.constant 0 : index
    %98 = vector.load %arg5[%c0_98, %c10_99, %c0_100, %c0_101] : memref<1x21x16x16xf32, #tpu.memory_space<vmem>>, vector<1x1x16x16xf32>
    %99 = vector.shape_cast %98 : vector<1x1x16x16xf32> to vector<16x16xf32>
    %100 = vector.shape_cast %97 : vector<16x16xf32> to vector<1x1x16x16xf32>
    tpu.vector_store %arg5[%c0_98, %c10_99, %c0_100, %c0_101], %100 {strides = array<i32>} : memref<1x21x16x16xf32, #tpu.memory_space<vmem>>, vector<1x1x16x16xf32>,
    %c0_102 = arith.constant 0 : index
    %c11 = arith.constant 11 : index
    %c0_103 = arith.constant 0 : index
    %c0_104 = arith.constant 0 : index
    %101 = vector.load %arg2[%c0_102, %c11, %c0_103, %c0_104] : memref<1x21x2x2xf32, #tpu.memory_space<vmem>>, vector<1x1x2x2xf32>
    %102 = vector.shape_cast %101 : vector<1x1x2x2xf32> to vector<2x2xf32>
    %103 = arith.truncf %102 : vector<2x2xf32> to vector<2x2xbf16>
    %cst_105 = arith.constant dense<0.000000e+00> : vector<16x2xf32>
    %104 = tpu.matmul %0, %103, %cst_105 {dimension_numbers = #tpu.dot_dimension_numbers<[1], [0], [0], [1], [0, 0, 1, 1], [], []>} : vector<16x2xbf16>, vector<2x2xbf16>, vector<16x2xf32> -> vector<16x2xf32>
    %105 = arith.truncf %104 : vector<16x2xf32> to vector<16x2xbf16>
    %cst_106 = arith.constant dense<0.000000e+00> : vector<16x16xf32>
    %106 = tpu.matmul %105, %1, %cst_106 {dimension_numbers = #tpu.dot_dimension_numbers<[1], [0], [0], [1], [0, 0, 1, 1], [], []>} : vector<16x2xbf16>, vector<2x16xbf16>, vector<16x16xf32> -> vector<16x16xf32>
    %c0_107 = arith.constant 0 : index
    %c11_108 = arith.constant 11 : index
    %c0_109 = arith.constant 0 : index
    %c0_110 = arith.constant 0 : index
    %107 = vector.load %arg5[%c0_107, %c11_108, %c0_109, %c0_110] : memref<1x21x16x16xf32, #tpu.memory_space<vmem>>, vector<1x1x16x16xf32>
    %108 = vector.shape_cast %107 : vector<1x1x16x16xf32> to vector<16x16xf32>
    %109 = vector.shape_cast %106 : vector<16x16xf32> to vector<1x1x16x16xf32>
    tpu.vector_store %arg5[%c0_107, %c11_108, %c0_109, %c0_110], %109 {strides = array<i32>} : memref<1x21x16x16xf32, #tpu.memory_space<vmem>>, vector<1x1x16x16xf32>,
    %c0_111 = arith.constant 0 : index
    %c12 = arith.constant 12 : index
    %c0_112 = arith.constant 0 : index
    %c0_113 = arith.constant 0 : index
    %110 = vector.load %arg2[%c0_111, %c12, %c0_112, %c0_113] : memref<1x21x2x2xf32, #tpu.memory_space<vmem>>, vector<1x1x2x2xf32>
    %111 = vector.shape_cast %110 : vector<1x1x2x2xf32> to vector<2x2xf32>
    %112 = arith.truncf %111 : vector<2x2xf32> to vector<2x2xbf16>
    %cst_114 = arith.constant dense<0.000000e+00> : vector<16x2xf32>
    %113 = tpu.matmul %0, %112, %cst_114 {dimension_numbers = #tpu.dot_dimension_numbers<[1], [0], [0], [1], [0, 0, 1, 1], [], []>} : vector<16x2xbf16>, vector<2x2xbf16>, vector<16x2xf32> -> vector<16x2xf32>
    %114 = arith.truncf %113 : vector<16x2xf32> to vector<16x2xbf16>
    %cst_115 = arith.constant dense<0.000000e+00> : vector<16x16xf32>
    %115 = tpu.matmul %114, %1, %cst_115 {dimension_numbers = #tpu.dot_dimension_numbers<[1], [0], [0], [1], [0, 0, 1, 1], [], []>} : vector<16x2xbf16>, vector<2x16xbf16>, vector<16x16xf32> -> vector<16x16xf32>
    %c0_116 = arith.constant 0 : index
    %c12_117 = arith.constant 12 : index
    %c0_118 = arith.constant 0 : index
    %c0_119 = arith.constant 0 : index
    %116 = vector.load %arg5[%c0_116, %c12_117, %c0_118, %c0_119] : memref<1x21x16x16xf32, #tpu.memory_space<vmem>>, vector<1x1x16x16xf32>
    %117 = vector.shape_cast %116 : vector<1x1x16x16xf32> to vector<16x16xf32>
    %118 = vector.shape_cast %115 : vector<16x16xf32> to vector<1x1x16x16xf32>
    tpu.vector_store %arg5[%c0_116, %c12_117, %c0_118, %c0_119], %118 {strides = array<i32>} : memref<1x21x16x16xf32, #tpu.memory_space<vmem>>, vector<1x1x16x16xf32>,
    %c0_120 = arith.constant 0 : index
    %c13 = arith.constant 13 : index
    %c0_121 = arith.constant 0 : index
    %c0_122 = arith.constant 0 : index
    %119 = vector.load %arg2[%c0_120, %c13, %c0_121, %c0_122] : memref<1x21x2x2xf32, #tpu.memory_space<vmem>>, vector<1x1x2x2xf32>
    %120 = vector.shape_cast %119 : vector<1x1x2x2xf32> to vector<2x2xf32>
    %121 = arith.truncf %120 : vector<2x2xf32> to vector<2x2xbf16>
    %cst_123 = arith.constant dense<0.000000e+00> : vector<16x2xf32>
    %122 = tpu.matmul %0, %121, %cst_123 {dimension_numbers = #tpu.dot_dimension_numbers<[1], [0], [0], [1], [0, 0, 1, 1], [], []>} : vector<16x2xbf16>, vector<2x2xbf16>, vector<16x2xf32> -> vector<16x2xf32>
    %123 = arith.truncf %122 : vector<16x2xf32> to vector<16x2xbf16>
    %cst_124 = arith.constant dense<0.000000e+00> : vector<16x16xf32>
    %124 = tpu.matmul %123, %1, %cst_124 {dimension_numbers = #tpu.dot_dimension_numbers<[1], [0], [0], [1], [0, 0, 1, 1], [], []>} : vector<16x2xbf16>, vector<2x16xbf16>, vector<16x16xf32> -> vector<16x16xf32>
    %c0_125 = arith.constant 0 : index
    %c13_126 = arith.constant 13 : index
    %c0_127 = arith.constant 0 : index
    %c0_128 = arith.constant 0 : index
    %125 = vector.load %arg5[%c0_125, %c13_126, %c0_127, %c0_128] : memref<1x21x16x16xf32, #tpu.memory_space<vmem>>, vector<1x1x16x16xf32>
    %126 = vector.shape_cast %125 : vector<1x1x16x16xf32> to vector<16x16xf32>
    %127 = vector.shape_cast %124 : vector<16x16xf32> to vector<1x1x16x16xf32>
    tpu.vector_store %arg5[%c0_125, %c13_126, %c0_127, %c0_128], %127 {strides = array<i32>} : memref<1x21x16x16xf32, #tpu.memory_space<vmem>>, vector<1x1x16x16xf32>,
    %c0_129 = arith.constant 0 : index
    %c14 = arith.constant 14 : index
    %c0_130 = arith.constant 0 : index
    %c0_131 = arith.constant 0 : index
    %128 = vector.load %arg2[%c0_129, %c14, %c0_130, %c0_131] : memref<1x21x2x2xf32, #tpu.memory_space<vmem>>, vector<1x1x2x2xf32>
    %129 = vector.shape_cast %128 : vector<1x1x2x2xf32> to vector<2x2xf32>
    %130 = arith.truncf %129 : vector<2x2xf32> to vector<2x2xbf16>
    %cst_132 = arith.constant dense<0.000000e+00> : vector<16x2xf32>
    %131 = tpu.matmul %0, %130, %cst_132 {dimension_numbers = #tpu.dot_dimension_numbers<[1], [0], [0], [1], [0, 0, 1, 1], [], []>} : vector<16x2xbf16>, vector<2x2xbf16>, vector<16x2xf32> -> vector<16x2xf32>
    %132 = arith.truncf %131 : vector<16x2xf32> to vector<16x2xbf16>
    %cst_133 = arith.constant dense<0.000000e+00> : vector<16x16xf32>
    %133 = tpu.matmul %132, %1, %cst_133 {dimension_numbers = #tpu.dot_dimension_numbers<[1], [0], [0], [1], [0, 0, 1, 1], [], []>} : vector<16x2xbf16>, vector<2x16xbf16>, vector<16x16xf32> -> vector<16x16xf32>
    %c0_134 = arith.constant 0 : index
    %c14_135 = arith.constant 14 : index
    %c0_136 = arith.constant 0 : index
    %c0_137 = arith.constant 0 : index
    %134 = vector.load %arg5[%c0_134, %c14_135, %c0_136, %c0_137] : memref<1x21x16x16xf32, #tpu.memory_space<vmem>>, vector<1x1x16x16xf32>
    %135 = vector.shape_cast %134 : vector<1x1x16x16xf32> to vector<16x16xf32>
    %136 = vector.shape_cast %133 : vector<16x16xf32> to vector<1x1x16x16xf32>
    tpu.vector_store %arg5[%c0_134, %c14_135, %c0_136, %c0_137], %136 {strides = array<i32>} : memref<1x21x16x16xf32, #tpu.memory_space<vmem>>, vector<1x1x16x16xf32>,
    %c0_138 = arith.constant 0 : index
    %c15 = arith.constant 15 : index
    %c0_139 = arith.constant 0 : index
    %c0_140 = arith.constant 0 : index
    %137 = vector.load %arg2[%c0_138, %c15, %c0_139, %c0_140] : memref<1x21x2x2xf32, #tpu.memory_space<vmem>>, vector<1x1x2x2xf32>
    %138 = vector.shape_cast %137 : vector<1x1x2x2xf32> to vector<2x2xf32>
    %139 = arith.truncf %138 : vector<2x2xf32> to vector<2x2xbf16>
    %cst_141 = arith.constant dense<0.000000e+00> : vector<16x2xf32>
    %140 = tpu.matmul %0, %139, %cst_141 {dimension_numbers = #tpu.dot_dimension_numbers<[1], [0], [0], [1], [0, 0, 1, 1], [], []>} : vector<16x2xbf16>, vector<2x2xbf16>, vector<16x2xf32> -> vector<16x2xf32>
    %141 = arith.truncf %140 : vector<16x2xf32> to vector<16x2xbf16>
    %cst_142 = arith.constant dense<0.000000e+00> : vector<16x16xf32>
    %142 = tpu.matmul %141, %1, %cst_142 {dimension_numbers = #tpu.dot_dimension_numbers<[1], [0], [0], [1], [0, 0, 1, 1], [], []>} : vector<16x2xbf16>, vector<2x16xbf16>, vector<16x16xf32> -> vector<16x16xf32>
    %c0_143 = arith.constant 0 : index
    %c15_144 = arith.constant 15 : index
    %c0_145 = arith.constant 0 : index
    %c0_146 = arith.constant 0 : index
    %143 = vector.load %arg5[%c0_143, %c15_144, %c0_145, %c0_146] : memref<1x21x16x16xf32, #tpu.memory_space<vmem>>, vector<1x1x16x16xf32>
    %144 = vector.shape_cast %143 : vector<1x1x16x16xf32> to vector<16x16xf32>
    %145 = vector.shape_cast %142 : vector<16x16xf32> to vector<1x1x16x16xf32>
    tpu.vector_store %arg5[%c0_143, %c15_144, %c0_145, %c0_146], %145 {strides = array<i32>} : memref<1x21x16x16xf32, #tpu.memory_space<vmem>>, vector<1x1x16x16xf32>,
    %c0_147 = arith.constant 0 : index
    %c16 = arith.constant 16 : index
    %c0_148 = arith.constant 0 : index
    %c0_149 = arith.constant 0 : index
    %146 = vector.load %arg2[%c0_147, %c16, %c0_148, %c0_149] : memref<1x21x2x2xf32, #tpu.memory_space<vmem>>, vector<1x1x2x2xf32>
    %147 = vector.shape_cast %146 : vector<1x1x2x2xf32> to vector<2x2xf32>
    %148 = arith.truncf %147 : vector<2x2xf32> to vector<2x2xbf16>
    %cst_150 = arith.constant dense<0.000000e+00> : vector<16x2xf32>
    %149 = tpu.matmul %0, %148, %cst_150 {dimension_numbers = #tpu.dot_dimension_numbers<[1], [0], [0], [1], [0, 0, 1, 1], [], []>} : vector<16x2xbf16>, vector<2x2xbf16>, vector<16x2xf32> -> vector<16x2xf32>
    %150 = arith.truncf %149 : vector<16x2xf32> to vector<16x2xbf16>
    %cst_151 = arith.constant dense<0.000000e+00> : vector<16x16xf32>
    %151 = tpu.matmul %150, %1, %cst_151 {dimension_numbers = #tpu.dot_dimension_numbers<[1], [0], [0], [1], [0, 0, 1, 1], [], []>} : vector<16x2xbf16>, vector<2x16xbf16>, vector<16x16xf32> -> vector<16x16xf32>
    %c0_152 = arith.constant 0 : index
    %c16_153 = arith.constant 16 : index
    %c0_154 = arith.constant 0 : index
    %c0_155 = arith.constant 0 : index
    %152 = vector.load %arg5[%c0_152, %c16_153, %c0_154, %c0_155] : memref<1x21x16x16xf32, #tpu.memory_space<vmem>>, vector<1x1x16x16xf32>
    %153 = vector.shape_cast %152 : vector<1x1x16x16xf32> to vector<16x16xf32>
    %154 = vector.shape_cast %151 : vector<16x16xf32> to vector<1x1x16x16xf32>
    tpu.vector_store %arg5[%c0_152, %c16_153, %c0_154, %c0_155], %154 {strides = array<i32>} : memref<1x21x16x16xf32, #tpu.memory_space<vmem>>, vector<1x1x16x16xf32>,
    %c0_156 = arith.constant 0 : index
    %c17 = arith.constant 17 : index
    %c0_157 = arith.constant 0 : index
    %c0_158 = arith.constant 0 : index
    %155 = vector.load %arg2[%c0_156, %c17, %c0_157, %c0_158] : memref<1x21x2x2xf32, #tpu.memory_space<vmem>>, vector<1x1x2x2xf32>
    %156 = vector.shape_cast %155 : vector<1x1x2x2xf32> to vector<2x2xf32>
    %157 = arith.truncf %156 : vector<2x2xf32> to vector<2x2xbf16>
    %cst_159 = arith.constant dense<0.000000e+00> : vector<16x2xf32>
    %158 = tpu.matmul %0, %157, %cst_159 {dimension_numbers = #tpu.dot_dimension_numbers<[1], [0], [0], [1], [0, 0, 1, 1], [], []>} : vector<16x2xbf16>, vector<2x2xbf16>, vector<16x2xf32> -> vector<16x2xf32>
    %159 = arith.truncf %158 : vector<16x2xf32> to vector<16x2xbf16>
    %cst_160 = arith.constant dense<0.000000e+00> : vector<16x16xf32>
    %160 = tpu.matmul %159, %1, %cst_160 {dimension_numbers = #tpu.dot_dimension_numbers<[1], [0], [0], [1], [0, 0, 1, 1], [], []>} : vector<16x2xbf16>, vector<2x16xbf16>, vector<16x16xf32> -> vector<16x16xf32>
    %c0_161 = arith.constant 0 : index
    %c17_162 = arith.constant 17 : index
    %c0_163 = arith.constant 0 : index
    %c0_164 = arith.constant 0 : index
    %161 = vector.load %arg5[%c0_161, %c17_162, %c0_163, %c0_164] : memref<1x21x16x16xf32, #tpu.memory_space<vmem>>, vector<1x1x16x16xf32>
    %162 = vector.shape_cast %161 : vector<1x1x16x16xf32> to vector<16x16xf32>
    %163 = vector.shape_cast %160 : vector<16x16xf32> to vector<1x1x16x16xf32>
    tpu.vector_store %arg5[%c0_161, %c17_162, %c0_163, %c0_164], %163 {strides = array<i32>} : memref<1x21x16x16xf32, #tpu.memory_space<vmem>>, vector<1x1x16x16xf32>,
    %c0_165 = arith.constant 0 : index
    %c18 = arith.constant 18 : index
    %c0_166 = arith.constant 0 : index
    %c0_167 = arith.constant 0 : index
    %164 = vector.load %arg2[%c0_165, %c18, %c0_166, %c0_167] : memref<1x21x2x2xf32, #tpu.memory_space<vmem>>, vector<1x1x2x2xf32>
    %165 = vector.shape_cast %164 : vector<1x1x2x2xf32> to vector<2x2xf32>
    %166 = arith.truncf %165 : vector<2x2xf32> to vector<2x2xbf16>
    %cst_168 = arith.constant dense<0.000000e+00> : vector<16x2xf32>
    %167 = tpu.matmul %0, %166, %cst_168 {dimension_numbers = #tpu.dot_dimension_numbers<[1], [0], [0], [1], [0, 0, 1, 1], [], []>} : vector<16x2xbf16>, vector<2x2xbf16>, vector<16x2xf32> -> vector<16x2xf32>
    %168 = arith.truncf %167 : vector<16x2xf32> to vector<16x2xbf16>
    %cst_169 = arith.constant dense<0.000000e+00> : vector<16x16xf32>
    %169 = tpu.matmul %168, %1, %cst_169 {dimension_numbers = #tpu.dot_dimension_numbers<[1], [0], [0], [1], [0, 0, 1, 1], [], []>} : vector<16x2xbf16>, vector<2x16xbf16>, vector<16x16xf32> -> vector<16x16xf32>
    %c0_170 = arith.constant 0 : index
    %c18_171 = arith.constant 18 : index
    %c0_172 = arith.constant 0 : index
    %c0_173 = arith.constant 0 : index
    %170 = vector.load %arg5[%c0_170, %c18_171, %c0_172, %c0_173] : memref<1x21x16x16xf32, #tpu.memory_space<vmem>>, vector<1x1x16x16xf32>
    %171 = vector.shape_cast %170 : vector<1x1x16x16xf32> to vector<16x16xf32>
    %172 = vector.shape_cast %169 : vector<16x16xf32> to vector<1x1x16x16xf32>
    tpu.vector_store %arg5[%c0_170, %c18_171, %c0_172, %c0_173], %172 {strides = array<i32>} : memref<1x21x16x16xf32, #tpu.memory_space<vmem>>, vector<1x1x16x16xf32>,
    %c0_174 = arith.constant 0 : index
    %c19 = arith.constant 19 : index
    %c0_175 = arith.constant 0 : index
    %c0_176 = arith.constant 0 : index
    %173 = vector.load %arg2[%c0_174, %c19, %c0_175, %c0_176] : memref<1x21x2x2xf32, #tpu.memory_space<vmem>>, vector<1x1x2x2xf32>
    %174 = vector.shape_cast %173 : vector<1x1x2x2xf32> to vector<2x2xf32>
    %175 = arith.truncf %174 : vector<2x2xf32> to vector<2x2xbf16>
    %cst_177 = arith.constant dense<0.000000e+00> : vector<16x2xf32>
    %176 = tpu.matmul %0, %175, %cst_177 {dimension_numbers = #tpu.dot_dimension_numbers<[1], [0], [0], [1], [0, 0, 1, 1], [], []>} : vector<16x2xbf16>, vector<2x2xbf16>, vector<16x2xf32> -> vector<16x2xf32>
    %177 = arith.truncf %176 : vector<16x2xf32> to vector<16x2xbf16>
    %cst_178 = arith.constant dense<0.000000e+00> : vector<16x16xf32>
    %178 = tpu.matmul %177, %1, %cst_178 {dimension_numbers = #tpu.dot_dimension_numbers<[1], [0], [0], [1], [0, 0, 1, 1], [], []>} : vector<16x2xbf16>, vector<2x16xbf16>, vector<16x16xf32> -> vector<16x16xf32>
    %c0_179 = arith.constant 0 : index
    %c19_180 = arith.constant 19 : index
    %c0_181 = arith.constant 0 : index
    %c0_182 = arith.constant 0 : index
    %179 = vector.load %arg5[%c0_179, %c19_180, %c0_181, %c0_182] : memref<1x21x16x16xf32, #tpu.memory_space<vmem>>, vector<1x1x16x16xf32>
    %180 = vector.shape_cast %179 : vector<1x1x16x16xf32> to vector<16x16xf32>
    %181 = vector.shape_cast %178 : vector<16x16xf32> to vector<1x1x16x16xf32>
    tpu.vector_store %arg5[%c0_179, %c19_180, %c0_181, %c0_182], %181 {strides = array<i32>} : memref<1x21x16x16xf32, #tpu.memory_space<vmem>>, vector<1x1x16x16xf32>,
    %c0_183 = arith.constant 0 : index
    %c20 = arith.constant 20 : index
    %c0_184 = arith.constant 0 : index
    %c0_185 = arith.constant 0 : index
    %182 = vector.load %arg2[%c0_183, %c20, %c0_184, %c0_185] : memref<1x21x2x2xf32, #tpu.memory_space<vmem>>, vector<1x1x2x2xf32>
    %183 = vector.shape_cast %182 : vector<1x1x2x2xf32> to vector<2x2xf32>
    %184 = arith.truncf %183 : vector<2x2xf32> to vector<2x2xbf16>
    %cst_186 = arith.constant dense<0.000000e+00> : vector<16x2xf32>
    %185 = tpu.matmul %0, %184, %cst_186 {dimension_numbers = #tpu.dot_dimension_numbers<[1], [0], [0], [1], [0, 0, 1, 1], [], []>} : vector<16x2xbf16>, vector<2x2xbf16>, vector<16x2xf32> -> vector<16x2xf32>
    %186 = arith.truncf %185 : vector<16x2xf32> to vector<16x2xbf16>
    %cst_187 = arith.constant dense<0.000000e+00> : vector<16x16xf32>
    %187 = tpu.matmul %186, %1, %cst_187 {dimension_numbers = #tpu.dot_dimension_numbers<[1], [0], [0], [1], [0, 0, 1, 1], [], []>} : vector<16x2xbf16>, vector<2x16xbf16>, vector<16x16xf32> -> vector<16x16xf32>
    %c0_188 = arith.constant 0 : index
    %c20_189 = arith.constant 20 : index
    %c0_190 = arith.constant 0 : index
    %c0_191 = arith.constant 0 : index
    %188 = vector.load %arg5[%c0_188, %c20_189, %c0_190, %c0_191] : memref<1x21x16x16xf32, #tpu.memory_space<vmem>>, vector<1x1x16x16xf32>
    %189 = vector.shape_cast %188 : vector<1x1x16x16xf32> to vector<16x16xf32>
    %190 = vector.shape_cast %187 : vector<16x16xf32> to vector<1x1x16x16xf32>
    tpu.vector_store %arg5[%c0_188, %c20_189, %c0_190, %c0_191], %190 {strides = array<i32>} : memref<1x21x16x16xf32, #tpu.memory_space<vmem>>, vector<1x1x16x16xf32>,
    return
  }
  func.func @transform_0(%arg0: i32, %arg1: i32) -> (i32, i32, i32, i32) {
    %c0_i32 = arith.constant 0 : i32
    %c0_i32_0 = arith.constant 0 : i32
    %c0_i32_1 = arith.constant 0 : i32
    %c0_i32_2 = arith.constant 0 : i32
    return %arg0, %c0_i32, %c0_i32_0, %c0_i32_1 : i32, i32, i32, i32
  }
  func.func @transform_1(%arg0: i32, %arg1: i32) -> (i32, i32) {
    %c0_i32 = arith.constant 0 : i32
    %c0_i32_0 = arith.constant 0 : i32
    return %arg1, %c0_i32 : i32, i32
  }
  func.func @transform_2(%arg0: i32, %arg1: i32) -> (i32, i32) {
    %c0_i32 = arith.constant 0 : i32
    %c0_i32_0 = arith.constant 0 : i32
    %c0_i32_1 = arith.constant 0 : i32
    return %c0_i32, %c0_i32_0 : i32, i32
  }
  func.func @transform_3(%arg0: i32, %arg1: i32) -> (i32, i32, i32, i32) {
    %c0_i32 = arith.constant 0 : i32
    %c0_i32_0 = arith.constant 0 : i32
    %c0_i32_1 = arith.constant 0 : i32
    return %arg0, %c0_i32, %arg1, %c0_i32_0 : i32, i32, i32, i32
  }
}

module attributes {stable_mosaic.version = 11 : i64} {
  func.func @_heads_kernel(%arg0: memref<4x128xf32, #tpu.memory_space<vmem>>, %arg1: memref<128x128xbf16, #tpu.memory_space<vmem>>, %arg2: memref<1x128xf32, #tpu.memory_space<vmem>>, %arg3: memref<128x128xbf16, #tpu.memory_space<vmem>>, %arg4: memref<1x128xf32, #tpu.memory_space<vmem>>, %arg5: memref<128x64xbf16, #tpu.memory_space<vmem>>, %arg6: memref<1x64xf32, #tpu.memory_space<vmem>>, %arg7: memref<64x128xbf16, #tpu.memory_space<vmem>>, %arg8: memref<1x128xf32, #tpu.memory_space<vmem>>, %arg9: memref<4x128xf32, #tpu.memory_space<vmem>>, %arg10: memref<4x128xf32, #tpu.memory_space<vmem>>) attributes {dimension_semantics = [], scalar_prefetch = 0 : i64, scratch_operands = 0 : i64, tpu.core_type = #tpu.core_type<tc>} {
    %c0 = arith.constant 0 : index
    %c0_0 = arith.constant 0 : index
    %0 = vector.load %arg0[%c0, %c0_0] : memref<4x128xf32, #tpu.memory_space<vmem>>, vector<4x128xf32>
    %1 = arith.truncf %0 : vector<4x128xf32> to vector<4x128xbf16>
    %c0_1 = arith.constant 0 : index
    %c0_2 = arith.constant 0 : index
    %2 = vector.load %arg1[%c0_1, %c0_2] : memref<128x128xbf16, #tpu.memory_space<vmem>>, vector<128x128xbf16>
    %cst = arith.constant dense<0.000000e+00> : vector<4x128xf32>
    %3 = tpu.matmul %1, %2, %cst {dimension_numbers = #tpu.dot_dimension_numbers<[1], [0], [0], [1], [0, 0, 1, 1], [], []>} : vector<4x128xbf16>, vector<128x128xbf16>, vector<4x128xf32> -> vector<4x128xf32>
    %c0_3 = arith.constant 0 : index
    %c0_4 = arith.constant 0 : index
    %4 = vector.load %arg2[%c0_3, %c0_4] : memref<1x128xf32, #tpu.memory_space<vmem>>, vector<1x128xf32>
    %5 = vector.broadcast %4 : vector<1x128xf32> to vector<4x128xf32>
    %6 = arith.addf %3, %5 : vector<4x128xf32>
    %cst_5 = arith.constant 0.000000e+00 : f32
    %7 = vector.broadcast %cst_5 : f32 to vector<4x128xf32>
    %8 = arith.maximumf %6, %7 : vector<4x128xf32>
    %9 = arith.truncf %8 : vector<4x128xf32> to vector<4x128xbf16>
    %c0_6 = arith.constant 0 : index
    %c0_7 = arith.constant 0 : index
    %10 = vector.load %arg3[%c0_6, %c0_7] : memref<128x128xbf16, #tpu.memory_space<vmem>>, vector<128x128xbf16>
    %cst_8 = arith.constant dense<0.000000e+00> : vector<4x128xf32>
    %11 = tpu.matmul %9, %10, %cst_8 {dimension_numbers = #tpu.dot_dimension_numbers<[1], [0], [0], [1], [0, 0, 1, 1], [], []>} : vector<4x128xbf16>, vector<128x128xbf16>, vector<4x128xf32> -> vector<4x128xf32>
    %c0_9 = arith.constant 0 : index
    %c0_10 = arith.constant 0 : index
    %12 = vector.load %arg4[%c0_9, %c0_10] : memref<1x128xf32, #tpu.memory_space<vmem>>, vector<1x128xf32>
    %13 = vector.broadcast %12 : vector<1x128xf32> to vector<4x128xf32>
    %14 = arith.addf %11, %13 : vector<4x128xf32>
    %15 = arith.truncf %14 : vector<4x128xf32> to vector<4x128xbf16>
    %c0_11 = arith.constant 0 : index
    %c0_12 = arith.constant 0 : index
    %16 = vector.load %arg5[%c0_11, %c0_12] : memref<128x64xbf16, #tpu.memory_space<vmem>>, vector<128x64xbf16>
    %cst_13 = arith.constant dense<0.000000e+00> : vector<4x64xf32>
    %17 = tpu.matmul %15, %16, %cst_13 {dimension_numbers = #tpu.dot_dimension_numbers<[1], [0], [0], [1], [0, 0, 1, 1], [], []>} : vector<4x128xbf16>, vector<128x64xbf16>, vector<4x64xf32> -> vector<4x64xf32>
    %c0_14 = arith.constant 0 : index
    %c0_15 = arith.constant 0 : index
    %18 = vector.load %arg6[%c0_14, %c0_15] : memref<1x64xf32, #tpu.memory_space<vmem>>, vector<1x64xf32>
    %19 = vector.broadcast %18 : vector<1x64xf32> to vector<4x64xf32>
    %20 = arith.addf %17, %19 : vector<4x64xf32>
    %cst_16 = arith.constant 0.000000e+00 : f32
    %21 = vector.broadcast %cst_16 : f32 to vector<4x64xf32>
    %22 = arith.maximumf %20, %21 : vector<4x64xf32>
    %23 = arith.truncf %22 : vector<4x64xf32> to vector<4x64xbf16>
    %c0_17 = arith.constant 0 : index
    %c0_18 = arith.constant 0 : index
    %24 = vector.load %arg7[%c0_17, %c0_18] : memref<64x128xbf16, #tpu.memory_space<vmem>>, vector<64x128xbf16>
    %cst_19 = arith.constant dense<0.000000e+00> : vector<4x128xf32>
    %25 = tpu.matmul %23, %24, %cst_19 {dimension_numbers = #tpu.dot_dimension_numbers<[1], [0], [0], [1], [0, 0, 1, 1], [], []>} : vector<4x64xbf16>, vector<64x128xbf16>, vector<4x128xf32> -> vector<4x128xf32>
    %c0_20 = arith.constant 0 : index
    %c0_21 = arith.constant 0 : index
    %26 = vector.load %arg8[%c0_20, %c0_21] : memref<1x128xf32, #tpu.memory_space<vmem>>, vector<1x128xf32>
    %27 = vector.broadcast %26 : vector<1x128xf32> to vector<4x128xf32>
    %28 = arith.addf %25, %27 : vector<4x128xf32>
    %29 = arith.mulf %14, %14 : vector<4x128xf32>
    %cst_22 = arith.constant dense<0.000000e+00> : vector<4xf32>
    %30 = vector.multi_reduction <add>, %29, %cst_22 [1] : vector<4x128xf32> to vector<4xf32>
    %31 = vector.shape_cast %30 : vector<4xf32> to vector<4x1xf32>
    %32 = math.sqrt %31 : vector<4x1xf32>
    %33 = arith.mulf %28, %28 : vector<4x128xf32>
    %cst_23 = arith.constant dense<0.000000e+00> : vector<4xf32>
    %34 = vector.multi_reduction <add>, %33, %cst_23 [1] : vector<4x128xf32> to vector<4xf32>
    %35 = vector.shape_cast %34 : vector<4xf32> to vector<4x1xf32>
    %36 = math.sqrt %35 : vector<4x1xf32>
    %cst_24 = arith.constant 9.99999996E-13 : f32
    %37 = vector.broadcast %cst_24 : f32 to vector<4x1xf32>
    %38 = arith.maximumf %32, %37 : vector<4x1xf32>
    %39 = vector.broadcast %38 : vector<4x1xf32> to vector<4x128xf32>
    %40 = arith.divf %14, %39 : vector<4x128xf32>
    %c0_25 = arith.constant 0 : index
    %c0_26 = arith.constant 0 : index
    %41 = vector.load %arg9[%c0_25, %c0_26] : memref<4x128xf32, #tpu.memory_space<vmem>>, vector<4x128xf32>
    tpu.vector_store %arg9[%c0_25, %c0_26], %40 {strides = array<i32>} : memref<4x128xf32, #tpu.memory_space<vmem>>, vector<4x128xf32>,
    %cst_27 = arith.constant 9.99999996E-13 : f32
    %42 = vector.broadcast %cst_27 : f32 to vector<4x1xf32>
    %43 = arith.maximumf %36, %42 : vector<4x1xf32>
    %44 = vector.broadcast %43 : vector<4x1xf32> to vector<4x128xf32>
    %45 = arith.divf %28, %44 : vector<4x128xf32>
    %c0_28 = arith.constant 0 : index
    %c0_29 = arith.constant 0 : index
    %46 = vector.load %arg10[%c0_28, %c0_29] : memref<4x128xf32, #tpu.memory_space<vmem>>, vector<4x128xf32>
    tpu.vector_store %arg10[%c0_28, %c0_29], %45 {strides = array<i32>} : memref<4x128xf32, #tpu.memory_space<vmem>>, vector<4x128xf32>,
    return
  }
}

module attributes {stable_mosaic.version = 11 : i64} {
  func.func @_gap_only_kernel(%arg0: i32, %arg1: i32, %arg2: memref<1x4x128xbf16, #tpu.memory_space<vmem>>, %arg3: memref<128x128xbf16, #tpu.memory_space<vmem>>, %arg4: memref<1x128xf32, #tpu.memory_space<vmem>>, %arg5: memref<1x1x128xf32, #tpu.memory_space<vmem>>, %arg6: memref<1x128xf32, #tpu.memory_space<vmem>>) attributes {dimension_semantics = [#tpu.dimension_semantics<parallel>, #tpu.dimension_semantics<arbitrary>], iteration_bounds = array<i64: 2, 1>, scalar_prefetch = 0 : i64, scratch_operands = 1 : i64, tpu.core_type = #tpu.core_type<tc>, window_params = [{transform_indices = @transform_0, window_bounds = array<i64: 1, 4, 128>}, {pipeline_mode = #tpu.pipeline_mode<synchronous>, transform_indices = @transform_1, window_bounds = array<i64: 128, 128>}, {pipeline_mode = #tpu.pipeline_mode<synchronous>, transform_indices = @transform_2, window_bounds = array<i64: 1, 128>}, {transform_indices = @transform_3, window_bounds = array<i64: 1, 1, 128>}]} {
    %c0_i32 = arith.constant 0 : i32
    %0 = arith.cmpi eq, %arg1, %c0_i32 : i32
    %1 = arith.extui %0 : i1 to i32
    %c0_i32_0 = arith.constant 0 : i32
    %2 = arith.cmpi ne, %1, %c0_i32_0 : i32
    scf.if %2 {
      %cst_15 = arith.constant 0.000000e+00 : f32
      %20 = vector.broadcast %cst_15 : f32 to vector<1x128xf32>
      %c0_16 = arith.constant 0 : index
      %c0_17 = arith.constant 0 : index
      %21 = vector.load %arg6[%c0_16, %c0_17] : memref<1x128xf32, #tpu.memory_space<vmem>>, vector<1x128xf32>
      tpu.vector_store %arg6[%c0_16, %c0_17], %20 {strides = array<i32>} : memref<1x128xf32, #tpu.memory_space<vmem>>, vector<1x128xf32>,
    } else {
    }
    %c0 = arith.constant 0 : index
    %c0_1 = arith.constant 0 : index
    %c0_2 = arith.constant 0 : index
    %3 = vector.load %arg2[%c0, %c0_1, %c0_2] : memref<1x4x128xbf16, #tpu.memory_space<vmem>>, vector<1x4x128xbf16>
    %4 = vector.shape_cast %3 : vector<1x4x128xbf16> to vector<4x128xbf16>
    %c0_3 = arith.constant 0 : index
    %c0_4 = arith.constant 0 : index
    %5 = vector.load %arg3[%c0_3, %c0_4] : memref<128x128xbf16, #tpu.memory_space<vmem>>, vector<128x128xbf16>
    %cst = arith.constant dense<0.000000e+00> : vector<4x128xf32>
    %6 = tpu.matmul %4, %5, %cst {dimension_numbers = #tpu.dot_dimension_numbers<[1], [0], [0], [1], [0, 0, 1, 1], [], []>} : vector<4x128xbf16>, vector<128x128xbf16>, vector<4x128xf32> -> vector<4x128xf32>
    %c0_5 = arith.constant 0 : index
    %c0_6 = arith.constant 0 : index
    %7 = vector.load %arg4[%c0_5, %c0_6] : memref<1x128xf32, #tpu.memory_space<vmem>>, vector<1x128xf32>
    %8 = vector.broadcast %7 : vector<1x128xf32> to vector<4x128xf32>
    %9 = arith.addf %6, %8 : vector<4x128xf32>
    %cst_7 = arith.constant 0.000000e+00 : f32
    %10 = vector.broadcast %cst_7 : f32 to vector<4x128xf32>
    %11 = arith.maximumf %9, %10 : vector<4x128xf32>
    %c0_8 = arith.constant 0 : index
    %c0_9 = arith.constant 0 : index
    %12 = vector.load %arg6[%c0_8, %c0_9] : memref<1x128xf32, #tpu.memory_space<vmem>>, vector<1x128xf32>
    %cst_10 = arith.constant dense<0.000000e+00> : vector<128xf32>
    %13 = vector.multi_reduction <add>, %11, %cst_10 [0] : vector<4x128xf32> to vector<128xf32>
    %14 = vector.shape_cast %13 : vector<128xf32> to vector<1x128xf32>
    %15 = arith.addf %12, %14 : vector<1x128xf32>
    %c0_11 = arith.constant 0 : index
    %c0_12 = arith.constant 0 : index
    %16 = vector.load %arg6[%c0_11, %c0_12] : memref<1x128xf32, #tpu.memory_space<vmem>>, vector<1x128xf32>
    tpu.vector_store %arg6[%c0_11, %c0_12], %15 {strides = array<i32>} : memref<1x128xf32, #tpu.memory_space<vmem>>, vector<1x128xf32>,
    %c0_i32_13 = arith.constant 0 : i32
    %17 = arith.cmpi eq, %arg1, %c0_i32_13 : i32
    %18 = arith.extui %17 : i1 to i32
    %c0_i32_14 = arith.constant 0 : i32
    %19 = arith.cmpi ne, %18, %c0_i32_14 : i32
    scf.if %19 {
      %c0_15 = arith.constant 0 : index
      %c0_16 = arith.constant 0 : index
      %20 = vector.load %arg6[%c0_15, %c0_16] : memref<1x128xf32, #tpu.memory_space<vmem>>, vector<1x128xf32>
      %cst_17 = arith.constant 2.500000e-01 : f32
      %21 = vector.broadcast %cst_17 : f32 to vector<1x128xf32>
      %22 = arith.mulf %20, %21 : vector<1x128xf32>
      %c0_18 = arith.constant 0 : index
      %c0_19 = arith.constant 0 : index
      %c0_20 = arith.constant 0 : index
      %23 = vector.load %arg5[%c0_18, %c0_19, %c0_20] : memref<1x1x128xf32, #tpu.memory_space<vmem>>, vector<1x1x128xf32>
      %24 = vector.shape_cast %23 : vector<1x1x128xf32> to vector<1x128xf32>
      %25 = vector.shape_cast %22 : vector<1x128xf32> to vector<1x1x128xf32>
      tpu.vector_store %arg5[%c0_18, %c0_19, %c0_20], %25 {strides = array<i32>} : memref<1x1x128xf32, #tpu.memory_space<vmem>>, vector<1x1x128xf32>,
    } else {
    }
    return
  }
  func.func @transform_0(%arg0: i32, %arg1: i32) -> (i32, i32, i32) {
    %c0_i32 = arith.constant 0 : i32
    %c0_i32_0 = arith.constant 0 : i32
    return %arg0, %arg1, %c0_i32 : i32, i32, i32
  }
  func.func @transform_1(%arg0: i32, %arg1: i32) -> (i32, i32) {
    %c0_i32 = arith.constant 0 : i32
    %c0_i32_0 = arith.constant 0 : i32
    %c0_i32_1 = arith.constant 0 : i32
    return %c0_i32, %c0_i32_0 : i32, i32
  }
  func.func @transform_2(%arg0: i32, %arg1: i32) -> (i32, i32) {
    %c0_i32 = arith.constant 0 : i32
    %c0_i32_0 = arith.constant 0 : i32
    %c0_i32_1 = arith.constant 0 : i32
    return %c0_i32, %c0_i32_0 : i32, i32
  }
  func.func @transform_3(%arg0: i32, %arg1: i32) -> (i32, i32, i32) {
    %c0_i32 = arith.constant 0 : i32
    %c0_i32_0 = arith.constant 0 : i32
    %c0_i32_1 = arith.constant 0 : i32
    return %arg0, %c0_i32, %c0_i32_0 : i32, i32, i32
  }
}

</mosaic_0001>

<llo_original>
// kernel: segmentation_simsiam_forward.12
$region0: #{segmentation_simsiam_forward.12}
  #allocation0 [shape = 'u32[]', space=smem, size = 0x4, offset = 0x4, fixed_abs, tag = 'smem constant byte address 0x4 - core index']
  #allocation1 [shape = 'u32[144,128]{1,0:T(1,128)}', space=vmem, size = 0x12000, scoped, tag = 'internal scratch']
  %s0 = inlined_call_operand.vmem [shape: bf16[16,8,32], index: 0, kind: input, shape index: {}]
  %s1 = inlined_call_operand.vmem [shape: bf16[32,64], index: 1, kind: input, shape index: {}]
  %s2 = inlined_call_operand.vmem [shape: f32[1,64], index: 2, kind: input, shape index: {}]
  %s3 = inlined_call_operand.vmem [shape: bf16[8,4,64], index: 3, kind: output, shape index: {}]
  %s4 = sld [smem:[#allocation0]]
  $region45: #{segmentation_simsiam_forward.12} parent=0
    _
  %s6 = ssub.s32 1, %s4
  %s7 = scalar_select 0, %s6, %s4
  loop: start=0, step=1, limit=4
  $region2: #{segmentation_simsiam_forward.12} parent=0 // loop_pre_header
    _
  $region3: #{segmentation_simsiam_forward.12} parent=0 // loop_header
    %s9 = sphi 0, %s13
    %p10 = scmp.ge.s32.totalorder %s9, 4
    %s19 = sphi 0, %s21
    %s22 = sphi 0, %s19
    %s23 = sphi 0, %s22
    %s39 = sphi 0, %s23
    %s43 = sphi 0, %s43
    %s45 = sphi 0, %s43
    %s46 = sphi 0, %s45
    %s60 = sphi 0, %s46
    %s64 = sphi 0, %s64
    %s66 = sphi 0, %s64
    %s67 = sphi 0, %s66
    %s81 = sphi 0, %s67
    %s87 = sphi 0, %s89
    %s90 = sphi 0, %s87
    %s91 = sphi 0, %s90
    %s107 = sphi 0, %s91
  $region4: #{segmentation_simsiam_forward.12} parent=0 // loop_header_branch
    %12 = sbr.rel (%p10) target = $region8
  $region5: #{segmentation_simsiam_forward.12} parent=0 // loop_body
    %s14 = ssub.s32 %s9, 1
    %s15 = ssub.s32 %s9, 2
    %s16 = sadd.s32 %s9, 1
    %s17 = ssub.s32 %s9, %s16
    %p18 = scmp.eq.s32.totalorder %s17, 0
    %s20 = sadd.s32 %s19, 1
    %s21 = scalar_select %p18, %s19, %s20
    %p24 = pneg %p18
    %p25 = scmp.eq.s32.totalorder %s9, 1
    %p26 = por %p24, %p25
    %p27 = scmp.ne.s32.totalorder %s19, %s22
    %p28 = scmp.eq.s32.totalorder %s9, 0
    %p29 = por %p27, %p28
    %p30 = scmp.ne.s32.totalorder %s19, %s22
    %p31 = scmp.eq.s32.totalorder %s14, 1
    %p32 = por %p30, %p31
    %p33 = scmp.ne.s32.totalorder %s22, %s23
    %p34 = scmp.eq.s32.totalorder %s14, 0
    %p35 = por %p33, %p34
    %p36 = scmp.ne.s32.totalorder %s22, %s23
    %p37 = scmp.eq.s32.totalorder %s15, 1
    %p38 = por %p36, %p37
    %p40 = scmp.ne.s32.totalorder %s23, %s39
    %p41 = scmp.eq.s32.totalorder %s15, 0
    %p42 = por %p40, %p41
    %s44 = sadd.s32 %s43, 1
    %p47 = scmp.eq.s32.totalorder %s9, 1
    %p48 = scmp.ne.s32.totalorder %s43, %s45
    %p49 = scmp.eq.s32.totalorder %s9, 0
    %p50 = por %p48, %p49
    %p51 = scmp.ne.s32.totalorder %s43, %s45
    %p52 = scmp.eq.s32.totalorder %s14, 1
    %p53 = por %p51, %p52
    %p54 = scmp.ne.s32.totalorder %s45, %s46
    %p55 = scmp.eq.s32.totalorder %s14, 0
    %p56 = por %p54, %p55
    %p57 = scmp.ne.s32.totalorder %s45, %s46
    %p58 = scmp.eq.s32.totalorder %s15, 1
    %p59 = por %p57, %p58
    %p61 = scmp.ne.s32.totalorder %s46, %s60
    %p62 = scmp.eq.s32.totalorder %s15, 0
    %p63 = por %p61, %p62
    %s65 = sadd.s32 %s64, 1
    %p68 = scmp.eq.s32.totalorder %s9, 1
    %p69 = scmp.ne.s32.totalorder %s64, %s66
    %p70 = scmp.eq.s32.totalorder %s9, 0
    %p71 = por %p69, %p70
    %p72 = scmp.ne.s32.totalorder %s64, %s66
    %p73 = scmp.eq.s32.totalorder %s14, 1
    %p74 = por %p72, %p73
    %p75 = scmp.ne.s32.totalorder %s66, %s67
    %p76 = scmp.eq.s32.totalorder %s14, 0
    %p77 = por %p75, %p76
    %p78 = scmp.ne.s32.totalorder %s66, %s67
    %p79 = scmp.eq.s32.totalorder %s15, 1
    %p80 = por %p78, %p79
    %p82 = scmp.ne.s32.totalorder %s67, %s81
    %p83 = scmp.eq.s32.totalorder %s15, 0
    %p84 = por %p82, %p83
    %s85 = ssub.s32 %s9, %s16
    %p86 = scmp.eq.s32.totalorder %s85, 0
    %s88 = sadd.s32 %s87, 1
    %s89 = scalar_select %p86, %s87, %s88
    %p92 = pneg %p86
    %p93 = scmp.eq.s32.totalorder %s9, 1
    %p94 = por %p92, %p93
    %p95 = scmp.ne.s32.totalorder %s87, %s90
    %p96 = scmp.eq.s32.totalorder %s9, 0
    %p97 = por %p95, %p96
    %p98 = scmp.ne.s32.totalorder %s87, %s90
    %p99 = scmp.eq.s32.totalorder %s14, 1
    %p100 = por %p98, %p99
    %p101 = scmp.ne.s32.totalorder %s90, %s91
    %p102 = scmp.eq.s32.totalorder %s14, 0
    %p103 = por %p101, %p102
    %p104 = scmp.ne.s32.totalorder %s90, %s91
    %p105 = scmp.eq.s32.totalorder %s15, 1
    %p106 = por %p104, %p105
    %p108 = scmp.ne.s32.totalorder %s91, %s107
    %p109 = scmp.eq.s32.totalorder %s15, 0
    %p110 = por %p108, %p109
    %p111 = scmp.le.s32.totalorder 1, %s9
    %p112 = scmp.lt.s32.totalorder %s9, 3
    %p113 = pnand %p111, %p112
    %p114 = pneg %p113
    // Predicated region
    $region9: #{segmentation_simsiam_forward.12} parent=5 // pred_check
      _
    $region10: #{segmentation_simsiam_forward.12} parent=5 // pred_check_branch
      %116 = sbr.rel (%p113) target = $region12
    $region11: #{segmentation_simsiam_forward.12} parent=5 // pred_region
      %s117 = ssub.s32 %s9, 1
      // Predicated region
      $region13: #{segmentation_simsiam_forward.12} parent=11 // pred_check
        %p118 = pneg %p56
      $region14: #{segmentation_simsiam_forward.12} parent=11 // pred_check_branch
        %120 = sbr.rel (%p118) target = $region16
      $region15: #{segmentation_simsiam_forward.12} parent=11 // pred_region
        _
      $region16: #{segmentation_simsiam_forward.12} parent=11 // pred_fallthru
        _
      // Predicated region
      $region17: #{segmentation_simsiam_forward.12} parent=11 // pred_check
        %p121 = pneg %p77
      $region18: #{segmentation_simsiam_forward.12} parent=11 // pred_check_branch
        %123 = sbr.rel (%p121) target = $region20
      $region19: #{segmentation_simsiam_forward.12} parent=11 // pred_region
        _
      $region20: #{segmentation_simsiam_forward.12} parent=11 // pred_fallthru
        _
    $region12: #{segmentation_simsiam_forward.12} parent=5 // pred_fallthru
      _
    %p124 = scmp.lt.s32.totalorder %s9, 2
    // Predicated region
    $region21: #{segmentation_simsiam_forward.12} parent=5 // pred_check
      %p125 = pneg %p124
    $region22: #{segmentation_simsiam_forward.12} parent=5 // pred_check_branch
      %127 = sbr.rel (%p125) target = $region24
    $region23: #{segmentation_simsiam_forward.12} parent=5 // pred_region
      // Predicated region
      $region25: #{segmentation_simsiam_forward.12} parent=23 // pred_check
        %p128 = pneg %p29
      $region26: #{segmentation_simsiam_forward.12} parent=23 // pred_check_branch
        %130 = sbr.rel (%p128) target = $region28
      $region27: #{segmentation_simsiam_forward.12} parent=23 // pred_region
        %s131 = smul.u32 8, %s9
        %p132 = scmp.lt.s32.totalorder %s131, 15
        %s133 = scalar_select %p132, %s131, 15
        %s134 = smul.addr %s133, 4
        %s135 = scalar_lea.vmem %s0, %s134
        %s136 = smul.u32 8, %s9
      $region28: #{segmentation_simsiam_forward.12} parent=23 // pred_fallthru
        _
    $region24: #{segmentation_simsiam_forward.12} parent=5 // pred_fallthru
      _
    %p137 = scmp.le.s32.totalorder 1, %s9
    %p138 = scmp.lt.s32.totalorder %s9, 3
    %p139 = pnand %p137, %p138
    %p140 = pneg %p139
    // Predicated region
    $region29: #{segmentation_simsiam_forward.12} parent=5 // pred_check
      _
    $region30: #{segmentation_simsiam_forward.12} parent=5 // pred_check_branch
      %142 = sbr.rel (%p139) target = $region32
    $region31: #{segmentation_simsiam_forward.12} parent=5 // pred_region
      %s143 = ssub.s32 %s9, 1
      %s144 = smul.u32 8, %s14
      %p145 = scmp.lt.s32.totalorder %s144, 15
      %s146 = scalar_select %p145, %s144, 15
      %s147 = smul.addr %s146, 4
      %s148 = scalar_lea.vmem %s0, %s147
      %p149 = pneg %p35
      %p150 = pneg %p32
      %p151 = pneg %p56
      %p152 = pneg %p53
      %p153 = pneg %p77
      %p154 = pneg %p74
      %p155 = pneg %p103
      %p156 = pneg %p100
      %s157 = smul.u32 4, %s14
      %p158 = scmp.lt.s32.totalorder %s157, 7
      %s159 = scalar_select %p158, %s157, 7
      %s160 = smul.addr %s159, 2
      %s161 = scalar_lea.vmem %s3, %s160
      %s162 = smul.u32 8, %s14
      %p163 = scmp.lt.s32.totalorder %s162, 15
      %s164 = scalar_select %p163, %s162, 15
      %s165 = smul.addr %s164, 4
      %s166 = scalar_lea.vmem %s0, %s165
      %s167 = smul.u32 8, %s14
      %s168 = smul.u32 4, %s14
      %p169 = scmp.lt.s32.totalorder %s168, 7
      %s170 = scalar_select %p169, %s168, 7
      %s171 = smul.addr %s170, 2
      %s172 = scalar_lea.vmem %s3, %s171
      %s173 = smul.u32 4, %s14
      %v175 = vld [vmem:[%s166] sm:$0xf]
      %v176 = vld [vmem:[%s166 + $0x4] sm:$0xf]
      %v177 = vld [vmem:[%s166 + $0x8] sm:$0xf]
      %v178 = vld [vmem:[%s166 + $0xc] sm:$0xf]
      %v179 = vld [vmem:[%s166 + $0x10] sm:$0xf]
      %v180 = vld [vmem:[%s166 + $0x14] sm:$0xf]
      %v181 = vld [vmem:[%s166 + $0x18] sm:$0xf]
      %v182 = vld [vmem:[%s166 + $0x1c] sm:$0xf]
      %v183 = vunpack.c.l.bf16 %v175
      %v184 = vunpack.c.l.bf16 %v176
      %v185 = vunpack.c.l.bf16 %v177
      %v186 = vunpack.c.l.bf16 %v178
      %v187 = vunpack.c.l.bf16 %v179
      %v188 = vunpack.c.l.bf16 %v180
      %v189 = vunpack.c.l.bf16 %v181
      %v190 = vunpack.c.l.bf16 %v182
      %vm191 = vcmask 261120
      %v192 = vsel %vm191, %v183, 0.0
      %v193 = vsel %vm191, %v184, 0.0
      %v194 = vadd.f32 %v192, %v193
      %v195 = vsel %vm191, %v185, 0.0
      %v196 = vsel %vm191, %v186, 0.0
      %v197 = vadd.f32 %v195, %v196
      %v198 = vsel %vm191, %v187, 0.0
      %v199 = vsel %vm191, %v188, 0.0
      %v200 = vadd.f32 %v198, %v199
      %v201 = vsel %vm191, %v189, 0.0
      %v202 = vsel %vm191, %v190, 0.0
      %v203 = vadd.f32 %v201, %v202
      %v208 = vcombine.high %v194, %v194
      %v210 = vunpack.c.l.s4 1983009808
      %v211 = vunpack.c.0.s8 %v210
      %v212 = vlaneseq
      %v213 = vshrl.u32 %v212, 7
      %v214 = vsub.s32 %v211, %v213
      %v215 = vrot.slane %v194, %v214
      %v217 = vunpack.c.l.s4 1983009808
      %v218 = vunpack.c.0.s8 %v217
      %v219 = vlaneseq
      %v220 = vshrl.u32 %v219, 7
      %v221 = vsub.s32 %v218, %v220
      %v222 = vrot.slane %v208, %v221
      %v223 = vcombine.high %v215, %v215
      %v224 = vcombine.high %v222, %v222
      %v225 = vcombine.high %v197, %v197
      %v227 = vunpack.c.l.s4 1983009808
      %v228 = vunpack.c.0.s8 %v227
      %v229 = vlaneseq
      %v230 = vshrl.u32 %v229, 7
      %v231 = vsub.s32 %v228, %v230
      %v232 = vrot.slane %v197, %v231
      %v234 = vunpack.c.l.s4 1983009808
      %v235 = vunpack.c.0.s8 %v234
      %v236 = vlaneseq
      %v237 = vshrl.u32 %v236, 7
      %v238 = vsub.s32 %v235, %v237
      %v239 = vrot.slane %v225, %v238
      %v240 = vcombine.high %v232, %v232
      %v241 = vcombine.high %v239, %v239
      %v242 = vcombine.high %v200, %v200
      %v244 = vunpack.c.l.s4 1983009808
      %v245 = vunpack.c.0.s8 %v244
      %v246 = vlaneseq
      %v247 = vshrl.u32 %v246, 7
      %v248 = vsub.s32 %v245, %v247
      %v249 = vrot.slane %v200, %v248
      %v251 = vunpack.c.l.s4 1983009808
      %v252 = vunpack.c.0.s8 %v251
      %v253 = vlaneseq
      %v254 = vshrl.u32 %v253, 7
      %v255 = vsub.s32 %v252, %v254
      %v256 = vrot.slane %v242, %v255
      %v257 = vcombine.high %v249, %v249
      %v258 = vcombine.high %v256, %v256
      %v259 = vcombine.high %v203, %v203
      %v261 = vunpack.c.l.s4 1983009808
      %v262 = vunpack.c.0.s8 %v261
      %v263 = vlaneseq
      %v264 = vshrl.u32 %v263, 7
      %v265 = vsub.s32 %v262, %v264
      %v266 = vrot.slane %v203, %v265
      %v268 = vunpack.c.l.s4 1983009808
      %v269 = vunpack.c.0.s8 %v268
      %v270 = vlaneseq
      %v271 = vshrl.u32 %v270, 7
      %v272 = vsub.s32 %v269, %v271
      %v273 = vrot.slane %v259, %v272
      %v274 = vcombine.high %v266, %v266
      %v275 = vcombine.high %v273, %v273
      %vm292 = vcmask 254976
      %v293 = vsel %vm292, %v215, 0.0
      %v294 = vrot.slane %v293, 4
      %v295 = vadd.f32 %v293, %v294
      %v296 = vrot.slane %v295, 2
      %v297 = vadd.f32 %v295, %v296
      %v298 = vrot.slane %v297, 1
      %v299 = vadd.f32 %v297, %v298
      %v300 = vsel %vm292, %v223, 0.0
      %v301 = vrot.slane %v300, 4
      %v302 = vadd.f32 %v300, %v301
      %v303 = vrot.slane %v302, 2
      %v304 = vadd.f32 %v302, %v303
      %v305 = vrot.slane %v304, 1
      %v306 = vadd.f32 %v304, %v305
      %v307 = vsel %vm292, %v222, 0.0
      %v308 = vrot.slane %v307, 4
      %v309 = vadd.f32 %v307, %v308
      %v310 = vrot.slane %v309, 2
      %v311 = vadd.f32 %v309, %v310
      %v312 = vrot.slane %v311, 1
      %v313 = vadd.f32 %v311, %v312
      %v314 = vsel %vm292, %v224, 0.0
      %v315 = vrot.slane %v314, 4
      %v316 = vadd.f32 %v314, %v315
      %v317 = vrot.slane %v316, 2
      %v318 = vadd.f32 %v316, %v317
      %v319 = vrot.slane %v318, 1
      %v320 = vadd.f32 %v318, %v319
      %v321 = vsel %vm292, %v232, 0.0
      %v322 = vrot.slane %v321, 4
      %v323 = vadd.f32 %v321, %v322
      %v324 = vrot.slane %v323, 2
      %v325 = vadd.f32 %v323, %v324
      %v326 = vrot.slane %v325, 1
      %v327 = vadd.f32 %v325, %v326
      %v328 = vsel %vm292, %v240, 0.0
      %v329 = vrot.slane %v328, 4
      %v330 = vadd.f32 %v328, %v329
      %v331 = vrot.slane %v330, 2
      %v332 = vadd.f32 %v330, %v331
      %v333 = vrot.slane %v332, 1
      %v334 = vadd.f32 %v332, %v333
      %v335 = vsel %vm292, %v239, 0.0
      %v336 = vrot.slane %v335, 4
      %v337 = vadd.f32 %v335, %v336
      %v338 = vrot.slane %v337, 2
      %v339 = vadd.f32 %v337, %v338
      %v340 = vrot.slane %v339, 1
      %v341 = vadd.f32 %v339, %v340
      %v342 = vsel %vm292, %v241, 0.0
      %v343 = vrot.slane %v342, 4
      %v344 = vadd.f32 %v342, %v343
      %v345 = vrot.slane %v344, 2
      %v346 = vadd.f32 %v344, %v345
      %v347 = vrot.slane %v346, 1
      %v348 = vadd.f32 %v346, %v347
      %v349 = vsel %vm292, %v249, 0.0
      %v350 = vrot.slane %v349, 4
      %v351 = vadd.f32 %v349, %v350
      %v352 = vrot.slane %v351, 2
      %v353 = vadd.f32 %v351, %v352
      %v354 = vrot.slane %v353, 1
      %v355 = vadd.f32 %v353, %v354
      %v356 = vsel %vm292, %v257, 0.0
      %v357 = vrot.slane %v356, 4
      %v358 = vadd.f32 %v356, %v357
      %v359 = vrot.slane %v358, 2
      %v360 = vadd.f32 %v358, %v359
      %v361 = vrot.slane %v360, 1
      %v362 = vadd.f32 %v360, %v361
      %v363 = vsel %vm292, %v256, 0.0
      %v364 = vrot.slane %v363, 4
      %v365 = vadd.f32 %v363, %v364
      %v366 = vrot.slane %v365, 2
      %v367 = vadd.f32 %v365, %v366
      %v368 = vrot.slane %v367, 1
      %v369 = vadd.f32 %v367, %v368
      %v370 = vsel %vm292, %v258, 0.0
      %v371 = vrot.slane %v370, 4
      %v372 = vadd.f32 %v370, %v371
      %v373 = vrot.slane %v372, 2
      %v374 = vadd.f32 %v372, %v373
      %v375 = vrot.slane %v374, 1
      %v376 = vadd.f32 %v374, %v375
      %v377 = vsel %vm292, %v266, 0.0
      %v378 = vrot.slane %v377, 4
      %v379 = vadd.f32 %v377, %v378
      %v380 = vrot.slane %v379, 2
      %v381 = vadd.f32 %v379, %v380
      %v382 = vrot.slane %v381, 1
      %v383 = vadd.f32 %v381, %v382
      %v384 = vsel %vm292, %v274, 0.0
      %v385 = vrot.slane %v384, 4
      %v386 = vadd.f32 %v384, %v385
      %v387 = vrot.slane %v386, 2
      %v388 = vadd.f32 %v386, %v387
      %v389 = vrot.slane %v388, 1
      %v390 = vadd.f32 %v388, %v389
      %v391 = vsel %vm292, %v273, 0.0
      %v392 = vrot.slane %v391, 4
      %v393 = vadd.f32 %v391, %v392
      %v394 = vrot.slane %v393, 2
      %v395 = vadd.f32 %v393, %v394
      %v396 = vrot.slane %v395, 1
      %v397 = vadd.f32 %v395, %v396
      %v398 = vsel %vm292, %v275, 0.0
      %v399 = vrot.slane %v398, 4
      %v400 = vadd.f32 %v398, %v399
      %v401 = vrot.slane %v400, 2
      %v402 = vadd.f32 %v400, %v401
      %v403 = vrot.slane %v402, 1
      %v404 = vadd.f32 %v402, %v403
      %v405 = vmul.f32 %v299, 0.25
      %v406 = vmul.f32 %v306, 0.25
      %v407 = vmul.f32 %v313, 0.25
      %v408 = vmul.f32 %v320, 0.25
      %v409 = vmul.f32 %v327, 0.25
      %v410 = vmul.f32 %v334, 0.25
      %v411 = vmul.f32 %v341, 0.25
      %v412 = vmul.f32 %v348, 0.25
      %v413 = vmul.f32 %v355, 0.25
      %v414 = vmul.f32 %v362, 0.25
      %v415 = vmul.f32 %v369, 0.25
      %v416 = vmul.f32 %v376, 0.25
      %v417 = vmul.f32 %v383, 0.25
      %v418 = vmul.f32 %v390, 0.25
      %v419 = vmul.f32 %v397, 0.25
      %v420 = vmul.f32 %v404, 0.25
      %v421 = vpack.c.bf16 %v405, %v405
      %v422 = vpack.c.bf16 %v406, %v406
      %v423 = vpack.c.bf16 %v407, %v407
      %v424 = vpack.c.bf16 %v408, %v408
      %v425 = vpack.c.bf16 %v409, %v409
      %v426 = vpack.c.bf16 %v410, %v410
      %v427 = vpack.c.bf16 %v411, %v411
      %v428 = vpack.c.bf16 %v412, %v412
      %v429 = vpack.c.bf16 %v413, %v413
      %v430 = vpack.c.bf16 %v414, %v414
      %v431 = vpack.c.bf16 %v415, %v415
      %v432 = vpack.c.bf16 %v416, %v416
      %v433 = vpack.c.bf16 %v417, %v417
      %v434 = vpack.c.bf16 %v418, %v418
      %v435 = vpack.c.bf16 %v419, %v419
      %v436 = vpack.c.bf16 %v420, %v420
      %v437 = vld [vmem:[%s1] sm:$0xf]
      %v438 = vld [vmem:[%s1 + $0x4] sm:$0xf]
      %v439 = vld [vmem:[%s1 + $0x8] sm:$0xf]
      %v440 = vld [vmem:[%s1 + $0xc] sm:$0xf]
      %v441 = vld [vmem:[%s2] sm:$0x1]
      %v443 = vlaneseq
      %v444 = vshrl.u32 %v443, 7
      %v445 = vsub.s32 0, %v444
      %v446 = vrot.slane %v441, %v445
      %v464 = vunpack.c.l.b16 %v421
      %v465 = vunpack.c.l.b16 %v422
      %v466 = vunpack.c.l.b16 %v423
      %v467 = vunpack.c.l.b16 %v424
      %v468 = vunpack.c.l.b16 %v425
      %v469 = vunpack.c.l.b16 %v426
      %v470 = vunpack.c.l.b16 %v427
      %v471 = vunpack.c.l.b16 %v428
      %v472 = vunpack.c.l.b16 %v429
      %v473 = vunpack.c.l.b16 %v430
      %v474 = vunpack.c.l.b16 %v431
      %v475 = vunpack.c.l.b16 %v432
      %v476 = vunpack.c.l.b16 %v433
      %v477 = vunpack.c.l.b16 %v434
      %v478 = vunpack.c.l.b16 %v435
      %v479 = vunpack.c.l.b16 %v436
      %vm480 = vcmask 1041409
      %v481 = vsel %vm480, %v465, %v464
      %vm482 = vcmask 1042434
      %v483 = vsel %vm482, %v466, %v481
      %vm484 = vcmask 1043459
      %v485 = vsel %vm484, %v467, %v483
      %vm486 = vcmask 1044484
      %v487 = vsel %vm486, %v468, %v485
      %vm488 = vcmask 1045509
      %v489 = vsel %vm488, %v469, %v487
      %vm490 = vcmask 1046534
      %v491 = vsel %vm490, %v470, %v489
      %vm492 = vcmask 1047559
      %v493 = vsel %vm492, %v471, %v491
      %v494 = vsel %vm480, %v473, %v472
      %v495 = vsel %vm482, %v474, %v494
      %v496 = vsel %vm484, %v475, %v495
      %v497 = vsel %vm486, %v476, %v496
      %v498 = vsel %vm488, %v477, %v497
      %v499 = vsel %vm490, %v478, %v498
      %v500 = vsel %vm492, %v479, %v499
      %v501 = vpack.c.b16 %v500, %v493
      %v506 = vunpack.c.l.b16 %v437
      %v507 = vunpack.c.l.b16 %v438
      %v508 = vunpack.c.l.b16 %v439
      %v509 = vunpack.c.l.b16 %v440
      %v510 = vpack.c.b16 %v507, %v506
      %v511 = vpack.c.b16 %v509, %v508
      %v515 = vsel %vm191, %v501, 0
      %517 = vmatprep.subr.bf16.mxu0 0
      %518 = vmatpush1.bf16.msra.mxu0 %v510
      %519 = vmatprep.subr.bf16.mxu0 0
      %520 = vmatpush1.bf16.msra.mxu0 %v511
      %521 = vmatprep.subr.bf16.mxu0 0
      %522 = vmatpush1.bf16.msra.mxu0 0
      %523 = vmatprep.subr.bf16.mxu0 0
      %524 = vmatpush1.bf16.msra.mxu0 0
      %525 = vmatprep.subr.bf16.mxu0 0
      %526 = vmatpush1.bf16.msra.mxu0 0
      %527 = vmatprep.subr.bf16.mxu0 0
      %528 = vmatpush1.bf16.msra.mxu0 0
      %529 = vmatprep.subr.bf16.mxu0 0
      %530 = vmatpush1.bf16.msra.mxu0 0
      %531 = vmatprep.subr.bf16.mxu0 0
      %532 = vmatpush1.bf16.msra.mxu0 0
      %533 = vmatprep.subr.bf16.mxu0 0
      %534 = vmatpush1.bf16.msra.mxu0 0
      %535 = vmatprep.subr.bf16.mxu0 0
      %536 = vmatpush1.bf16.msra.mxu0 0
      %537 = vmatprep.subr.bf16.mxu0 0
      %538 = vmatpush1.bf16.msra.mxu0 0
      %539 = vmatprep.subr.bf16.mxu0 0
      %540 = vmatpush1.bf16.msra.mxu0 0
      %541 = vmatprep.subr.bf16.mxu0 0
      %542 = vmatpush1.bf16.msra.mxu0 0
      %543 = vmatprep.subr.bf16.mxu0 0
      %544 = vmatpush1.bf16.msra.mxu0 0
      %545 = vmatprep.subr.bf16.mxu0 0
      %546 = vmatpush1.bf16.msra.mxu0 0
      %547 = vmatprep.subr.bf16.mxu0 0
      %548 = vmatpush1.bf16.msra.mxu0 0
      %549 = vmatprep.mubr.bf16.mxu0 0
      %550 = vmatmul.mubr.bf16.gmra.mrb[0].mxu0 %v515
      %v551 = vpop.f32.mrb[0].mxu0
      %v552 = vadd.f32 %v446, %v551
      %v553 = vpop.f32.mrb[0].mxu0
      %v554 = vpop.f32.mrb[0].mxu0
      %v555 = vadd.f32 %v446, %v554
      %v556 = vpop.f32.mrb[0].mxu0
      %557 = vdwg.mxu0
      %v558 = vmax.f32 %v552, 0.0
      %v559 = vmax.f32 %v555, 0.0
      %v562 = vcombine.high %v558, %v558
      %v563 = vcombine.high %v559, %v559
      %v566 = vpack.c.bf16 %v558, %v558
      %v567 = vpack.c.bf16 %v562, %v562
      %v568 = vpack.c.bf16 %v559, %v559
      %v569 = vpack.c.bf16 %v563, %v563
      %vm570 = vcmask 517120
      %571 = vst.msk [vmem:[%s172] sm:$0x3] %vm570, %v566
      %572 = vst.msk [vmem:[%s172 + $0x2] sm:$0x3] %vm570, %v567
      %573 = vst.msk [vmem:[%s172 + $0x4] sm:$0x3] %vm570, %v568
      %574 = vst.msk [vmem:[%s172 + $0x6] sm:$0x3] %vm570, %v569
      %s575 = smul.u32 4, %s14
      %p576 = scmp.lt.s32.totalorder %s575, 7
      %s577 = scalar_select %p576, %s575, 7
      %s578 = smul.addr %s577, 2
      %s579 = scalar_lea.vmem %s3, %s578
      // Predicated region
      $region33: #{segmentation_simsiam_forward.12} parent=31 // pred_check
        %p580 = pneg %p100
      $region34: #{segmentation_simsiam_forward.12} parent=31 // pred_check_branch
        %582 = sbr.rel (%p580) target = $region36
      $region35: #{segmentation_simsiam_forward.12} parent=31 // pred_region
        %s583 = smul.u32 4, %s14
      $region36: #{segmentation_simsiam_forward.12} parent=31 // pred_fallthru
        _
    $region32: #{segmentation_simsiam_forward.12} parent=5 // pred_fallthru
      _
    %p584 = scmp.le.s32.totalorder 2, %s9
    // Predicated region
    $region37: #{segmentation_simsiam_forward.12} parent=5 // pred_check
      %p585 = pneg %p584
    $region38: #{segmentation_simsiam_forward.12} parent=5 // pred_check_branch
      %587 = sbr.rel (%p585) target = $region40
    $region39: #{segmentation_simsiam_forward.12} parent=5 // pred_region
      %s588 = ssub.s32 %s9, 2
      // Predicated region
      $region41: #{segmentation_simsiam_forward.12} parent=39 // pred_check
        %p589 = pneg %p106
      $region42: #{segmentation_simsiam_forward.12} parent=39 // pred_check_branch
        %591 = sbr.rel (%p589) target = $region44
      $region43: #{segmentation_simsiam_forward.12} parent=39 // pred_region
        %s592 = smul.u32 4, %s15
        %p593 = scmp.lt.s32.totalorder %s592, 7
        %s594 = scalar_select %p593, %s592, 7
        %s595 = smul.addr %s594, 2
        %s596 = scalar_lea.vmem %s3, %s595
      $region44: #{segmentation_simsiam_forward.12} parent=39 // pred_fallthru
        _
    $region40: #{segmentation_simsiam_forward.12} parent=5 // pred_fallthru
      _
  $region6: #{segmentation_simsiam_forward.12} parent=0 // loop_footer
    %s13 = sadd.s32 1, %s9
  $region7: #{segmentation_simsiam_forward.12} parent=0 // loop_footer_branch
    %8 = sbr.rel target = $region3
  $region8: #{segmentation_simsiam_forward.12} parent=0 // loop_exit
    _

// kernel: segmentation_simsiam_forward.11
$region0: #{segmentation_simsiam_forward.11}
  #allocation0 [shape = 'u32[]', space=smem, size = 0x4, offset = 0x4, fixed_abs, tag = 'smem constant byte address 0x4 - core index']
  #allocation1 [shape = 'u32[144,128]{1,0:T(1,128)}', space=vmem, size = 0x12000, scoped, tag = 'internal scratch']
  %s0 = inlined_call_operand.vmem [shape: bf16[32,16,3], index: 0, kind: input, shape index: {}]
  %s1 = inlined_call_operand.vmem [shape: bf16[3,32], index: 1, kind: input, shape index: {}]
  %s2 = inlined_call_operand.vmem [shape: f32[1,32], index: 2, kind: input, shape index: {}]
  %s3 = inlined_call_operand.vmem [shape: bf16[16,8,32], index: 3, kind: output, shape index: {}]
  %s4 = sld [smem:[#allocation0]]
  $region45: #{segmentation_simsiam_forward.11} parent=0
    _
  %s6 = ssub.s32 1, %s4
  %s7 = scalar_select 0, %s6, %s4
  loop: start=0, step=1, limit=4
  $region2: #{segmentation_simsiam_forward.11} parent=0 // loop_pre_header
    _
  $region3: #{segmentation_simsiam_forward.11} parent=0 // loop_header
    %s9 = sphi 0, %s13
    %p10 = scmp.ge.s32.totalorder %s9, 4
    %s19 = sphi 0, %s21
    %s22 = sphi 0, %s19
    %s23 = sphi 0, %s22
    %s39 = sphi 0, %s23
    %s43 = sphi 0, %s43
    %s45 = sphi 0, %s43
    %s46 = sphi 0, %s45
    %s60 = sphi 0, %s46
    %s64 = sphi 0, %s64
    %s66 = sphi 0, %s64
    %s67 = sphi 0, %s66
    %s81 = sphi 0, %s67
    %s87 = sphi 0, %s89
    %s90 = sphi 0, %s87
    %s91 = sphi 0, %s90
    %s107 = sphi 0, %s91
  $region4: #{segmentation_simsiam_forward.11} parent=0 // loop_header_branch
    %12 = sbr.rel (%p10) target = $region8
  $region5: #{segmentation_simsiam_forward.11} parent=0 // loop_body
    %s14 = ssub.s32 %s9, 1
    %s15 = ssub.s32 %s9, 2
    %s16 = sadd.s32 %s9, 1
    %s17 = ssub.s32 %s9, %s16
    %p18 = scmp.eq.s32.totalorder %s17, 0
    %s20 = sadd.s32 %s19, 1
    %s21 = scalar_select %p18, %s19, %s20
    %p24 = pneg %p18
    %p25 = scmp.eq.s32.totalorder %s9, 1
    %p26 = por %p24, %p25
    %p27 = scmp.ne.s32.totalorder %s19, %s22
    %p28 = scmp.eq.s32.totalorder %s9, 0
    %p29 = por %p27, %p28
    %p30 = scmp.ne.s32.totalorder %s19, %s22
    %p31 = scmp.eq.s32.totalorder %s14, 1
    %p32 = por %p30, %p31
    %p33 = scmp.ne.s32.totalorder %s22, %s23
    %p34 = scmp.eq.s32.totalorder %s14, 0
    %p35 = por %p33, %p34
    %p36 = scmp.ne.s32.totalorder %s22, %s23
    %p37 = scmp.eq.s32.totalorder %s15, 1
    %p38 = por %p36, %p37
    %p40 = scmp.ne.s32.totalorder %s23, %s39
    %p41 = scmp.eq.s32.totalorder %s15, 0
    %p42 = por %p40, %p41
    %s44 = sadd.s32 %s43, 1
    %p47 = scmp.eq.s32.totalorder %s9, 1
    %p48 = scmp.ne.s32.totalorder %s43, %s45
    %p49 = scmp.eq.s32.totalorder %s9, 0
    %p50 = por %p48, %p49
    %p51 = scmp.ne.s32.totalorder %s43, %s45
    %p52 = scmp.eq.s32.totalorder %s14, 1
    %p53 = por %p51, %p52
    %p54 = scmp.ne.s32.totalorder %s45, %s46
    %p55 = scmp.eq.s32.totalorder %s14, 0
    %p56 = por %p54, %p55
    %p57 = scmp.ne.s32.totalorder %s45, %s46
    %p58 = scmp.eq.s32.totalorder %s15, 1
    %p59 = por %p57, %p58
    %p61 = scmp.ne.s32.totalorder %s46, %s60
    %p62 = scmp.eq.s32.totalorder %s15, 0
    %p63 = por %p61, %p62
    %s65 = sadd.s32 %s64, 1
    %p68 = scmp.eq.s32.totalorder %s9, 1
    %p69 = scmp.ne.s32.totalorder %s64, %s66
    %p70 = scmp.eq.s32.totalorder %s9, 0
    %p71 = por %p69, %p70
    %p72 = scmp.ne.s32.totalorder %s64, %s66
    %p73 = scmp.eq.s32.totalorder %s14, 1
    %p74 = por %p72, %p73
    %p75 = scmp.ne.s32.totalorder %s66, %s67
    %p76 = scmp.eq.s32.totalorder %s14, 0
    %p77 = por %p75, %p76
    %p78 = scmp.ne.s32.totalorder %s66, %s67
    %p79 = scmp.eq.s32.totalorder %s15, 1
    %p80 = por %p78, %p79
    %p82 = scmp.ne.s32.totalorder %s67, %s81
    %p83 = scmp.eq.s32.totalorder %s15, 0
    %p84 = por %p82, %p83
    %s85 = ssub.s32 %s9, %s16
    %p86 = scmp.eq.s32.totalorder %s85, 0
    %s88 = sadd.s32 %s87, 1
    %s89 = scalar_select %p86, %s87, %s88
    %p92 = pneg %p86
    %p93 = scmp.eq.s32.totalorder %s9, 1
    %p94 = por %p92, %p93
    %p95 = scmp.ne.s32.totalorder %s87, %s90
    %p96 = scmp.eq.s32.totalorder %s9, 0
    %p97 = por %p95, %p96
    %p98 = scmp.ne.s32.totalorder %s87, %s90
    %p99 = scmp.eq.s32.totalorder %s14, 1
    %p100 = por %p98, %p99
    %p101 = scmp.ne.s32.totalorder %s90, %s91
    %p102 = scmp.eq.s32.totalorder %s14, 0
    %p103 = por %p101, %p102
    %p104 = scmp.ne.s32.totalorder %s90, %s91
    %p105 = scmp.eq.s32.totalorder %s15, 1
    %p106 = por %p104, %p105
    %p108 = scmp.ne.s32.totalorder %s91, %s107
    %p109 = scmp.eq.s32.totalorder %s15, 0
    %p110 = por %p108, %p109
    %p111 = scmp.le.s32.totalorder 1, %s9
    %p112 = scmp.lt.s32.totalorder %s9, 3
    %p113 = pnand %p111, %p112
    %p114 = pneg %p113
    // Predicated region
    $region9: #{segmentation_simsiam_forward.11} parent=5 // pred_check
      _
    $region10: #{segmentation_simsiam_forward.11} parent=5 // pred_check_branch
      %116 = sbr.rel (%p113) target = $region12
    $region11: #{segmentation_simsiam_forward.11} parent=5 // pred_region
      %s117 = ssub.s32 %s9, 1
      // Predicated region
      $region13: #{segmentation_simsiam_forward.11} parent=11 // pred_check
        %p118 = pneg %p56
      $region14: #{segmentation_simsiam_forward.11} parent=11 // pred_check_branch
        %120 = sbr.rel (%p118) target = $region16
      $region15: #{segmentation_simsiam_forward.11} parent=11 // pred_region
        _
      $region16: #{segmentation_simsiam_forward.11} parent=11 // pred_fallthru
        _
      // Predicated region
      $region17: #{segmentation_simsiam_forward.11} parent=11 // pred_check
        %p121 = pneg %p77
      $region18: #{segmentation_simsiam_forward.11} parent=11 // pred_check_branch
        %123 = sbr.rel (%p121) target = $region20
      $region19: #{segmentation_simsiam_forward.11} parent=11 // pred_region
        _
      $region20: #{segmentation_simsiam_forward.11} parent=11 // pred_fallthru
        _
    $region12: #{segmentation_simsiam_forward.11} parent=5 // pred_fallthru
      _
    %p124 = scmp.lt.s32.totalorder %s9, 2
    // Predicated region
    $region21: #{segmentation_simsiam_forward.11} parent=5 // pred_check
      %p125 = pneg %p124
    $region22: #{segmentation_simsiam_forward.11} parent=5 // pred_check_branch
      %127 = sbr.rel (%p125) target = $region24
    $region23: #{segmentation_simsiam_forward.11} parent=5 // pred_region
      // Predicated region
      $region25: #{segmentation_simsiam_forward.11} parent=23 // pred_check
        %p128 = pneg %p29
      $region26: #{segmentation_simsiam_forward.11} parent=23 // pred_check_branch
        %130 = sbr.rel (%p128) target = $region28
      $region27: #{segmentation_simsiam_forward.11} parent=23 // pred_region
        %s131 = smul.u32 16, %s9
        %p132 = scmp.lt.s32.totalorder %s131, 31
        %s133 = scalar_select %p132, %s131, 31
        %s134 = smul.addr %s133, 2
        %s135 = smul.addr %s134, 4
        %s136 = scalar_lea.vmem %s0, %s135
        %s137 = smul.u32 16, %s9
      $region28: #{segmentation_simsiam_forward.11} parent=23 // pred_fallthru
        _
    $region24: #{segmentation_simsiam_forward.11} parent=5 // pred_fallthru
      _
    %p138 = scmp.le.s32.totalorder 1, %s9
    %p139 = scmp.lt.s32.totalorder %s9, 3
    %p140 = pnand %p138, %p139
    %p141 = pneg %p140
    // Predicated region
    $region29: #{segmentation_simsiam_forward.11} parent=5 // pred_check
      _
    $region30: #{segmentation_simsiam_forward.11} parent=5 // pred_check_branch
      %143 = sbr.rel (%p140) target = $region32
    $region31: #{segmentation_simsiam_forward.11} parent=5 // pred_region
      %s144 = ssub.s32 %s9, 1
      %s145 = smul.u32 16, %s14
      %p146 = scmp.lt.s32.totalorder %s145, 31
      %s147 = scalar_select %p146, %s145, 31
      %s148 = smul.addr %s147, 2
      %s149 = smul.addr %s148, 4
      %s150 = scalar_lea.vmem %s0, %s149
      %p151 = pneg %p35
      %p152 = pneg %p32
      %p153 = pneg %p56
      %p154 = pneg %p53
      %p155 = pneg %p77
      %p156 = pneg %p74
      %p157 = pneg %p103
      %p158 = pneg %p100
      %s159 = smul.u32 8, %s14
      %p160 = scmp.lt.s32.totalorder %s159, 15
      %s161 = scalar_select %p160, %s159, 15
      %s162 = smul.addr %s161, 4
      %s163 = scalar_lea.vmem %s3, %s162
      %s164 = smul.u32 16, %s14
      %p165 = scmp.lt.s32.totalorder %s164, 31
      %s166 = scalar_select %p165, %s164, 31
      %s167 = smul.addr %s166, 2
      %s168 = smul.addr %s167, 4
      %s169 = scalar_lea.vmem %s0, %s168
      %s170 = smul.u32 16, %s14
      %s171 = smul.u32 8, %s14
      %p172 = scmp.lt.s32.totalorder %s171, 15
      %s173 = scalar_select %p172, %s171, 15
      %s174 = smul.addr %s173, 4
      %s175 = scalar_lea.vmem %s3, %s174
      %s176 = smul.u32 8, %s14
      %v178 = vld [vmem:[%s169] sm:$0xf]
      %v179 = vld [vmem:[%s169 + $0x4] sm:$0xf]
      %v180 = vld [vmem:[%s169 + $0x8] sm:$0xf]
      %v181 = vld [vmem:[%s169 + $0xc] sm:$0xf]
      %v182 = vld [vmem:[%s169 + $0x10] sm:$0xf]
      %v183 = vld [vmem:[%s169 + $0x14] sm:$0xf]
      %v184 = vld [vmem:[%s169 + $0x18] sm:$0xf]
      %v185 = vld [vmem:[%s169 + $0x1c] sm:$0xf]
      %v186 = vld [vmem:[%s169 + $0x20] sm:$0xf]
      %v187 = vld [vmem:[%s169 + $0x24] sm:$0xf]
      %v188 = vld [vmem:[%s169 + $0x28] sm:$0xf]
      %v189 = vld [vmem:[%s169 + $0x2c] sm:$0xf]
      %v190 = vld [vmem:[%s169 + $0x30] sm:$0xf]
      %v191 = vld [vmem:[%s169 + $0x34] sm:$0xf]
      %v192 = vld [vmem:[%s169 + $0x38] sm:$0xf]
      %v193 = vld [vmem:[%s169 + $0x3c] sm:$0xf]
      %v194 = vld [vmem:[%s169 + $0x40] sm:$0xf]
      %v195 = vld [vmem:[%s169 + $0x44] sm:$0xf]
      %v196 = vld [vmem:[%s169 + $0x48] sm:$0xf]
      %v197 = vld [vmem:[%s169 + $0x4c] sm:$0xf]
      %v198 = vld [vmem:[%s169 + $0x50] sm:$0xf]
      %v199 = vld [vmem:[%s169 + $0x54] sm:$0xf]
      %v200 = vld [vmem:[%s169 + $0x58] sm:$0xf]
      %v201 = vld [vmem:[%s169 + $0x5c] sm:$0xf]
      %v202 = vld [vmem:[%s169 + $0x60] sm:$0xf]
      %v203 = vld [vmem:[%s169 + $0x64] sm:$0xf]
      %v204 = vld [vmem:[%s169 + $0x68] sm:$0xf]
      %v205 = vld [vmem:[%s169 + $0x6c] sm:$0xf]
      %v206 = vld [vmem:[%s169 + $0x70] sm:$0xf]
      %v207 = vld [vmem:[%s169 + $0x74] sm:$0xf]
      %v208 = vld [vmem:[%s169 + $0x78] sm:$0xf]
      %v209 = vld [vmem:[%s169 + $0x7c] sm:$0xf]
      %v210 = vunpack.c.l.bf16 %v178
      %v211 = vunpack.c.l.bf16 %v179
      %v212 = vunpack.c.l.bf16 %v180
      %v213 = vunpack.c.l.bf16 %v181
      %v214 = vunpack.c.l.bf16 %v182
      %v215 = vunpack.c.l.bf16 %v183
      %v216 = vunpack.c.l.bf16 %v184
      %v217 = vunpack.c.l.bf16 %v185
      %v218 = vunpack.c.l.bf16 %v186
      %v219 = vunpack.c.l.bf16 %v187
      %v220 = vunpack.c.l.bf16 %v188
      %v221 = vunpack.c.l.bf16 %v189
      %v222 = vunpack.c.l.bf16 %v190
      %v223 = vunpack.c.l.bf16 %v191
      %v224 = vunpack.c.l.bf16 %v192
      %v225 = vunpack.c.l.bf16 %v193
      %v226 = vunpack.c.l.bf16 %v194
      %v227 = vunpack.c.l.bf16 %v195
      %v228 = vunpack.c.l.bf16 %v196
      %v229 = vunpack.c.l.bf16 %v197
      %v230 = vunpack.c.l.bf16 %v198
      %v231 = vunpack.c.l.bf16 %v199
      %v232 = vunpack.c.l.bf16 %v200
      %v233 = vunpack.c.l.bf16 %v201
      %v234 = vunpack.c.l.bf16 %v202
      %v235 = vunpack.c.l.bf16 %v203
      %v236 = vunpack.c.l.bf16 %v204
      %v237 = vunpack.c.l.bf16 %v205
      %v238 = vunpack.c.l.bf16 %v206
      %v239 = vunpack.c.l.bf16 %v207
      %v240 = vunpack.c.l.bf16 %v208
      %v241 = vunpack.c.l.bf16 %v209
      %vm242 = vcmask 23552
      %v243 = vsel %vm242, %v210, 0.0
      %v244 = vsel %vm242, %v212, 0.0
      %v245 = vadd.f32 %v243, %v244
      %v246 = vsel %vm242, %v211, 0.0
      %v247 = vsel %vm242, %v213, 0.0
      %v248 = vadd.f32 %v246, %v247
      %v249 = vsel %vm242, %v214, 0.0
      %v250 = vsel %vm242, %v216, 0.0
      %v251 = vadd.f32 %v249, %v250
      %v252 = vsel %vm242, %v215, 0.0
      %v253 = vsel %vm242, %v217, 0.0
      %v254 = vadd.f32 %v252, %v253
      %v255 = vsel %vm242, %v218, 0.0
      %v256 = vsel %vm242, %v220, 0.0
      %v257 = vadd.f32 %v255, %v256
      %v258 = vsel %vm242, %v219, 0.0
      %v259 = vsel %vm242, %v221, 0.0
      %v260 = vadd.f32 %v258, %v259
      %v261 = vsel %vm242, %v222, 0.0
      %v262 = vsel %vm242, %v224, 0.0
      %v263 = vadd.f32 %v261, %v262
      %v264 = vsel %vm242, %v223, 0.0
      %v265 = vsel %vm242, %v225, 0.0
      %v266 = vadd.f32 %v264, %v265
      %v267 = vsel %vm242, %v226, 0.0
      %v268 = vsel %vm242, %v228, 0.0
      %v269 = vadd.f32 %v267, %v268
      %v270 = vsel %vm242, %v227, 0.0
      %v271 = vsel %vm242, %v229, 0.0
      %v272 = vadd.f32 %v270, %v271
      %v273 = vsel %vm242, %v230, 0.0
      %v274 = vsel %vm242, %v232, 0.0
      %v275 = vadd.f32 %v273, %v274
      %v276 = vsel %vm242, %v231, 0.0
      %v277 = vsel %vm242, %v233, 0.0
      %v278 = vadd.f32 %v276, %v277
      %v279 = vsel %vm242, %v234, 0.0
      %v280 = vsel %vm242, %v236, 0.0
      %v281 = vadd.f32 %v279, %v280
      %v282 = vsel %vm242, %v235, 0.0
      %v283 = vsel %vm242, %v237, 0.0
      %v284 = vadd.f32 %v282, %v283
      %v285 = vsel %vm242, %v238, 0.0
      %v286 = vsel %vm242, %v240, 0.0
      %v287 = vadd.f32 %v285, %v286
      %v288 = vsel %vm242, %v239, 0.0
      %v289 = vsel %vm242, %v241, 0.0
      %v290 = vadd.f32 %v288, %v289
      %v307 = vcombine.high %v245, %v245
      %v309 = vunpack.c.l.s4 1983009808
      %v310 = vunpack.c.0.s8 %v309
      %v311 = vlaneseq
      %v312 = vshrl.u32 %v311, 7
      %v313 = vsub.s32 %v310, %v312
      %v314 = vrot.slane %v245, %v313
      %v316 = vunpack.c.l.s4 1983009808
      %v317 = vunpack.c.0.s8 %v316
      %v318 = vlaneseq
      %v319 = vshrl.u32 %v318, 7
      %v320 = vsub.s32 %v317, %v319
      %v321 = vrot.slane %v307, %v320
      %v322 = vcombine.high %v314, %v314
      %v323 = vcombine.high %v321, %v321
      %v324 = vcombine.high %v248, %v248
      %v326 = vunpack.c.l.s4 1983009808
      %v327 = vunpack.c.0.s8 %v326
      %v328 = vlaneseq
      %v329 = vshrl.u32 %v328, 7
      %v330 = vsub.s32 %v327, %v329
      %v331 = vrot.slane %v248, %v330
      %v333 = vunpack.c.l.s4 1983009808
      %v334 = vunpack.c.0.s8 %v333
      %v335 = vlaneseq
      %v336 = vshrl.u32 %v335, 7
      %v337 = vsub.s32 %v334, %v336
      %v338 = vrot.slane %v324, %v337
      %v339 = vcombine.high %v331, %v331
      %v340 = vcombine.high %v338, %v338
      %v341 = vcombine.high %v251, %v251
      %v343 = vunpack.c.l.s4 1983009808
      %v344 = vunpack.c.0.s8 %v343
      %v345 = vlaneseq
      %v346 = vshrl.u32 %v345, 7
      %v347 = vsub.s32 %v344, %v346
      %v348 = vrot.slane %v251, %v347
      %v350 = vunpack.c.l.s4 1983009808
      %v351 = vunpack.c.0.s8 %v350
      %v352 = vlaneseq
      %v353 = vshrl.u32 %v352, 7
      %v354 = vsub.s32 %v351, %v353
      %v355 = vrot.slane %v341, %v354
      %v356 = vcombine.high %v348, %v348
      %v357 = vcombine.high %v355, %v355
      %v358 = vcombine.high %v254, %v254
      %v360 = vunpack.c.l.s4 1983009808
      %v361 = vunpack.c.0.s8 %v360
      %v362 = vlaneseq
      %v363 = vshrl.u32 %v362, 7
      %v364 = vsub.s32 %v361, %v363
      %v365 = vrot.slane %v254, %v364
      %v367 = vunpack.c.l.s4 1983009808
      %v368 = vunpack.c.0.s8 %v367
      %v369 = vlaneseq
      %v370 = vshrl.u32 %v369, 7
      %v371 = vsub.s32 %v368, %v370
      %v372 = vrot.slane %v358, %v371
      %v373 = vcombine.high %v365, %v365
      %v374 = vcombine.high %v372, %v372
      %v375 = vcombine.high %v257, %v257
      %v377 = vunpack.c.l.s4 1983009808
      %v378 = vunpack.c.0.s8 %v377
      %v379 = vlaneseq
      %v380 = vshrl.u32 %v379, 7
      %v381 = vsub.s32 %v378, %v380
      %v382 = vrot.slane %v257, %v381
      %v384 = vunpack.c.l.s4 1983009808
      %v385 = vunpack.c.0.s8 %v384
      %v386 = vlaneseq
      %v387 = vshrl.u32 %v386, 7
      %v388 = vsub.s32 %v385, %v387
      %v389 = vrot.slane %v375, %v388
      %v390 = vcombine.high %v382, %v382
      %v391 = vcombine.high %v389, %v389
      %v392 = vcombine.high %v260, %v260
      %v394 = vunpack.c.l.s4 1983009808
      %v395 = vunpack.c.0.s8 %v394
      %v396 = vlaneseq
      %v397 = vshrl.u32 %v396, 7
      %v398 = vsub.s32 %v395, %v397
      %v399 = vrot.slane %v260, %v398
      %v401 = vunpack.c.l.s4 1983009808
      %v402 = vunpack.c.0.s8 %v401
      %v403 = vlaneseq
      %v404 = vshrl.u32 %v403, 7
      %v405 = vsub.s32 %v402, %v404
      %v406 = vrot.slane %v392, %v405
      %v407 = vcombine.high %v399, %v399
      %v408 = vcombine.high %v406, %v406
      %v409 = vcombine.high %v263, %v263
      %v411 = vunpack.c.l.s4 1983009808
      %v412 = vunpack.c.0.s8 %v411
      %v413 = vlaneseq
      %v414 = vshrl.u32 %v413, 7
      %v415 = vsub.s32 %v412, %v414
      %v416 = vrot.slane %v263, %v415
      %v418 = vunpack.c.l.s4 1983009808
      %v419 = vunpack.c.0.s8 %v418
      %v420 = vlaneseq
      %v421 = vshrl.u32 %v420, 7
      %v422 = vsub.s32 %v419, %v421
      %v423 = vrot.slane %v409, %v422
      %v424 = vcombine.high %v416, %v416
      %v425 = vcombine.high %v423, %v423
      %v426 = vcombine.high %v266, %v266
      %v428 = vunpack.c.l.s4 1983009808
      %v429 = vunpack.c.0.s8 %v428
      %v430 = vlaneseq
      %v431 = vshrl.u32 %v430, 7
      %v432 = vsub.s32 %v429, %v431
      %v433 = vrot.slane %v266, %v432
      %v435 = vunpack.c.l.s4 1983009808
      %v436 = vunpack.c.0.s8 %v435
      %v437 = vlaneseq
      %v438 = vshrl.u32 %v437, 7
      %v439 = vsub.s32 %v436, %v438
      %v440 = vrot.slane %v426, %v439
      %v441 = vcombine.high %v433, %v433
      %v442 = vcombine.high %v440, %v440
      %v443 = vcombine.high %v269, %v269
      %v445 = vunpack.c.l.s4 1983009808
      %v446 = vunpack.c.0.s8 %v445
      %v447 = vlaneseq
      %v448 = vshrl.u32 %v447, 7
      %v449 = vsub.s32 %v446, %v448
      %v450 = vrot.slane %v269, %v449
      %v452 = vunpack.c.l.s4 1983009808
      %v453 = vunpack.c.0.s8 %v452
      %v454 = vlaneseq
      %v455 = vshrl.u32 %v454, 7
      %v456 = vsub.s32 %v453, %v455
      %v457 = vrot.slane %v443, %v456
      %v458 = vcombine.high %v450, %v450
      %v459 = vcombine.high %v457, %v457
      %v460 = vcombine.high %v272, %v272
      %v462 = vunpack.c.l.s4 1983009808
      %v463 = vunpack.c.0.s8 %v462
      %v464 = vlaneseq
      %v465 = vshrl.u32 %v464, 7
      %v466 = vsub.s32 %v463, %v465
      %v467 = vrot.slane %v272, %v466
      %v469 = vunpack.c.l.s4 1983009808
      %v470 = vunpack.c.0.s8 %v469
      %v471 = vlaneseq
      %v472 = vshrl.u32 %v471, 7
      %v473 = vsub.s32 %v470, %v472
      %v474 = vrot.slane %v460, %v473
      %v475 = vcombine.high %v467, %v467
      %v476 = vcombine.high %v474, %v474
      %v477 = vcombine.high %v275, %v275
      %v479 = vunpack.c.l.s4 1983009808
      %v480 = vunpack.c.0.s8 %v479
      %v481 = vlaneseq
      %v482 = vshrl.u32 %v481, 7
      %v483 = vsub.s32 %v480, %v482
      %v484 = vrot.slane %v275, %v483
      %v486 = vunpack.c.l.s4 1983009808
      %v487 = vunpack.c.0.s8 %v486
      %v488 = vlaneseq
      %v489 = vshrl.u32 %v488, 7
      %v490 = vsub.s32 %v487, %v489
      %v491 = vrot.slane %v477, %v490
      %v492 = vcombine.high %v484, %v484
      %v493 = vcombine.high %v491, %v491
      %v494 = vcombine.high %v278, %v278
      %v496 = vunpack.c.l.s4 1983009808
      %v497 = vunpack.c.0.s8 %v496
      %v498 = vlaneseq
      %v499 = vshrl.u32 %v498, 7
      %v500 = vsub.s32 %v497, %v499
      %v501 = vrot.slane %v278, %v500
      %v503 = vunpack.c.l.s4 1983009808
      %v504 = vunpack.c.0.s8 %v503
      %v505 = vlaneseq
      %v506 = vshrl.u32 %v505, 7
      %v507 = vsub.s32 %v504, %v506
      %v508 = vrot.slane %v494, %v507
      %v509 = vcombine.high %v501, %v501
      %v510 = vcombine.high %v508, %v508
      %v511 = vcombine.high %v281, %v281
      %v513 = vunpack.c.l.s4 1983009808
      %v514 = vunpack.c.0.s8 %v513
      %v515 = vlaneseq
      %v516 = vshrl.u32 %v515, 7
      %v517 = vsub.s32 %v514, %v516
      %v518 = vrot.slane %v281, %v517
      %v520 = vunpack.c.l.s4 1983009808
      %v521 = vunpack.c.0.s8 %v520
      %v522 = vlaneseq
      %v523 = vshrl.u32 %v522, 7
      %v524 = vsub.s32 %v521, %v523
      %v525 = vrot.slane %v511, %v524
      %v526 = vcombine.high %v518, %v518
      %v527 = vcombine.high %v525, %v525
      %v528 = vcombine.high %v284, %v284
      %v530 = vunpack.c.l.s4 1983009808
      %v531 = vunpack.c.0.s8 %v530
      %v532 = vlaneseq
      %v533 = vshrl.u32 %v532, 7
      %v534 = vsub.s32 %v531, %v533
      %v535 = vrot.slane %v284, %v534
      %v537 = vunpack.c.l.s4 1983009808
      %v538 = vunpack.c.0.s8 %v537
      %v539 = vlaneseq
      %v540 = vshrl.u32 %v539, 7
      %v541 = vsub.s32 %v538, %v540
      %v542 = vrot.slane %v528, %v541
      %v543 = vcombine.high %v535, %v535
      %v544 = vcombine.high %v542, %v542
      %v545 = vcombine.high %v287, %v287
      %v547 = vunpack.c.l.s4 1983009808
      %v548 = vunpack.c.0.s8 %v547
      %v549 = vlaneseq
      %v550 = vshrl.u32 %v549, 7
      %v551 = vsub.s32 %v548, %v550
      %v552 = vrot.slane %v287, %v551
      %v554 = vunpack.c.l.s4 1983009808
      %v555 = vunpack.c.0.s8 %v554
      %v556 = vlaneseq
      %v557 = vshrl.u32 %v556, 7
      %v558 = vsub.s32 %v555, %v557
      %v559 = vrot.slane %v545, %v558
      %v560 = vcombine.high %v552, %v552
      %v561 = vcombine.high %v559, %v559
      %v562 = vcombine.high %v290, %v290
      %v564 = vunpack.c.l.s4 1983009808
      %v565 = vunpack.c.0.s8 %v564
      %v566 = vlaneseq
      %v567 = vshrl.u32 %v566, 7
      %v568 = vsub.s32 %v565, %v567
      %v569 = vrot.slane %v290, %v568
      %v571 = vunpack.c.l.s4 1983009808
      %v572 = vunpack.c.0.s8 %v571
      %v573 = vlaneseq
      %v574 = vshrl.u32 %v573, 7
      %v575 = vsub.s32 %v572, %v574
      %v576 = vrot.slane %v562, %v575
      %v577 = vcombine.high %v569, %v569
      %v578 = vcombine.high %v576, %v576
      %vm643 = vcmask 17408
      %v644 = vsel %vm643, %v314, 0.0
      %v645 = vrot.slane %v644, 4
      %v646 = vadd.f32 %v644, %v645
      %v647 = vrot.slane %v646, 2
      %v648 = vadd.f32 %v646, %v647
      %v649 = vrot.slane %v648, 1
      %v650 = vadd.f32 %v648, %v649
      %v651 = vsel %vm643, %v322, 0.0
      %v652 = vrot.slane %v651, 4
      %v653 = vadd.f32 %v651, %v652
      %v654 = vrot.slane %v653, 2
      %v655 = vadd.f32 %v653, %v654
      %v656 = vrot.slane %v655, 1
      %v657 = vadd.f32 %v655, %v656
      %v658 = vsel %vm643, %v321, 0.0
      %v659 = vrot.slane %v658, 4
      %v660 = vadd.f32 %v658, %v659
      %v661 = vrot.slane %v660, 2
      %v662 = vadd.f32 %v660, %v661
      %v663 = vrot.slane %v662, 1
      %v664 = vadd.f32 %v662, %v663
      %v665 = vsel %vm643, %v323, 0.0
      %v666 = vrot.slane %v665, 4
      %v667 = vadd.f32 %v665, %v666
      %v668 = vrot.slane %v667, 2
      %v669 = vadd.f32 %v667, %v668
      %v670 = vrot.slane %v669, 1
      %v671 = vadd.f32 %v669, %v670
      %v672 = vsel %vm643, %v331, 0.0
      %v673 = vrot.slane %v672, 4
      %v674 = vadd.f32 %v672, %v673
      %v675 = vrot.slane %v674, 2
      %v676 = vadd.f32 %v674, %v675
      %v677 = vrot.slane %v676, 1
      %v678 = vadd.f32 %v676, %v677
      %v679 = vsel %vm643, %v339, 0.0
      %v680 = vrot.slane %v679, 4
      %v681 = vadd.f32 %v679, %v680
      %v682 = vrot.slane %v681, 2
      %v683 = vadd.f32 %v681, %v682
      %v684 = vrot.slane %v683, 1
      %v685 = vadd.f32 %v683, %v684
      %v686 = vsel %vm643, %v338, 0.0
      %v687 = vrot.slane %v686, 4
      %v688 = vadd.f32 %v686, %v687
      %v689 = vrot.slane %v688, 2
      %v690 = vadd.f32 %v688, %v689
      %v691 = vrot.slane %v690, 1
      %v692 = vadd.f32 %v690, %v691
      %v693 = vsel %vm643, %v340, 0.0
      %v694 = vrot.slane %v693, 4
      %v695 = vadd.f32 %v693, %v694
      %v696 = vrot.slane %v695, 2
      %v697 = vadd.f32 %v695, %v696
      %v698 = vrot.slane %v697, 1
      %v699 = vadd.f32 %v697, %v698
      %v700 = vsel %vm643, %v348, 0.0
      %v701 = vrot.slane %v700, 4
      %v702 = vadd.f32 %v700, %v701
      %v703 = vrot.slane %v702, 2
      %v704 = vadd.f32 %v702, %v703
      %v705 = vrot.slane %v704, 1
      %v706 = vadd.f32 %v704, %v705
      %v707 = vsel %vm643, %v356, 0.0
      %v708 = vrot.slane %v707, 4
      %v709 = vadd.f32 %v707, %v708
      %v710 = vrot.slane %v709, 2
      %v711 = vadd.f32 %v709, %v710
      %v712 = vrot.slane %v711, 1
      %v713 = vadd.f32 %v711, %v712
      %v714 = vsel %vm643, %v355, 0.0
      %v715 = vrot.slane %v714, 4
      %v716 = vadd.f32 %v714, %v715
      %v717 = vrot.slane %v716, 2
      %v718 = vadd.f32 %v716, %v717
      %v719 = vrot.slane %v718, 1
      %v720 = vadd.f32 %v718, %v719
      %v721 = vsel %vm643, %v357, 0.0
      %v722 = vrot.slane %v721, 4
      %v723 = vadd.f32 %v721, %v722
      %v724 = vrot.slane %v723, 2
      %v725 = vadd.f32 %v723, %v724
      %v726 = vrot.slane %v725, 1
      %v727 = vadd.f32 %v725, %v726
      %v728 = vsel %vm643, %v365, 0.0
      %v729 = vrot.slane %v728, 4
      %v730 = vadd.f32 %v728, %v729
      %v731 = vrot.slane %v730, 2
      %v732 = vadd.f32 %v730, %v731
      %v733 = vrot.slane %v732, 1
      %v734 = vadd.f32 %v732, %v733
      %v735 = vsel %vm643, %v373, 0.0
      %v736 = vrot.slane %v735, 4
      %v737 = vadd.f32 %v735, %v736
      %v738 = vrot.slane %v737, 2
      %v739 = vadd.f32 %v737, %v738
      %v740 = vrot.slane %v739, 1
      %v741 = vadd.f32 %v739, %v740
      %v742 = vsel %vm643, %v372, 0.0
      %v743 = vrot.slane %v742, 4
      %v744 = vadd.f32 %v742, %v743
      %v745 = vrot.slane %v744, 2
      %v746 = vadd.f32 %v744, %v745
      %v747 = vrot.slane %v746, 1
      %v748 = vadd.f32 %v746, %v747
      %v749 = vsel %vm643, %v374, 0.0
      %v750 = vrot.slane %v749, 4
      %v751 = vadd.f32 %v749, %v750
      %v752 = vrot.slane %v751, 2
      %v753 = vadd.f32 %v751, %v752
      %v754 = vrot.slane %v753, 1
      %v755 = vadd.f32 %v753, %v754
      %v756 = vsel %vm643, %v382, 0.0
      %v757 = vrot.slane %v756, 4
      %v758 = vadd.f32 %v756, %v757
      %v759 = vrot.slane %v758, 2
      %v760 = vadd.f32 %v758, %v759
      %v761 = vrot.slane %v760, 1
      %v762 = vadd.f32 %v760, %v761
      %v763 = vsel %vm643, %v390, 0.0
      %v764 = vrot.slane %v763, 4
      %v765 = vadd.f32 %v763, %v764
      %v766 = vrot.slane %v765, 2
      %v767 = vadd.f32 %v765, %v766
      %v768 = vrot.slane %v767, 1
      %v769 = vadd.f32 %v767, %v768
      %v770 = vsel %vm643, %v389, 0.0
      %v771 = vrot.slane %v770, 4
      %v772 = vadd.f32 %v770, %v771
      %v773 = vrot.slane %v772, 2
      %v774 = vadd.f32 %v772, %v773
      %v775 = vrot.slane %v774, 1
      %v776 = vadd.f32 %v774, %v775
      %v777 = vsel %vm643, %v391, 0.0
      %v778 = vrot.slane %v777, 4
      %v779 = vadd.f32 %v777, %v778
      %v780 = vrot.slane %v779, 2
      %v781 = vadd.f32 %v779, %v780
      %v782 = vrot.slane %v781, 1
      %v783 = vadd.f32 %v781, %v782
      %v784 = vsel %vm643, %v399, 0.0
      %v785 = vrot.slane %v784, 4
      %v786 = vadd.f32 %v784, %v785
      %v787 = vrot.slane %v786, 2
      %v788 = vadd.f32 %v786, %v787
      %v789 = vrot.slane %v788, 1
      %v790 = vadd.f32 %v788, %v789
      %v791 = vsel %vm643, %v407, 0.0
      %v792 = vrot.slane %v791, 4
      %v793 = vadd.f32 %v791, %v792
      %v794 = vrot.slane %v793, 2
      %v795 = vadd.f32 %v793, %v794
      %v796 = vrot.slane %v795, 1
      %v797 = vadd.f32 %v795, %v796
      %v798 = vsel %vm643, %v406, 0.0
      %v799 = vrot.slane %v798, 4
      %v800 = vadd.f32 %v798, %v799
      %v801 = vrot.slane %v800, 2
      %v802 = vadd.f32 %v800, %v801
      %v803 = vrot.slane %v802, 1
      %v804 = vadd.f32 %v802, %v803
      %v805 = vsel %vm643, %v408, 0.0
      %v806 = vrot.slane %v805, 4
      %v807 = vadd.f32 %v805, %v806
      %v808 = vrot.slane %v807, 2
      %v809 = vadd.f32 %v807, %v808
      %v810 = vrot.slane %v809, 1
      %v811 = vadd.f32 %v809, %v810
      %v812 = vsel %vm643, %v416, 0.0
      %v813 = vrot.slane %v812, 4
      %v814 = vadd.f32 %v812, %v813
      %v815 = vrot.slane %v814, 2
      %v816 = vadd.f32 %v814, %v815
      %v817 = vrot.slane %v816, 1
      %v818 = vadd.f32 %v816, %v817
      %v819 = vsel %vm643, %v424, 0.0
      %v820 = vrot.slane %v819, 4
      %v821 = vadd.f32 %v819, %v820
      %v822 = vrot.slane %v821, 2
      %v823 = vadd.f32 %v821, %v822
      %v824 = vrot.slane %v823, 1
      %v825 = vadd.f32 %v823, %v824
      %v826 = vsel %vm643, %v423, 0.0
      %v827 = vrot.slane %v826, 4
      %v828 = vadd.f32 %v826, %v827
      %v829 = vrot.slane %v828, 2
      %v830 = vadd.f32 %v828, %v829
      %v831 = vrot.slane %v830, 1
      %v832 = vadd.f32 %v830, %v831
      %v833 = vsel %vm643, %v425, 0.0
      %v834 = vrot.slane %v833, 4
      %v835 = vadd.f32 %v833, %v834
      %v836 = vrot.slane %v835, 2
      %v837 = vadd.f32 %v835, %v836
      %v838 = vrot.slane %v837, 1
      %v839 = vadd.f32 %v837, %v838
      %v840 = vsel %vm643, %v433, 0.0
      %v841 = vrot.slane %v840, 4
      %v842 = vadd.f32 %v840, %v841
      %v843 = vrot.slane %v842, 2
      %v844 = vadd.f32 %v842, %v843
      %v845 = vrot.slane %v844, 1
      %v846 = vadd.f32 %v844, %v845
      %v847 = vsel %vm643, %v441, 0.0
      %v848 = vrot.slane %v847, 4
      %v849 = vadd.f32 %v847, %v848
      %v850 = vrot.slane %v849, 2
      %v851 = vadd.f32 %v849, %v850
      %v852 = vrot.slane %v851, 1
      %v853 = vadd.f32 %v851, %v852
      %v854 = vsel %vm643, %v440, 0.0
      %v855 = vrot.slane %v854, 4
      %v856 = vadd.f32 %v854, %v855
      %v857 = vrot.slane %v856, 2
      %v858 = vadd.f32 %v856, %v857
      %v859 = vrot.slane %v858, 1
      %v860 = vadd.f32 %v858, %v859
      %v861 = vsel %vm643, %v442, 0.0
      %v862 = vrot.slane %v861, 4
      %v863 = vadd.f32 %v861, %v862
      %v864 = vrot.slane %v863, 2
      %v865 = vadd.f32 %v863, %v864
      %v866 = vrot.slane %v865, 1
      %v867 = vadd.f32 %v865, %v866
      %v868 = vsel %vm643, %v450, 0.0
      %v869 = vrot.slane %v868, 4
      %v870 = vadd.f32 %v868, %v869
      %v871 = vrot.slane %v870, 2
      %v872 = vadd.f32 %v870, %v871
      %v873 = vrot.slane %v872, 1
      %v874 = vadd.f32 %v872, %v873
      %v875 = vsel %vm643, %v458, 0.0
      %v876 = vrot.slane %v875, 4
      %v877 = vadd.f32 %v875, %v876
      %v878 = vrot.slane %v877, 2
      %v879 = vadd.f32 %v877, %v878
      %v880 = vrot.slane %v879, 1
      %v881 = vadd.f32 %v879, %v880
      %v882 = vsel %vm643, %v457, 0.0
      %v883 = vrot.slane %v882, 4
      %v884 = vadd.f32 %v882, %v883
      %v885 = vrot.slane %v884, 2
      %v886 = vadd.f32 %v884, %v885
      %v887 = vrot.slane %v886, 1
      %v888 = vadd.f32 %v886, %v887
      %v889 = vsel %vm643, %v459, 0.0
      %v890 = vrot.slane %v889, 4
      %v891 = vadd.f32 %v889, %v890
      %v892 = vrot.slane %v891, 2
      %v893 = vadd.f32 %v891, %v892
      %v894 = vrot.slane %v893, 1
      %v895 = vadd.f32 %v893, %v894
      %v896 = vsel %vm643, %v467, 0.0
      %v897 = vrot.slane %v896, 4
      %v898 = vadd.f32 %v896, %v897
      %v899 = vrot.slane %v898, 2
      %v900 = vadd.f32 %v898, %v899
      %v901 = vrot.slane %v900, 1
      %v902 = vadd.f32 %v900, %v901
      %v903 = vsel %vm643, %v475, 0.0
      %v904 = vrot.slane %v903, 4
      %v905 = vadd.f32 %v903, %v904
      %v906 = vrot.slane %v905, 2
      %v907 = vadd.f32 %v905, %v906
      %v908 = vrot.slane %v907, 1
      %v909 = vadd.f32 %v907, %v908
      %v910 = vsel %vm643, %v474, 0.0
      %v911 = vrot.slane %v910, 4
      %v912 = vadd.f32 %v910, %v911
      %v913 = vrot.slane %v912, 2
      %v914 = vadd.f32 %v912, %v913
      %v915 = vrot.slane %v914, 1
      %v916 = vadd.f32 %v914, %v915
      %v917 = vsel %vm643, %v476, 0.0
      %v918 = vrot.slane %v917, 4
      %v919 = vadd.f32 %v917, %v918
      %v920 = vrot.slane %v919, 2
      %v921 = vadd.f32 %v919, %v920
      %v922 = vrot.slane %v921, 1
      %v923 = vadd.f32 %v921, %v922
      %v924 = vsel %vm643, %v484, 0.0
      %v925 = vrot.slane %v924, 4
      %v926 = vadd.f32 %v924, %v925
      %v927 = vrot.slane %v926, 2
      %v928 = vadd.f32 %v926, %v927
      %v929 = vrot.slane %v928, 1
      %v930 = vadd.f32 %v928, %v929
      %v931 = vsel %vm643, %v492, 0.0
      %v932 = vrot.slane %v931, 4
      %v933 = vadd.f32 %v931, %v932
      %v934 = vrot.slane %v933, 2
      %v935 = vadd.f32 %v933, %v934
      %v936 = vrot.slane %v935, 1
      %v937 = vadd.f32 %v935, %v936
      %v938 = vsel %vm643, %v491, 0.0
      %v939 = vrot.slane %v938, 4
      %v940 = vadd.f32 %v938, %v939
      %v941 = vrot.slane %v940, 2
      %v942 = vadd.f32 %v940, %v941
      %v943 = vrot.slane %v942, 1
      %v944 = vadd.f32 %v942, %v943
      %v945 = vsel %vm643, %v493, 0.0
      %v946 = vrot.slane %v945, 4
      %v947 = vadd.f32 %v945, %v946
      %v948 = vrot.slane %v947, 2
      %v949 = vadd.f32 %v947, %v948
      %v950 = vrot.slane %v949, 1
      %v951 = vadd.f32 %v949, %v950
      %v952 = vsel %vm643, %v501, 0.0
      %v953 = vrot.slane %v952, 4
      %v954 = vadd.f32 %v952, %v953
      %v955 = vrot.slane %v954, 2
      %v956 = vadd.f32 %v954, %v955
      %v957 = vrot.slane %v956, 1
      %v958 = vadd.f32 %v956, %v957
      %v959 = vsel %vm643, %v509, 0.0
      %v960 = vrot.slane %v959, 4
      %v961 = vadd.f32 %v959, %v960
      %v962 = vrot.slane %v961, 2
      %v963 = vadd.f32 %v961, %v962
      %v964 = vrot.slane %v963, 1
      %v965 = vadd.f32 %v963, %v964
      %v966 = vsel %vm643, %v508, 0.0
      %v967 = vrot.slane %v966, 4
      %v968 = vadd.f32 %v966, %v967
      %v969 = vrot.slane %v968, 2
      %v970 = vadd.f32 %v968, %v969
      %v971 = vrot.slane %v970, 1
      %v972 = vadd.f32 %v970, %v971
      %v973 = vsel %vm643, %v510, 0.0
      %v974 = vrot.slane %v973, 4
      %v975 = vadd.f32 %v973, %v974
      %v976 = vrot.slane %v975, 2
      %v977 = vadd.f32 %v975, %v976
      %v978 = vrot.slane %v977, 1
      %v979 = vadd.f32 %v977, %v978
      %v980 = vsel %vm643, %v518, 0.0
      %v981 = vrot.slane %v980, 4
      %v982 = vadd.f32 %v980, %v981
      %v983 = vrot.slane %v982, 2
      %v984 = vadd.f32 %v982, %v983
      %v985 = vrot.slane %v984, 1
      %v986 = vadd.f32 %v984, %v985
      %v987 = vsel %vm643, %v526, 0.0
      %v988 = vrot.slane %v987, 4
      %v989 = vadd.f32 %v987, %v988
      %v990 = vrot.slane %v989, 2
      %v991 = vadd.f32 %v989, %v990
      %v992 = vrot.slane %v991, 1
      %v993 = vadd.f32 %v991, %v992
      %v994 = vsel %vm643, %v525, 0.0
      %v995 = vrot.slane %v994, 4
      %v996 = vadd.f32 %v994, %v995
      %v997 = vrot.slane %v996, 2
      %v998 = vadd.f32 %v996, %v997
      %v999 = vrot.slane %v998, 1
      %v1000 = vadd.f32 %v998, %v999
      %v1001 = vsel %vm643, %v527, 0.0
      %v1002 = vrot.slane %v1001, 4
      %v1003 = vadd.f32 %v1001, %v1002
      %v1004 = vrot.slane %v1003, 2
      %v1005 = vadd.f32 %v1003, %v1004
      %v1006 = vrot.slane %v1005, 1
      %v1007 = vadd.f32 %v1005, %v1006
      %v1008 = vsel %vm643, %v535, 0.0
      %v1009 = vrot.slane %v1008, 4
      %v1010 = vadd.f32 %v1008, %v1009
      %v1011 = vrot.slane %v1010, 2
      %v1012 = vadd.f32 %v1010, %v1011
      %v1013 = vrot.slane %v1012, 1
      %v1014 = vadd.f32 %v1012, %v1013
      %v1015 = vsel %vm643, %v543, 0.0
      %v1016 = vrot.slane %v1015, 4
      %v1017 = vadd.f32 %v1015, %v1016
      %v1018 = vrot.slane %v1017, 2
      %v1019 = vadd.f32 %v1017, %v1018
      %v1020 = vrot.slane %v1019, 1
      %v1021 = vadd.f32 %v1019, %v1020
      %v1022 = vsel %vm643, %v542, 0.0
      %v1023 = vrot.slane %v1022, 4
      %v1024 = vadd.f32 %v1022, %v1023
      %v1025 = vrot.slane %v1024, 2
      %v1026 = vadd.f32 %v1024, %v1025
      %v1027 = vrot.slane %v1026, 1
      %v1028 = vadd.f32 %v1026, %v1027
      %v1029 = vsel %vm643, %v544, 0.0
      %v1030 = vrot.slane %v1029, 4
      %v1031 = vadd.f32 %v1029, %v1030
      %v1032 = vrot.slane %v1031, 2
      %v1033 = vadd.f32 %v1031, %v1032
      %v1034 = vrot.slane %v1033, 1
      %v1035 = vadd.f32 %v1033, %v1034
      %v1036 = vsel %vm643, %v552, 0.0
      %v1037 = vrot.slane %v1036, 4
      %v1038 = vadd.f32 %v1036, %v1037
      %v1039 = vrot.slane %v1038, 2
      %v1040 = vadd.f32 %v1038, %v1039
      %v1041 = vrot.slane %v1040, 1
      %v1042 = vadd.f32 %v1040, %v1041
      %v1043 = vsel %vm643, %v560, 0.0
      %v1044 = vrot.slane %v1043, 4
      %v1045 = vadd.f32 %v1043, %v1044
      %v1046 = vrot.slane %v1045, 2
      %v1047 = vadd.f32 %v1045, %v1046
      %v1048 = vrot.slane %v1047, 1
      %v1049 = vadd.f32 %v1047, %v1048
      %v1050 = vsel %vm643, %v559, 0.0
      %v1051 = vrot.slane %v1050, 4
      %v1052 = vadd.f32 %v1050, %v1051
      %v1053 = vrot.slane %v1052, 2
      %v1054 = vadd.f32 %v1052, %v1053
      %v1055 = vrot.slane %v1054, 1
      %v1056 = vadd.f32 %v1054, %v1055
      %v1057 = vsel %vm643, %v561, 0.0
      %v1058 = vrot.slane %v1057, 4
      %v1059 = vadd.f32 %v1057, %v1058
      %v1060 = vrot.slane %v1059, 2
      %v1061 = vadd.f32 %v1059, %v1060
      %v1062 = vrot.slane %v1061, 1
      %v1063 = vadd.f32 %v1061, %v1062
      %v1064 = vsel %vm643, %v569, 0.0
      %v1065 = vrot.slane %v1064, 4
      %v1066 = vadd.f32 %v1064, %v1065
      %v1067 = vrot.slane %v1066, 2
      %v1068 = vadd.f32 %v1066, %v1067
      %v1069 = vrot.slane %v1068, 1
      %v1070 = vadd.f32 %v1068, %v1069
      %v1071 = vsel %vm643, %v577, 0.0
      %v1072 = vrot.slane %v1071, 4
      %v1073 = vadd.f32 %v1071, %v1072
      %v1074 = vrot.slane %v1073, 2
      %v1075 = vadd.f32 %v1073, %v1074
      %v1076 = vrot.slane %v1075, 1
      %v1077 = vadd.f32 %v1075, %v1076
      %v1078 = vsel %vm643, %v576, 0.0
      %v1079 = vrot.slane %v1078, 4
      %v1080 = vadd.f32 %v1078, %v1079
      %v1081 = vrot.slane %v1080, 2
      %v1082 = vadd.f32 %v1080, %v1081
      %v1083 = vrot.slane %v1082, 1
      %v1084 = vadd.f32 %v1082, %v1083
      %v1085 = vsel %vm643, %v578, 0.0
      %v1086 = vrot.slane %v1085, 4
      %v1087 = vadd.f32 %v1085, %v1086
      %v1088 = vrot.slane %v1087, 2
      %v1089 = vadd.f32 %v1087, %v1088
      %v1090 = vrot.slane %v1089, 1
      %v1091 = vadd.f32 %v1089, %v1090
      %v1092 = vmul.f32 %v650, 0.25
      %v1093 = vmul.f32 %v657, 0.25
      %v1094 = vmul.f32 %v664, 0.25
      %v1095 = vmul.f32 %v671, 0.25
      %v1096 = vmul.f32 %v678, 0.25
      %v1097 = vmul.f32 %v685, 0.25
      %v1098 = vmul.f32 %v692, 0.25
      %v1099 = vmul.f32 %v699, 0.25
      %v1100 = vmul.f32 %v706, 0.25
      %v1101 = vmul.f32 %v713, 0.25
      %v1102 = vmul.f32 %v720, 0.25
      %v1103 = vmul.f32 %v727, 0.25
      %v1104 = vmul.f32 %v734, 0.25
      %v1105 = vmul.f32 %v741, 0.25
      %v1106 = vmul.f32 %v748, 0.25
      %v1107 = vmul.f32 %v755, 0.25
      %v1108 = vmul.f32 %v762, 0.25
      %v1109 = vmul.f32 %v769, 0.25
      %v1110 = vmul.f32 %v776, 0.25
      %v1111 = vmul.f32 %v783, 0.25
      %v1112 = vmul.f32 %v790, 0.25
      %v1113 = vmul.f32 %v797, 0.25
      %v1114 = vmul.f32 %v804, 0.25
      %v1115 = vmul.f32 %v811, 0.25
      %v1116 = vmul.f32 %v818, 0.25
      %v1117 = vmul.f32 %v825, 0.25
      %v1118 = vmul.f32 %v832, 0.25
      %v1119 = vmul.f32 %v839, 0.25
      %v1120 = vmul.f32 %v846, 0.25
      %v1121 = vmul.f32 %v853, 0.25
      %v1122 = vmul.f32 %v860, 0.25
      %v1123 = vmul.f32 %v867, 0.25
      %v1124 = vmul.f32 %v874, 0.25
      %v1125 = vmul.f32 %v881, 0.25
      %v1126 = vmul.f32 %v888, 0.25
      %v1127 = vmul.f32 %v895, 0.25
      %v1128 = vmul.f32 %v902, 0.25
      %v1129 = vmul.f32 %v909, 0.25
      %v1130 = vmul.f32 %v916, 0.25
      %v1131 = vmul.f32 %v923, 0.25
      %v1132 = vmul.f32 %v930, 0.25
      %v1133 = vmul.f32 %v937, 0.25
      %v1134 = vmul.f32 %v944, 0.25
      %v1135 = vmul.f32 %v951, 0.25
      %v1136 = vmul.f32 %v958, 0.25
      %v1137 = vmul.f32 %v965, 0.25
      %v1138 = vmul.f32 %v972, 0.25
      %v1139 = vmul.f32 %v979, 0.25
      %v1140 = vmul.f32 %v986, 0.25
      %v1141 = vmul.f32 %v993, 0.25
      %v1142 = vmul.f32 %v1000, 0.25
      %v1143 = vmul.f32 %v1007, 0.25
      %v1144 = vmul.f32 %v1014, 0.25
      %v1145 = vmul.f32 %v1021, 0.25
      %v1146 = vmul.f32 %v1028, 0.25
      %v1147 = vmul.f32 %v1035, 0.25
      %v1148 = vmul.f32 %v1042, 0.25
      %v1149 = vmul.f32 %v1049, 0.25
      %v1150 = vmul.f32 %v1056, 0.25
      %v1151 = vmul.f32 %v1063, 0.25
      %v1152 = vmul.f32 %v1070, 0.25
      %v1153 = vmul.f32 %v1077, 0.25
      %v1154 = vmul.f32 %v1084, 0.25
      %v1155 = vmul.f32 %v1091, 0.25
      %v1156 = vpack.c.bf16 %v1092, %v1092
      %v1157 = vpack.c.bf16 %v1093, %v1093
      %v1158 = vpack.c.bf16 %v1094, %v1094
      %v1159 = vpack.c.bf16 %v1095, %v1095
      %v1160 = vpack.c.bf16 %v1096, %v1096
      %v1161 = vpack.c.bf16 %v1097, %v1097
      %v1162 = vpack.c.bf16 %v1098, %v1098
      %v1163 = vpack.c.bf16 %v1099, %v1099
      %v1164 = vpack.c.bf16 %v1100, %v1100
      %v1165 = vpack.c.bf16 %v1101, %v1101
      %v1166 = vpack.c.bf16 %v1102, %v1102
      %v1167 = vpack.c.bf16 %v1103, %v1103
      %v1168 = vpack.c.bf16 %v1104, %v1104
      %v1169 = vpack.c.bf16 %v1105, %v1105
      %v1170 = vpack.c.bf16 %v1106, %v1106
      %v1171 = vpack.c.bf16 %v1107, %v1107
      %v1172 = vpack.c.bf16 %v1108, %v1108
      %v1173 = vpack.c.bf16 %v1109, %v1109
      %v1174 = vpack.c.bf16 %v1110, %v1110
      %v1175 = vpack.c.bf16 %v1111, %v1111
      %v1176 = vpack.c.bf16 %v1112, %v1112
      %v1177 = vpack.c.bf16 %v1113, %v1113
      %v1178 = vpack.c.bf16 %v1114, %v1114
      %v1179 = vpack.c.bf16 %v1115, %v1115
      %v1180 = vpack.c.bf16 %v1116, %v1116
      %v1181 = vpack.c.bf16 %v1117, %v1117
      %v1182 = vpack.c.bf16 %v1118, %v1118
      %v1183 = vpack.c.bf16 %v1119, %v1119
      %v1184 = vpack.c.bf16 %v1120, %v1120
      %v1185 = vpack.c.bf16 %v1121, %v1121
      %v1186 = vpack.c.bf16 %v1122, %v1122
      %v1187 = vpack.c.bf16 %v1123, %v1123
      %v1188 = vpack.c.bf16 %v1124, %v1124
      %v1189 = vpack.c.bf16 %v1125, %v1125
      %v1190 = vpack.c.bf16 %v1126, %v1126
      %v1191 = vpack.c.bf16 %v1127, %v1127
      %v1192 = vpack.c.bf16 %v1128, %v1128
      %v1193 = vpack.c.bf16 %v1129, %v1129
      %v1194 = vpack.c.bf16 %v1130, %v1130
      %v1195 = vpack.c.bf16 %v1131, %v1131
      %v1196 = vpack.c.bf16 %v1132, %v1132
      %v1197 = vpack.c.bf16 %v1133, %v1133
      %v1198 = vpack.c.bf16 %v1134, %v1134
      %v1199 = vpack.c.bf16 %v1135, %v1135
      %v1200 = vpack.c.bf16 %v1136, %v1136
      %v1201 = vpack.c.bf16 %v1137, %v1137
      %v1202 = vpack.c.bf16 %v1138, %v1138
      %v1203 = vpack.c.bf16 %v1139, %v1139
      %v1204 = vpack.c.bf16 %v1140, %v1140
      %v1205 = vpack.c.bf16 %v1141, %v1141
      %v1206 = vpack.c.bf16 %v1142, %v1142
      %v1207 = vpack.c.bf16 %v1143, %v1143
      %v1208 = vpack.c.bf16 %v1144, %v1144
      %v1209 = vpack.c.bf16 %v1145, %v1145
      %v1210 = vpack.c.bf16 %v1146, %v1146
      %v1211 = vpack.c.bf16 %v1147, %v1147
      %v1212 = vpack.c.bf16 %v1148, %v1148
      %v1213 = vpack.c.bf16 %v1149, %v1149
      %v1214 = vpack.c.bf16 %v1150, %v1150
      %v1215 = vpack.c.bf16 %v1151, %v1151
      %v1216 = vpack.c.bf16 %v1152, %v1152
      %v1217 = vpack.c.bf16 %v1153, %v1153
      %v1218 = vpack.c.bf16 %v1154, %v1154
      %v1219 = vpack.c.bf16 %v1155, %v1155
      %v1220 = vld [vmem:[%s1] sm:$0x3]
      %v1221 = vld [vmem:[%s2] sm:$0x1]
      %v1223 = vlaneseq
      %v1224 = vshrl.u32 %v1223, 7
      %v1225 = vsub.s32 0, %v1224
      %v1226 = vrot.slane %v1221, %v1225
      %v1292 = vunpack.c.l.b16 %v1156
      %v1293 = vunpack.c.l.b16 %v1157
      %v1294 = vunpack.c.l.b16 %v1158
      %v1295 = vunpack.c.l.b16 %v1159
      %v1296 = vunpack.c.l.b16 %v1160
      %v1297 = vunpack.c.l.b16 %v1161
      %v1298 = vunpack.c.l.b16 %v1162
      %v1299 = vunpack.c.l.b16 %v1163
      %v1300 = vunpack.c.l.b16 %v1164
      %v1301 = vunpack.c.l.b16 %v1165
      %v1302 = vunpack.c.l.b16 %v1166
      %v1303 = vunpack.c.l.b16 %v1167
      %v1304 = vunpack.c.l.b16 %v1168
      %v1305 = vunpack.c.l.b16 %v1169
      %v1306 = vunpack.c.l.b16 %v1170
      %v1307 = vunpack.c.l.b16 %v1171
      %v1308 = vunpack.c.l.b16 %v1172
      %v1309 = vunpack.c.l.b16 %v1173
      %v1310 = vunpack.c.l.b16 %v1174
      %v1311 = vunpack.c.l.b16 %v1175
      %v1312 = vunpack.c.l.b16 %v1176
      %v1313 = vunpack.c.l.b16 %v1177
      %v1314 = vunpack.c.l.b16 %v1178
      %v1315 = vunpack.c.l.b16 %v1179
      %v1316 = vunpack.c.l.b16 %v1180
      %v1317 = vunpack.c.l.b16 %v1181
      %v1318 = vunpack.c.l.b16 %v1182
      %v1319 = vunpack.c.l.b16 %v1183
      %v1320 = vunpack.c.l.b16 %v1184
      %v1321 = vunpack.c.l.b16 %v1185
      %v1322 = vunpack.c.l.b16 %v1186
      %v1323 = vunpack.c.l.b16 %v1187
      %v1324 = vunpack.c.l.b16 %v1188
      %v1325 = vunpack.c.l.b16 %v1189
      %v1326 = vunpack.c.l.b16 %v1190
      %v1327 = vunpack.c.l.b16 %v1191
      %v1328 = vunpack.c.l.b16 %v1192
      %v1329 = vunpack.c.l.b16 %v1193
      %v1330 = vunpack.c.l.b16 %v1194
      %v1331 = vunpack.c.l.b16 %v1195
      %v1332 = vunpack.c.l.b16 %v1196
      %v1333 = vunpack.c.l.b16 %v1197
      %v1334 = vunpack.c.l.b16 %v1198
      %v1335 = vunpack.c.l.b16 %v1199
      %v1336 = vunpack.c.l.b16 %v1200
      %v1337 = vunpack.c.l.b16 %v1201
      %v1338 = vunpack.c.l.b16 %v1202
      %v1339 = vunpack.c.l.b16 %v1203
      %v1340 = vunpack.c.l.b16 %v1204
      %v1341 = vunpack.c.l.b16 %v1205
      %v1342 = vunpack.c.l.b16 %v1206
      %v1343 = vunpack.c.l.b16 %v1207
      %v1344 = vunpack.c.l.b16 %v1208
      %v1345 = vunpack.c.l.b16 %v1209
      %v1346 = vunpack.c.l.b16 %v1210
      %v1347 = vunpack.c.l.b16 %v1211
      %v1348 = vunpack.c.l.b16 %v1212
      %v1349 = vunpack.c.l.b16 %v1213
      %v1350 = vunpack.c.l.b16 %v1214
      %v1351 = vunpack.c.l.b16 %v1215
      %v1352 = vunpack.c.l.b16 %v1216
      %v1353 = vunpack.c.l.b16 %v1217
      %v1354 = vunpack.c.l.b16 %v1218
      %v1355 = vunpack.c.l.b16 %v1219
      %vm1356 = vcmask 1041409
      %v1357 = vsel %vm1356, %v1293, %v1292
      %vm1358 = vcmask 1042434
      %v1359 = vsel %vm1358, %v1294, %v1357
      %vm1360 = vcmask 1043459
      %v1361 = vsel %vm1360, %v1295, %v1359
      %vm1362 = vcmask 1044484
      %v1363 = vsel %vm1362, %v1296, %v1361
      %vm1364 = vcmask 1045509
      %v1365 = vsel %vm1364, %v1297, %v1363
      %vm1366 = vcmask 1046534
      %v1367 = vsel %vm1366, %v1298, %v1365
      %vm1368 = vcmask 1047559
      %v1369 = vsel %vm1368, %v1299, %v1367
      %v1370 = vsel %vm1356, %v1301, %v1300
      %v1371 = vsel %vm1358, %v1302, %v1370
      %v1372 = vsel %vm1360, %v1303, %v1371
      %v1373 = vsel %vm1362, %v1304, %v1372
      %v1374 = vsel %vm1364, %v1305, %v1373
      %v1375 = vsel %vm1366, %v1306, %v1374
      %v1376 = vsel %vm1368, %v1307, %v1375
      %v1377 = vsel %vm1356, %v1309, %v1308
      %v1378 = vsel %vm1358, %v1310, %v1377
      %v1379 = vsel %vm1360, %v1311, %v1378
      %v1380 = vsel %vm1362, %v1312, %v1379
      %v1381 = vsel %vm1364, %v1313, %v1380
      %v1382 = vsel %vm1366, %v1314, %v1381
      %v1383 = vsel %vm1368, %v1315, %v1382
      %v1384 = vsel %vm1356, %v1317, %v1316
      %v1385 = vsel %vm1358, %v1318, %v1384
      %v1386 = vsel %vm1360, %v1319, %v1385
      %v1387 = vsel %vm1362, %v1320, %v1386
      %v1388 = vsel %vm1364, %v1321, %v1387
      %v1389 = vsel %vm1366, %v1322, %v1388
      %v1390 = vsel %vm1368, %v1323, %v1389
      %v1391 = vsel %vm1356, %v1325, %v1324
      %v1392 = vsel %vm1358, %v1326, %v1391
      %v1393 = vsel %vm1360, %v1327, %v1392
      %v1394 = vsel %vm1362, %v1328, %v1393
      %v1395 = vsel %vm1364, %v1329, %v1394
      %v1396 = vsel %vm1366, %v1330, %v1395
      %v1397 = vsel %vm1368, %v1331, %v1396
      %v1398 = vsel %vm1356, %v1333, %v1332
      %v1399 = vsel %vm1358, %v1334, %v1398
      %v1400 = vsel %vm1360, %v1335, %v1399
      %v1401 = vsel %vm1362, %v1336, %v1400
      %v1402 = vsel %vm1364, %v1337, %v1401
      %v1403 = vsel %vm1366, %v1338, %v1402
      %v1404 = vsel %vm1368, %v1339, %v1403
      %v1405 = vsel %vm1356, %v1341, %v1340
      %v1406 = vsel %vm1358, %v1342, %v1405
      %v1407 = vsel %vm1360, %v1343, %v1406
      %v1408 = vsel %vm1362, %v1344, %v1407
      %v1409 = vsel %vm1364, %v1345, %v1408
      %v1410 = vsel %vm1366, %v1346, %v1409
      %v1411 = vsel %vm1368, %v1347, %v1410
      %v1412 = vsel %vm1356, %v1349, %v1348
      %v1413 = vsel %vm1358, %v1350, %v1412
      %v1414 = vsel %vm1360, %v1351, %v1413
      %v1415 = vsel %vm1362, %v1352, %v1414
      %v1416 = vsel %vm1364, %v1353, %v1415
      %v1417 = vsel %vm1366, %v1354, %v1416
      %v1418 = vsel %vm1368, %v1355, %v1417
      %v1419 = vpack.c.b16 %v1376, %v1369
      %v1420 = vpack.c.b16 %v1390, %v1383
      %v1421 = vpack.c.b16 %v1404, %v1397
      %v1422 = vpack.c.b16 %v1418, %v1411
      %v1424 = vsel %vm242, %v1419, 0
      %v1427 = vsel %vm242, %v1420, 0
      %v1430 = vsel %vm242, %v1421, 0
      %v1433 = vsel %vm242, %v1422, 0
      %vm1435 = vcmask 1040384
      %vm1436 = vcmask 1041408
      %v1437 = vsel %vm1435, 4294967295, 65535
      %v1438 = vsel %vm1436, %v1437, 0
      %v1440 = vand.u32 %v1220, %v1438
      %1442 = vmatprep.subr.bf16.mxu0 0
      %1443 = vmatpush1.bf16.msra.mxu0 %v1440
      %1444 = vmatprep.subr.bf16.mxu0 0
      %1445 = vmatpush1.bf16.msra.mxu0 0
      %1446 = vmatprep.subr.bf16.mxu0 0
      %1447 = vmatpush1.bf16.msra.mxu0 0
      %1448 = vmatprep.subr.bf16.mxu0 0
      %1449 = vmatpush1.bf16.msra.mxu0 0
      %1450 = vmatprep.subr.bf16.mxu0 0
      %1451 = vmatpush1.bf16.msra.mxu0 0
      %1452 = vmatprep.subr.bf16.mxu0 0
      %1453 = vmatpush1.bf16.msra.mxu0 0
      %1454 = vmatprep.subr.bf16.mxu0 0
      %1455 = vmatpush1.bf16.msra.mxu0 0
      %1456 = vmatprep.subr.bf16.mxu0 0
      %1457 = vmatpush1.bf16.msra.mxu0 0
      %1458 = vmatprep.subr.bf16.mxu0 0
      %1459 = vmatpush1.bf16.msra.mxu0 0
      %1460 = vmatprep.subr.bf16.mxu0 0
      %1461 = vmatpush1.bf16.msra.mxu0 0
      %1462 = vmatprep.subr.bf16.mxu0 0
      %1463 = vmatpush1.bf16.msra.mxu0 0
      %1464 = vmatprep.subr.bf16.mxu0 0
      %1465 = vmatpush1.bf16.msra.mxu0 0
      %1466 = vmatprep.subr.bf16.mxu0 0
      %1467 = vmatpush1.bf16.msra.mxu0 0
      %1468 = vmatprep.subr.bf16.mxu0 0
      %1469 = vmatpush1.bf16.msra.mxu0 0
      %1470 = vmatprep.subr.bf16.mxu0 0
      %1471 = vmatpush1.bf16.msra.mxu0 0
      %1472 = vmatprep.subr.bf16.mxu0 0
      %1473 = vmatpush1.bf16.msra.mxu0 0
      %1474 = vmatprep.mubr.bf16.mxu0 0
      %1475 = vmatmul.mubr.bf16.gmra.mrb[0].mxu0 %v1424
      %v1476 = vpop.f32.mrb[0].mxu0
      %v1477 = vadd.f32 %v1226, %v1476
      %v1478 = vpop.f32.mrb[0].mxu0
      %v1479 = vpop.f32.mrb[0].mxu0
      %v1480 = vadd.f32 %v1226, %v1479
      %v1481 = vpop.f32.mrb[0].mxu0
      %1482 = vmatprep.mubr.bf16.mxu0 0
      %1483 = vmatmul.mubr.bf16.gmra.mrb[0].mxu0 %v1427
      %v1484 = vpop.f32.mrb[0].mxu0
      %v1485 = vadd.f32 %v1226, %v1484
      %v1486 = vpop.f32.mrb[0].mxu0
      %v1487 = vpop.f32.mrb[0].mxu0
      %v1488 = vadd.f32 %v1226, %v1487
      %v1489 = vpop.f32.mrb[0].mxu0
      %1490 = vmatprep.mubr.bf16.mxu0 0
      %1491 = vmatmul.mubr.bf16.gmra.mrb[0].mxu0 %v1430
      %v1492 = vpop.f32.mrb[0].mxu0
      %v1493 = vadd.f32 %v1226, %v1492
      %v1494 = vpop.f32.mrb[0].mxu0
      %v1495 = vpop.f32.mrb[0].mxu0
      %v1496 = vadd.f32 %v1226, %v1495
      %v1497 = vpop.f32.mrb[0].mxu0
      %1498 = vmatprep.mubr.bf16.mxu0 0
      %1499 = vmatmul.mubr.bf16.gmra.mrb[0].mxu0 %v1433
      %v1500 = vpop.f32.mrb[0].mxu0
      %v1501 = vadd.f32 %v1226, %v1500
      %v1502 = vpop.f32.mrb[0].mxu0
      %v1503 = vpop.f32.mrb[0].mxu0
      %v1504 = vadd.f32 %v1226, %v1503
      %v1505 = vpop.f32.mrb[0].mxu0
      %1506 = vdwg.mxu0
      %v1507 = vmax.f32 %v1477, 0.0
      %v1508 = vmax.f32 %v1480, 0.0
      %v1509 = vmax.f32 %v1485, 0.0
      %v1510 = vmax.f32 %v1488, 0.0
      %v1511 = vmax.f32 %v1493, 0.0
      %v1512 = vmax.f32 %v1496, 0.0
      %v1513 = vmax.f32 %v1501, 0.0
      %v1514 = vmax.f32 %v1504, 0.0
      %v1515 = vpack.c.bf16 %v1507, %v1507
      %v1516 = vpack.c.bf16 %v1508, %v1508
      %v1517 = vpack.c.bf16 %v1509, %v1509
      %v1518 = vpack.c.bf16 %v1510, %v1510
      %v1519 = vpack.c.bf16 %v1511, %v1511
      %v1520 = vpack.c.bf16 %v1512, %v1512
      %v1521 = vpack.c.bf16 %v1513, %v1513
      %v1522 = vpack.c.bf16 %v1514, %v1514
      %vm1523 = vcmask 257024
      %1524 = vst.msk [vmem:[%s175] sm:$0xf] %vm1523, %v1515
      %1525 = vst.msk [vmem:[%s175 + $0x4] sm:$0xf] %vm1523, %v1516
      %1526 = vst.msk [vmem:[%s175 + $0x8] sm:$0xf] %vm1523, %v1517
      %1527 = vst.msk [vmem:[%s175 + $0xc] sm:$0xf] %vm1523, %v1518
      %1528 = vst.msk [vmem:[%s175 + $0x10] sm:$0xf] %vm1523, %v1519
      %1529 = vst.msk [vmem:[%s175 + $0x14] sm:$0xf] %vm1523, %v1520
      %1530 = vst.msk [vmem:[%s175 + $0x18] sm:$0xf] %vm1523, %v1521
      %1531 = vst.msk [vmem:[%s175 + $0x1c] sm:$0xf] %vm1523, %v1522
      %s1532 = smul.u32 8, %s14
      %p1533 = scmp.lt.s32.totalorder %s1532, 15
      %s1534 = scalar_select %p1533, %s1532, 15
      %s1535 = smul.addr %s1534, 4
      %s1536 = scalar_lea.vmem %s3, %s1535
      // Predicated region
      $region33: #{segmentation_simsiam_forward.11} parent=31 // pred_check
        %p1537 = pneg %p100
      $region34: #{segmentation_simsiam_forward.11} parent=31 // pred_check_branch
        %1539 = sbr.rel (%p1537) target = $region36
      $region35: #{segmentation_simsiam_forward.11} parent=31 // pred_region
        %s1540 = smul.u32 8, %s14
      $region36: #{segmentation_simsiam_forward.11} parent=31 // pred_fallthru
        _
    $region32: #{segmentation_simsiam_forward.11} parent=5 // pred_fallthru
      _
    %p1541 = scmp.le.s32.totalorder 2, %s9
    // Predicated region
    $region37: #{segmentation_simsiam_forward.11} parent=5 // pred_check
      %p1542 = pneg %p1541
    $region38: #{segmentation_simsiam_forward.11} parent=5 // pred_check_branch
      %1544 = sbr.rel (%p1542) target = $region40
    $region39: #{segmentation_simsiam_forward.11} parent=5 // pred_region
      %s1545 = ssub.s32 %s9, 2
      // Predicated region
      $region41: #{segmentation_simsiam_forward.11} parent=39 // pred_check
        %p1546 = pneg %p106
      $region42: #{segmentation_simsiam_forward.11} parent=39 // pred_check_branch
        %1548 = sbr.rel (%p1546) target = $region44
      $region43: #{segmentation_simsiam_forward.11} parent=39 // pred_region
        %s1549 = smul.u32 8, %s15
        %p1550 = scmp.lt.s32.totalorder %s1549, 15
        %s1551 = scalar_select %p1550, %s1549, 15
        %s1552 = smul.addr %s1551, 4
        %s1553 = scalar_lea.vmem %s3, %s1552
      $region44: #{segmentation_simsiam_forward.11} parent=39 // pred_fallthru
        _
    $region40: #{segmentation_simsiam_forward.11} parent=5 // pred_fallthru
      _
  $region6: #{segmentation_simsiam_forward.11} parent=0 // loop_footer
    %s13 = sadd.s32 1, %s9
  $region7: #{segmentation_simsiam_forward.11} parent=0 // loop_footer_branch
    %8 = sbr.rel target = $region3
  $region8: #{segmentation_simsiam_forward.11} parent=0 // loop_exit
    _

// kernel: segmentation_simsiam_forward.13
$region0: #{segmentation_simsiam_forward.13}
  #allocation0 [shape = 'u32[]', space=smem, size = 0x4, offset = 0x4, fixed_abs, tag = 'smem constant byte address 0x4 - core index']
  #allocation1 [shape = 'u32[144,128]{1,0:T(1,128)}', space=vmem, size = 0x12000, scoped, tag = 'internal scratch']
  %s0 = inlined_call_operand.vmem [shape: bf16[8,4,64], index: 0, kind: input, shape index: {}]
  %s1 = inlined_call_operand.vmem [shape: bf16[64,128], index: 1, kind: input, shape index: {}]
  %s2 = inlined_call_operand.vmem [shape: f32[1,128], index: 2, kind: input, shape index: {}]
  %s3 = inlined_call_operand.vmem [shape: bf16[4,2,128], index: 3, kind: output, shape index: {}]
  %s4 = sld [smem:[#allocation0]]
  $region45: #{segmentation_simsiam_forward.13} parent=0
    _
  %s6 = ssub.s32 1, %s4
  %s7 = scalar_select 0, %s6, %s4
  loop: start=0, step=1, limit=4
  $region2: #{segmentation_simsiam_forward.13} parent=0 // loop_pre_header
    _
  $region3: #{segmentation_simsiam_forward.13} parent=0 // loop_header
    %s9 = sphi 0, %s13
    %p10 = scmp.ge.s32.totalorder %s9, 4
    %s19 = sphi 0, %s21
    %s22 = sphi 0, %s19
    %s23 = sphi 0, %s22
    %s39 = sphi 0, %s23
    %s43 = sphi 0, %s43
    %s45 = sphi 0, %s43
    %s46 = sphi 0, %s45
    %s60 = sphi 0, %s46
    %s64 = sphi 0, %s64
    %s66 = sphi 0, %s64
    %s67 = sphi 0, %s66
    %s81 = sphi 0, %s67
    %s87 = sphi 0, %s89
    %s90 = sphi 0, %s87
    %s91 = sphi 0, %s90
    %s107 = sphi 0, %s91
  $region4: #{segmentation_simsiam_forward.13} parent=0 // loop_header_branch
    %12 = sbr.rel (%p10) target = $region8
  $region5: #{segmentation_simsiam_forward.13} parent=0 // loop_body
    %s14 = ssub.s32 %s9, 1
    %s15 = ssub.s32 %s9, 2
    %s16 = sadd.s32 %s9, 1
    %s17 = ssub.s32 %s9, %s16
    %p18 = scmp.eq.s32.totalorder %s17, 0
    %s20 = sadd.s32 %s19, 1
    %s21 = scalar_select %p18, %s19, %s20
    %p24 = pneg %p18
    %p25 = scmp.eq.s32.totalorder %s9, 1
    %p26 = por %p24, %p25
    %p27 = scmp.ne.s32.totalorder %s19, %s22
    %p28 = scmp.eq.s32.totalorder %s9, 0
    %p29 = por %p27, %p28
    %p30 = scmp.ne.s32.totalorder %s19, %s22
    %p31 = scmp.eq.s32.totalorder %s14, 1
    %p32 = por %p30, %p31
    %p33 = scmp.ne.s32.totalorder %s22, %s23
    %p34 = scmp.eq.s32.totalorder %s14, 0
    %p35 = por %p33, %p34
    %p36 = scmp.ne.s32.totalorder %s22, %s23
    %p37 = scmp.eq.s32.totalorder %s15, 1
    %p38 = por %p36, %p37
    %p40 = scmp.ne.s32.totalorder %s23, %s39
    %p41 = scmp.eq.s32.totalorder %s15, 0
    %p42 = por %p40, %p41
    %s44 = sadd.s32 %s43, 1
    %p47 = scmp.eq.s32.totalorder %s9, 1
    %p48 = scmp.ne.s32.totalorder %s43, %s45
    %p49 = scmp.eq.s32.totalorder %s9, 0
    %p50 = por %p48, %p49
    %p51 = scmp.ne.s32.totalorder %s43, %s45
    %p52 = scmp.eq.s32.totalorder %s14, 1
    %p53 = por %p51, %p52
    %p54 = scmp.ne.s32.totalorder %s45, %s46
    %p55 = scmp.eq.s32.totalorder %s14, 0
    %p56 = por %p54, %p55
    %p57 = scmp.ne.s32.totalorder %s45, %s46
    %p58 = scmp.eq.s32.totalorder %s15, 1
    %p59 = por %p57, %p58
    %p61 = scmp.ne.s32.totalorder %s46, %s60
    %p62 = scmp.eq.s32.totalorder %s15, 0
    %p63 = por %p61, %p62
    %s65 = sadd.s32 %s64, 1
    %p68 = scmp.eq.s32.totalorder %s9, 1
    %p69 = scmp.ne.s32.totalorder %s64, %s66
    %p70 = scmp.eq.s32.totalorder %s9, 0
    %p71 = por %p69, %p70
    %p72 = scmp.ne.s32.totalorder %s64, %s66
    %p73 = scmp.eq.s32.totalorder %s14, 1
    %p74 = por %p72, %p73
    %p75 = scmp.ne.s32.totalorder %s66, %s67
    %p76 = scmp.eq.s32.totalorder %s14, 0
    %p77 = por %p75, %p76
    %p78 = scmp.ne.s32.totalorder %s66, %s67
    %p79 = scmp.eq.s32.totalorder %s15, 1
    %p80 = por %p78, %p79
    %p82 = scmp.ne.s32.totalorder %s67, %s81
    %p83 = scmp.eq.s32.totalorder %s15, 0
    %p84 = por %p82, %p83
    %s85 = ssub.s32 %s9, %s16
    %p86 = scmp.eq.s32.totalorder %s85, 0
    %s88 = sadd.s32 %s87, 1
    %s89 = scalar_select %p86, %s87, %s88
    %p92 = pneg %p86
    %p93 = scmp.eq.s32.totalorder %s9, 1
    %p94 = por %p92, %p93
    %p95 = scmp.ne.s32.totalorder %s87, %s90
    %p96 = scmp.eq.s32.totalorder %s9, 0
    %p97 = por %p95, %p96
    %p98 = scmp.ne.s32.totalorder %s87, %s90
    %p99 = scmp.eq.s32.totalorder %s14, 1
    %p100 = por %p98, %p99
    %p101 = scmp.ne.s32.totalorder %s90, %s91
    %p102 = scmp.eq.s32.totalorder %s14, 0
    %p103 = por %p101, %p102
    %p104 = scmp.ne.s32.totalorder %s90, %s91
    %p105 = scmp.eq.s32.totalorder %s15, 1
    %p106 = por %p104, %p105
    %p108 = scmp.ne.s32.totalorder %s91, %s107
    %p109 = scmp.eq.s32.totalorder %s15, 0
    %p110 = por %p108, %p109
    %p111 = scmp.le.s32.totalorder 1, %s9
    %p112 = scmp.lt.s32.totalorder %s9, 3
    %p113 = pnand %p111, %p112
    %p114 = pneg %p113
    // Predicated region
    $region9: #{segmentation_simsiam_forward.13} parent=5 // pred_check
      _
    $region10: #{segmentation_simsiam_forward.13} parent=5 // pred_check_branch
      %116 = sbr.rel (%p113) target = $region12
    $region11: #{segmentation_simsiam_forward.13} parent=5 // pred_region
      %s117 = ssub.s32 %s9, 1
      // Predicated region
      $region13: #{segmentation_simsiam_forward.13} parent=11 // pred_check
        %p118 = pneg %p56
      $region14: #{segmentation_simsiam_forward.13} parent=11 // pred_check_branch
        %120 = sbr.rel (%p118) target = $region16
      $region15: #{segmentation_simsiam_forward.13} parent=11 // pred_region
        _
      $region16: #{segmentation_simsiam_forward.13} parent=11 // pred_fallthru
        _
      // Predicated region
      $region17: #{segmentation_simsiam_forward.13} parent=11 // pred_check
        %p121 = pneg %p77
      $region18: #{segmentation_simsiam_forward.13} parent=11 // pred_check_branch
        %123 = sbr.rel (%p121) target = $region20
      $region19: #{segmentation_simsiam_forward.13} parent=11 // pred_region
        _
      $region20: #{segmentation_simsiam_forward.13} parent=11 // pred_fallthru
        _
    $region12: #{segmentation_simsiam_forward.13} parent=5 // pred_fallthru
      _
    %p124 = scmp.lt.s32.totalorder %s9, 2
    // Predicated region
    $region21: #{segmentation_simsiam_forward.13} parent=5 // pred_check
      %p125 = pneg %p124
    $region22: #{segmentation_simsiam_forward.13} parent=5 // pred_check_branch
      %127 = sbr.rel (%p125) target = $region24
    $region23: #{segmentation_simsiam_forward.13} parent=5 // pred_region
      // Predicated region
      $region25: #{segmentation_simsiam_forward.13} parent=23 // pred_check
        %p128 = pneg %p29
      $region26: #{segmentation_simsiam_forward.13} parent=23 // pred_check_branch
        %130 = sbr.rel (%p128) target = $region28
      $region27: #{segmentation_simsiam_forward.13} parent=23 // pred_region
        %s131 = smul.u32 4, %s9
        %p132 = scmp.lt.s32.totalorder %s131, 7
        %s133 = scalar_select %p132, %s131, 7
        %s134 = smul.addr %s133, 2
        %s135 = scalar_lea.vmem %s0, %s134
        %s136 = smul.u32 4, %s9
      $region28: #{segmentation_simsiam_forward.13} parent=23 // pred_fallthru
        _
    $region24: #{segmentation_simsiam_forward.13} parent=5 // pred_fallthru
      _
    %p137 = scmp.le.s32.totalorder 1, %s9
    %p138 = scmp.lt.s32.totalorder %s9, 3
    %p139 = pnand %p137, %p138
    %p140 = pneg %p139
    // Predicated region
    $region29: #{segmentation_simsiam_forward.13} parent=5 // pred_check
      _
    $region30: #{segmentation_simsiam_forward.13} parent=5 // pred_check_branch
      %142 = sbr.rel (%p139) target = $region32
    $region31: #{segmentation_simsiam_forward.13} parent=5 // pred_region
      %s143 = ssub.s32 %s9, 1
      %s144 = smul.u32 4, %s14
      %p145 = scmp.lt.s32.totalorder %s144, 7
      %s146 = scalar_select %p145, %s144, 7
      %s147 = smul.addr %s146, 2
      %s148 = scalar_lea.vmem %s0, %s147
      %p149 = pneg %p35
      %p150 = pneg %p32
      %p151 = pneg %p56
      %p152 = pneg %p53
      %p153 = pneg %p77
      %p154 = pneg %p74
      %p155 = pneg %p103
      %p156 = pneg %p100
      %s157 = smul.u32 2, %s14
      %p158 = scmp.lt.s32.totalorder %s157, 3
      %s159 = scalar_select %p158, %s157, 3
      %s160 = scalar_lea.vmem %s3, %s159
      %s161 = smul.u32 4, %s14
      %p162 = scmp.lt.s32.totalorder %s161, 7
      %s163 = scalar_select %p162, %s161, 7
      %s164 = smul.addr %s163, 2
      %s165 = scalar_lea.vmem %s0, %s164
      %s166 = smul.u32 4, %s14
      %s167 = smul.u32 2, %s14
      %p168 = scmp.lt.s32.totalorder %s167, 3
      %s169 = scalar_select %p168, %s167, 3
      %s170 = scalar_lea.vmem %s3, %s169
      %s171 = smul.u32 2, %s14
      %v173 = vld [vmem:[%s165] sm:$0x3]
      %v174 = vld [vmem:[%s165 + $0x2] sm:$0x3]
      %v175 = vld [vmem:[%s165 + $0x4] sm:$0x3]
      %v176 = vld [vmem:[%s165 + $0x6] sm:$0x3]
      %v177 = vunpack.c.l.bf16 %v173
      %v178 = vunpack.c.l.bf16 %v174
      %v179 = vunpack.c.l.bf16 %v175
      %v180 = vunpack.c.l.bf16 %v176
      %vm181 = vcmask 519168
      %v182 = vsel %vm181, %v177, 0.0
      %v183 = vsel %vm181, %v178, 0.0
      %v184 = vadd.f32 %v182, %v183
      %v185 = vsel %vm181, %v179, 0.0
      %v186 = vsel %vm181, %v180, 0.0
      %v187 = vadd.f32 %v185, %v186
      %v191 = vunpack.c.l.s4 1983009808
      %v192 = vunpack.c.0.s8 %v191
      %v193 = vlaneseq
      %v194 = vshrl.u32 %v193, 7
      %v195 = vsub.s32 %v192, %v194
      %v196 = vrot.slane %v184, %v195
      %v197 = vcombine.high %v196, %v196
      %v199 = vunpack.c.l.s4 1983009808
      %v200 = vunpack.c.0.s8 %v199
      %v201 = vlaneseq
      %v202 = vshrl.u32 %v201, 7
      %v203 = vsub.s32 %v200, %v202
      %v204 = vrot.slane %v187, %v203
      %v205 = vcombine.high %v204, %v204
      %vm210 = vcmask 517120
      %v211 = vsel %vm210, %v196, 0.0
      %v212 = vrot.slane %v211, 4
      %v213 = vadd.f32 %v211, %v212
      %v214 = vrot.slane %v213, 2
      %v215 = vadd.f32 %v213, %v214
      %v216 = vrot.slane %v215, 1
      %v217 = vadd.f32 %v215, %v216
      %v218 = vsel %vm210, %v197, 0.0
      %v219 = vrot.slane %v218, 4
      %v220 = vadd.f32 %v218, %v219
      %v221 = vrot.slane %v220, 2
      %v222 = vadd.f32 %v220, %v221
      %v223 = vrot.slane %v222, 1
      %v224 = vadd.f32 %v222, %v223
      %v225 = vsel %vm210, %v204, 0.0
      %v226 = vrot.slane %v225, 4
      %v227 = vadd.f32 %v225, %v226
      %v228 = vrot.slane %v227, 2
      %v229 = vadd.f32 %v227, %v228
      %v230 = vrot.slane %v229, 1
      %v231 = vadd.f32 %v229, %v230
      %v232 = vsel %vm210, %v205, 0.0
      %v233 = vrot.slane %v232, 4
      %v234 = vadd.f32 %v232, %v233
      %v235 = vrot.slane %v234, 2
      %v236 = vadd.f32 %v234, %v235
      %v237 = vrot.slane %v236, 1
      %v238 = vadd.f32 %v236, %v237
      %v239 = vmul.f32 %v217, 0.25
      %v240 = vmul.f32 %v224, 0.25
      %v241 = vmul.f32 %v231, 0.25
      %v242 = vmul.f32 %v238, 0.25
      %v243 = vpack.c.bf16 %v239, %v239
      %v244 = vpack.c.bf16 %v240, %v240
      %v245 = vpack.c.bf16 %v241, %v241
      %v246 = vpack.c.bf16 %v242, %v242
      %v247 = vld [vmem:[%s1] sm:$0xf]
      %v248 = vld [vmem:[%s1 + $0x4] sm:$0xf]
      %v249 = vld [vmem:[%s1 + $0x8] sm:$0xf]
      %v250 = vld [vmem:[%s1 + $0xc] sm:$0xf]
      %v251 = vld [vmem:[%s1 + $0x10] sm:$0xf]
      %v252 = vld [vmem:[%s1 + $0x14] sm:$0xf]
      %v253 = vld [vmem:[%s1 + $0x18] sm:$0xf]
      %v254 = vld [vmem:[%s1 + $0x1c] sm:$0xf]
      %v255 = vld [vmem:[%s2] sm:$0x1]
      %v257 = vlaneseq
      %v258 = vshrl.u32 %v257, 7
      %v259 = vsub.s32 0, %v258
      %v260 = vrot.slane %v255, %v259
      %v266 = vunpack.c.l.b16 %v243
      %v267 = vunpack.c.l.b16 %v244
      %v268 = vunpack.c.l.b16 %v245
      %v269 = vunpack.c.l.b16 %v246
      %vm270 = vcmask 1041409
      %v271 = vsel %vm270, %v267, %v266
      %vm272 = vcmask 1042434
      %v273 = vsel %vm272, %v268, %v271
      %vm274 = vcmask 1043459
      %v275 = vsel %vm274, %v269, %v273
      %v276 = vpack.c.b16 %v275, %v275
      %v285 = vunpack.c.l.b16 %v247
      %v286 = vunpack.c.l.b16 %v248
      %v287 = vunpack.c.l.b16 %v249
      %v288 = vunpack.c.l.b16 %v250
      %v289 = vunpack.c.l.b16 %v251
      %v290 = vunpack.c.l.b16 %v252
      %v291 = vunpack.c.l.b16 %v253
      %v292 = vunpack.c.l.b16 %v254
      %v293 = vpack.c.b16 %v286, %v285
      %v294 = vpack.c.b16 %v288, %v287
      %v295 = vpack.c.b16 %v290, %v289
      %v296 = vpack.c.b16 %v292, %v291
      %vm301 = vcmask 523264
      %v303 = vsel %vm301, %v276, 0
      %305 = vmatprep.subr.bf16.mxu0 0
      %306 = vmatpush1.bf16.msra.mxu0 %v293
      %307 = vmatprep.subr.bf16.mxu0 0
      %308 = vmatpush1.bf16.msra.mxu0 %v294
      %309 = vmatprep.subr.bf16.mxu0 0
      %310 = vmatpush1.bf16.msra.mxu0 %v295
      %311 = vmatprep.subr.bf16.mxu0 0
      %312 = vmatpush1.bf16.msra.mxu0 %v296
      %313 = vmatprep.subr.bf16.mxu0 0
      %314 = vmatpush1.bf16.msra.mxu0 0
      %315 = vmatprep.subr.bf16.mxu0 0
      %316 = vmatpush1.bf16.msra.mxu0 0
      %317 = vmatprep.subr.bf16.mxu0 0
      %318 = vmatpush1.bf16.msra.mxu0 0
      %319 = vmatprep.subr.bf16.mxu0 0
      %320 = vmatpush1.bf16.msra.mxu0 0
      %321 = vmatprep.subr.bf16.mxu0 0
      %322 = vmatpush1.bf16.msra.mxu0 0
      %323 = vmatprep.subr.bf16.mxu0 0
      %324 = vmatpush1.bf16.msra.mxu0 0
      %325 = vmatprep.subr.bf16.mxu0 0
      %326 = vmatpush1.bf16.msra.mxu0 0
      %327 = vmatprep.subr.bf16.mxu0 0
      %328 = vmatpush1.bf16.msra.mxu0 0
      %329 = vmatprep.subr.bf16.mxu0 0
      %330 = vmatpush1.bf16.msra.mxu0 0
      %331 = vmatprep.subr.bf16.mxu0 0
      %332 = vmatpush1.bf16.msra.mxu0 0
      %333 = vmatprep.subr.bf16.mxu0 0
      %334 = vmatpush1.bf16.msra.mxu0 0
      %335 = vmatprep.subr.bf16.mxu0 0
      %336 = vmatpush1.bf16.msra.mxu0 0
      %337 = vmatprep.mubr.bf16.mxu0 0
      %338 = vmatmul.mubr.bf16.gmra.mrb[0].mxu0 %v303
      %v339 = vpop.f32.mrb[0].mxu0
      %v340 = vadd.f32 %v260, %v339
      %v341 = vpop.f32.mrb[0].mxu0
      %v342 = vpop.f32.mrb[0].mxu0
      %v343 = vpop.f32.mrb[0].mxu0
      %344 = vdwg.mxu0
      %v345 = vmax.f32 %v340, 0.0
      %v348 = vunpack.c.l.s4 1983009808
      %v349 = vunpack.c.0.s8 %v348
      %v350 = vlaneseq
      %v351 = vshrl.u32 %v350, 7
      %v352 = vsub.s32 %v349, %v351
      %v353 = vrot.slane %v345, %v352
      %v354 = vcombine.high %v353, %v353
      %v357 = vpack.c.bf16 %v353, %v353
      %v358 = vpack.c.bf16 %v354, %v354
      %359 = vst [vmem:[%s170] sm:$0x1] %v357
      %360 = vst [vmem:[%s170 + $0x1] sm:$0x1] %v358
      %s361 = smul.u32 2, %s14
      %p362 = scmp.lt.s32.totalorder %s361, 3
      %s363 = scalar_select %p362, %s361, 3
      %s364 = scalar_lea.vmem %s3, %s363
      // Predicated region
      $region33: #{segmentation_simsiam_forward.13} parent=31 // pred_check
        %p365 = pneg %p100
      $region34: #{segmentation_simsiam_forward.13} parent=31 // pred_check_branch
        %367 = sbr.rel (%p365) target = $region36
      $region35: #{segmentation_simsiam_forward.13} parent=31 // pred_region
        %s368 = smul.u32 2, %s14
      $region36: #{segmentation_simsiam_forward.13} parent=31 // pred_fallthru
        _
    $region32: #{segmentation_simsiam_forward.13} parent=5 // pred_fallthru
      _
    %p369 = scmp.le.s32.totalorder 2, %s9
    // Predicated region
    $region37: #{segmentation_simsiam_forward.13} parent=5 // pred_check
      %p370 = pneg %p369
    $region38: #{segmentation_simsiam_forward.13} parent=5 // pred_check_branch
      %372 = sbr.rel (%p370) target = $region40
    $region39: #{segmentation_simsiam_forward.13} parent=5 // pred_region
      %s373 = ssub.s32 %s9, 2
      // Predicated region
      $region41: #{segmentation_simsiam_forward.13} parent=39 // pred_check
        %p374 = pneg %p106
      $region42: #{segmentation_simsiam_forward.13} parent=39 // pred_check_branch
        %376 = sbr.rel (%p374) target = $region44
      $region43: #{segmentation_simsiam_forward.13} parent=39 // pred_region
        %s377 = smul.u32 2, %s15
        %p378 = scmp.lt.s32.totalorder %s377, 3
        %s379 = scalar_select %p378, %s377, 3
        %s380 = scalar_lea.vmem %s3, %s379
      $region44: #{segmentation_simsiam_forward.13} parent=39 // pred_fallthru
        _
    $region40: #{segmentation_simsiam_forward.13} parent=5 // pred_fallthru
      _
  $region6: #{segmentation_simsiam_forward.13} parent=0 // loop_footer
    %s13 = sadd.s32 1, %s9
  $region7: #{segmentation_simsiam_forward.13} parent=0 // loop_footer_branch
    %8 = sbr.rel target = $region3
  $region8: #{segmentation_simsiam_forward.13} parent=0 // loop_exit
    _

// kernel: segmentation_simsiam_forward.14
$region0: #{segmentation_simsiam_forward.14}
  #allocation0 [shape = 'u32[]', space=smem, size = 0x4, offset = 0x4, fixed_abs, tag = 'smem constant byte address 0x4 - core index']
  #allocation1 [shape = 'u32[144,128]{1,0:T(1,128)}', space=vmem, size = 0x12000, scoped, tag = 'internal scratch']
  #allocation2 [shape = 'f32[1,128]{1,0:T(1,128)}', space=vmem, size = 0x200, scoped, tag = 'scratch operand']
  %s0 = inlined_call_operand.vmem [shape: bf16[2,4,128], index: 0, kind: input, shape index: {}]
  %s1 = inlined_call_operand.vmem [shape: bf16[128,128], index: 1, kind: input, shape index: {}]
  %s2 = inlined_call_operand.vmem [shape: f32[1,128], index: 2, kind: input, shape index: {}]
  %s3 = inlined_call_operand.vmem [shape: bf16[2,4,128], index: 3, kind: output, shape index: {0}]
  %s4 = inlined_call_operand.vmem [shape: f32[2,1,128], index: 4, kind: output, shape index: {1}]
  %5 = xla_tuple %s3, %s4
  %s6 = sld [smem:[#allocation0]]
  $region61: #{segmentation_simsiam_forward.14} parent=0
    _
  %s8 = ssub.s32 1, %s6
  %s9 = scalar_select 0, %s8, %s6
  loop: start=0, step=1, limit=4
  $region2: #{segmentation_simsiam_forward.14} parent=0 // loop_pre_header
    _
  $region3: #{segmentation_simsiam_forward.14} parent=0 // loop_header
    %s11 = sphi 0, %s15
    %p12 = scmp.ge.s32.totalorder %s11, 4
    %s18 = sphi 0, %s30
    %s19 = sphi 0, %s26
    %s20 = sphi 0, %s18
    %s21 = sphi 0, %s19
    %s22 = sphi 0, %s20
    %s23 = sphi 0, %s21
    %s35 = sphi 0, %s37
    %s38 = sphi 0, %s35
    %s39 = sphi 0, %s38
    %s55 = sphi 0, %s39
    %s59 = sphi 0, %s59
    %s61 = sphi 0, %s59
    %s62 = sphi 0, %s61
    %s76 = sphi 0, %s62
    %s80 = sphi 0, %s80
    %s82 = sphi 0, %s80
    %s83 = sphi 0, %s82
    %s97 = sphi 0, %s83
    %s105 = sphi 0, %s107
    %s108 = sphi 0, %s105
    %s109 = sphi 0, %s108
    %s125 = sphi 0, %s109
    %s131 = sphi 0, %s133
    %s134 = sphi 0, %s131
    %s135 = sphi 0, %s134
    %s151 = sphi 0, %s135
  $region4: #{segmentation_simsiam_forward.14} parent=0 // loop_header_branch
    %14 = sbr.rel (%p12) target = $region8
  $region5: #{segmentation_simsiam_forward.14} parent=0 // loop_body
    %s16 = ssub.s32 %s11, 1
    %s17 = ssub.s32 %s11, 2
    %s24 = sadd.s32 1, %s19
    %p25 = scmp.ge.s32.totalorder %s24, 1
    %s26 = scalar_select %p25, 0, %s24
    %s27 = sadd.s32 1, %s18
    %s28 = scalar_select %p25, %s27, %s18
    %p29 = scmp.ge.s32.totalorder %s28, 2
    %s30 = scalar_select %p29, 0, %s28
    %s31 = ssub.s32 %s18, %s30
    %s32 = ssub.s32 %s19, %s26
    %s33 = sor.u32 %s31, %s32
    %p34 = scmp.eq.s32.totalorder %s33, 0
    %s36 = sadd.s32 %s35, 1
    %s37 = scalar_select %p34, %s35, %s36
    %p40 = pneg %p34
    %p41 = scmp.eq.s32.totalorder %s11, 1
    %p42 = por %p40, %p41
    %p43 = scmp.ne.s32.totalorder %s35, %s38
    %p44 = scmp.eq.s32.totalorder %s11, 0
    %p45 = por %p43, %p44
    %p46 = scmp.ne.s32.totalorder %s35, %s38
    %p47 = scmp.eq.s32.totalorder %s16, 1
    %p48 = por %p46, %p47
    %p49 = scmp.ne.s32.totalorder %s38, %s39
    %p50 = scmp.eq.s32.totalorder %s16, 0
    %p51 = por %p49, %p50
    %p52 = scmp.ne.s32.totalorder %s38, %s39
    %p53 = scmp.eq.s32.totalorder %s17, 1
    %p54 = por %p52, %p53
    %p56 = scmp.ne.s32.totalorder %s39, %s55
    %p57 = scmp.eq.s32.totalorder %s17, 0
    %p58 = por %p56, %p57
    %s60 = sadd.s32 %s59, 1
    %p63 = scmp.eq.s32.totalorder %s11, 1
    %p64 = scmp.ne.s32.totalorder %s59, %s61
    %p65 = scmp.eq.s32.totalorder %s11, 0
    %p66 = por %p64, %p65
    %p67 = scmp.ne.s32.totalorder %s59, %s61
    %p68 = scmp.eq.s32.totalorder %s16, 1
    %p69 = por %p67, %p68
    %p70 = scmp.ne.s32.totalorder %s61, %s62
    %p71 = scmp.eq.s32.totalorder %s16, 0
    %p72 = por %p70, %p71
    %p73 = scmp.ne.s32.totalorder %s61, %s62
    %p74 = scmp.eq.s32.totalorder %s17, 1
    %p75 = por %p73, %p74
    %p77 = scmp.ne.s32.totalorder %s62, %s76
    %p78 = scmp.eq.s32.totalorder %s17, 0
    %p79 = por %p77, %p78
    %s81 = sadd.s32 %s80, 1
    %p84 = scmp.eq.s32.totalorder %s11, 1
    %p85 = scmp.ne.s32.totalorder %s80, %s82
    %p86 = scmp.eq.s32.totalorder %s11, 0
    %p87 = por %p85, %p86
    %p88 = scmp.ne.s32.totalorder %s80, %s82
    %p89 = scmp.eq.s32.totalorder %s16, 1
    %p90 = por %p88, %p89
    %p91 = scmp.ne.s32.totalorder %s82, %s83
    %p92 = scmp.eq.s32.totalorder %s16, 0
    %p93 = por %p91, %p92
    %p94 = scmp.ne.s32.totalorder %s82, %s83
    %p95 = scmp.eq.s32.totalorder %s17, 1
    %p96 = por %p94, %p95
    %p98 = scmp.ne.s32.totalorder %s83, %s97
    %p99 = scmp.eq.s32.totalorder %s17, 0
    %p100 = por %p98, %p99
    %s101 = ssub.s32 %s18, %s30
    %s102 = ssub.s32 %s19, %s26
    %s103 = sor.u32 %s101, %s102
    %p104 = scmp.eq.s32.totalorder %s103, 0
    %s106 = sadd.s32 %s105, 1
    %s107 = scalar_select %p104, %s105, %s106
    %p110 = pneg %p104
    %p111 = scmp.eq.s32.totalorder %s11, 1
    %p112 = por %p110, %p111
    %p113 = scmp.ne.s32.totalorder %s105, %s108
    %p114 = scmp.eq.s32.totalorder %s11, 0
    %p115 = por %p113, %p114
    %p116 = scmp.ne.s32.totalorder %s105, %s108
    %p117 = scmp.eq.s32.totalorder %s16, 1
    %p118 = por %p116, %p117
    %p119 = scmp.ne.s32.totalorder %s108, %s109
    %p120 = scmp.eq.s32.totalorder %s16, 0
    %p121 = por %p119, %p120
    %p122 = scmp.ne.s32.totalorder %s108, %s109
    %p123 = scmp.eq.s32.totalorder %s17, 1
    %p124 = por %p122, %p123
    %p126 = scmp.ne.s32.totalorder %s109, %s125
    %p127 = scmp.eq.s32.totalorder %s17, 0
    %p128 = por %p126, %p127
    %s129 = ssub.s32 %s18, %s30
    %p130 = scmp.eq.s32.totalorder %s129, 0
    %s132 = sadd.s32 %s131, 1
    %s133 = scalar_select %p130, %s131, %s132
    %p136 = pneg %p130
    %p137 = scmp.eq.s32.totalorder %s11, 1
    %p138 = por %p136, %p137
    %p139 = scmp.ne.s32.totalorder %s131, %s134
    %p140 = scmp.eq.s32.totalorder %s11, 0
    %p141 = por %p139, %p140
    %p142 = scmp.ne.s32.totalorder %s131, %s134
    %p143 = scmp.eq.s32.totalorder %s16, 1
    %p144 = por %p142, %p143
    %p145 = scmp.ne.s32.totalorder %s134, %s135
    %p146 = scmp.eq.s32.totalorder %s16, 0
    %p147 = por %p145, %p146
    %p148 = scmp.ne.s32.totalorder %s134, %s135
    %p149 = scmp.eq.s32.totalorder %s17, 1
    %p150 = por %p148, %p149
    %p152 = scmp.ne.s32.totalorder %s135, %s151
    %p153 = scmp.eq.s32.totalorder %s17, 0
    %p154 = por %p152, %p153
    %p155 = scmp.le.s32.totalorder 1, %s11
    %p156 = scmp.lt.s32.totalorder %s11, 3
    %p157 = pnand %p155, %p156
    %p158 = pneg %p157
    // Predicated region
    $region9: #{segmentation_simsiam_forward.14} parent=5 // pred_check
      _
    $region10: #{segmentation_simsiam_forward.14} parent=5 // pred_check_branch
      %160 = sbr.rel (%p157) target = $region12
    $region11: #{segmentation_simsiam_forward.14} parent=5 // pred_region
      %s161 = ssub.s32 %s11, 1
      // Predicated region
      $region13: #{segmentation_simsiam_forward.14} parent=11 // pred_check
        %p162 = pneg %p72
      $region14: #{segmentation_simsiam_forward.14} parent=11 // pred_check_branch
        %164 = sbr.rel (%p162) target = $region16
      $region15: #{segmentation_simsiam_forward.14} parent=11 // pred_region
        _
      $region16: #{segmentation_simsiam_forward.14} parent=11 // pred_fallthru
        _
      // Predicated region
      $region17: #{segmentation_simsiam_forward.14} parent=11 // pred_check
        %p165 = pneg %p93
      $region18: #{segmentation_simsiam_forward.14} parent=11 // pred_check_branch
        %167 = sbr.rel (%p165) target = $region20
      $region19: #{segmentation_simsiam_forward.14} parent=11 // pred_region
        _
      $region20: #{segmentation_simsiam_forward.14} parent=11 // pred_fallthru
        _
    $region12: #{segmentation_simsiam_forward.14} parent=5 // pred_fallthru
      _
    %p168 = scmp.lt.s32.totalorder %s11, 2
    // Predicated region
    $region21: #{segmentation_simsiam_forward.14} parent=5 // pred_check
      %p169 = pneg %p168
    $region22: #{segmentation_simsiam_forward.14} parent=5 // pred_check_branch
      %171 = sbr.rel (%p169) target = $region24
    $region23: #{segmentation_simsiam_forward.14} parent=5 // pred_region
      // Predicated region
      $region25: #{segmentation_simsiam_forward.14} parent=23 // pred_check
        %p172 = pneg %p45
      $region26: #{segmentation_simsiam_forward.14} parent=23 // pred_check_branch
        %174 = sbr.rel (%p172) target = $region28
      $region27: #{segmentation_simsiam_forward.14} parent=23 // pred_region
        %p175 = scmp.lt.s32.totalorder %s18, 1
        %s176 = scalar_select %p175, %s18, 1
        %p177 = scmp.lt.s32.totalorder %s19, 0
        %s178 = scalar_select %p177, %s19, 0
        %s179 = sadd.s32 %s178, %s176
        %s180 = smul.addr %s179, 2
        %s181 = scalar_lea.vmem %s0, %s180
      $region28: #{segmentation_simsiam_forward.14} parent=23 // pred_fallthru
        _
    $region24: #{segmentation_simsiam_forward.14} parent=5 // pred_fallthru
      _
    %p182 = scmp.le.s32.totalorder 1, %s11
    %p183 = scmp.lt.s32.totalorder %s11, 3
    %p184 = pnand %p182, %p183
    %p185 = pneg %p184
    // Predicated region
    $region29: #{segmentation_simsiam_forward.14} parent=5 // pred_check
      _
    $region30: #{segmentation_simsiam_forward.14} parent=5 // pred_check_branch
      %187 = sbr.rel (%p184) target = $region32
    $region31: #{segmentation_simsiam_forward.14} parent=5 // pred_region
      %s188 = ssub.s32 %s11, 1
      %p189 = scmp.lt.s32.totalorder %s20, 1
      %s190 = scalar_select %p189, %s20, 1
      %p191 = scmp.lt.s32.totalorder %s21, 0
      %s192 = scalar_select %p191, %s21, 0
      %s193 = sadd.s32 %s192, %s190
      %s194 = smul.addr %s193, 2
      %s195 = scalar_lea.vmem %s0, %s194
      %p196 = pneg %p51
      %p197 = pneg %p48
      %p198 = pneg %p72
      %p199 = pneg %p69
      %p200 = pneg %p93
      %p201 = pneg %p90
      %p202 = pneg %p121
      %p203 = pneg %p118
      %p204 = scmp.lt.s32.totalorder %s20, 1
      %s205 = scalar_select %p204, %s20, 1
      %p206 = scmp.lt.s32.totalorder %s21, 0
      %s207 = scalar_select %p206, %s21, 0
      %s208 = sadd.s32 %s207, %s205
      %s209 = smul.addr %s208, 2
      %s210 = scalar_lea.vmem %s3, %s209
      %p211 = pneg %p147
      %p212 = pneg %p144
      %p213 = scmp.lt.s32.totalorder %s20, 1
      %s214 = scalar_select %p213, %s20, 1
      %s215 = scalar_lea.vmem %s4, %s214
      %p216 = scmp.lt.s32.totalorder %s20, 1
      %s217 = scalar_select %p216, %s20, 1
      %p218 = scmp.lt.s32.totalorder %s21, 0
      %s219 = scalar_select %p218, %s21, 0
      %s220 = sadd.s32 %s219, %s217
      %s221 = smul.addr %s220, 2
      %s222 = scalar_lea.vmem %s0, %s221
      %p223 = scmp.lt.s32.totalorder %s20, 1
      %s224 = scalar_select %p223, %s20, 1
      %p225 = scmp.lt.s32.totalorder %s21, 0
      %s226 = scalar_select %p225, %s21, 0
      %s227 = sadd.s32 %s226, %s224
      %s228 = smul.addr %s227, 2
      %s229 = scalar_lea.vmem %s3, %s228
      %p230 = scmp.lt.s32.totalorder %s20, 1
      %s231 = scalar_select %p230, %s20, 1
      %s232 = scalar_lea.vmem %s4, %s231
      %p234 = scmp.eq.s32.totalorder %s21, 0
      // Predicated region
      $region33: #{segmentation_simsiam_forward.14} parent=31 // pred_check
        %p235 = pneg %p234
      $region34: #{segmentation_simsiam_forward.14} parent=31 // pred_check_branch
        %237 = sbr.rel (%p235) target = $region36
      $region35: #{segmentation_simsiam_forward.14} parent=31 // pred_region
        %238 = vst [vmem:[#allocation2] sm:$0x1] 0.0
      $region36: #{segmentation_simsiam_forward.14} parent=31 // pred_fallthru
        _
      %v239 = vld [vmem:[%s222] sm:$0x3]
      %v240 = vld [vmem:[%s1] sm:$0xf]
      %v241 = vld [vmem:[%s1 + $0x4] sm:$0xf]
      %v242 = vld [vmem:[%s1 + $0x8] sm:$0xf]
      %v243 = vld [vmem:[%s1 + $0xc] sm:$0xf]
      %v244 = vld [vmem:[%s1 + $0x10] sm:$0xf]
      %v245 = vld [vmem:[%s1 + $0x14] sm:$0xf]
      %v246 = vld [vmem:[%s1 + $0x18] sm:$0xf]
      %v247 = vld [vmem:[%s1 + $0x1c] sm:$0xf]
      %v248 = vld [vmem:[%s1 + $0x20] sm:$0xf]
      %v249 = vld [vmem:[%s1 + $0x24] sm:$0xf]
      %v250 = vld [vmem:[%s1 + $0x28] sm:$0xf]
      %v251 = vld [vmem:[%s1 + $0x2c] sm:$0xf]
      %v252 = vld [vmem:[%s1 + $0x30] sm:$0xf]
      %v253 = vld [vmem:[%s1 + $0x34] sm:$0xf]
      %v254 = vld [vmem:[%s1 + $0x38] sm:$0xf]
      %v255 = vld [vmem:[%s1 + $0x3c] sm:$0xf]
      %v256 = vld [vmem:[%s2] sm:$0x1]
      %v258 = vlaneseq
      %v259 = vshrl.u32 %v258, 7
      %v260 = vsub.s32 0, %v259
      %v261 = vrot.slane %v256, %v260
      %v279 = vunpack.c.l.b16 %v240
      %v280 = vunpack.c.l.b16 %v241
      %v281 = vunpack.c.l.b16 %v242
      %v282 = vunpack.c.l.b16 %v243
      %v283 = vunpack.c.l.b16 %v244
      %v284 = vunpack.c.l.b16 %v245
      %v285 = vunpack.c.l.b16 %v246
      %v286 = vunpack.c.l.b16 %v247
      %v287 = vunpack.c.l.b16 %v248
      %v288 = vunpack.c.l.b16 %v249
      %v289 = vunpack.c.l.b16 %v250
      %v290 = vunpack.c.l.b16 %v251
      %v291 = vunpack.c.l.b16 %v252
      %v292 = vunpack.c.l.b16 %v253
      %v293 = vunpack.c.l.b16 %v254
      %v294 = vunpack.c.l.b16 %v255
      %v295 = vpack.c.b16 %v280, %v279
      %v296 = vpack.c.b16 %v282, %v281
      %v297 = vpack.c.b16 %v284, %v283
      %v298 = vpack.c.b16 %v286, %v285
      %v299 = vpack.c.b16 %v288, %v287
      %v300 = vpack.c.b16 %v290, %v289
      %v301 = vpack.c.b16 %v292, %v291
      %v302 = vpack.c.b16 %v294, %v293
      %311 = vmatprep.subr.bf16.mxu0 0
      %312 = vmatpush1.bf16.msra.mxu0 %v295
      %313 = vmatprep.subr.bf16.mxu0 0
      %314 = vmatpush1.bf16.msra.mxu0 %v296
      %315 = vmatprep.subr.bf16.mxu0 0
      %316 = vmatpush1.bf16.msra.mxu0 %v297
      %317 = vmatprep.subr.bf16.mxu0 0
      %318 = vmatpush1.bf16.msra.mxu0 %v298
      %319 = vmatprep.subr.bf16.mxu0 0
      %320 = vmatpush1.bf16.msra.mxu0 %v299
      %321 = vmatprep.subr.bf16.mxu0 0
      %322 = vmatpush1.bf16.msra.mxu0 %v300
      %323 = vmatprep.subr.bf16.mxu0 0
      %324 = vmatpush1.bf16.msra.mxu0 %v301
      %325 = vmatprep.subr.bf16.mxu0 0
      %326 = vmatpush1.bf16.msra.mxu0 %v302
      %327 = vmatprep.subr.bf16.mxu0 0
      %328 = vmatpush1.bf16.msra.mxu0 0
      %329 = vmatprep.subr.bf16.mxu0 0
      %330 = vmatpush1.bf16.msra.mxu0 0
      %331 = vmatprep.subr.bf16.mxu0 0
      %332 = vmatpush1.bf16.msra.mxu0 0
      %333 = vmatprep.subr.bf16.mxu0 0
      %334 = vmatpush1.bf16.msra.mxu0 0
      %335 = vmatprep.subr.bf16.mxu0 0
      %336 = vmatpush1.bf16.msra.mxu0 0
      %337 = vmatprep.subr.bf16.mxu0 0
      %338 = vmatpush1.bf16.msra.mxu0 0
      %339 = vmatprep.subr.bf16.mxu0 0
      %340 = vmatpush1.bf16.msra.mxu0 0
      %341 = vmatprep.subr.bf16.mxu0 0
      %342 = vmatpush1.bf16.msra.mxu0 0
      %343 = vmatprep.mubr.bf16.mxu0 0
      %344 = vmatmul.mubr.bf16.gmra.mrb[0].mxu0 %v239
      %v345 = vpop.f32.mrb[0].mxu0
      %v346 = vadd.f32 %v261, %v345
      %v347 = vpop.f32.mrb[0].mxu0
      %v348 = vpop.f32.mrb[0].mxu0
      %v349 = vpop.f32.mrb[0].mxu0
      %350 = vdwg.mxu0
      %v351 = vmax.f32 %v346, 0.0
      %v352 = vpack.c.bf16 %v351, %v351
      %353 = vst [vmem:[%s229] sm:$0x3] %v352
      %v354 = vld [vmem:[#allocation2] sm:$0x1]
      %vm355 = vcmask 1043456
      %v356 = vsel %vm355, %v351, 0.0
      %v357 = vrot.slane %v356, 4
      %v358 = vadd.f32 %v356, %v357
      %v359 = vrot.slane %v358, 2
      %v360 = vadd.f32 %v358, %v359
      %v361 = vrot.slane %v360, 1
      %v362 = vadd.f32 %v360, %v361
      %v363 = vadd.f32 %v354, %v362
      %364 = vst [vmem:[#allocation2] sm:$0x1] %v363
      // Predicated region
      $region37: #{segmentation_simsiam_forward.14} parent=31 // pred_check
        %p365 = pneg %p234
      $region38: #{segmentation_simsiam_forward.14} parent=31 // pred_check_branch
        %367 = sbr.rel (%p365) target = $region40
      $region39: #{segmentation_simsiam_forward.14} parent=31 // pred_region
        %v368 = vld [vmem:[#allocation2] sm:$0x1]
        %v369 = vmul.f32 %v368, 0.25
        %370 = vst [vmem:[%s232] sm:$0x1] %v369
      $region40: #{segmentation_simsiam_forward.14} parent=31 // pred_fallthru
        _
      %p371 = scmp.lt.s32.totalorder %s20, 1
      %s372 = scalar_select %p371, %s20, 1
      %p373 = scmp.lt.s32.totalorder %s21, 0
      %s374 = scalar_select %p373, %s21, 0
      %s375 = sadd.s32 %s374, %s372
      %s376 = smul.addr %s375, 2
      %s377 = scalar_lea.vmem %s3, %s376
      %p378 = scmp.lt.s32.totalorder %s20, 1
      %s379 = scalar_select %p378, %s20, 1
      %s380 = scalar_lea.vmem %s4, %s379
      // Predicated region
      $region41: #{segmentation_simsiam_forward.14} parent=31 // pred_check
        %p381 = pneg %p118
      $region42: #{segmentation_simsiam_forward.14} parent=31 // pred_check_branch
        %383 = sbr.rel (%p381) target = $region44
      $region43: #{segmentation_simsiam_forward.14} parent=31 // pred_region
        _
      $region44: #{segmentation_simsiam_forward.14} parent=31 // pred_fallthru
        _
      // Predicated region
      $region45: #{segmentation_simsiam_forward.14} parent=31 // pred_check
        %p384 = pneg %p144
      $region46: #{segmentation_simsiam_forward.14} parent=31 // pred_check_branch
        %386 = sbr.rel (%p384) target = $region48
      $region47: #{segmentation_simsiam_forward.14} parent=31 // pred_region
        _
      $region48: #{segmentation_simsiam_forward.14} parent=31 // pred_fallthru
        _
    $region32: #{segmentation_simsiam_forward.14} parent=5 // pred_fallthru
      _
    %p387 = scmp.le.s32.totalorder 2, %s11
    // Predicated region
    $region49: #{segmentation_simsiam_forward.14} parent=5 // pred_check
      %p388 = pneg %p387
    $region50: #{segmentation_simsiam_forward.14} parent=5 // pred_check_branch
      %390 = sbr.rel (%p388) target = $region52
    $region51: #{segmentation_simsiam_forward.14} parent=5 // pred_region
      %s391 = ssub.s32 %s11, 2
      // Predicated region
      $region53: #{segmentation_simsiam_forward.14} parent=51 // pred_check
        %p392 = pneg %p124
      $region54: #{segmentation_simsiam_forward.14} parent=51 // pred_check_branch
        %394 = sbr.rel (%p392) target = $region56
      $region55: #{segmentation_simsiam_forward.14} parent=51 // pred_region
        %p395 = scmp.lt.s32.totalorder %s22, 1
        %s396 = scalar_select %p395, %s22, 1
        %p397 = scmp.lt.s32.totalorder %s23, 0
        %s398 = scalar_select %p397, %s23, 0
        %s399 = sadd.s32 %s398, %s396
        %s400 = smul.addr %s399, 2
        %s401 = scalar_lea.vmem %s3, %s400
      $region56: #{segmentation_simsiam_forward.14} parent=51 // pred_fallthru
        _
      // Predicated region
      $region57: #{segmentation_simsiam_forward.14} parent=51 // pred_check
        %p402 = pneg %p150
      $region58: #{segmentation_simsiam_forward.14} parent=51 // pred_check_branch
        %404 = sbr.rel (%p402) target = $region60
      $region59: #{segmentation_simsiam_forward.14} parent=51 // pred_region
        %p405 = scmp.lt.s32.totalorder %s22, 1
        %s406 = scalar_select %p405, %s22, 1
        %s407 = scalar_lea.vmem %s4, %s406
      $region60: #{segmentation_simsiam_forward.14} parent=51 // pred_fallthru
        _
    $region52: #{segmentation_simsiam_forward.14} parent=5 // pred_fallthru
      _
  $region6: #{segmentation_simsiam_forward.14} parent=0 // loop_footer
    %s15 = sadd.s32 1, %s11
  $region7: #{segmentation_simsiam_forward.14} parent=0 // loop_footer_branch
    %10 = sbr.rel target = $region3
  $region8: #{segmentation_simsiam_forward.14} parent=0 // loop_exit
    _

// kernel: segmentation_simsiam_forward.20
$region0: #{segmentation_simsiam_forward.20}
  #allocation0 [shape = 'u32[]', space=smem, size = 0x4, offset = 0x4, fixed_abs, tag = 'smem constant byte address 0x4 - core index']
  #allocation1 [shape = 'u32[144,128]{1,0:T(1,128)}', space=vmem, size = 0x12000, scoped, tag = 'internal scratch']
  %s0 = inlined_call_operand.vmem [shape: bf16[8,128], index: 0, kind: input, shape index: {}]
  %s1 = inlined_call_operand.vmem [shape: bf16[128,128], index: 1, kind: input, shape index: {}]
  %s2 = inlined_call_operand.vmem [shape: f32[1,128], index: 2, kind: input, shape index: {}]
  %s3 = inlined_call_operand.vmem [shape: f32[8,128], index: 3, kind: output, shape index: {}]
  %s4 = sld [smem:[#allocation0]]
  $region22: #{segmentation_simsiam_forward.20} parent=0
    _
  %s6 = ssub.s32 1, %s4
  %s7 = scalar_select 0, %s6, %s4
  // Predicated region
  $region2: #{segmentation_simsiam_forward.20} parent=0 // pred_check
    _
  $region3: #{segmentation_simsiam_forward.20} parent=0 // pred_check_branch
    %9 = sbr.rel (0) target = $region5
  $region4: #{segmentation_simsiam_forward.20} parent=0 // pred_region
    _
  $region5: #{segmentation_simsiam_forward.20} parent=0 // pred_fallthru
    _
  // Predicated region
  $region6: #{segmentation_simsiam_forward.20} parent=0 // pred_check
    _
  $region7: #{segmentation_simsiam_forward.20} parent=0 // pred_check_branch
    %11 = sbr.rel (0) target = $region9
  $region8: #{segmentation_simsiam_forward.20} parent=0 // pred_region
    _
  $region9: #{segmentation_simsiam_forward.20} parent=0 // pred_fallthru
    _
  // Predicated region
  $region10: #{segmentation_simsiam_forward.20} parent=0 // pred_check
    _
  $region11: #{segmentation_simsiam_forward.20} parent=0 // pred_check_branch
    %13 = sbr.rel (0) target = $region13
  $region12: #{segmentation_simsiam_forward.20} parent=0 // pred_region
    _
  $region13: #{segmentation_simsiam_forward.20} parent=0 // pred_fallthru
    _
  %v15 = vld [vmem:[%s0] sm:$0xf]
  %v16 = vld [vmem:[%s1] sm:$0xf]
  %v17 = vld [vmem:[%s1 + $0x4] sm:$0xf]
  %v18 = vld [vmem:[%s1 + $0x8] sm:$0xf]
  %v19 = vld [vmem:[%s1 + $0xc] sm:$0xf]
  %v20 = vld [vmem:[%s1 + $0x10] sm:$0xf]
  %v21 = vld [vmem:[%s1 + $0x14] sm:$0xf]
  %v22 = vld [vmem:[%s1 + $0x18] sm:$0xf]
  %v23 = vld [vmem:[%s1 + $0x1c] sm:$0xf]
  %v24 = vld [vmem:[%s1 + $0x20] sm:$0xf]
  %v25 = vld [vmem:[%s1 + $0x24] sm:$0xf]
  %v26 = vld [vmem:[%s1 + $0x28] sm:$0xf]
  %v27 = vld [vmem:[%s1 + $0x2c] sm:$0xf]
  %v28 = vld [vmem:[%s1 + $0x30] sm:$0xf]
  %v29 = vld [vmem:[%s1 + $0x34] sm:$0xf]
  %v30 = vld [vmem:[%s1 + $0x38] sm:$0xf]
  %v31 = vld [vmem:[%s1 + $0x3c] sm:$0xf]
  %v32 = vld [vmem:[%s2] sm:$0x1]
  %v34 = vlaneseq
  %v35 = vshrl.u32 %v34, 7
  %v36 = vsub.s32 0, %v35
  %v37 = vrot.slane %v32, %v36
  %v55 = vunpack.c.l.b16 %v16
  %v56 = vunpack.c.l.b16 %v17
  %v57 = vunpack.c.l.b16 %v18
  %v58 = vunpack.c.l.b16 %v19
  %v59 = vunpack.c.l.b16 %v20
  %v60 = vunpack.c.l.b16 %v21
  %v61 = vunpack.c.l.b16 %v22
  %v62 = vunpack.c.l.b16 %v23
  %v63 = vunpack.c.l.b16 %v24
  %v64 = vunpack.c.l.b16 %v25
  %v65 = vunpack.c.l.b16 %v26
  %v66 = vunpack.c.l.b16 %v27
  %v67 = vunpack.c.l.b16 %v28
  %v68 = vunpack.c.l.b16 %v29
  %v69 = vunpack.c.l.b16 %v30
  %v70 = vunpack.c.l.b16 %v31
  %v71 = vpack.c.b16 %v56, %v55
  %v72 = vpack.c.b16 %v58, %v57
  %v73 = vpack.c.b16 %v60, %v59
  %v74 = vpack.c.b16 %v62, %v61
  %v75 = vpack.c.b16 %v64, %v63
  %v76 = vpack.c.b16 %v66, %v65
  %v77 = vpack.c.b16 %v68, %v67
  %v78 = vpack.c.b16 %v70, %v69
  %87 = vmatprep.subr.bf16.mxu0 0
  %88 = vmatpush1.bf16.msra.mxu0 %v71
  %89 = vmatprep.subr.bf16.mxu0 0
  %90 = vmatpush1.bf16.msra.mxu0 %v72
  %91 = vmatprep.subr.bf16.mxu0 0
  %92 = vmatpush1.bf16.msra.mxu0 %v73
  %93 = vmatprep.subr.bf16.mxu0 0
  %94 = vmatpush1.bf16.msra.mxu0 %v74
  %95 = vmatprep.subr.bf16.mxu0 0
  %96 = vmatpush1.bf16.msra.mxu0 %v75
  %97 = vmatprep.subr.bf16.mxu0 0
  %98 = vmatpush1.bf16.msra.mxu0 %v76
  %99 = vmatprep.subr.bf16.mxu0 0
  %100 = vmatpush1.bf16.msra.mxu0 %v77
  %101 = vmatprep.subr.bf16.mxu0 0
  %102 = vmatpush1.bf16.msra.mxu0 %v78
  %103 = vmatprep.subr.bf16.mxu0 0
  %104 = vmatpush1.bf16.msra.mxu0 0
  %105 = vmatprep.subr.bf16.mxu0 0
  %106 = vmatpush1.bf16.msra.mxu0 0
  %107 = vmatprep.subr.bf16.mxu0 0
  %108 = vmatpush1.bf16.msra.mxu0 0
  %109 = vmatprep.subr.bf16.mxu0 0
  %110 = vmatpush1.bf16.msra.mxu0 0
  %111 = vmatprep.subr.bf16.mxu0 0
  %112 = vmatpush1.bf16.msra.mxu0 0
  %113 = vmatprep.subr.bf16.mxu0 0
  %114 = vmatpush1.bf16.msra.mxu0 0
  %115 = vmatprep.subr.bf16.mxu0 0
  %116 = vmatpush1.bf16.msra.mxu0 0
  %117 = vmatprep.subr.bf16.mxu0 0
  %118 = vmatpush1.bf16.msra.mxu0 0
  %119 = vmatprep.mubr.bf16.mxu0 0
  %120 = vmatmul.mubr.bf16.gmra.mrb[0].mxu0 %v15
  %v121 = vpop.f32.mrb[0].mxu0
  %v122 = vadd.f32 %v37, %v121
  %v123 = vpop.f32.mrb[0].mxu0
  %v124 = vpop.f32.mrb[0].mxu0
  %v125 = vpop.f32.mrb[0].mxu0
  %126 = vdwg.mxu0
  %127 = vst [vmem:[%s3] sm:$0xff] %v122
  // Predicated region
  $region14: #{segmentation_simsiam_forward.20} parent=0 // pred_check
    _
  $region15: #{segmentation_simsiam_forward.20} parent=0 // pred_check_branch
    %129 = sbr.rel (0) target = $region17
  $region16: #{segmentation_simsiam_forward.20} parent=0 // pred_region
    _
  $region17: #{segmentation_simsiam_forward.20} parent=0 // pred_fallthru
    _
  // Predicated region
  $region18: #{segmentation_simsiam_forward.20} parent=0 // pred_check
    _
  $region19: #{segmentation_simsiam_forward.20} parent=0 // pred_check_branch
    %131 = sbr.rel (0) target = $region21
  $region20: #{segmentation_simsiam_forward.20} parent=0 // pred_region
    _
  $region21: #{segmentation_simsiam_forward.20} parent=0 // pred_fallthru
    _

// kernel: segmentation_simsiam_forward.18
$region0: #{segmentation_simsiam_forward.18}
  #allocation0 [shape = 'u32[]', space=smem, size = 0x4, offset = 0x4, fixed_abs, tag = 'smem constant byte address 0x4 - core index']
  #allocation1 [shape = 'u32[144,128]{1,0:T(1,128)}', space=vmem, size = 0x12000, scoped, tag = 'internal scratch']
  #allocation2 [shape = 'f32[1,128]{1,0:T(1,128)}', space=vmem, size = 0x200, scoped, tag = 'scratch operand']
  %s0 = inlined_call_operand.vmem [shape: bf16[2,4,128], index: 0, kind: input, shape index: {}]
  %s1 = inlined_call_operand.vmem [shape: bf16[128,128], index: 1, kind: input, shape index: {}]
  %s2 = inlined_call_operand.vmem [shape: f32[1,128], index: 2, kind: input, shape index: {}]
  %s3 = inlined_call_operand.vmem [shape: f32[2,1,128], index: 3, kind: output, shape index: {}]
  %s4 = sld [smem:[#allocation0]]
  $region53: #{segmentation_simsiam_forward.18} parent=0
    _
  %s6 = ssub.s32 1, %s4
  %s7 = scalar_select 0, %s6, %s4
  loop: start=0, step=1, limit=4
  $region2: #{segmentation_simsiam_forward.18} parent=0 // loop_pre_header
    _
  $region3: #{segmentation_simsiam_forward.18} parent=0 // loop_header
    %s9 = sphi 0, %s13
    %p10 = scmp.ge.s32.totalorder %s9, 4
    %s16 = sphi 0, %s28
    %s17 = sphi 0, %s24
    %s18 = sphi 0, %s16
    %s19 = sphi 0, %s17
    %s20 = sphi 0, %s18
    %s21 = sphi 0, %s19
    %s33 = sphi 0, %s35
    %s36 = sphi 0, %s33
    %s37 = sphi 0, %s36
    %s53 = sphi 0, %s37
    %s57 = sphi 0, %s57
    %s59 = sphi 0, %s57
    %s60 = sphi 0, %s59
    %s74 = sphi 0, %s60
    %s78 = sphi 0, %s78
    %s80 = sphi 0, %s78
    %s81 = sphi 0, %s80
    %s95 = sphi 0, %s81
    %s101 = sphi 0, %s103
    %s104 = sphi 0, %s101
    %s105 = sphi 0, %s104
    %s121 = sphi 0, %s105
  $region4: #{segmentation_simsiam_forward.18} parent=0 // loop_header_branch
    %12 = sbr.rel (%p10) target = $region8
  $region5: #{segmentation_simsiam_forward.18} parent=0 // loop_body
    %s14 = ssub.s32 %s9, 1
    %s15 = ssub.s32 %s9, 2
    %s22 = sadd.s32 1, %s17
    %p23 = scmp.ge.s32.totalorder %s22, 1
    %s24 = scalar_select %p23, 0, %s22
    %s25 = sadd.s32 1, %s16
    %s26 = scalar_select %p23, %s25, %s16
    %p27 = scmp.ge.s32.totalorder %s26, 2
    %s28 = scalar_select %p27, 0, %s26
    %s29 = ssub.s32 %s16, %s28
    %s30 = ssub.s32 %s17, %s24
    %s31 = sor.u32 %s29, %s30
    %p32 = scmp.eq.s32.totalorder %s31, 0
    %s34 = sadd.s32 %s33, 1
    %s35 = scalar_select %p32, %s33, %s34
    %p38 = pneg %p32
    %p39 = scmp.eq.s32.totalorder %s9, 1
    %p40 = por %p38, %p39
    %p41 = scmp.ne.s32.totalorder %s33, %s36
    %p42 = scmp.eq.s32.totalorder %s9, 0
    %p43 = por %p41, %p42
    %p44 = scmp.ne.s32.totalorder %s33, %s36
    %p45 = scmp.eq.s32.totalorder %s14, 1
    %p46 = por %p44, %p45
    %p47 = scmp.ne.s32.totalorder %s36, %s37
    %p48 = scmp.eq.s32.totalorder %s14, 0
    %p49 = por %p47, %p48
    %p50 = scmp.ne.s32.totalorder %s36, %s37
    %p51 = scmp.eq.s32.totalorder %s15, 1
    %p52 = por %p50, %p51
    %p54 = scmp.ne.s32.totalorder %s37, %s53
    %p55 = scmp.eq.s32.totalorder %s15, 0
    %p56 = por %p54, %p55
    %s58 = sadd.s32 %s57, 1
    %p61 = scmp.eq.s32.totalorder %s9, 1
    %p62 = scmp.ne.s32.totalorder %s57, %s59
    %p63 = scmp.eq.s32.totalorder %s9, 0
    %p64 = por %p62, %p63
    %p65 = scmp.ne.s32.totalorder %s57, %s59
    %p66 = scmp.eq.s32.totalorder %s14, 1
    %p67 = por %p65, %p66
    %p68 = scmp.ne.s32.totalorder %s59, %s60
    %p69 = scmp.eq.s32.totalorder %s14, 0
    %p70 = por %p68, %p69
    %p71 = scmp.ne.s32.totalorder %s59, %s60
    %p72 = scmp.eq.s32.totalorder %s15, 1
    %p73 = por %p71, %p72
    %p75 = scmp.ne.s32.totalorder %s60, %s74
    %p76 = scmp.eq.s32.totalorder %s15, 0
    %p77 = por %p75, %p76
    %s79 = sadd.s32 %s78, 1
    %p82 = scmp.eq.s32.totalorder %s9, 1
    %p83 = scmp.ne.s32.totalorder %s78, %s80
    %p84 = scmp.eq.s32.totalorder %s9, 0
    %p85 = por %p83, %p84
    %p86 = scmp.ne.s32.totalorder %s78, %s80
    %p87 = scmp.eq.s32.totalorder %s14, 1
    %p88 = por %p86, %p87
    %p89 = scmp.ne.s32.totalorder %s80, %s81
    %p90 = scmp.eq.s32.totalorder %s14, 0
    %p91 = por %p89, %p90
    %p92 = scmp.ne.s32.totalorder %s80, %s81
    %p93 = scmp.eq.s32.totalorder %s15, 1
    %p94 = por %p92, %p93
    %p96 = scmp.ne.s32.totalorder %s81, %s95
    %p97 = scmp.eq.s32.totalorder %s15, 0
    %p98 = por %p96, %p97
    %s99 = ssub.s32 %s16, %s28
    %p100 = scmp.eq.s32.totalorder %s99, 0
    %s102 = sadd.s32 %s101, 1
    %s103 = scalar_select %p100, %s101, %s102
    %p106 = pneg %p100
    %p107 = scmp.eq.s32.totalorder %s9, 1
    %p108 = por %p106, %p107
    %p109 = scmp.ne.s32.totalorder %s101, %s104
    %p110 = scmp.eq.s32.totalorder %s9, 0
    %p111 = por %p109, %p110
    %p112 = scmp.ne.s32.totalorder %s101, %s104
    %p113 = scmp.eq.s32.totalorder %s14, 1
    %p114 = por %p112, %p113
    %p115 = scmp.ne.s32.totalorder %s104, %s105
    %p116 = scmp.eq.s32.totalorder %s14, 0
    %p117 = por %p115, %p116
    %p118 = scmp.ne.s32.totalorder %s104, %s105
    %p119 = scmp.eq.s32.totalorder %s15, 1
    %p120 = por %p118, %p119
    %p122 = scmp.ne.s32.totalorder %s105, %s121
    %p123 = scmp.eq.s32.totalorder %s15, 0
    %p124 = por %p122, %p123
    %p125 = scmp.le.s32.totalorder 1, %s9
    %p126 = scmp.lt.s32.totalorder %s9, 3
    %p127 = pnand %p125, %p126
    %p128 = pneg %p127
    // Predicated region
    $region9: #{segmentation_simsiam_forward.18} parent=5 // pred_check
      _
    $region10: #{segmentation_simsiam_forward.18} parent=5 // pred_check_branch
      %130 = sbr.rel (%p127) target = $region12
    $region11: #{segmentation_simsiam_forward.18} parent=5 // pred_region
      %s131 = ssub.s32 %s9, 1
      // Predicated region
      $region13: #{segmentation_simsiam_forward.18} parent=11 // pred_check
        %p132 = pneg %p70
      $region14: #{segmentation_simsiam_forward.18} parent=11 // pred_check_branch
        %134 = sbr.rel (%p132) target = $region16
      $region15: #{segmentation_simsiam_forward.18} parent=11 // pred_region
        _
      $region16: #{segmentation_simsiam_forward.18} parent=11 // pred_fallthru
        _
      // Predicated region
      $region17: #{segmentation_simsiam_forward.18} parent=11 // pred_check
        %p135 = pneg %p91
      $region18: #{segmentation_simsiam_forward.18} parent=11 // pred_check_branch
        %137 = sbr.rel (%p135) target = $region20
      $region19: #{segmentation_simsiam_forward.18} parent=11 // pred_region
        _
      $region20: #{segmentation_simsiam_forward.18} parent=11 // pred_fallthru
        _
    $region12: #{segmentation_simsiam_forward.18} parent=5 // pred_fallthru
      _
    %p138 = scmp.lt.s32.totalorder %s9, 2
    // Predicated region
    $region21: #{segmentation_simsiam_forward.18} parent=5 // pred_check
      %p139 = pneg %p138
    $region22: #{segmentation_simsiam_forward.18} parent=5 // pred_check_branch
      %141 = sbr.rel (%p139) target = $region24
    $region23: #{segmentation_simsiam_forward.18} parent=5 // pred_region
      // Predicated region
      $region25: #{segmentation_simsiam_forward.18} parent=23 // pred_check
        %p142 = pneg %p43
      $region26: #{segmentation_simsiam_forward.18} parent=23 // pred_check_branch
        %144 = sbr.rel (%p142) target = $region28
      $region27: #{segmentation_simsiam_forward.18} parent=23 // pred_region
        %p145 = scmp.lt.s32.totalorder %s16, 1
        %s146 = scalar_select %p145, %s16, 1
        %p147 = scmp.lt.s32.totalorder %s17, 0
        %s148 = scalar_select %p147, %s17, 0
        %s149 = sadd.s32 %s148, %s146
        %s150 = smul.addr %s149, 2
        %s151 = scalar_lea.vmem %s0, %s150
      $region28: #{segmentation_simsiam_forward.18} parent=23 // pred_fallthru
        _
    $region24: #{segmentation_simsiam_forward.18} parent=5 // pred_fallthru
      _
    %p152 = scmp.le.s32.totalorder 1, %s9
    %p153 = scmp.lt.s32.totalorder %s9, 3
    %p154 = pnand %p152, %p153
    %p155 = pneg %p154
    // Predicated region
    $region29: #{segmentation_simsiam_forward.18} parent=5 // pred_check
      _
    $region30: #{segmentation_simsiam_forward.18} parent=5 // pred_check_branch
      %157 = sbr.rel (%p154) target = $region32
    $region31: #{segmentation_simsiam_forward.18} parent=5 // pred_region
      %s158 = ssub.s32 %s9, 1
      %p159 = scmp.lt.s32.totalorder %s18, 1
      %s160 = scalar_select %p159, %s18, 1
      %p161 = scmp.lt.s32.totalorder %s19, 0
      %s162 = scalar_select %p161, %s19, 0
      %s163 = sadd.s32 %s162, %s160
      %s164 = smul.addr %s163, 2
      %s165 = scalar_lea.vmem %s0, %s164
      %p166 = pneg %p49
      %p167 = pneg %p46
      %p168 = pneg %p70
      %p169 = pneg %p67
      %p170 = pneg %p91
      %p171 = pneg %p88
      %p172 = pneg %p117
      %p173 = pneg %p114
      %p174 = scmp.lt.s32.totalorder %s18, 1
      %s175 = scalar_select %p174, %s18, 1
      %s176 = scalar_lea.vmem %s3, %s175
      %p177 = scmp.lt.s32.totalorder %s18, 1
      %s178 = scalar_select %p177, %s18, 1
      %p179 = scmp.lt.s32.totalorder %s19, 0
      %s180 = scalar_select %p179, %s19, 0
      %s181 = sadd.s32 %s180, %s178
      %s182 = smul.addr %s181, 2
      %s183 = scalar_lea.vmem %s0, %s182
      %p184 = scmp.lt.s32.totalorder %s18, 1
      %s185 = scalar_select %p184, %s18, 1
      %s186 = scalar_lea.vmem %s3, %s185
      %p188 = scmp.eq.s32.totalorder %s19, 0
      // Predicated region
      $region33: #{segmentation_simsiam_forward.18} parent=31 // pred_check
        %p189 = pneg %p188
      $region34: #{segmentation_simsiam_forward.18} parent=31 // pred_check_branch
        %191 = sbr.rel (%p189) target = $region36
      $region35: #{segmentation_simsiam_forward.18} parent=31 // pred_region
        %192 = vst [vmem:[#allocation2] sm:$0x1] 0.0
      $region36: #{segmentation_simsiam_forward.18} parent=31 // pred_fallthru
        _
      %v193 = vld [vmem:[%s183] sm:$0x3]
      %v194 = vld [vmem:[%s1] sm:$0xf]
      %v195 = vld [vmem:[%s1 + $0x4] sm:$0xf]
      %v196 = vld [vmem:[%s1 + $0x8] sm:$0xf]
      %v197 = vld [vmem:[%s1 + $0xc] sm:$0xf]
      %v198 = vld [vmem:[%s1 + $0x10] sm:$0xf]
      %v199 = vld [vmem:[%s1 + $0x14] sm:$0xf]
      %v200 = vld [vmem:[%s1 + $0x18] sm:$0xf]
      %v201 = vld [vmem:[%s1 + $0x1c] sm:$0xf]
      %v202 = vld [vmem:[%s1 + $0x20] sm:$0xf]
      %v203 = vld [vmem:[%s1 + $0x24] sm:$0xf]
      %v204 = vld [vmem:[%s1 + $0x28] sm:$0xf]
      %v205 = vld [vmem:[%s1 + $0x2c] sm:$0xf]
      %v206 = vld [vmem:[%s1 + $0x30] sm:$0xf]
      %v207 = vld [vmem:[%s1 + $0x34] sm:$0xf]
      %v208 = vld [vmem:[%s1 + $0x38] sm:$0xf]
      %v209 = vld [vmem:[%s1 + $0x3c] sm:$0xf]
      %v210 = vld [vmem:[%s2] sm:$0x1]
      %v212 = vlaneseq
      %v213 = vshrl.u32 %v212, 7
      %v214 = vsub.s32 0, %v213
      %v215 = vrot.slane %v210, %v214
      %v233 = vunpack.c.l.b16 %v194
      %v234 = vunpack.c.l.b16 %v195
      %v235 = vunpack.c.l.b16 %v196
      %v236 = vunpack.c.l.b16 %v197
      %v237 = vunpack.c.l.b16 %v198
      %v238 = vunpack.c.l.b16 %v199
      %v239 = vunpack.c.l.b16 %v200
      %v240 = vunpack.c.l.b16 %v201
      %v241 = vunpack.c.l.b16 %v202
      %v242 = vunpack.c.l.b16 %v203
      %v243 = vunpack.c.l.b16 %v204
      %v244 = vunpack.c.l.b16 %v205
      %v245 = vunpack.c.l.b16 %v206
      %v246 = vunpack.c.l.b16 %v207
      %v247 = vunpack.c.l.b16 %v208
      %v248 = vunpack.c.l.b16 %v209
      %v249 = vpack.c.b16 %v234, %v233
      %v250 = vpack.c.b16 %v236, %v235
      %v251 = vpack.c.b16 %v238, %v237
      %v252 = vpack.c.b16 %v240, %v239
      %v253 = vpack.c.b16 %v242, %v241
      %v254 = vpack.c.b16 %v244, %v243
      %v255 = vpack.c.b16 %v246, %v245
      %v256 = vpack.c.b16 %v248, %v247
      %265 = vmatprep.subr.bf16.mxu0 0
      %266 = vmatpush1.bf16.msra.mxu0 %v249
      %267 = vmatprep.subr.bf16.mxu0 0
      %268 = vmatpush1.bf16.msra.mxu0 %v250
      %269 = vmatprep.subr.bf16.mxu0 0
      %270 = vmatpush1.bf16.msra.mxu0 %v251
      %271 = vmatprep.subr.bf16.mxu0 0
      %272 = vmatpush1.bf16.msra.mxu0 %v252
      %273 = vmatprep.subr.bf16.mxu0 0
      %274 = vmatpush1.bf16.msra.mxu0 %v253
      %275 = vmatprep.subr.bf16.mxu0 0
      %276 = vmatpush1.bf16.msra.mxu0 %v254
      %277 = vmatprep.subr.bf16.mxu0 0
      %278 = vmatpush1.bf16.msra.mxu0 %v255
      %279 = vmatprep.subr.bf16.mxu0 0
      %280 = vmatpush1.bf16.msra.mxu0 %v256
      %281 = vmatprep.subr.bf16.mxu0 0
      %282 = vmatpush1.bf16.msra.mxu0 0
      %283 = vmatprep.subr.bf16.mxu0 0
      %284 = vmatpush1.bf16.msra.mxu0 0
      %285 = vmatprep.subr.bf16.mxu0 0
      %286 = vmatpush1.bf16.msra.mxu0 0
      %287 = vmatprep.subr.bf16.mxu0 0
      %288 = vmatpush1.bf16.msra.mxu0 0
      %289 = vmatprep.subr.bf16.mxu0 0
      %290 = vmatpush1.bf16.msra.mxu0 0
      %291 = vmatprep.subr.bf16.mxu0 0
      %292 = vmatpush1.bf16.msra.mxu0 0
      %293 = vmatprep.subr.bf16.mxu0 0
      %294 = vmatpush1.bf16.msra.mxu0 0
      %295 = vmatprep.subr.bf16.mxu0 0
      %296 = vmatpush1.bf16.msra.mxu0 0
      %297 = vmatprep.mubr.bf16.mxu0 0
      %298 = vmatmul.mubr.bf16.gmra.mrb[0].mxu0 %v193
      %v299 = vpop.f32.mrb[0].mxu0
      %v300 = vadd.f32 %v215, %v299
      %v301 = vpop.f32.mrb[0].mxu0
      %v302 = vpop.f32.mrb[0].mxu0
      %v303 = vpop.f32.mrb[0].mxu0
      %304 = vdwg.mxu0
      %v305 = vmax.f32 %v300, 0.0
      %v306 = vld [vmem:[#allocation2] sm:$0x1]
      %vm307 = vcmask 1043456
      %v308 = vsel %vm307, %v305, 0.0
      %v309 = vrot.slane %v308, 4
      %v310 = vadd.f32 %v308, %v309
      %v311 = vrot.slane %v310, 2
      %v312 = vadd.f32 %v310, %v311
      %v313 = vrot.slane %v312, 1
      %v314 = vadd.f32 %v312, %v313
      %v315 = vadd.f32 %v306, %v314
      %316 = vst [vmem:[#allocation2] sm:$0x1] %v315
      // Predicated region
      $region37: #{segmentation_simsiam_forward.18} parent=31 // pred_check
        %p317 = pneg %p188
      $region38: #{segmentation_simsiam_forward.18} parent=31 // pred_check_branch
        %319 = sbr.rel (%p317) target = $region40
      $region39: #{segmentation_simsiam_forward.18} parent=31 // pred_region
        %v320 = vld [vmem:[#allocation2] sm:$0x1]
        %v321 = vmul.f32 %v320, 0.25
        %322 = vst [vmem:[%s186] sm:$0x1] %v321
      $region40: #{segmentation_simsiam_forward.18} parent=31 // pred_fallthru
        _
      %p323 = scmp.lt.s32.totalorder %s18, 1
      %s324 = scalar_select %p323, %s18, 1
      %s325 = scalar_lea.vmem %s3, %s324
      // Predicated region
      $region41: #{segmentation_simsiam_forward.18} parent=31 // pred_check
        %p326 = pneg %p114
      $region42: #{segmentation_simsiam_forward.18} parent=31 // pred_check_branch
        %328 = sbr.rel (%p326) target = $region44
      $region43: #{segmentation_simsiam_forward.18} parent=31 // pred_region
        _
      $region44: #{segmentation_simsiam_forward.18} parent=31 // pred_fallthru
        _
    $region32: #{segmentation_simsiam_forward.18} parent=5 // pred_fallthru
      _
    %p329 = scmp.le.s32.totalorder 2, %s9
    // Predicated region
    $region45: #{segmentation_simsiam_forward.18} parent=5 // pred_check
      %p330 = pneg %p329
    $region46: #{segmentation_simsiam_forward.18} parent=5 // pred_check_branch
      %332 = sbr.rel (%p330) target = $region48
    $region47: #{segmentation_simsiam_forward.18} parent=5 // pred_region
      %s333 = ssub.s32 %s9, 2
      // Predicated region
      $region49: #{segmentation_simsiam_forward.18} parent=47 // pred_check
        %p334 = pneg %p120
      $region50: #{segmentation_simsiam_forward.18} parent=47 // pred_check_branch
        %336 = sbr.rel (%p334) target = $region52
      $region51: #{segmentation_simsiam_forward.18} parent=47 // pred_region
        %p337 = scmp.lt.s32.totalorder %s20, 1
        %s338 = scalar_select %p337, %s20, 1
        %s339 = scalar_lea.vmem %s3, %s338
      $region52: #{segmentation_simsiam_forward.18} parent=47 // pred_fallthru
        _
    $region48: #{segmentation_simsiam_forward.18} parent=5 // pred_fallthru
      _
  $region6: #{segmentation_simsiam_forward.18} parent=0 // loop_footer
    %s13 = sadd.s32 1, %s9
  $region7: #{segmentation_simsiam_forward.18} parent=0 // loop_footer_branch
    %8 = sbr.rel target = $region3
  $region8: #{segmentation_simsiam_forward.18} parent=0 // loop_exit
    _

// kernel: segmentation_simsiam_forward.19
$region0: #{segmentation_simsiam_forward.19}
  #allocation0 [shape = 'u32[]', space=smem, size = 0x4, offset = 0x4, fixed_abs, tag = 'smem constant byte address 0x4 - core index']
  #allocation1 [shape = 'u32[144,128]{1,0:T(1,128)}', space=vmem, size = 0x12000, scoped, tag = 'internal scratch']
  %s0 = inlined_call_operand.vmem [shape: f32[4,128], index: 0, kind: input, shape index: {}]
  %s1 = inlined_call_operand.vmem [shape: bf16[128,128], index: 1, kind: input, shape index: {}]
  %s2 = inlined_call_operand.vmem [shape: f32[1,128], index: 2, kind: input, shape index: {}]
  %s3 = inlined_call_operand.vmem [shape: bf16[128,128], index: 3, kind: input, shape index: {}]
  %s4 = inlined_call_operand.vmem [shape: f32[1,128], index: 4, kind: input, shape index: {}]
  %s5 = inlined_call_operand.vmem [shape: bf16[128,64], index: 5, kind: input, shape index: {}]
  %s6 = inlined_call_operand.vmem [shape: f32[1,64], index: 6, kind: input, shape index: {}]
  %s7 = inlined_call_operand.vmem [shape: bf16[64,128], index: 7, kind: input, shape index: {}]
  %s8 = inlined_call_operand.vmem [shape: f32[1,128], index: 8, kind: input, shape index: {}]
  %s9 = inlined_call_operand.vmem [shape: f32[4,128], index: 9, kind: output, shape index: {0}]
  %s10 = inlined_call_operand.vmem [shape: f32[4,128], index: 10, kind: output, shape index: {1}]
  %11 = xla_tuple %s9, %s10
  %s12 = sld [smem:[#allocation0]]
  $region54: #{segmentation_simsiam_forward.19} parent=0
    _
  %s14 = ssub.s32 1, %s12
  %s15 = scalar_select 0, %s14, %s12
  // Predicated region
  $region2: #{segmentation_simsiam_forward.19} parent=0 // pred_check
    _
  $region3: #{segmentation_simsiam_forward.19} parent=0 // pred_check_branch
    %17 = sbr.rel (0) target = $region5
  $region4: #{segmentation_simsiam_forward.19} parent=0 // pred_region
    _
  $region5: #{segmentation_simsiam_forward.19} parent=0 // pred_fallthru
    _
  // Predicated region
  $region6: #{segmentation_simsiam_forward.19} parent=0 // pred_check
    _
  $region7: #{segmentation_simsiam_forward.19} parent=0 // pred_check_branch
    %19 = sbr.rel (0) target = $region9
  $region8: #{segmentation_simsiam_forward.19} parent=0 // pred_region
    _
  $region9: #{segmentation_simsiam_forward.19} parent=0 // pred_fallthru
    _
  // Predicated region
  $region10: #{segmentation_simsiam_forward.19} parent=0 // pred_check
    _
  $region11: #{segmentation_simsiam_forward.19} parent=0 // pred_check_branch
    %21 = sbr.rel (0) target = $region13
  $region12: #{segmentation_simsiam_forward.19} parent=0 // pred_region
    _
  $region13: #{segmentation_simsiam_forward.19} parent=0 // pred_fallthru
    _
  // Predicated region
  $region14: #{segmentation_simsiam_forward.19} parent=0 // pred_check
    _
  $region15: #{segmentation_simsiam_forward.19} parent=0 // pred_check_branch
    %23 = sbr.rel (0) target = $region17
  $region16: #{segmentation_simsiam_forward.19} parent=0 // pred_region
    _
  $region17: #{segmentation_simsiam_forward.19} parent=0 // pred_fallthru
    _
  // Predicated region
  $region18: #{segmentation_simsiam_forward.19} parent=0 // pred_check
    _
  $region19: #{segmentation_simsiam_forward.19} parent=0 // pred_check_branch
    %25 = sbr.rel (0) target = $region21
  $region20: #{segmentation_simsiam_forward.19} parent=0 // pred_region
    _
  $region21: #{segmentation_simsiam_forward.19} parent=0 // pred_fallthru
    _
  // Predicated region
  $region22: #{segmentation_simsiam_forward.19} parent=0 // pred_check
    _
  $region23: #{segmentation_simsiam_forward.19} parent=0 // pred_check_branch
    %27 = sbr.rel (0) target = $region25
  $region24: #{segmentation_simsiam_forward.19} parent=0 // pred_region
    _
  $region25: #{segmentation_simsiam_forward.19} parent=0 // pred_fallthru
    _
  // Predicated region
  $region26: #{segmentation_simsiam_forward.19} parent=0 // pred_check
    _
  $region27: #{segmentation_simsiam_forward.19} parent=0 // pred_check_branch
    %29 = sbr.rel (0) target = $region29
  $region28: #{segmentation_simsiam_forward.19} parent=0 // pred_region
    _
  $region29: #{segmentation_simsiam_forward.19} parent=0 // pred_fallthru
    _
  // Predicated region
  $region30: #{segmentation_simsiam_forward.19} parent=0 // pred_check
    _
  $region31: #{segmentation_simsiam_forward.19} parent=0 // pred_check_branch
    %31 = sbr.rel (0) target = $region33
  $region32: #{segmentation_simsiam_forward.19} parent=0 // pred_region
    _
  $region33: #{segmentation_simsiam_forward.19} parent=0 // pred_fallthru
    _
  // Predicated region
  $region34: #{segmentation_simsiam_forward.19} parent=0 // pred_check
    _
  $region35: #{segmentation_simsiam_forward.19} parent=0 // pred_check_branch
    %33 = sbr.rel (0) target = $region37
  $region36: #{segmentation_simsiam_forward.19} parent=0 // pred_region
    _
  $region37: #{segmentation_simsiam_forward.19} parent=0 // pred_fallthru
    _
  %v35 = vld [vmem:[%s0] sm:$0xf]
  %v36 = vpack.c.bf16 %v35, %v35
  %v37 = vld [vmem:[%s1] sm:$0xf]
  %v38 = vld [vmem:[%s1 + $0x4] sm:$0xf]
  %v39 = vld [vmem:[%s1 + $0x8] sm:$0xf]
  %v40 = vld [vmem:[%s1 + $0xc] sm:$0xf]
  %v41 = vld [vmem:[%s1 + $0x10] sm:$0xf]
  %v42 = vld [vmem:[%s1 + $0x14] sm:$0xf]
  %v43 = vld [vmem:[%s1 + $0x18] sm:$0xf]
  %v44 = vld [vmem:[%s1 + $0x1c] sm:$0xf]
  %v45 = vld [vmem:[%s1 + $0x20] sm:$0xf]
  %v46 = vld [vmem:[%s1 + $0x24] sm:$0xf]
  %v47 = vld [vmem:[%s1 + $0x28] sm:$0xf]
  %v48 = vld [vmem:[%s1 + $0x2c] sm:$0xf]
  %v49 = vld [vmem:[%s1 + $0x30] sm:$0xf]
  %v50 = vld [vmem:[%s1 + $0x34] sm:$0xf]
  %v51 = vld [vmem:[%s1 + $0x38] sm:$0xf]
  %v52 = vld [vmem:[%s1 + $0x3c] sm:$0xf]
  %v53 = vld [vmem:[%s2] sm:$0x1]
  %v55 = vlaneseq
  %v56 = vshrl.u32 %v55, 7
  %v57 = vsub.s32 0, %v56
  %v58 = vrot.slane %v53, %v57
  %v76 = vunpack.c.l.b16 %v37
  %v77 = vunpack.c.l.b16 %v38
  %v78 = vunpack.c.l.b16 %v39
  %v79 = vunpack.c.l.b16 %v40
  %v80 = vunpack.c.l.b16 %v41
  %v81 = vunpack.c.l.b16 %v42
  %v82 = vunpack.c.l.b16 %v43
  %v83 = vunpack.c.l.b16 %v44
  %v84 = vunpack.c.l.b16 %v45
  %v85 = vunpack.c.l.b16 %v46
  %v86 = vunpack.c.l.b16 %v47
  %v87 = vunpack.c.l.b16 %v48
  %v88 = vunpack.c.l.b16 %v49
  %v89 = vunpack.c.l.b16 %v50
  %v90 = vunpack.c.l.b16 %v51
  %v91 = vunpack.c.l.b16 %v52
  %v92 = vpack.c.b16 %v77, %v76
  %v93 = vpack.c.b16 %v79, %v78
  %v94 = vpack.c.b16 %v81, %v80
  %v95 = vpack.c.b16 %v83, %v82
  %v96 = vpack.c.b16 %v85, %v84
  %v97 = vpack.c.b16 %v87, %v86
  %v98 = vpack.c.b16 %v89, %v88
  %v99 = vpack.c.b16 %v91, %v90
  %108 = vmatprep.subr.bf16.mxu0 0
  %109 = vmatpush1.bf16.msra.mxu0 %v92
  %110 = vmatprep.subr.bf16.mxu0 0
  %111 = vmatpush1.bf16.msra.mxu0 %v93
  %112 = vmatprep.subr.bf16.mxu0 0
  %113 = vmatpush1.bf16.msra.mxu0 %v94
  %114 = vmatprep.subr.bf16.mxu0 0
  %115 = vmatpush1.bf16.msra.mxu0 %v95
  %116 = vmatprep.subr.bf16.mxu0 0
  %117 = vmatpush1.bf16.msra.mxu0 %v96
  %118 = vmatprep.subr.bf16.mxu0 0
  %119 = vmatpush1.bf16.msra.mxu0 %v97
  %120 = vmatprep.subr.bf16.mxu0 0
  %121 = vmatpush1.bf16.msra.mxu0 %v98
  %122 = vmatprep.subr.bf16.mxu0 0
  %123 = vmatpush1.bf16.msra.mxu0 %v99
  %124 = vmatprep.subr.bf16.mxu0 0
  %125 = vmatpush1.bf16.msra.mxu0 0
  %126 = vmatprep.subr.bf16.mxu0 0
  %127 = vmatpush1.bf16.msra.mxu0 0
  %128 = vmatprep.subr.bf16.mxu0 0
  %129 = vmatpush1.bf16.msra.mxu0 0
  %130 = vmatprep.subr.bf16.mxu0 0
  %131 = vmatpush1.bf16.msra.mxu0 0
  %132 = vmatprep.subr.bf16.mxu0 0
  %133 = vmatpush1.bf16.msra.mxu0 0
  %134 = vmatprep.subr.bf16.mxu0 0
  %135 = vmatpush1.bf16.msra.mxu0 0
  %136 = vmatprep.subr.bf16.mxu0 0
  %137 = vmatpush1.bf16.msra.mxu0 0
  %138 = vmatprep.subr.bf16.mxu0 0
  %139 = vmatpush1.bf16.msra.mxu0 0
  %140 = vmatprep.mubr.bf16.mxu0 0
  %141 = vmatmul.mubr.bf16.gmra.mrb[0].mxu0 %v36
  %v142 = vpop.f32.mrb[0].mxu0
  %v143 = vadd.f32 %v58, %v142
  %v144 = vpop.f32.mrb[0].mxu0
  %v145 = vpop.f32.mrb[0].mxu0
  %v146 = vpop.f32.mrb[0].mxu0
  %147 = vdwg.mxu0
  %v148 = vmax.f32 %v143, 0.0
  %v149 = vpack.c.bf16 %v148, %v148
  %v150 = vld [vmem:[%s3] sm:$0xf]
  %v151 = vld [vmem:[%s3 + $0x4] sm:$0xf]
  %v152 = vld [vmem:[%s3 + $0x8] sm:$0xf]
  %v153 = vld [vmem:[%s3 + $0xc] sm:$0xf]
  %v154 = vld [vmem:[%s3 + $0x10] sm:$0xf]
  %v155 = vld [vmem:[%s3 + $0x14] sm:$0xf]
  %v156 = vld [vmem:[%s3 + $0x18] sm:$0xf]
  %v157 = vld [vmem:[%s3 + $0x1c] sm:$0xf]
  %v158 = vld [vmem:[%s3 + $0x20] sm:$0xf]
  %v159 = vld [vmem:[%s3 + $0x24] sm:$0xf]
  %v160 = vld [vmem:[%s3 + $0x28] sm:$0xf]
  %v161 = vld [vmem:[%s3 + $0x2c] sm:$0xf]
  %v162 = vld [vmem:[%s3 + $0x30] sm:$0xf]
  %v163 = vld [vmem:[%s3 + $0x34] sm:$0xf]
  %v164 = vld [vmem:[%s3 + $0x38] sm:$0xf]
  %v165 = vld [vmem:[%s3 + $0x3c] sm:$0xf]
  %v166 = vld [vmem:[%s4] sm:$0x1]
  %v168 = vlaneseq
  %v169 = vshrl.u32 %v168, 7
  %v170 = vsub.s32 0, %v169
  %v171 = vrot.slane %v166, %v170
  %v189 = vunpack.c.l.b16 %v150
  %v190 = vunpack.c.l.b16 %v151
  %v191 = vunpack.c.l.b16 %v152
  %v192 = vunpack.c.l.b16 %v153
  %v193 = vunpack.c.l.b16 %v154
  %v194 = vunpack.c.l.b16 %v155
  %v195 = vunpack.c.l.b16 %v156
  %v196 = vunpack.c.l.b16 %v157
  %v197 = vunpack.c.l.b16 %v158
  %v198 = vunpack.c.l.b16 %v159
  %v199 = vunpack.c.l.b16 %v160
  %v200 = vunpack.c.l.b16 %v161
  %v201 = vunpack.c.l.b16 %v162
  %v202 = vunpack.c.l.b16 %v163
  %v203 = vunpack.c.l.b16 %v164
  %v204 = vunpack.c.l.b16 %v165
  %v205 = vpack.c.b16 %v190, %v189
  %v206 = vpack.c.b16 %v192, %v191
  %v207 = vpack.c.b16 %v194, %v193
  %v208 = vpack.c.b16 %v196, %v195
  %v209 = vpack.c.b16 %v198, %v197
  %v210 = vpack.c.b16 %v200, %v199
  %v211 = vpack.c.b16 %v202, %v201
  %v212 = vpack.c.b16 %v204, %v203
  %221 = vmatprep.subr.bf16.mxu0 0
  %222 = vmatpush1.bf16.msra.mxu0 %v205
  %223 = vmatprep.subr.bf16.mxu0 0
  %224 = vmatpush1.bf16.msra.mxu0 %v206
  %225 = vmatprep.subr.bf16.mxu0 0
  %226 = vmatpush1.bf16.msra.mxu0 %v207
  %227 = vmatprep.subr.bf16.mxu0 0
  %228 = vmatpush1.bf16.msra.mxu0 %v208
  %229 = vmatprep.subr.bf16.mxu0 0
  %230 = vmatpush1.bf16.msra.mxu0 %v209
  %231 = vmatprep.subr.bf16.mxu0 0
  %232 = vmatpush1.bf16.msra.mxu0 %v210
  %233 = vmatprep.subr.bf16.mxu0 0
  %234 = vmatpush1.bf16.msra.mxu0 %v211
  %235 = vmatprep.subr.bf16.mxu0 0
  %236 = vmatpush1.bf16.msra.mxu0 %v212
  %237 = vmatprep.subr.bf16.mxu0 0
  %238 = vmatpush1.bf16.msra.mxu0 0
  %239 = vmatprep.subr.bf16.mxu0 0
  %240 = vmatpush1.bf16.msra.mxu0 0
  %241 = vmatprep.subr.bf16.mxu0 0
  %242 = vmatpush1.bf16.msra.mxu0 0
  %243 = vmatprep.subr.bf16.mxu0 0
  %244 = vmatpush1.bf16.msra.mxu0 0
  %245 = vmatprep.subr.bf16.mxu0 0
  %246 = vmatpush1.bf16.msra.mxu0 0
  %247 = vmatprep.subr.bf16.mxu0 0
  %248 = vmatpush1.bf16.msra.mxu0 0
  %249 = vmatprep.subr.bf16.mxu0 0
  %250 = vmatpush1.bf16.msra.mxu0 0
  %251 = vmatprep.subr.bf16.mxu0 0
  %252 = vmatpush1.bf16.msra.mxu0 0
  %253 = vmatprep.mubr.bf16.mxu0 0
  %254 = vmatmul.mubr.bf16.gmra.mrb[0].mxu0 %v149
  %v255 = vpop.f32.mrb[0].mxu0
  %v256 = vadd.f32 %v171, %v255
  %v257 = vpop.f32.mrb[0].mxu0
  %v258 = vpop.f32.mrb[0].mxu0
  %v259 = vpop.f32.mrb[0].mxu0
  %260 = vdwg.mxu0
  %v261 = vpack.c.bf16 %v256, %v256
  %v262 = vld [vmem:[%s5] sm:$0xf]
  %v263 = vld [vmem:[%s5 + $0x4] sm:$0xf]
  %v264 = vld [vmem:[%s5 + $0x8] sm:$0xf]
  %v265 = vld [vmem:[%s5 + $0xc] sm:$0xf]
  %v266 = vld [vmem:[%s5 + $0x10] sm:$0xf]
  %v267 = vld [vmem:[%s5 + $0x14] sm:$0xf]
  %v268 = vld [vmem:[%s5 + $0x18] sm:$0xf]
  %v269 = vld [vmem:[%s5 + $0x1c] sm:$0xf]
  %v270 = vld [vmem:[%s5 + $0x20] sm:$0xf]
  %v271 = vld [vmem:[%s5 + $0x24] sm:$0xf]
  %v272 = vld [vmem:[%s5 + $0x28] sm:$0xf]
  %v273 = vld [vmem:[%s5 + $0x2c] sm:$0xf]
  %v274 = vld [vmem:[%s5 + $0x30] sm:$0xf]
  %v275 = vld [vmem:[%s5 + $0x34] sm:$0xf]
  %v276 = vld [vmem:[%s5 + $0x38] sm:$0xf]
  %v277 = vld [vmem:[%s5 + $0x3c] sm:$0xf]
  %v278 = vld [vmem:[%s6] sm:$0x1]
  %v280 = vlaneseq
  %v281 = vshrl.u32 %v280, 7
  %v282 = vsub.s32 0, %v281
  %v283 = vrot.slane %v278, %v282
  %v301 = vunpack.c.l.b16 %v262
  %v302 = vunpack.c.l.b16 %v263
  %v303 = vunpack.c.l.b16 %v264
  %v304 = vunpack.c.l.b16 %v265
  %v305 = vunpack.c.l.b16 %v266
  %v306 = vunpack.c.l.b16 %v267
  %v307 = vunpack.c.l.b16 %v268
  %v308 = vunpack.c.l.b16 %v269
  %v309 = vunpack.c.l.b16 %v270
  %v310 = vunpack.c.l.b16 %v271
  %v311 = vunpack.c.l.b16 %v272
  %v312 = vunpack.c.l.b16 %v273
  %v313 = vunpack.c.l.b16 %v274
  %v314 = vunpack.c.l.b16 %v275
  %v315 = vunpack.c.l.b16 %v276
  %v316 = vunpack.c.l.b16 %v277
  %v317 = vpack.c.b16 %v302, %v301
  %v318 = vpack.c.b16 %v304, %v303
  %v319 = vpack.c.b16 %v306, %v305
  %v320 = vpack.c.b16 %v308, %v307
  %v321 = vpack.c.b16 %v310, %v309
  %v322 = vpack.c.b16 %v312, %v311
  %v323 = vpack.c.b16 %v314, %v313
  %v324 = vpack.c.b16 %v316, %v315
  %333 = vmatprep.subr.bf16.mxu0 0
  %334 = vmatpush1.bf16.msra.mxu0 %v317
  %335 = vmatprep.subr.bf16.mxu0 0
  %336 = vmatpush1.bf16.msra.mxu0 %v318
  %337 = vmatprep.subr.bf16.mxu0 0
  %338 = vmatpush1.bf16.msra.mxu0 %v319
  %339 = vmatprep.subr.bf16.mxu0 0
  %340 = vmatpush1.bf16.msra.mxu0 %v320
  %341 = vmatprep.subr.bf16.mxu0 0
  %342 = vmatpush1.bf16.msra.mxu0 %v321
  %343 = vmatprep.subr.bf16.mxu0 0
  %344 = vmatpush1.bf16.msra.mxu0 %v322
  %345 = vmatprep.subr.bf16.mxu0 0
  %346 = vmatpush1.bf16.msra.mxu0 %v323
  %347 = vmatprep.subr.bf16.mxu0 0
  %348 = vmatpush1.bf16.msra.mxu0 %v324
  %349 = vmatprep.subr.bf16.mxu0 0
  %350 = vmatpush1.bf16.msra.mxu0 0
  %351 = vmatprep.subr.bf16.mxu0 0
  %352 = vmatpush1.bf16.msra.mxu0 0
  %353 = vmatprep.subr.bf16.mxu0 0
  %354 = vmatpush1.bf16.msra.mxu0 0
  %355 = vmatprep.subr.bf16.mxu0 0
  %356 = vmatpush1.bf16.msra.mxu0 0
  %357 = vmatprep.subr.bf16.mxu0 0
  %358 = vmatpush1.bf16.msra.mxu0 0
  %359 = vmatprep.subr.bf16.mxu0 0
  %360 = vmatpush1.bf16.msra.mxu0 0
  %361 = vmatprep.subr.bf16.mxu0 0
  %362 = vmatpush1.bf16.msra.mxu0 0
  %363 = vmatprep.subr.bf16.mxu0 0
  %364 = vmatpush1.bf16.msra.mxu0 0
  %365 = vmatprep.mubr.bf16.mxu0 0
  %366 = vmatmul.mubr.bf16.gmra.mrb[0].mxu0 %v261
  %v367 = vpop.f32.mrb[0].mxu0
  %v368 = vadd.f32 %v283, %v367
  %v369 = vpop.f32.mrb[0].mxu0
  %v370 = vpop.f32.mrb[0].mxu0
  %v371 = vpop.f32.mrb[0].mxu0
  %372 = vdwg.mxu0
  %v373 = vmax.f32 %v368, 0.0
  %v374 = vpack.c.bf16 %v373, %v373
  %v375 = vld [vmem:[%s7] sm:$0xf]
  %v376 = vld [vmem:[%s7 + $0x4] sm:$0xf]
  %v377 = vld [vmem:[%s7 + $0x8] sm:$0xf]
  %v378 = vld [vmem:[%s7 + $0xc] sm:$0xf]
  %v379 = vld [vmem:[%s7 + $0x10] sm:$0xf]
  %v380 = vld [vmem:[%s7 + $0x14] sm:$0xf]
  %v381 = vld [vmem:[%s7 + $0x18] sm:$0xf]
  %v382 = vld [vmem:[%s7 + $0x1c] sm:$0xf]
  %v383 = vld [vmem:[%s8] sm:$0x1]
  %v385 = vlaneseq
  %v386 = vshrl.u32 %v385, 7
  %v387 = vsub.s32 0, %v386
  %v388 = vrot.slane %v383, %v387
  %v398 = vunpack.c.l.b16 %v375
  %v399 = vunpack.c.l.b16 %v376
  %v400 = vunpack.c.l.b16 %v377
  %v401 = vunpack.c.l.b16 %v378
  %v402 = vunpack.c.l.b16 %v379
  %v403 = vunpack.c.l.b16 %v380
  %v404 = vunpack.c.l.b16 %v381
  %v405 = vunpack.c.l.b16 %v382
  %v406 = vpack.c.b16 %v399, %v398
  %v407 = vpack.c.b16 %v401, %v400
  %v408 = vpack.c.b16 %v403, %v402
  %v409 = vpack.c.b16 %v405, %v404
  %vm414 = vcmask 523264
  %v416 = vsel %vm414, %v374, 0
  %418 = vmatprep.subr.bf16.mxu0 0
  %419 = vmatpush1.bf16.msra.mxu0 %v406
  %420 = vmatprep.subr.bf16.mxu0 0
  %421 = vmatpush1.bf16.msra.mxu0 %v407
  %422 = vmatprep.subr.bf16.mxu0 0
  %423 = vmatpush1.bf16.msra.mxu0 %v408
  %424 = vmatprep.subr.bf16.mxu0 0
  %425 = vmatpush1.bf16.msra.mxu0 %v409
  %426 = vmatprep.subr.bf16.mxu0 0
  %427 = vmatpush1.bf16.msra.mxu0 0
  %428 = vmatprep.subr.bf16.mxu0 0
  %429 = vmatpush1.bf16.msra.mxu0 0
  %430 = vmatprep.subr.bf16.mxu0 0
  %431 = vmatpush1.bf16.msra.mxu0 0
  %432 = vmatprep.subr.bf16.mxu0 0
  %433 = vmatpush1.bf16.msra.mxu0 0
  %434 = vmatprep.subr.bf16.mxu0 0
  %435 = vmatpush1.bf16.msra.mxu0 0
  %436 = vmatprep.subr.bf16.mxu0 0
  %437 = vmatpush1.bf16.msra.mxu0 0
  %438 = vmatprep.subr.bf16.mxu0 0
  %439 = vmatpush1.bf16.msra.mxu0 0
  %440 = vmatprep.subr.bf16.mxu0 0
  %441 = vmatpush1.bf16.msra.mxu0 0
  %442 = vmatprep.subr.bf16.mxu0 0
  %443 = vmatpush1.bf16.msra.mxu0 0
  %444 = vmatprep.subr.bf16.mxu0 0
  %445 = vmatpush1.bf16.msra.mxu0 0
  %446 = vmatprep.subr.bf16.mxu0 0
  %447 = vmatpush1.bf16.msra.mxu0 0
  %448 = vmatprep.subr.bf16.mxu0 0
  %449 = vmatpush1.bf16.msra.mxu0 0
  %450 = vmatprep.mubr.bf16.mxu0 0
  %451 = vmatmul.mubr.bf16.gmra.mrb[0].mxu0 %v416
  %v452 = vpop.f32.mrb[0].mxu0
  %v453 = vadd.f32 %v388, %v452
  %v454 = vpop.f32.mrb[0].mxu0
  %v455 = vpop.f32.mrb[0].mxu0
  %v456 = vpop.f32.mrb[0].mxu0
  %457 = vdwg.mxu0
  %v458 = vmul.f32 %v256, %v256
  %vm459 = vcmask 1043456
  %v460 = vsel %vm459, %v458, 0.0
  %461 = vadd.xlane.f32.xlu0 %v460
  %v462 = vpop.xlane.xlu0 %461
  %v463 = vrsqrt.pop %v462
  %v464 = vmul.f32 %v462, %v463
  %vm465 = vcmp.eq.f32.partialorder %v462, inf
  %v466 = vsel %vm465, %v462, %v464
  %vm467 = vcmp.eq.f32.partialorder %v462, 0.0
  %v468 = vand.u32 %v462, 2147483648
  %v469 = vsel %vm467, %v468, %v466
  %v470 = vmul.f32 %v453, %v453
  %v471 = vsel %vm459, %v470, 0.0
  %472 = vadd.xlane.f32.xlu0 %v471
  %v473 = vpop.xlane.xlu0 %472
  %v474 = vrsqrt.pop %v473
  %v475 = vmul.f32 %v473, %v474
  %vm476 = vcmp.eq.f32.partialorder %v473, inf
  %v477 = vsel %vm476, %v473, %v475
  %vm478 = vcmp.eq.f32.partialorder %v473, 0.0
  %v479 = vand.u32 %v473, 2147483648
  %v480 = vsel %vm478, %v479, %v477
  %v481 = vmax.f32 %v469, 1e-12
  %v482 = vrcp.pop %v481
  %v483 = vmul.f32 %v256, %v482
  %484 = vst [vmem:[%s9] sm:$0xf] %v483
  %v485 = vmax.f32 %v480, 1e-12
  %v486 = vrcp.pop %v485
  %v487 = vmul.f32 %v453, %v486
  %488 = vst [vmem:[%s10] sm:$0xf] %v487
  // Predicated region
  $region38: #{segmentation_simsiam_forward.19} parent=0 // pred_check
    _
  $region39: #{segmentation_simsiam_forward.19} parent=0 // pred_check_branch
    %490 = sbr.rel (0) target = $region41
  $region40: #{segmentation_simsiam_forward.19} parent=0 // pred_region
    _
  $region41: #{segmentation_simsiam_forward.19} parent=0 // pred_fallthru
    _
  // Predicated region
  $region42: #{segmentation_simsiam_forward.19} parent=0 // pred_check
    _
  $region43: #{segmentation_simsiam_forward.19} parent=0 // pred_check_branch
    %492 = sbr.rel (0) target = $region45
  $region44: #{segmentation_simsiam_forward.19} parent=0 // pred_region
    _
  $region45: #{segmentation_simsiam_forward.19} parent=0 // pred_fallthru
    _
  // Predicated region
  $region46: #{segmentation_simsiam_forward.19} parent=0 // pred_check
    _
  $region47: #{segmentation_simsiam_forward.19} parent=0 // pred_check_branch
    %494 = sbr.rel (0) target = $region49
  $region48: #{segmentation_simsiam_forward.19} parent=0 // pred_region
    _
  $region49: #{segmentation_simsiam_forward.19} parent=0 // pred_fallthru
    _
  // Predicated region
  $region50: #{segmentation_simsiam_forward.19} parent=0 // pred_check
    _
  $region51: #{segmentation_simsiam_forward.19} parent=0 // pred_check_branch
    %496 = sbr.rel (0) target = $region53
  $region52: #{segmentation_simsiam_forward.19} parent=0 // pred_region
    _
  $region53: #{segmentation_simsiam_forward.19} parent=0 // pred_fallthru
    _

// kernel: segmentation_simsiam_forward.21
$region0: #{segmentation_simsiam_forward.21}
  #allocation0 [shape = 'u32[]', space=smem, size = 0x4, offset = 0x4, fixed_abs, tag = 'smem constant byte address 0x4 - core index']
  #allocation1 [shape = 'u32[144,128]{1,0:T(1,128)}', space=vmem, size = 0x12000, scoped, tag = 'internal scratch']
  %s0 = inlined_call_operand.vmem [shape: f32[2,21,2,2], index: 0, kind: input, shape index: {}]
  %s1 = inlined_call_operand.vmem [shape: bf16[16,2], index: 1, kind: input, shape index: {}]
  %s2 = inlined_call_operand.vmem [shape: bf16[2,16], index: 2, kind: input, shape index: {}]
  %s3 = inlined_call_operand.vmem [shape: f32[2,21,16,16], index: 3, kind: output, shape index: {}]
  %s4 = sld [smem:[#allocation0]]
  $region45: #{segmentation_simsiam_forward.21} parent=0
    _
  %s6 = ssub.s32 1, %s4
  %s7 = scalar_select 0, %s6, %s4
  loop: start=0, step=1, limit=4
  $region2: #{segmentation_simsiam_forward.21} parent=0 // loop_pre_header
    _
  $region3: #{segmentation_simsiam_forward.21} parent=0 // loop_header
    %s9 = sphi 0, %s13
    %p10 = scmp.ge.s32.totalorder %s9, 4
    %s16 = sphi 0, %s28
    %s17 = sphi 0, %s24
    %s18 = sphi 0, %s16
    %s19 = sphi 0, %s17
    %s20 = sphi 0, %s18
    %s21 = sphi 0, %s19
    %s31 = sphi 0, %s33
    %s34 = sphi 0, %s31
    %s35 = sphi 0, %s34
    %s51 = sphi 0, %s35
    %s57 = sphi 0, %s59
    %s60 = sphi 0, %s57
    %s61 = sphi 0, %s60
    %s77 = sphi 0, %s61
    %s81 = sphi 0, %s81
    %s83 = sphi 0, %s81
    %s84 = sphi 0, %s83
    %s98 = sphi 0, %s84
    %s106 = sphi 0, %s108
    %s109 = sphi 0, %s106
    %s110 = sphi 0, %s109
    %s126 = sphi 0, %s110
  $region4: #{segmentation_simsiam_forward.21} parent=0 // loop_header_branch
    %12 = sbr.rel (%p10) target = $region8
  $region5: #{segmentation_simsiam_forward.21} parent=0 // loop_body
    %s14 = ssub.s32 %s9, 1
    %s15 = ssub.s32 %s9, 2
    %s22 = sadd.s32 1, %s17
    %p23 = scmp.ge.s32.totalorder %s22, 1
    %s24 = scalar_select %p23, 0, %s22
    %s25 = sadd.s32 1, %s16
    %s26 = scalar_select %p23, %s25, %s16
    %p27 = scmp.ge.s32.totalorder %s26, 2
    %s28 = scalar_select %p27, 0, %s26
    %s29 = ssub.s32 %s16, %s28
    %p30 = scmp.eq.s32.totalorder %s29, 0
    %s32 = sadd.s32 %s31, 1
    %s33 = scalar_select %p30, %s31, %s32
    %p36 = pneg %p30
    %p37 = scmp.eq.s32.totalorder %s9, 1
    %p38 = por %p36, %p37
    %p39 = scmp.ne.s32.totalorder %s31, %s34
    %p40 = scmp.eq.s32.totalorder %s9, 0
    %p41 = por %p39, %p40
    %p42 = scmp.ne.s32.totalorder %s31, %s34
    %p43 = scmp.eq.s32.totalorder %s14, 1
    %p44 = por %p42, %p43
    %p45 = scmp.ne.s32.totalorder %s34, %s35
    %p46 = scmp.eq.s32.totalorder %s14, 0
    %p47 = por %p45, %p46
    %p48 = scmp.ne.s32.totalorder %s34, %s35
    %p49 = scmp.eq.s32.totalorder %s15, 1
    %p50 = por %p48, %p49
    %p52 = scmp.ne.s32.totalorder %s35, %s51
    %p53 = scmp.eq.s32.totalorder %s15, 0
    %p54 = por %p52, %p53
    %s55 = ssub.s32 %s17, %s24
    %p56 = scmp.eq.s32.totalorder %s55, 0
    %s58 = sadd.s32 %s57, 1
    %s59 = scalar_select %p56, %s57, %s58
    %p62 = pneg %p56
    %p63 = scmp.eq.s32.totalorder %s9, 1
    %p64 = por %p62, %p63
    %p65 = scmp.ne.s32.totalorder %s57, %s60
    %p66 = scmp.eq.s32.totalorder %s9, 0
    %p67 = por %p65, %p66
    %p68 = scmp.ne.s32.totalorder %s57, %s60
    %p69 = scmp.eq.s32.totalorder %s14, 1
    %p70 = por %p68, %p69
    %p71 = scmp.ne.s32.totalorder %s60, %s61
    %p72 = scmp.eq.s32.totalorder %s14, 0
    %p73 = por %p71, %p72
    %p74 = scmp.ne.s32.totalorder %s60, %s61
    %p75 = scmp.eq.s32.totalorder %s15, 1
    %p76 = por %p74, %p75
    %p78 = scmp.ne.s32.totalorder %s61, %s77
    %p79 = scmp.eq.s32.totalorder %s15, 0
    %p80 = por %p78, %p79
    %s82 = sadd.s32 %s81, 1
    %p85 = scmp.eq.s32.totalorder %s9, 1
    %p86 = scmp.ne.s32.totalorder %s81, %s83
    %p87 = scmp.eq.s32.totalorder %s9, 0
    %p88 = por %p86, %p87
    %p89 = scmp.ne.s32.totalorder %s81, %s83
    %p90 = scmp.eq.s32.totalorder %s14, 1
    %p91 = por %p89, %p90
    %p92 = scmp.ne.s32.totalorder %s83, %s84
    %p93 = scmp.eq.s32.totalorder %s14, 0
    %p94 = por %p92, %p93
    %p95 = scmp.ne.s32.totalorder %s83, %s84
    %p96 = scmp.eq.s32.totalorder %s15, 1
    %p97 = por %p95, %p96
    %p99 = scmp.ne.s32.totalorder %s84, %s98
    %p100 = scmp.eq.s32.totalorder %s15, 0
    %p101 = por %p99, %p100
    %s102 = ssub.s32 %s16, %s28
    %s103 = ssub.s32 %s17, %s24
    %s104 = sor.u32 %s102, %s103
    %p105 = scmp.eq.s32.totalorder %s104, 0
    %s107 = sadd.s32 %s106, 1
    %s108 = scalar_select %p105, %s106, %s107
    %p111 = pneg %p105
    %p112 = scmp.eq.s32.totalorder %s9, 1
    %p113 = por %p111, %p112
    %p114 = scmp.ne.s32.totalorder %s106, %s109
    %p115 = scmp.eq.s32.totalorder %s9, 0
    %p116 = por %p114, %p115
    %p117 = scmp.ne.s32.totalorder %s106, %s109
    %p118 = scmp.eq.s32.totalorder %s14, 1
    %p119 = por %p117, %p118
    %p120 = scmp.ne.s32.totalorder %s109, %s110
    %p121 = scmp.eq.s32.totalorder %s14, 0
    %p122 = por %p120, %p121
    %p123 = scmp.ne.s32.totalorder %s109, %s110
    %p124 = scmp.eq.s32.totalorder %s15, 1
    %p125 = por %p123, %p124
    %p127 = scmp.ne.s32.totalorder %s110, %s126
    %p128 = scmp.eq.s32.totalorder %s15, 0
    %p129 = por %p127, %p128
    %p130 = scmp.le.s32.totalorder 1, %s9
    %p131 = scmp.lt.s32.totalorder %s9, 3
    %p132 = pnand %p130, %p131
    %p133 = pneg %p132
    // Predicated region
    $region9: #{segmentation_simsiam_forward.21} parent=5 // pred_check
      _
    $region10: #{segmentation_simsiam_forward.21} parent=5 // pred_check_branch
      %135 = sbr.rel (%p132) target = $region12
    $region11: #{segmentation_simsiam_forward.21} parent=5 // pred_region
      %s136 = ssub.s32 %s9, 1
      // Predicated region
      $region13: #{segmentation_simsiam_forward.21} parent=11 // pred_check
        %p137 = pneg %p73
      $region14: #{segmentation_simsiam_forward.21} parent=11 // pred_check_branch
        %139 = sbr.rel (%p137) target = $region16
      $region15: #{segmentation_simsiam_forward.21} parent=11 // pred_region
        %s140 = smul.u32 2, %s19
        %p141 = scmp.lt.s32.totalorder %s140, 1
        %s142 = scalar_select %p141, %s140, 1
        %s143 = smul.addr %s142, 4
        %s144 = scalar_lea.vmem %s1, %s143
        %s145 = smul.u32 2, %s19
      $region16: #{segmentation_simsiam_forward.21} parent=11 // pred_fallthru
        _
      // Predicated region
      $region17: #{segmentation_simsiam_forward.21} parent=11 // pred_check
        %p146 = pneg %p94
      $region18: #{segmentation_simsiam_forward.21} parent=11 // pred_check_branch
        %148 = sbr.rel (%p146) target = $region20
      $region19: #{segmentation_simsiam_forward.21} parent=11 // pred_region
        _
      $region20: #{segmentation_simsiam_forward.21} parent=11 // pred_fallthru
        _
    $region12: #{segmentation_simsiam_forward.21} parent=5 // pred_fallthru
      _
    %p149 = scmp.lt.s32.totalorder %s9, 2
    // Predicated region
    $region21: #{segmentation_simsiam_forward.21} parent=5 // pred_check
      %p150 = pneg %p149
    $region22: #{segmentation_simsiam_forward.21} parent=5 // pred_check_branch
      %152 = sbr.rel (%p150) target = $region24
    $region23: #{segmentation_simsiam_forward.21} parent=5 // pred_region
      // Predicated region
      $region25: #{segmentation_simsiam_forward.21} parent=23 // pred_check
        %p153 = pneg %p41
      $region26: #{segmentation_simsiam_forward.21} parent=23 // pred_check_branch
        %155 = sbr.rel (%p153) target = $region28
      $region27: #{segmentation_simsiam_forward.21} parent=23 // pred_region
        %p156 = scmp.lt.s32.totalorder %s16, 1
        %s157 = scalar_select %p156, %s16, 1
        %s158 = smul.addr %s157, 21
        %s159 = smul.addr %s158, 2
        %s160 = scalar_lea.vmem %s0, %s159
      $region28: #{segmentation_simsiam_forward.21} parent=23 // pred_fallthru
        _
    $region24: #{segmentation_simsiam_forward.21} parent=5 // pred_fallthru
      _
    %p161 = scmp.le.s32.totalorder 1, %s9
    %p162 = scmp.lt.s32.totalorder %s9, 3
    %p163 = pnand %p161, %p162
    %p164 = pneg %p163
    // Predicated region
    $region29: #{segmentation_simsiam_forward.21} parent=5 // pred_check
      _
    $region30: #{segmentation_simsiam_forward.21} parent=5 // pred_check_branch
      %166 = sbr.rel (%p163) target = $region32
    $region31: #{segmentation_simsiam_forward.21} parent=5 // pred_region
      %s167 = ssub.s32 %s9, 1
      %p168 = scmp.lt.s32.totalorder %s18, 1
      %s169 = scalar_select %p168, %s18, 1
      %s170 = smul.addr %s169, 21
      %s171 = smul.addr %s170, 2
      %s172 = scalar_lea.vmem %s0, %s171
      %p173 = pneg %p47
      %p174 = pneg %p44
      %s175 = smul.u32 2, %s19
      %p176 = scmp.lt.s32.totalorder %s175, 1
      %s177 = scalar_select %p176, %s175, 1
      %s178 = smul.addr %s177, 4
      %s179 = scalar_lea.vmem %s1, %s178
      %p180 = pneg %p73
      %p181 = pneg %p70
      %p182 = pneg %p94
      %p183 = pneg %p91
      %p184 = pneg %p122
      %p185 = pneg %p119
      %s186 = smul.u32 2, %s19
      %p187 = scmp.lt.s32.totalorder %s18, 1
      %s188 = scalar_select %p187, %s18, 1
      %p189 = scmp.lt.s32.totalorder %s186, 1
      %s190 = scalar_select %p189, %s186, 1
      %s191 = smul.addr %s188, 42
      %s192 = sadd.s32 %s190, %s191
      %s193 = smul.addr %s192, 8
      %s194 = scalar_lea.vmem %s3, %s193
      %p195 = scmp.lt.s32.totalorder %s18, 1
      %s196 = scalar_select %p195, %s18, 1
      %s197 = smul.addr %s196, 21
      %s198 = smul.addr %s197, 2
      %s199 = scalar_lea.vmem %s0, %s198
      %s200 = smul.u32 2, %s19
      %p201 = scmp.lt.s32.totalorder %s200, 1
      %s202 = scalar_select %p201, %s200, 1
      %s203 = smul.addr %s202, 4
      %s204 = scalar_lea.vmem %s1, %s203
      %s205 = smul.u32 2, %s19
      %s206 = smul.u32 2, %s19
      %p207 = scmp.lt.s32.totalorder %s18, 1
      %s208 = scalar_select %p207, %s18, 1
      %p209 = scmp.lt.s32.totalorder %s206, 1
      %s210 = scalar_select %p209, %s206, 1
      %s211 = smul.addr %s208, 42
      %s212 = sadd.s32 %s210, %s211
      %s213 = smul.addr %s212, 8
      %s214 = scalar_lea.vmem %s3, %s213
      %s215 = smul.u32 2, %s19
      %v217 = vld [vmem:[%s204] sm:$0xf]
      %v218 = vld [vmem:[%s204 + $0x4] sm:$0xf]
      %v219 = vld [vmem:[%s2] sm:$0x1]
      %v220 = vld [vmem:[%s199] sm:$0x3]
      %v221 = vpack.c.bf16 %v220, %v220
      %v224 = vunpack.c.l.b16 %v217
      %v225 = vunpack.c.l.b16 %v218
      %v226 = vpack.c.b16 %v225, %v224
      %vm227 = vcmask 15360
      %v229 = vsel %vm227, %v226, 0
      %vm231 = vcmask 1040384
      %v233 = vsel %vm231, %v221, 0
      %235 = vmatprep.subr.bf16.mxu0 0
      %236 = vmatpush1.bf16.msra.mxu0 %v233
      %237 = vmatprep.subr.bf16.mxu0 0
      %238 = vmatpush1.bf16.msra.mxu0 0
      %239 = vmatprep.subr.bf16.mxu0 0
      %240 = vmatpush1.bf16.msra.mxu0 0
      %241 = vmatprep.subr.bf16.mxu0 0
      %242 = vmatpush1.bf16.msra.mxu0 0
      %243 = vmatprep.subr.bf16.mxu0 0
      %244 = vmatpush1.bf16.msra.mxu0 0
      %245 = vmatprep.subr.bf16.mxu0 0
      %246 = vmatpush1.bf16.msra.mxu0 0
      %247 = vmatprep.subr.bf16.mxu0 0
      %248 = vmatpush1.bf16.msra.mxu0 0
      %249 = vmatprep.subr.bf16.mxu0 0
      %250 = vmatpush1.bf16.msra.mxu0 0
      %251 = vmatprep.subr.bf16.mxu0 0
      %252 = vmatpush1.bf16.msra.mxu0 0
      %253 = vmatprep.subr.bf16.mxu0 0
      %254 = vmatpush1.bf16.msra.mxu0 0
      %255 = vmatprep.subr.bf16.mxu0 0
      %256 = vmatpush1.bf16.msra.mxu0 0
      %257 = vmatprep.subr.bf16.mxu0 0
      %258 = vmatpush1.bf16.msra.mxu0 0
      %259 = vmatprep.subr.bf16.mxu0 0
      %260 = vmatpush1.bf16.msra.mxu0 0
      %261 = vmatprep.subr.bf16.mxu0 0
      %262 = vmatpush1.bf16.msra.mxu0 0
      %263 = vmatprep.subr.bf16.mxu0 0
      %264 = vmatpush1.bf16.msra.mxu0 0
      %265 = vmatprep.subr.bf16.mxu0 0
      %266 = vmatpush1.bf16.msra.mxu0 0
      %267 = vmatprep.mubr.bf16.mxu0 0
      %268 = vmatmul.mubr.bf16.gmra.mrb[0].mxu0 %v229
      %v269 = vpop.f32.mrb[0].mxu0
      %v270 = vadd.f32 0.0, %v269
      %v271 = vpop.f32.mrb[0].mxu0
      %v272 = vpop.f32.mrb[0].mxu0
      %v273 = vadd.f32 0.0, %v272
      %v274 = vpop.f32.mrb[0].mxu0
      %275 = vdwg.mxu0
      %v276 = vpack.c.bf16 %v273, %v270
      %v278 = vsel %vm227, %v276, 0
      %v281 = vsel %vm231, %v219, 0
      %283 = vmatprep.subr.bf16.mxu0 0
      %284 = vmatpush1.bf16.msra.mxu0 %v281
      %285 = vmatprep.subr.bf16.mxu0 0
      %286 = vmatpush1.bf16.msra.mxu0 0
      %287 = vmatprep.subr.bf16.mxu0 0
      %288 = vmatpush1.bf16.msra.mxu0 0
      %289 = vmatprep.subr.bf16.mxu0 0
      %290 = vmatpush1.bf16.msra.mxu0 0
      %291 = vmatprep.subr.bf16.mxu0 0
      %292 = vmatpush1.bf16.msra.mxu0 0
      %293 = vmatprep.subr.bf16.mxu0 0
      %294 = vmatpush1.bf16.msra.mxu0 0
      %295 = vmatprep.subr.bf16.mxu0 0
      %296 = vmatpush1.bf16.msra.mxu0 0
      %297 = vmatprep.subr.bf16.mxu0 0
      %298 = vmatpush1.bf16.msra.mxu0 0
      %299 = vmatprep.subr.bf16.mxu0 0
      %300 = vmatpush1.bf16.msra.mxu0 0
      %301 = vmatprep.subr.bf16.mxu0 0
      %302 = vmatpush1.bf16.msra.mxu0 0
      %303 = vmatprep.subr.bf16.mxu0 0
      %304 = vmatpush1.bf16.msra.mxu0 0
      %305 = vmatprep.subr.bf16.mxu0 0
      %306 = vmatpush1.bf16.msra.mxu0 0
      %307 = vmatprep.subr.bf16.mxu0 0
      %308 = vmatpush1.bf16.msra.mxu0 0
      %309 = vmatprep.subr.bf16.mxu0 0
      %310 = vmatpush1.bf16.msra.mxu0 0
      %311 = vmatprep.subr.bf16.mxu0 0
      %312 = vmatpush1.bf16.msra.mxu0 0
      %313 = vmatprep.subr.bf16.mxu0 0
      %314 = vmatpush1.bf16.msra.mxu0 0
      %315 = vmatprep.mubr.bf16.mxu0 0
      %316 = vmatmul.mubr.bf16.gmra.mrb[0].mxu0 %v278
      %v317 = vpop.f32.mrb[0].mxu0
      %v318 = vadd.f32 0.0, %v317
      %v319 = vpop.f32.mrb[0].mxu0
      %v320 = vpop.f32.mrb[0].mxu0
      %v321 = vadd.f32 0.0, %v320
      %v322 = vpop.f32.mrb[0].mxu0
      %323 = vdwg.mxu0
      %vm324 = vcmask 130048
      %325 = vst.msk [vmem:[%s214] sm:$0xff] %vm324, %v318
      %326 = vst.msk [vmem:[%s214 + $0x8] sm:$0xff] %vm324, %v321
      %s327 = scalar_lea.vmem %s199, 2
      %v328 = vld [vmem:[%s327] sm:$0x3]
      %v329 = vpack.c.bf16 %v328, %v328
      %v331 = vsel %vm231, %v329, 0
      %333 = vmatprep.subr.bf16.mxu0 0
      %334 = vmatpush1.bf16.msra.mxu0 %v331
      %335 = vmatprep.subr.bf16.mxu0 0
      %336 = vmatpush1.bf16.msra.mxu0 0
      %337 = vmatprep.subr.bf16.mxu0 0
      %338 = vmatpush1.bf16.msra.mxu0 0
      %339 = vmatprep.subr.bf16.mxu0 0
      %340 = vmatpush1.bf16.msra.mxu0 0
      %341 = vmatprep.subr.bf16.mxu0 0
      %342 = vmatpush1.bf16.msra.mxu0 0
      %343 = vmatprep.subr.bf16.mxu0 0
      %344 = vmatpush1.bf16.msra.mxu0 0
      %345 = vmatprep.subr.bf16.mxu0 0
      %346 = vmatpush1.bf16.msra.mxu0 0
      %347 = vmatprep.subr.bf16.mxu0 0
      %348 = vmatpush1.bf16.msra.mxu0 0
      %349 = vmatprep.subr.bf16.mxu0 0
      %350 = vmatpush1.bf16.msra.mxu0 0
      %351 = vmatprep.subr.bf16.mxu0 0
      %352 = vmatpush1.bf16.msra.mxu0 0
      %353 = vmatprep.subr.bf16.mxu0 0
      %354 = vmatpush1.bf16.msra.mxu0 0
      %355 = vmatprep.subr.bf16.mxu0 0
      %356 = vmatpush1.bf16.msra.mxu0 0
      %357 = vmatprep.subr.bf16.mxu0 0
      %358 = vmatpush1.bf16.msra.mxu0 0
      %359 = vmatprep.subr.bf16.mxu0 0
      %360 = vmatpush1.bf16.msra.mxu0 0
      %361 = vmatprep.subr.bf16.mxu0 0
      %362 = vmatpush1.bf16.msra.mxu0 0
      %363 = vmatprep.subr.bf16.mxu0 0
      %364 = vmatpush1.bf16.msra.mxu0 0
      %365 = vmatprep.mubr.bf16.mxu0 0
      %366 = vmatmul.mubr.bf16.gmra.mrb[0].mxu0 %v229
      %v367 = vpop.f32.mrb[0].mxu0
      %v368 = vadd.f32 0.0, %v367
      %v369 = vpop.f32.mrb[0].mxu0
      %v370 = vpop.f32.mrb[0].mxu0
      %v371 = vadd.f32 0.0, %v370
      %v372 = vpop.f32.mrb[0].mxu0
      %373 = vdwg.mxu0
      %v374 = vpack.c.bf16 %v371, %v368
      %v376 = vsel %vm227, %v374, 0
      %378 = vmatprep.subr.bf16.mxu0 0
      %379 = vmatpush1.bf16.msra.mxu0 %v281
      %380 = vmatprep.subr.bf16.mxu0 0
      %381 = vmatpush1.bf16.msra.mxu0 0
      %382 = vmatprep.subr.bf16.mxu0 0
      %383 = vmatpush1.bf16.msra.mxu0 0
      %384 = vmatprep.subr.bf16.mxu0 0
      %385 = vmatpush1.bf16.msra.mxu0 0
      %386 = vmatprep.subr.bf16.mxu0 0
      %387 = vmatpush1.bf16.msra.mxu0 0
      %388 = vmatprep.subr.bf16.mxu0 0
      %389 = vmatpush1.bf16.msra.mxu0 0
      %390 = vmatprep.subr.bf16.mxu0 0
      %391 = vmatpush1.bf16.msra.mxu0 0
      %392 = vmatprep.subr.bf16.mxu0 0
      %393 = vmatpush1.bf16.msra.mxu0 0
      %394 = vmatprep.subr.bf16.mxu0 0
      %395 = vmatpush1.bf16.msra.mxu0 0
      %396 = vmatprep.subr.bf16.mxu0 0
      %397 = vmatpush1.bf16.msra.mxu0 0
      %398 = vmatprep.subr.bf16.mxu0 0
      %399 = vmatpush1.bf16.msra.mxu0 0
      %400 = vmatprep.subr.bf16.mxu0 0
      %401 = vmatpush1.bf16.msra.mxu0 0
      %402 = vmatprep.subr.bf16.mxu0 0
      %403 = vmatpush1.bf16.msra.mxu0 0
      %404 = vmatprep.subr.bf16.mxu0 0
      %405 = vmatpush1.bf16.msra.mxu0 0
      %406 = vmatprep.subr.bf16.mxu0 0
      %407 = vmatpush1.bf16.msra.mxu0 0
      %408 = vmatprep.subr.bf16.mxu0 0
      %409 = vmatpush1.bf16.msra.mxu0 0
      %410 = vmatprep.mubr.bf16.mxu0 0
      %411 = vmatmul.mubr.bf16.gmra.mrb[0].mxu0 %v376
      %v412 = vpop.f32.mrb[0].mxu0
      %v413 = vadd.f32 0.0, %v412
      %v414 = vpop.f32.mrb[0].mxu0
      %v415 = vpop.f32.mrb[0].mxu0
      %v416 = vadd.f32 0.0, %v415
      %v417 = vpop.f32.mrb[0].mxu0
      %418 = vdwg.mxu0
      %s419 = scalar_lea.vmem %s214, 16
      %420 = vst.msk [vmem:[%s419] sm:$0xff] %vm324, %v413
      %421 = vst.msk [vmem:[%s419 + $0x8] sm:$0xff] %vm324, %v416
      %s422 = scalar_lea.vmem %s199, 4
      %v423 = vld [vmem:[%s422] sm:$0x3]
      %v424 = vpack.c.bf16 %v423, %v423
      %v426 = vsel %vm231, %v424, 0
      %428 = vmatprep.subr.bf16.mxu0 0
      %429 = vmatpush1.bf16.msra.mxu0 %v426
      %430 = vmatprep.subr.bf16.mxu0 0
      %431 = vmatpush1.bf16.msra.mxu0 0
      %432 = vmatprep.subr.bf16.mxu0 0
      %433 = vmatpush1.bf16.msra.mxu0 0
      %434 = vmatprep.subr.bf16.mxu0 0
      %435 = vmatpush1.bf16.msra.mxu0 0
      %436 = vmatprep.subr.bf16.mxu0 0
      %437 = vmatpush1.bf16.msra.mxu0 0
      %438 = vmatprep.subr.bf16.mxu0 0
      %439 = vmatpush1.bf16.msra.mxu0 0
      %440 = vmatprep.subr.bf16.mxu0 0
      %441 = vmatpush1.bf16.msra.mxu0 0
      %442 = vmatprep.subr.bf16.mxu0 0
      %443 = vmatpush1.bf16.msra.mxu0 0
      %444 = vmatprep.subr.bf16.mxu0 0
      %445 = vmatpush1.bf16.msra.mxu0 0
      %446 = vmatprep.subr.bf16.mxu0 0
      %447 = vmatpush1.bf16.msra.mxu0 0
      %448 = vmatprep.subr.bf16.mxu0 0
      %449 = vmatpush1.bf16.msra.mxu0 0
      %450 = vmatprep.subr.bf16.mxu0 0
      %451 = vmatpush1.bf16.msra.mxu0 0
      %452 = vmatprep.subr.bf16.mxu0 0
      %453 = vmatpush1.bf16.msra.mxu0 0
      %454 = vmatprep.subr.bf16.mxu0 0
      %455 = vmatpush1.bf16.msra.mxu0 0
      %456 = vmatprep.subr.bf16.mxu0 0
      %457 = vmatpush1.bf16.msra.mxu0 0
      %458 = vmatprep.subr.bf16.mxu0 0
      %459 = vmatpush1.bf16.msra.mxu0 0
      %460 = vmatprep.mubr.bf16.mxu0 0
      %461 = vmatmul.mubr.bf16.gmra.mrb[0].mxu0 %v229
      %v462 = vpop.f32.mrb[0].mxu0
      %v463 = vadd.f32 0.0, %v462
      %v464 = vpop.f32.mrb[0].mxu0
      %v465 = vpop.f32.mrb[0].mxu0
      %v466 = vadd.f32 0.0, %v465
      %v467 = vpop.f32.mrb[0].mxu0
      %468 = vdwg.mxu0
      %v469 = vpack.c.bf16 %v466, %v463
      %v471 = vsel %vm227, %v469, 0
      %473 = vmatprep.subr.bf16.mxu0 0
      %474 = vmatpush1.bf16.msra.mxu0 %v281
      %475 = vmatprep.subr.bf16.mxu0 0
      %476 = vmatpush1.bf16.msra.mxu0 0
      %477 = vmatprep.subr.bf16.mxu0 0
      %478 = vmatpush1.bf16.msra.mxu0 0
      %479 = vmatprep.subr.bf16.mxu0 0
      %480 = vmatpush1.bf16.msra.mxu0 0
      %481 = vmatprep.subr.bf16.mxu0 0
      %482 = vmatpush1.bf16.msra.mxu0 0
      %483 = vmatprep.subr.bf16.mxu0 0
      %484 = vmatpush1.bf16.msra.mxu0 0
      %485 = vmatprep.subr.bf16.mxu0 0
      %486 = vmatpush1.bf16.msra.mxu0 0
      %487 = vmatprep.subr.bf16.mxu0 0
      %488 = vmatpush1.bf16.msra.mxu0 0
      %489 = vmatprep.subr.bf16.mxu0 0
      %490 = vmatpush1.bf16.msra.mxu0 0
      %491 = vmatprep.subr.bf16.mxu0 0
      %492 = vmatpush1.bf16.msra.mxu0 0
      %493 = vmatprep.subr.bf16.mxu0 0
      %494 = vmatpush1.bf16.msra.mxu0 0
      %495 = vmatprep.subr.bf16.mxu0 0
      %496 = vmatpush1.bf16.msra.mxu0 0
      %497 = vmatprep.subr.bf16.mxu0 0
      %498 = vmatpush1.bf16.msra.mxu0 0
      %499 = vmatprep.subr.bf16.mxu0 0
      %500 = vmatpush1.bf16.msra.mxu0 0
      %501 = vmatprep.subr.bf16.mxu0 0
      %502 = vmatpush1.bf16.msra.mxu0 0
      %503 = vmatprep.subr.bf16.mxu0 0
      %504 = vmatpush1.bf16.msra.mxu0 0
      %505 = vmatprep.mubr.bf16.mxu0 0
      %506 = vmatmul.mubr.bf16.gmra.mrb[0].mxu0 %v471
      %v507 = vpop.f32.mrb[0].mxu0
      %v508 = vadd.f32 0.0, %v507
      %v509 = vpop.f32.mrb[0].mxu0
      %v510 = vpop.f32.mrb[0].mxu0
      %v511 = vadd.f32 0.0, %v510
      %v512 = vpop.f32.mrb[0].mxu0
      %513 = vdwg.mxu0
      %s514 = scalar_lea.vmem %s214, 32
      %515 = vst.msk [vmem:[%s514] sm:$0xff] %vm324, %v508
      %516 = vst.msk [vmem:[%s514 + $0x8] sm:$0xff] %vm324, %v511
      %s517 = scalar_lea.vmem %s199, 6
      %v518 = vld [vmem:[%s517] sm:$0x3]
      %v519 = vpack.c.bf16 %v518, %v518
      %v521 = vsel %vm231, %v519, 0
      %523 = vmatprep.subr.bf16.mxu0 0
      %524 = vmatpush1.bf16.msra.mxu0 %v521
      %525 = vmatprep.subr.bf16.mxu0 0
      %526 = vmatpush1.bf16.msra.mxu0 0
      %527 = vmatprep.subr.bf16.mxu0 0
      %528 = vmatpush1.bf16.msra.mxu0 0
      %529 = vmatprep.subr.bf16.mxu0 0
      %530 = vmatpush1.bf16.msra.mxu0 0
      %531 = vmatprep.subr.bf16.mxu0 0
      %532 = vmatpush1.bf16.msra.mxu0 0
      %533 = vmatprep.subr.bf16.mxu0 0
      %534 = vmatpush1.bf16.msra.mxu0 0
      %535 = vmatprep.subr.bf16.mxu0 0
      %536 = vmatpush1.bf16.msra.mxu0 0
      %537 = vmatprep.subr.bf16.mxu0 0
      %538 = vmatpush1.bf16.msra.mxu0 0
      %539 = vmatprep.subr.bf16.mxu0 0
      %540 = vmatpush1.bf16.msra.mxu0 0
      %541 = vmatprep.subr.bf16.mxu0 0
      %542 = vmatpush1.bf16.msra.mxu0 0
      %543 = vmatprep.subr.bf16.mxu0 0
      %544 = vmatpush1.bf16.msra.mxu0 0
      %545 = vmatprep.subr.bf16.mxu0 0
      %546 = vmatpush1.bf16.msra.mxu0 0
      %547 = vmatprep.subr.bf16.mxu0 0
      %548 = vmatpush1.bf16.msra.mxu0 0
      %549 = vmatprep.subr.bf16.mxu0 0
      %550 = vmatpush1.bf16.msra.mxu0 0
      %551 = vmatprep.subr.bf16.mxu0 0
      %552 = vmatpush1.bf16.msra.mxu0 0
      %553 = vmatprep.subr.bf16.mxu0 0
      %554 = vmatpush1.bf16.msra.mxu0 0
      %555 = vmatprep.mubr.bf16.mxu0 0
      %556 = vmatmul.mubr.bf16.gmra.mrb[0].mxu0 %v229
      %v557 = vpop.f32.mrb[0].mxu0
      %v558 = vadd.f32 0.0, %v557
      %v559 = vpop.f32.mrb[0].mxu0
      %v560 = vpop.f32.mrb[0].mxu0
      %v561 = vadd.f32 0.0, %v560
      %v562 = vpop.f32.mrb[0].mxu0
      %563 = vdwg.mxu0
      %v564 = vpack.c.bf16 %v561, %v558
      %v566 = vsel %vm227, %v564, 0
      %568 = vmatprep.subr.bf16.mxu0 0
      %569 = vmatpush1.bf16.msra.mxu0 %v281
      %570 = vmatprep.subr.bf16.mxu0 0
      %571 = vmatpush1.bf16.msra.mxu0 0
      %572 = vmatprep.subr.bf16.mxu0 0
      %573 = vmatpush1.bf16.msra.mxu0 0
      %574 = vmatprep.subr.bf16.mxu0 0
      %575 = vmatpush1.bf16.msra.mxu0 0
      %576 = vmatprep.subr.bf16.mxu0 0
      %577 = vmatpush1.bf16.msra.mxu0 0
      %578 = vmatprep.subr.bf16.mxu0 0
      %579 = vmatpush1.bf16.msra.mxu0 0
      %580 = vmatprep.subr.bf16.mxu0 0
      %581 = vmatpush1.bf16.msra.mxu0 0
      %582 = vmatprep.subr.bf16.mxu0 0
      %583 = vmatpush1.bf16.msra.mxu0 0
      %584 = vmatprep.subr.bf16.mxu0 0
      %585 = vmatpush1.bf16.msra.mxu0 0
      %586 = vmatprep.subr.bf16.mxu0 0
      %587 = vmatpush1.bf16.msra.mxu0 0
      %588 = vmatprep.subr.bf16.mxu0 0
      %589 = vmatpush1.bf16.msra.mxu0 0
      %590 = vmatprep.subr.bf16.mxu0 0
      %591 = vmatpush1.bf16.msra.mxu0 0
      %592 = vmatprep.subr.bf16.mxu0 0
      %593 = vmatpush1.bf16.msra.mxu0 0
      %594 = vmatprep.subr.bf16.mxu0 0
      %595 = vmatpush1.bf16.msra.mxu0 0
      %596 = vmatprep.subr.bf16.mxu0 0
      %597 = vmatpush1.bf16.msra.mxu0 0
      %598 = vmatprep.subr.bf16.mxu0 0
      %599 = vmatpush1.bf16.msra.mxu0 0
      %600 = vmatprep.mubr.bf16.mxu0 0
      %601 = vmatmul.mubr.bf16.gmra.mrb[0].mxu0 %v566
      %v602 = vpop.f32.mrb[0].mxu0
      %v603 = vadd.f32 0.0, %v602
      %v604 = vpop.f32.mrb[0].mxu0
      %v605 = vpop.f32.mrb[0].mxu0
      %v606 = vadd.f32 0.0, %v605
      %v607 = vpop.f32.mrb[0].mxu0
      %608 = vdwg.mxu0
      %s609 = scalar_lea.vmem %s214, 48
      %610 = vst.msk [vmem:[%s609] sm:$0xff] %vm324, %v603
      %611 = vst.msk [vmem:[%s609 + $0x8] sm:$0xff] %vm324, %v606
      %s612 = scalar_lea.vmem %s199, 8
      %v613 = vld [vmem:[%s612] sm:$0x3]
      %v614 = vpack.c.bf16 %v613, %v613
      %v616 = vsel %vm231, %v614, 0
      %618 = vmatprep.subr.bf16.mxu0 0
      %619 = vmatpush1.bf16.msra.mxu0 %v616
      %620 = vmatprep.subr.bf16.mxu0 0
      %621 = vmatpush1.bf16.msra.mxu0 0
      %622 = vmatprep.subr.bf16.mxu0 0
      %623 = vmatpush1.bf16.msra.mxu0 0
      %624 = vmatprep.subr.bf16.mxu0 0
      %625 = vmatpush1.bf16.msra.mxu0 0
      %626 = vmatprep.subr.bf16.mxu0 0
      %627 = vmatpush1.bf16.msra.mxu0 0
      %628 = vmatprep.subr.bf16.mxu0 0
      %629 = vmatpush1.bf16.msra.mxu0 0
      %630 = vmatprep.subr.bf16.mxu0 0
      %631 = vmatpush1.bf16.msra.mxu0 0
      %632 = vmatprep.subr.bf16.mxu0 0
      %633 = vmatpush1.bf16.msra.mxu0 0
      %634 = vmatprep.subr.bf16.mxu0 0
      %635 = vmatpush1.bf16.msra.mxu0 0
      %636 = vmatprep.subr.bf16.mxu0 0
      %637 = vmatpush1.bf16.msra.mxu0 0
      %638 = vmatprep.subr.bf16.mxu0 0
      %639 = vmatpush1.bf16.msra.mxu0 0
      %640 = vmatprep.subr.bf16.mxu0 0
      %641 = vmatpush1.bf16.msra.mxu0 0
      %642 = vmatprep.subr.bf16.mxu0 0
      %643 = vmatpush1.bf16.msra.mxu0 0
      %644 = vmatprep.subr.bf16.mxu0 0
      %645 = vmatpush1.bf16.msra.mxu0 0
      %646 = vmatprep.subr.bf16.mxu0 0
      %647 = vmatpush1.bf16.msra.mxu0 0
      %648 = vmatprep.subr.bf16.mxu0 0
      %649 = vmatpush1.bf16.msra.mxu0 0
      %650 = vmatprep.mubr.bf16.mxu0 0
      %651 = vmatmul.mubr.bf16.gmra.mrb[0].mxu0 %v229
      %v652 = vpop.f32.mrb[0].mxu0
      %v653 = vadd.f32 0.0, %v652
      %v654 = vpop.f32.mrb[0].mxu0
      %v655 = vpop.f32.mrb[0].mxu0
      %v656 = vadd.f32 0.0, %v655
      %v657 = vpop.f32.mrb[0].mxu0
      %658 = vdwg.mxu0
      %v659 = vpack.c.bf16 %v656, %v653
      %v661 = vsel %vm227, %v659, 0
      %663 = vmatprep.subr.bf16.mxu0 0
      %664 = vmatpush1.bf16.msra.mxu0 %v281
      %665 = vmatprep.subr.bf16.mxu0 0
      %666 = vmatpush1.bf16.msra.mxu0 0
      %667 = vmatprep.subr.bf16.mxu0 0
      %668 = vmatpush1.bf16.msra.mxu0 0
      %669 = vmatprep.subr.bf16.mxu0 0
      %670 = vmatpush1.bf16.msra.mxu0 0
      %671 = vmatprep.subr.bf16.mxu0 0
      %672 = vmatpush1.bf16.msra.mxu0 0
      %673 = vmatprep.subr.bf16.mxu0 0
      %674 = vmatpush1.bf16.msra.mxu0 0
      %675 = vmatprep.subr.bf16.mxu0 0
      %676 = vmatpush1.bf16.msra.mxu0 0
      %677 = vmatprep.subr.bf16.mxu0 0
      %678 = vmatpush1.bf16.msra.mxu0 0
      %679 = vmatprep.subr.bf16.mxu0 0
      %680 = vmatpush1.bf16.msra.mxu0 0
      %681 = vmatprep.subr.bf16.mxu0 0
      %682 = vmatpush1.bf16.msra.mxu0 0
      %683 = vmatprep.subr.bf16.mxu0 0
      %684 = vmatpush1.bf16.msra.mxu0 0
      %685 = vmatprep.subr.bf16.mxu0 0
      %686 = vmatpush1.bf16.msra.mxu0 0
      %687 = vmatprep.subr.bf16.mxu0 0
      %688 = vmatpush1.bf16.msra.mxu0 0
      %689 = vmatprep.subr.bf16.mxu0 0
      %690 = vmatpush1.bf16.msra.mxu0 0
      %691 = vmatprep.subr.bf16.mxu0 0
      %692 = vmatpush1.bf16.msra.mxu0 0
      %693 = vmatprep.subr.bf16.mxu0 0
      %694 = vmatpush1.bf16.msra.mxu0 0
      %695 = vmatprep.mubr.bf16.mxu0 0
      %696 = vmatmul.mubr.bf16.gmra.mrb[0].mxu0 %v661
      %v697 = vpop.f32.mrb[0].mxu0
      %v698 = vadd.f32 0.0, %v697
      %v699 = vpop.f32.mrb[0].mxu0
      %v700 = vpop.f32.mrb[0].mxu0
      %v701 = vadd.f32 0.0, %v700
      %v702 = vpop.f32.mrb[0].mxu0
      %703 = vdwg.mxu0
      %s704 = scalar_lea.vmem %s214, 64
      %705 = vst.msk [vmem:[%s704] sm:$0xff] %vm324, %v698
      %706 = vst.msk [vmem:[%s704 + $0x8] sm:$0xff] %vm324, %v701
      %s707 = scalar_lea.vmem %s199, 10
      %v708 = vld [vmem:[%s707] sm:$0x3]
      %v709 = vpack.c.bf16 %v708, %v708
      %v711 = vsel %vm231, %v709, 0
      %713 = vmatprep.subr.bf16.mxu0 0
      %714 = vmatpush1.bf16.msra.mxu0 %v711
      %715 = vmatprep.subr.bf16.mxu0 0
      %716 = vmatpush1.bf16.msra.mxu0 0
      %717 = vmatprep.subr.bf16.mxu0 0
      %718 = vmatpush1.bf16.msra.mxu0 0
      %719 = vmatprep.subr.bf16.mxu0 0
      %720 = vmatpush1.bf16.msra.mxu0 0
      %721 = vmatprep.subr.bf16.mxu0 0
      %722 = vmatpush1.bf16.msra.mxu0 0
      %723 = vmatprep.subr.bf16.mxu0 0
      %724 = vmatpush1.bf16.msra.mxu0 0
      %725 = vmatprep.subr.bf16.mxu0 0
      %726 = vmatpush1.bf16.msra.mxu0 0
      %727 = vmatprep.subr.bf16.mxu0 0
      %728 = vmatpush1.bf16.msra.mxu0 0
      %729 = vmatprep.subr.bf16.mxu0 0
      %730 = vmatpush1.bf16.msra.mxu0 0
      %731 = vmatprep.subr.bf16.mxu0 0
      %732 = vmatpush1.bf16.msra.mxu0 0
      %733 = vmatprep.subr.bf16.mxu0 0
      %734 = vmatpush1.bf16.msra.mxu0 0
      %735 = vmatprep.subr.bf16.mxu0 0
      %736 = vmatpush1.bf16.msra.mxu0 0
      %737 = vmatprep.subr.bf16.mxu0 0
      %738 = vmatpush1.bf16.msra.mxu0 0
      %739 = vmatprep.subr.bf16.mxu0 0
      %740 = vmatpush1.bf16.msra.mxu0 0
      %741 = vmatprep.subr.bf16.mxu0 0
      %742 = vmatpush1.bf16.msra.mxu0 0
      %743 = vmatprep.subr.bf16.mxu0 0
      %744 = vmatpush1.bf16.msra.mxu0 0
      %745 = vmatprep.mubr.bf16.mxu0 0
      %746 = vmatmul.mubr.bf16.gmra.mrb[0].mxu0 %v229
      %v747 = vpop.f32.mrb[0].mxu0
      %v748 = vadd.f32 0.0, %v747
      %v749 = vpop.f32.mrb[0].mxu0
      %v750 = vpop.f32.mrb[0].mxu0
      %v751 = vadd.f32 0.0, %v750
      %v752 = vpop.f32.mrb[0].mxu0
      %753 = vdwg.mxu0
      %v754 = vpack.c.bf16 %v751, %v748
      %v756 = vsel %vm227, %v754, 0
      %758 = vmatprep.subr.bf16.mxu0 0
      %759 = vmatpush1.bf16.msra.mxu0 %v281
      %760 = vmatprep.subr.bf16.mxu0 0
      %761 = vmatpush1.bf16.msra.mxu0 0
      %762 = vmatprep.subr.bf16.mxu0 0
      %763 = vmatpush1.bf16.msra.mxu0 0
      %764 = vmatprep.subr.bf16.mxu0 0
      %765 = vmatpush1.bf16.msra.mxu0 0
      %766 = vmatprep.subr.bf16.mxu0 0
      %767 = vmatpush1.bf16.msra.mxu0 0
      %768 = vmatprep.subr.bf16.mxu0 0
      %769 = vmatpush1.bf16.msra.mxu0 0
      %770 = vmatprep.subr.bf16.mxu0 0
      %771 = vmatpush1.bf16.msra.mxu0 0
      %772 = vmatprep.subr.bf16.mxu0 0
      %773 = vmatpush1.bf16.msra.mxu0 0
      %774 = vmatprep.subr.bf16.mxu0 0
      %775 = vmatpush1.bf16.msra.mxu0 0
      %776 = vmatprep.subr.bf16.mxu0 0
      %777 = vmatpush1.bf16.msra.mxu0 0
      %778 = vmatprep.subr.bf16.mxu0 0
      %779 = vmatpush1.bf16.msra.mxu0 0
      %780 = vmatprep.subr.bf16.mxu0 0
      %781 = vmatpush1.bf16.msra.mxu0 0
      %782 = vmatprep.subr.bf16.mxu0 0
      %783 = vmatpush1.bf16.msra.mxu0 0
      %784 = vmatprep.subr.bf16.mxu0 0
      %785 = vmatpush1.bf16.msra.mxu0 0
      %786 = vmatprep.subr.bf16.mxu0 0
      %787 = vmatpush1.bf16.msra.mxu0 0
      %788 = vmatprep.subr.bf16.mxu0 0
      %789 = vmatpush1.bf16.msra.mxu0 0
      %790 = vmatprep.mubr.bf16.mxu0 0
      %791 = vmatmul.mubr.bf16.gmra.mrb[0].mxu0 %v756
      %v792 = vpop.f32.mrb[0].mxu0
      %v793 = vadd.f32 0.0, %v792
      %v794 = vpop.f32.mrb[0].mxu0
      %v795 = vpop.f32.mrb[0].mxu0
      %v796 = vadd.f32 0.0, %v795
      %v797 = vpop.f32.mrb[0].mxu0
      %798 = vdwg.mxu0
      %s799 = scalar_lea.vmem %s214, 80
      %800 = vst.msk [vmem:[%s799] sm:$0xff] %vm324, %v793
      %801 = vst.msk [vmem:[%s799 + $0x8] sm:$0xff] %vm324, %v796
      %s802 = scalar_lea.vmem %s199, 12
      %v803 = vld [vmem:[%s802] sm:$0x3]
      %v804 = vpack.c.bf16 %v803, %v803
      %v806 = vsel %vm231, %v804, 0
      %808 = vmatprep.subr.bf16.mxu0 0
      %809 = vmatpush1.bf16.msra.mxu0 %v806
      %810 = vmatprep.subr.bf16.mxu0 0
      %811 = vmatpush1.bf16.msra.mxu0 0
      %812 = vmatprep.subr.bf16.mxu0 0
      %813 = vmatpush1.bf16.msra.mxu0 0
      %814 = vmatprep.subr.bf16.mxu0 0
      %815 = vmatpush1.bf16.msra.mxu0 0
      %816 = vmatprep.subr.bf16.mxu0 0
      %817 = vmatpush1.bf16.msra.mxu0 0
      %818 = vmatprep.subr.bf16.mxu0 0
      %819 = vmatpush1.bf16.msra.mxu0 0
      %820 = vmatprep.subr.bf16.mxu0 0
      %821 = vmatpush1.bf16.msra.mxu0 0
      %822 = vmatprep.subr.bf16.mxu0 0
      %823 = vmatpush1.bf16.msra.mxu0 0
      %824 = vmatprep.subr.bf16.mxu0 0
      %825 = vmatpush1.bf16.msra.mxu0 0
      %826 = vmatprep.subr.bf16.mxu0 0
      %827 = vmatpush1.bf16.msra.mxu0 0
      %828 = vmatprep.subr.bf16.mxu0 0
      %829 = vmatpush1.bf16.msra.mxu0 0
      %830 = vmatprep.subr.bf16.mxu0 0
      %831 = vmatpush1.bf16.msra.mxu0 0
      %832 = vmatprep.subr.bf16.mxu0 0
      %833 = vmatpush1.bf16.msra.mxu0 0
      %834 = vmatprep.subr.bf16.mxu0 0
      %835 = vmatpush1.bf16.msra.mxu0 0
      %836 = vmatprep.subr.bf16.mxu0 0
      %837 = vmatpush1.bf16.msra.mxu0 0
      %838 = vmatprep.subr.bf16.mxu0 0
      %839 = vmatpush1.bf16.msra.mxu0 0
      %840 = vmatprep.mubr.bf16.mxu0 0
      %841 = vmatmul.mubr.bf16.gmra.mrb[0].mxu0 %v229
      %v842 = vpop.f32.mrb[0].mxu0
      %v843 = vadd.f32 0.0, %v842
      %v844 = vpop.f32.mrb[0].mxu0
      %v845 = vpop.f32.mrb[0].mxu0
      %v846 = vadd.f32 0.0, %v845
      %v847 = vpop.f32.mrb[0].mxu0
      %848 = vdwg.mxu0
      %v849 = vpack.c.bf16 %v846, %v843
      %v851 = vsel %vm227, %v849, 0
      %853 = vmatprep.subr.bf16.mxu0 0
      %854 = vmatpush1.bf16.msra.mxu0 %v281
      %855 = vmatprep.subr.bf16.mxu0 0
      %856 = vmatpush1.bf16.msra.mxu0 0
      %857 = vmatprep.subr.bf16.mxu0 0
      %858 = vmatpush1.bf16.msra.mxu0 0
      %859 = vmatprep.subr.bf16.mxu0 0
      %860 = vmatpush1.bf16.msra.mxu0 0
      %861 = vmatprep.subr.bf16.mxu0 0
      %862 = vmatpush1.bf16.msra.mxu0 0
      %863 = vmatprep.subr.bf16.mxu0 0
      %864 = vmatpush1.bf16.msra.mxu0 0
      %865 = vmatprep.subr.bf16.mxu0 0
      %866 = vmatpush1.bf16.msra.mxu0 0
      %867 = vmatprep.subr.bf16.mxu0 0
      %868 = vmatpush1.bf16.msra.mxu0 0
      %869 = vmatprep.subr.bf16.mxu0 0
      %870 = vmatpush1.bf16.msra.mxu0 0
      %871 = vmatprep.subr.bf16.mxu0 0
      %872 = vmatpush1.bf16.msra.mxu0 0
      %873 = vmatprep.subr.bf16.mxu0 0
      %874 = vmatpush1.bf16.msra.mxu0 0
      %875 = vmatprep.subr.bf16.mxu0 0
      %876 = vmatpush1.bf16.msra.mxu0 0
      %877 = vmatprep.subr.bf16.mxu0 0
      %878 = vmatpush1.bf16.msra.mxu0 0
      %879 = vmatprep.subr.bf16.mxu0 0
      %880 = vmatpush1.bf16.msra.mxu0 0
      %881 = vmatprep.subr.bf16.mxu0 0
      %882 = vmatpush1.bf16.msra.mxu0 0
      %883 = vmatprep.subr.bf16.mxu0 0
      %884 = vmatpush1.bf16.msra.mxu0 0
      %885 = vmatprep.mubr.bf16.mxu0 0
      %886 = vmatmul.mubr.bf16.gmra.mrb[0].mxu0 %v851
      %v887 = vpop.f32.mrb[0].mxu0
      %v888 = vadd.f32 0.0, %v887
      %v889 = vpop.f32.mrb[0].mxu0
      %v890 = vpop.f32.mrb[0].mxu0
      %v891 = vadd.f32 0.0, %v890
      %v892 = vpop.f32.mrb[0].mxu0
      %893 = vdwg.mxu0
      %s894 = scalar_lea.vmem %s214, 96
      %895 = vst.msk [vmem:[%s894] sm:$0xff] %vm324, %v888
      %896 = vst.msk [vmem:[%s894 + $0x8] sm:$0xff] %vm324, %v891
      %s897 = scalar_lea.vmem %s199, 14
      %v898 = vld [vmem:[%s897] sm:$0x3]
      %v899 = vpack.c.bf16 %v898, %v898
      %v901 = vsel %vm231, %v899, 0
      %903 = vmatprep.subr.bf16.mxu0 0
      %904 = vmatpush1.bf16.msra.mxu0 %v901
      %905 = vmatprep.subr.bf16.mxu0 0
      %906 = vmatpush1.bf16.msra.mxu0 0
      %907 = vmatprep.subr.bf16.mxu0 0
      %908 = vmatpush1.bf16.msra.mxu0 0
      %909 = vmatprep.subr.bf16.mxu0 0
      %910 = vmatpush1.bf16.msra.mxu0 0
      %911 = vmatprep.subr.bf16.mxu0 0
      %912 = vmatpush1.bf16.msra.mxu0 0
      %913 = vmatprep.subr.bf16.mxu0 0
      %914 = vmatpush1.bf16.msra.mxu0 0
      %915 = vmatprep.subr.bf16.mxu0 0
      %916 = vmatpush1.bf16.msra.mxu0 0
      %917 = vmatprep.subr.bf16.mxu0 0
      %918 = vmatpush1.bf16.msra.mxu0 0
      %919 = vmatprep.subr.bf16.mxu0 0
      %920 = vmatpush1.bf16.msra.mxu0 0
      %921 = vmatprep.subr.bf16.mxu0 0
      %922 = vmatpush1.bf16.msra.mxu0 0
      %923 = vmatprep.subr.bf16.mxu0 0
      %924 = vmatpush1.bf16.msra.mxu0 0
      %925 = vmatprep.subr.bf16.mxu0 0
      %926 = vmatpush1.bf16.msra.mxu0 0
      %927 = vmatprep.subr.bf16.mxu0 0
      %928 = vmatpush1.bf16.msra.mxu0 0
      %929 = vmatprep.subr.bf16.mxu0 0
      %930 = vmatpush1.bf16.msra.mxu0 0
      %931 = vmatprep.subr.bf16.mxu0 0
      %932 = vmatpush1.bf16.msra.mxu0 0
      %933 = vmatprep.subr.bf16.mxu0 0
      %934 = vmatpush1.bf16.msra.mxu0 0
      %935 = vmatprep.mubr.bf16.mxu0 0
      %936 = vmatmul.mubr.bf16.gmra.mrb[0].mxu0 %v229
      %v937 = vpop.f32.mrb[0].mxu0
      %v938 = vadd.f32 0.0, %v937
      %v939 = vpop.f32.mrb[0].mxu0
      %v940 = vpop.f32.mrb[0].mxu0
      %v941 = vadd.f32 0.0, %v940
      %v942 = vpop.f32.mrb[0].mxu0
      %943 = vdwg.mxu0
      %v944 = vpack.c.bf16 %v941, %v938
      %v946 = vsel %vm227, %v944, 0
      %948 = vmatprep.subr.bf16.mxu0 0
      %949 = vmatpush1.bf16.msra.mxu0 %v281
      %950 = vmatprep.subr.bf16.mxu0 0
      %951 = vmatpush1.bf16.msra.mxu0 0
      %952 = vmatprep.subr.bf16.mxu0 0
      %953 = vmatpush1.bf16.msra.mxu0 0
      %954 = vmatprep.subr.bf16.mxu0 0
      %955 = vmatpush1.bf16.msra.mxu0 0
      %956 = vmatprep.subr.bf16.mxu0 0
      %957 = vmatpush1.bf16.msra.mxu0 0
      %958 = vmatprep.subr.bf16.mxu0 0
      %959 = vmatpush1.bf16.msra.mxu0 0
      %960 = vmatprep.subr.bf16.mxu0 0
      %961 = vmatpush1.bf16.msra.mxu0 0
      %962 = vmatprep.subr.bf16.mxu0 0
      %963 = vmatpush1.bf16.msra.mxu0 0
      %964 = vmatprep.subr.bf16.mxu0 0
      %965 = vmatpush1.bf16.msra.mxu0 0
      %966 = vmatprep.subr.bf16.mxu0 0
      %967 = vmatpush1.bf16.msra.mxu0 0
      %968 = vmatprep.subr.bf16.mxu0 0
      %969 = vmatpush1.bf16.msra.mxu0 0
      %970 = vmatprep.subr.bf16.mxu0 0
      %971 = vmatpush1.bf16.msra.mxu0 0
      %972 = vmatprep.subr.bf16.mxu0 0
      %973 = vmatpush1.bf16.msra.mxu0 0
      %974 = vmatprep.subr.bf16.mxu0 0
      %975 = vmatpush1.bf16.msra.mxu0 0
      %976 = vmatprep.subr.bf16.mxu0 0
      %977 = vmatpush1.bf16.msra.mxu0 0
      %978 = vmatprep.subr.bf16.mxu0 0
      %979 = vmatpush1.bf16.msra.mxu0 0
      %980 = vmatprep.mubr.bf16.mxu0 0
      %981 = vmatmul.mubr.bf16.gmra.mrb[0].mxu0 %v946
      %v982 = vpop.f32.mrb[0].mxu0
      %v983 = vadd.f32 0.0, %v982
      %v984 = vpop.f32.mrb[0].mxu0
      %v985 = vpop.f32.mrb[0].mxu0
      %v986 = vadd.f32 0.0, %v985
      %v987 = vpop.f32.mrb[0].mxu0
      %988 = vdwg.mxu0
      %s989 = scalar_lea.vmem %s214, 112
      %990 = vst.msk [vmem:[%s989] sm:$0xff] %vm324, %v983
      %991 = vst.msk [vmem:[%s989 + $0x8] sm:$0xff] %vm324, %v986
      %s992 = scalar_lea.vmem %s199, 16
      %v993 = vld [vmem:[%s992] sm:$0x3]
      %v994 = vpack.c.bf16 %v993, %v993
      %v996 = vsel %vm231, %v994, 0
      %998 = vmatprep.subr.bf16.mxu0 0
      %999 = vmatpush1.bf16.msra.mxu0 %v996
      %1000 = vmatprep.subr.bf16.mxu0 0
      %1001 = vmatpush1.bf16.msra.mxu0 0
      %1002 = vmatprep.subr.bf16.mxu0 0
      %1003 = vmatpush1.bf16.msra.mxu0 0
      %1004 = vmatprep.subr.bf16.mxu0 0
      %1005 = vmatpush1.bf16.msra.mxu0 0
      %1006 = vmatprep.subr.bf16.mxu0 0
      %1007 = vmatpush1.bf16.msra.mxu0 0
      %1008 = vmatprep.subr.bf16.mxu0 0
      %1009 = vmatpush1.bf16.msra.mxu0 0
      %1010 = vmatprep.subr.bf16.mxu0 0
      %1011 = vmatpush1.bf16.msra.mxu0 0
      %1012 = vmatprep.subr.bf16.mxu0 0
      %1013 = vmatpush1.bf16.msra.mxu0 0
      %1014 = vmatprep.subr.bf16.mxu0 0
      %1015 = vmatpush1.bf16.msra.mxu0 0
      %1016 = vmatprep.subr.bf16.mxu0 0
      %1017 = vmatpush1.bf16.msra.mxu0 0
      %1018 = vmatprep.subr.bf16.mxu0 0
      %1019 = vmatpush1.bf16.msra.mxu0 0
      %1020 = vmatprep.subr.bf16.mxu0 0
      %1021 = vmatpush1.bf16.msra.mxu0 0
      %1022 = vmatprep.subr.bf16.mxu0 0
      %1023 = vmatpush1.bf16.msra.mxu0 0
      %1024 = vmatprep.subr.bf16.mxu0 0
      %1025 = vmatpush1.bf16.msra.mxu0 0
      %1026 = vmatprep.subr.bf16.mxu0 0
      %1027 = vmatpush1.bf16.msra.mxu0 0
      %1028 = vmatprep.subr.bf16.mxu0 0
      %1029 = vmatpush1.bf16.msra.mxu0 0
      %1030 = vmatprep.mubr.bf16.mxu0 0
      %1031 = vmatmul.mubr.bf16.gmra.mrb[0].mxu0 %v229
      %v1032 = vpop.f32.mrb[0].mxu0
      %v1033 = vadd.f32 0.0, %v1032
      %v1034 = vpop.f32.mrb[0].mxu0
      %v1035 = vpop.f32.mrb[0].mxu0
      %v1036 = vadd.f32 0.0, %v1035
      %v1037 = vpop.f32.mrb[0].mxu0
      %1038 = vdwg.mxu0
      %v1039 = vpack.c.bf16 %v1036, %v1033
      %v1041 = vsel %vm227, %v1039, 0
      %1043 = vmatprep.subr.bf16.mxu0 0
      %1044 = vmatpush1.bf16.msra.mxu0 %v281
      %1045 = vmatprep.subr.bf16.mxu0 0
      %1046 = vmatpush1.bf16.msra.mxu0 0
      %1047 = vmatprep.subr.bf16.mxu0 0
      %1048 = vmatpush1.bf16.msra.mxu0 0
      %1049 = vmatprep.subr.bf16.mxu0 0
      %1050 = vmatpush1.bf16.msra.mxu0 0
      %1051 = vmatprep.subr.bf16.mxu0 0
      %1052 = vmatpush1.bf16.msra.mxu0 0
      %1053 = vmatprep.subr.bf16.mxu0 0
      %1054 = vmatpush1.bf16.msra.mxu0 0
      %1055 = vmatprep.subr.bf16.mxu0 0
      %1056 = vmatpush1.bf16.msra.mxu0 0
      %1057 = vmatprep.subr.bf16.mxu0 0
      %1058 = vmatpush1.bf16.msra.mxu0 0
      %1059 = vmatprep.subr.bf16.mxu0 0
      %1060 = vmatpush1.bf16.msra.mxu0 0
      %1061 = vmatprep.subr.bf16.mxu0 0
      %1062 = vmatpush1.bf16.msra.mxu0 0
      %1063 = vmatprep.subr.bf16.mxu0 0
      %1064 = vmatpush1.bf16.msra.mxu0 0
      %1065 = vmatprep.subr.bf16.mxu0 0
      %1066 = vmatpush1.bf16.msra.mxu0 0
      %1067 = vmatprep.subr.bf16.mxu0 0
      %1068 = vmatpush1.bf16.msra.mxu0 0
      %1069 = vmatprep.subr.bf16.mxu0 0
      %1070 = vmatpush1.bf16.msra.mxu0 0
      %1071 = vmatprep.subr.bf16.mxu0 0
      %1072 = vmatpush1.bf16.msra.mxu0 0
      %1073 = vmatprep.subr.bf16.mxu0 0
      %1074 = vmatpush1.bf16.msra.mxu0 0
      %1075 = vmatprep.mubr.bf16.mxu0 0
      %1076 = vmatmul.mubr.bf16.gmra.mrb[0].mxu0 %v1041
      %v1077 = vpop.f32.mrb[0].mxu0
      %v1078 = vadd.f32 0.0, %v1077
      %v1079 = vpop.f32.mrb[0].mxu0
      %v1080 = vpop.f32.mrb[0].mxu0
      %v1081 = vadd.f32 0.0, %v1080
      %v1082 = vpop.f32.mrb[0].mxu0
      %1083 = vdwg.mxu0
      %s1084 = scalar_lea.vmem %s214, 128
      %1085 = vst.msk [vmem:[%s1084] sm:$0xff] %vm324, %v1078
      %1086 = vst.msk [vmem:[%s1084 + $0x8] sm:$0xff] %vm324, %v1081
      %s1087 = scalar_lea.vmem %s199, 18
      %v1088 = vld [vmem:[%s1087] sm:$0x3]
      %v1089 = vpack.c.bf16 %v1088, %v1088
      %v1091 = vsel %vm231, %v1089, 0
      %1093 = vmatprep.subr.bf16.mxu0 0
      %1094 = vmatpush1.bf16.msra.mxu0 %v1091
      %1095 = vmatprep.subr.bf16.mxu0 0
      %1096 = vmatpush1.bf16.msra.mxu0 0
      %1097 = vmatprep.subr.bf16.mxu0 0
      %1098 = vmatpush1.bf16.msra.mxu0 0
      %1099 = vmatprep.subr.bf16.mxu0 0
      %1100 = vmatpush1.bf16.msra.mxu0 0
      %1101 = vmatprep.subr.bf16.mxu0 0
      %1102 = vmatpush1.bf16.msra.mxu0 0
      %1103 = vmatprep.subr.bf16.mxu0 0
      %1104 = vmatpush1.bf16.msra.mxu0 0
      %1105 = vmatprep.subr.bf16.mxu0 0
      %1106 = vmatpush1.bf16.msra.mxu0 0
      %1107 = vmatprep.subr.bf16.mxu0 0
      %1108 = vmatpush1.bf16.msra.mxu0 0
      %1109 = vmatprep.subr.bf16.mxu0 0
      %1110 = vmatpush1.bf16.msra.mxu0 0
      %1111 = vmatprep.subr.bf16.mxu0 0
      %1112 = vmatpush1.bf16.msra.mxu0 0
      %1113 = vmatprep.subr.bf16.mxu0 0
      %1114 = vmatpush1.bf16.msra.mxu0 0
      %1115 = vmatprep.subr.bf16.mxu0 0
      %1116 = vmatpush1.bf16.msra.mxu0 0
      %1117 = vmatprep.subr.bf16.mxu0 0
      %1118 = vmatpush1.bf16.msra.mxu0 0
      %1119 = vmatprep.subr.bf16.mxu0 0
      %1120 = vmatpush1.bf16.msra.mxu0 0
      %1121 = vmatprep.subr.bf16.mxu0 0
      %1122 = vmatpush1.bf16.msra.mxu0 0
      %1123 = vmatprep.subr.bf16.mxu0 0
      %1124 = vmatpush1.bf16.msra.mxu0 0
      %1125 = vmatprep.mubr.bf16.mxu0 0
      %1126 = vmatmul.mubr.bf16.gmra.mrb[0].mxu0 %v229
      %v1127 = vpop.f32.mrb[0].mxu0
      %v1128 = vadd.f32 0.0, %v1127
      %v1129 = vpop.f32.mrb[0].mxu0
      %v1130 = vpop.f32.mrb[0].mxu0
      %v1131 = vadd.f32 0.0, %v1130
      %v1132 = vpop.f32.mrb[0].mxu0
      %1133 = vdwg.mxu0
      %v1134 = vpack.c.bf16 %v1131, %v1128
      %v1136 = vsel %vm227, %v1134, 0
      %1138 = vmatprep.subr.bf16.mxu0 0
      %1139 = vmatpush1.bf16.msra.mxu0 %v281
      %1140 = vmatprep.subr.bf16.mxu0 0
      %1141 = vmatpush1.bf16.msra.mxu0 0
      %1142 = vmatprep.subr.bf16.mxu0 0
      %1143 = vmatpush1.bf16.msra.mxu0 0
      %1144 = vmatprep.subr.bf16.mxu0 0
      %1145 = vmatpush1.bf16.msra.mxu0 0
      %1146 = vmatprep.subr.bf16.mxu0 0
      %1147 = vmatpush1.bf16.msra.mxu0 0
      %1148 = vmatprep.subr.bf16.mxu0 0
      %1149 = vmatpush1.bf16.msra.mxu0 0
      %1150 = vmatprep.subr.bf16.mxu0 0
      %1151 = vmatpush1.bf16.msra.mxu0 0
      %1152 = vmatprep.subr.bf16.mxu0 0
      %1153 = vmatpush1.bf16.msra.mxu0 0
      %1154 = vmatprep.subr.bf16.mxu0 0
      %1155 = vmatpush1.bf16.msra.mxu0 0
      %1156 = vmatprep.subr.bf16.mxu0 0
      %1157 = vmatpush1.bf16.msra.mxu0 0
      %1158 = vmatprep.subr.bf16.mxu0 0
      %1159 = vmatpush1.bf16.msra.mxu0 0
      %1160 = vmatprep.subr.bf16.mxu0 0
      %1161 = vmatpush1.bf16.msra.mxu0 0
      %1162 = vmatprep.subr.bf16.mxu0 0
      %1163 = vmatpush1.bf16.msra.mxu0 0
      %1164 = vmatprep.subr.bf16.mxu0 0
      %1165 = vmatpush1.bf16.msra.mxu0 0
      %1166 = vmatprep.subr.bf16.mxu0 0
      %1167 = vmatpush1.bf16.msra.mxu0 0
      %1168 = vmatprep.subr.bf16.mxu0 0
      %1169 = vmatpush1.bf16.msra.mxu0 0
      %1170 = vmatprep.mubr.bf16.mxu0 0
      %1171 = vmatmul.mubr.bf16.gmra.mrb[0].mxu0 %v1136
      %v1172 = vpop.f32.mrb[0].mxu0
      %v1173 = vadd.f32 0.0, %v1172
      %v1174 = vpop.f32.mrb[0].mxu0
      %v1175 = vpop.f32.mrb[0].mxu0
      %v1176 = vadd.f32 0.0, %v1175
      %v1177 = vpop.f32.mrb[0].mxu0
      %1178 = vdwg.mxu0
      %s1179 = scalar_lea.vmem %s214, 144
      %1180 = vst.msk [vmem:[%s1179] sm:$0xff] %vm324, %v1173
      %1181 = vst.msk [vmem:[%s1179 + $0x8] sm:$0xff] %vm324, %v1176
      %s1182 = scalar_lea.vmem %s199, 20
      %v1183 = vld [vmem:[%s1182] sm:$0x3]
      %v1184 = vpack.c.bf16 %v1183, %v1183
      %v1186 = vsel %vm231, %v1184, 0
      %1188 = vmatprep.subr.bf16.mxu0 0
      %1189 = vmatpush1.bf16.msra.mxu0 %v1186
      %1190 = vmatprep.subr.bf16.mxu0 0
      %1191 = vmatpush1.bf16.msra.mxu0 0
      %1192 = vmatprep.subr.bf16.mxu0 0
      %1193 = vmatpush1.bf16.msra.mxu0 0
      %1194 = vmatprep.subr.bf16.mxu0 0
      %1195 = vmatpush1.bf16.msra.mxu0 0
      %1196 = vmatprep.subr.bf16.mxu0 0
      %1197 = vmatpush1.bf16.msra.mxu0 0
      %1198 = vmatprep.subr.bf16.mxu0 0
      %1199 = vmatpush1.bf16.msra.mxu0 0
      %1200 = vmatprep.subr.bf16.mxu0 0
      %1201 = vmatpush1.bf16.msra.mxu0 0
      %1202 = vmatprep.subr.bf16.mxu0 0
      %1203 = vmatpush1.bf16.msra.mxu0 0
      %1204 = vmatprep.subr.bf16.mxu0 0
      %1205 = vmatpush1.bf16.msra.mxu0 0
      %1206 = vmatprep.subr.bf16.mxu0 0
      %1207 = vmatpush1.bf16.msra.mxu0 0
      %1208 = vmatprep.subr.bf16.mxu0 0
      %1209 = vmatpush1.bf16.msra.mxu0 0
      %1210 = vmatprep.subr.bf16.mxu0 0
      %1211 = vmatpush1.bf16.msra.mxu0 0
      %1212 = vmatprep.subr.bf16.mxu0 0
      %1213 = vmatpush1.bf16.msra.mxu0 0
      %1214 = vmatprep.subr.bf16.mxu0 0
      %1215 = vmatpush1.bf16.msra.mxu0 0
      %1216 = vmatprep.subr.bf16.mxu0 0
      %1217 = vmatpush1.bf16.msra.mxu0 0
      %1218 = vmatprep.subr.bf16.mxu0 0
      %1219 = vmatpush1.bf16.msra.mxu0 0
      %1220 = vmatprep.mubr.bf16.mxu0 0
      %1221 = vmatmul.mubr.bf16.gmra.mrb[0].mxu0 %v229
      %v1222 = vpop.f32.mrb[0].mxu0
      %v1223 = vadd.f32 0.0, %v1222
      %v1224 = vpop.f32.mrb[0].mxu0
      %v1225 = vpop.f32.mrb[0].mxu0
      %v1226 = vadd.f32 0.0, %v1225
      %v1227 = vpop.f32.mrb[0].mxu0
      %1228 = vdwg.mxu0
      %v1229 = vpack.c.bf16 %v1226, %v1223
      %v1231 = vsel %vm227, %v1229, 0
      %1233 = vmatprep.subr.bf16.mxu0 0
      %1234 = vmatpush1.bf16.msra.mxu0 %v281
      %1235 = vmatprep.subr.bf16.mxu0 0
      %1236 = vmatpush1.bf16.msra.mxu0 0
      %1237 = vmatprep.subr.bf16.mxu0 0
      %1238 = vmatpush1.bf16.msra.mxu0 0
      %1239 = vmatprep.subr.bf16.mxu0 0
      %1240 = vmatpush1.bf16.msra.mxu0 0
      %1241 = vmatprep.subr.bf16.mxu0 0
      %1242 = vmatpush1.bf16.msra.mxu0 0
      %1243 = vmatprep.subr.bf16.mxu0 0
      %1244 = vmatpush1.bf16.msra.mxu0 0
      %1245 = vmatprep.subr.bf16.mxu0 0
      %1246 = vmatpush1.bf16.msra.mxu0 0
      %1247 = vmatprep.subr.bf16.mxu0 0
      %1248 = vmatpush1.bf16.msra.mxu0 0
      %1249 = vmatprep.subr.bf16.mxu0 0
      %1250 = vmatpush1.bf16.msra.mxu0 0
      %1251 = vmatprep.subr.bf16.mxu0 0
      %1252 = vmatpush1.bf16.msra.mxu0 0
      %1253 = vmatprep.subr.bf16.mxu0 0
      %1254 = vmatpush1.bf16.msra.mxu0 0
      %1255 = vmatprep.subr.bf16.mxu0 0
      %1256 = vmatpush1.bf16.msra.mxu0 0
      %1257 = vmatprep.subr.bf16.mxu0 0
      %1258 = vmatpush1.bf16.msra.mxu0 0
      %1259 = vmatprep.subr.bf16.mxu0 0
      %1260 = vmatpush1.bf16.msra.mxu0 0
      %1261 = vmatprep.subr.bf16.mxu0 0
      %1262 = vmatpush1.bf16.msra.mxu0 0
      %1263 = vmatprep.subr.bf16.mxu0 0
      %1264 = vmatpush1.bf16.msra.mxu0 0
      %1265 = vmatprep.mubr.bf16.mxu0 0
      %1266 = vmatmul.mubr.bf16.gmra.mrb[0].mxu0 %v1231
      %v1267 = vpop.f32.mrb[0].mxu0
      %v1268 = vadd.f32 0.0, %v1267
      %v1269 = vpop.f32.mrb[0].mxu0
      %v1270 = vpop.f32.mrb[0].mxu0
      %v1271 = vadd.f32 0.0, %v1270
      %v1272 = vpop.f32.mrb[0].mxu0
      %1273 = vdwg.mxu0
      %s1274 = scalar_lea.vmem %s214, 160
      %1275 = vst.msk [vmem:[%s1274] sm:$0xff] %vm324, %v1268
      %1276 = vst.msk [vmem:[%s1274 + $0x8] sm:$0xff] %vm324, %v1271
      %s1277 = scalar_lea.vmem %s199, 22
      %v1278 = vld [vmem:[%s1277] sm:$0x3]
      %v1279 = vpack.c.bf16 %v1278, %v1278
      %v1281 = vsel %vm231, %v1279, 0
      %1283 = vmatprep.subr.bf16.mxu0 0
      %1284 = vmatpush1.bf16.msra.mxu0 %v1281
      %1285 = vmatprep.subr.bf16.mxu0 0
      %1286 = vmatpush1.bf16.msra.mxu0 0
      %1287 = vmatprep.subr.bf16.mxu0 0
      %1288 = vmatpush1.bf16.msra.mxu0 0
      %1289 = vmatprep.subr.bf16.mxu0 0
      %1290 = vmatpush1.bf16.msra.mxu0 0
      %1291 = vmatprep.subr.bf16.mxu0 0
      %1292 = vmatpush1.bf16.msra.mxu0 0
      %1293 = vmatprep.subr.bf16.mxu0 0
      %1294 = vmatpush1.bf16.msra.mxu0 0
      %1295 = vmatprep.subr.bf16.mxu0 0
      %1296 = vmatpush1.bf16.msra.mxu0 0
      %1297 = vmatprep.subr.bf16.mxu0 0
      %1298 = vmatpush1.bf16.msra.mxu0 0
      %1299 = vmatprep.subr.bf16.mxu0 0
      %1300 = vmatpush1.bf16.msra.mxu0 0
      %1301 = vmatprep.subr.bf16.mxu0 0
      %1302 = vmatpush1.bf16.msra.mxu0 0
      %1303 = vmatprep.subr.bf16.mxu0 0
      %1304 = vmatpush1.bf16.msra.mxu0 0
      %1305 = vmatprep.subr.bf16.mxu0 0
      %1306 = vmatpush1.bf16.msra.mxu0 0
      %1307 = vmatprep.subr.bf16.mxu0 0
      %1308 = vmatpush1.bf16.msra.mxu0 0
      %1309 = vmatprep.subr.bf16.mxu0 0
      %1310 = vmatpush1.bf16.msra.mxu0 0
      %1311 = vmatprep.subr.bf16.mxu0 0
      %1312 = vmatpush1.bf16.msra.mxu0 0
      %1313 = vmatprep.subr.bf16.mxu0 0
      %1314 = vmatpush1.bf16.msra.mxu0 0
      %1315 = vmatprep.mubr.bf16.mxu0 0
      %1316 = vmatmul.mubr.bf16.gmra.mrb[0].mxu0 %v229
      %v1317 = vpop.f32.mrb[0].mxu0
      %v1318 = vadd.f32 0.0, %v1317
      %v1319 = vpop.f32.mrb[0].mxu0
      %v1320 = vpop.f32.mrb[0].mxu0
      %v1321 = vadd.f32 0.0, %v1320
      %v1322 = vpop.f32.mrb[0].mxu0
      %1323 = vdwg.mxu0
      %v1324 = vpack.c.bf16 %v1321, %v1318
      %v1326 = vsel %vm227, %v1324, 0
      %1328 = vmatprep.subr.bf16.mxu0 0
      %1329 = vmatpush1.bf16.msra.mxu0 %v281
      %1330 = vmatprep.subr.bf16.mxu0 0
      %1331 = vmatpush1.bf16.msra.mxu0 0
      %1332 = vmatprep.subr.bf16.mxu0 0
      %1333 = vmatpush1.bf16.msra.mxu0 0
      %1334 = vmatprep.subr.bf16.mxu0 0
      %1335 = vmatpush1.bf16.msra.mxu0 0
      %1336 = vmatprep.subr.bf16.mxu0 0
      %1337 = vmatpush1.bf16.msra.mxu0 0
      %1338 = vmatprep.subr.bf16.mxu0 0
      %1339 = vmatpush1.bf16.msra.mxu0 0
      %1340 = vmatprep.subr.bf16.mxu0 0
      %1341 = vmatpush1.bf16.msra.mxu0 0
      %1342 = vmatprep.subr.bf16.mxu0 0
      %1343 = vmatpush1.bf16.msra.mxu0 0
      %1344 = vmatprep.subr.bf16.mxu0 0
      %1345 = vmatpush1.bf16.msra.mxu0 0
      %1346 = vmatprep.subr.bf16.mxu0 0
      %1347 = vmatpush1.bf16.msra.mxu0 0
      %1348 = vmatprep.subr.bf16.mxu0 0
      %1349 = vmatpush1.bf16.msra.mxu0 0
      %1350 = vmatprep.subr.bf16.mxu0 0
      %1351 = vmatpush1.bf16.msra.mxu0 0
      %1352 = vmatprep.subr.bf16.mxu0 0
      %1353 = vmatpush1.bf16.msra.mxu0 0
      %1354 = vmatprep.subr.bf16.mxu0 0
      %1355 = vmatpush1.bf16.msra.mxu0 0
      %1356 = vmatprep.subr.bf16.mxu0 0
      %1357 = vmatpush1.bf16.msra.mxu0 0
      %1358 = vmatprep.subr.bf16.mxu0 0
      %1359 = vmatpush1.bf16.msra.mxu0 0
      %1360 = vmatprep.mubr.bf16.mxu0 0
      %1361 = vmatmul.mubr.bf16.gmra.mrb[0].mxu0 %v1326
      %v1362 = vpop.f32.mrb[0].mxu0
      %v1363 = vadd.f32 0.0, %v1362
      %v1364 = vpop.f32.mrb[0].mxu0
      %v1365 = vpop.f32.mrb[0].mxu0
      %v1366 = vadd.f32 0.0, %v1365
      %v1367 = vpop.f32.mrb[0].mxu0
      %1368 = vdwg.mxu0
      %s1369 = scalar_lea.vmem %s214, 176
      %1370 = vst.msk [vmem:[%s1369] sm:$0xff] %vm324, %v1363
      %1371 = vst.msk [vmem:[%s1369 + $0x8] sm:$0xff] %vm324, %v1366
      %s1372 = scalar_lea.vmem %s199, 24
      %v1373 = vld [vmem:[%s1372] sm:$0x3]
      %v1374 = vpack.c.bf16 %v1373, %v1373
      %v1376 = vsel %vm231, %v1374, 0
      %1378 = vmatprep.subr.bf16.mxu0 0
      %1379 = vmatpush1.bf16.msra.mxu0 %v1376
      %1380 = vmatprep.subr.bf16.mxu0 0
      %1381 = vmatpush1.bf16.msra.mxu0 0
      %1382 = vmatprep.subr.bf16.mxu0 0
      %1383 = vmatpush1.bf16.msra.mxu0 0
      %1384 = vmatprep.subr.bf16.mxu0 0
      %1385 = vmatpush1.bf16.msra.mxu0 0
      %1386 = vmatprep.subr.bf16.mxu0 0
      %1387 = vmatpush1.bf16.msra.mxu0 0
      %1388 = vmatprep.subr.bf16.mxu0 0
      %1389 = vmatpush1.bf16.msra.mxu0 0
      %1390 = vmatprep.subr.bf16.mxu0 0
      %1391 = vmatpush1.bf16.msra.mxu0 0
      %1392 = vmatprep.subr.bf16.mxu0 0
      %1393 = vmatpush1.bf16.msra.mxu0 0
      %1394 = vmatprep.subr.bf16.mxu0 0
      %1395 = vmatpush1.bf16.msra.mxu0 0
      %1396 = vmatprep.subr.bf16.mxu0 0
      %1397 = vmatpush1.bf16.msra.mxu0 0
      %1398 = vmatprep.subr.bf16.mxu0 0
      %1399 = vmatpush1.bf16.msra.mxu0 0
      %1400 = vmatprep.subr.bf16.mxu0 0
      %1401 = vmatpush1.bf16.msra.mxu0 0
      %1402 = vmatprep.subr.bf16.mxu0 0
      %1403 = vmatpush1.bf16.msra.mxu0 0
      %1404 = vmatprep.subr.bf16.mxu0 0
      %1405 = vmatpush1.bf16.msra.mxu0 0
      %1406 = vmatprep.subr.bf16.mxu0 0
      %1407 = vmatpush1.bf16.msra.mxu0 0
      %1408 = vmatprep.subr.bf16.mxu0 0
      %1409 = vmatpush1.bf16.msra.mxu0 0
      %1410 = vmatprep.mubr.bf16.mxu0 0
      %1411 = vmatmul.mubr.bf16.gmra.mrb[0].mxu0 %v229
      %v1412 = vpop.f32.mrb[0].mxu0
      %v1413 = vadd.f32 0.0, %v1412
      %v1414 = vpop.f32.mrb[0].mxu0
      %v1415 = vpop.f32.mrb[0].mxu0
      %v1416 = vadd.f32 0.0, %v1415
      %v1417 = vpop.f32.mrb[0].mxu0
      %1418 = vdwg.mxu0
      %v1419 = vpack.c.bf16 %v1416, %v1413
      %v1421 = vsel %vm227, %v1419, 0
      %1423 = vmatprep.subr.bf16.mxu0 0
      %1424 = vmatpush1.bf16.msra.mxu0 %v281
      %1425 = vmatprep.subr.bf16.mxu0 0
      %1426 = vmatpush1.bf16.msra.mxu0 0
      %1427 = vmatprep.subr.bf16.mxu0 0
      %1428 = vmatpush1.bf16.msra.mxu0 0
      %1429 = vmatprep.subr.bf16.mxu0 0
      %1430 = vmatpush1.bf16.msra.mxu0 0
      %1431 = vmatprep.subr.bf16.mxu0 0
      %1432 = vmatpush1.bf16.msra.mxu0 0
      %1433 = vmatprep.subr.bf16.mxu0 0
      %1434 = vmatpush1.bf16.msra.mxu0 0
      %1435 = vmatprep.subr.bf16.mxu0 0
      %1436 = vmatpush1.bf16.msra.mxu0 0
      %1437 = vmatprep.subr.bf16.mxu0 0
      %1438 = vmatpush1.bf16.msra.mxu0 0
      %1439 = vmatprep.subr.bf16.mxu0 0
      %1440 = vmatpush1.bf16.msra.mxu0 0
      %1441 = vmatprep.subr.bf16.mxu0 0
      %1442 = vmatpush1.bf16.msra.mxu0 0
      %1443 = vmatprep.subr.bf16.mxu0 0
      %1444 = vmatpush1.bf16.msra.mxu0 0
      %1445 = vmatprep.subr.bf16.mxu0 0
      %1446 = vmatpush1.bf16.msra.mxu0 0
      %1447 = vmatprep.subr.bf16.mxu0 0
      %1448 = vmatpush1.bf16.msra.mxu0 0
      %1449 = vmatprep.subr.bf16.mxu0 0
      %1450 = vmatpush1.bf16.msra.mxu0 0
      %1451 = vmatprep.subr.bf16.mxu0 0
      %1452 = vmatpush1.bf16.msra.mxu0 0
      %1453 = vmatprep.subr.bf16.mxu0 0
      %1454 = vmatpush1.bf16.msra.mxu0 0
      %1455 = vmatprep.mubr.bf16.mxu0 0
      %1456 = vmatmul.mubr.bf16.gmra.mrb[0].mxu0 %v1421
      %v1457 = vpop.f32.mrb[0].mxu0
      %v1458 = vadd.f32 0.0, %v1457
      %v1459 = vpop.f32.mrb[0].mxu0
      %v1460 = vpop.f32.mrb[0].mxu0
      %v1461 = vadd.f32 0.0, %v1460
      %v1462 = vpop.f32.mrb[0].mxu0
      %1463 = vdwg.mxu0
      %s1464 = scalar_lea.vmem %s214, 192
      %1465 = vst.msk [vmem:[%s1464] sm:$0xff] %vm324, %v1458
      %1466 = vst.msk [vmem:[%s1464 + $0x8] sm:$0xff] %vm324, %v1461
      %s1467 = scalar_lea.vmem %s199, 26
      %v1468 = vld [vmem:[%s1467] sm:$0x3]
      %v1469 = vpack.c.bf16 %v1468, %v1468
      %v1471 = vsel %vm231, %v1469, 0
      %1473 = vmatprep.subr.bf16.mxu0 0
      %1474 = vmatpush1.bf16.msra.mxu0 %v1471
      %1475 = vmatprep.subr.bf16.mxu0 0
      %1476 = vmatpush1.bf16.msra.mxu0 0
      %1477 = vmatprep.subr.bf16.mxu0 0
      %1478 = vmatpush1.bf16.msra.mxu0 0
      %1479 = vmatprep.subr.bf16.mxu0 0
      %1480 = vmatpush1.bf16.msra.mxu0 0
      %1481 = vmatprep.subr.bf16.mxu0 0
      %1482 = vmatpush1.bf16.msra.mxu0 0
      %1483 = vmatprep.subr.bf16.mxu0 0
      %1484 = vmatpush1.bf16.msra.mxu0 0
      %1485 = vmatprep.subr.bf16.mxu0 0
      %1486 = vmatpush1.bf16.msra.mxu0 0
      %1487 = vmatprep.subr.bf16.mxu0 0
      %1488 = vmatpush1.bf16.msra.mxu0 0
      %1489 = vmatprep.subr.bf16.mxu0 0
      %1490 = vmatpush1.bf16.msra.mxu0 0
      %1491 = vmatprep.subr.bf16.mxu0 0
      %1492 = vmatpush1.bf16.msra.mxu0 0
      %1493 = vmatprep.subr.bf16.mxu0 0
      %1494 = vmatpush1.bf16.msra.mxu0 0
      %1495 = vmatprep.subr.bf16.mxu0 0
      %1496 = vmatpush1.bf16.msra.mxu0 0
      %1497 = vmatprep.subr.bf16.mxu0 0
      %1498 = vmatpush1.bf16.msra.mxu0 0
      %1499 = vmatprep.subr.bf16.mxu0 0
      %1500 = vmatpush1.bf16.msra.mxu0 0
      %1501 = vmatprep.subr.bf16.mxu0 0
      %1502 = vmatpush1.bf16.msra.mxu0 0
      %1503 = vmatprep.subr.bf16.mxu0 0
      %1504 = vmatpush1.bf16.msra.mxu0 0
      %1505 = vmatprep.mubr.bf16.mxu0 0
      %1506 = vmatmul.mubr.bf16.gmra.mrb[0].mxu0 %v229
      %v1507 = vpop.f32.mrb[0].mxu0
      %v1508 = vadd.f32 0.0, %v1507
      %v1509 = vpop.f32.mrb[0].mxu0
      %v1510 = vpop.f32.mrb[0].mxu0
      %v1511 = vadd.f32 0.0, %v1510
      %v1512 = vpop.f32.mrb[0].mxu0
      %1513 = vdwg.mxu0
      %v1514 = vpack.c.bf16 %v1511, %v1508
      %v1516 = vsel %vm227, %v1514, 0
      %1518 = vmatprep.subr.bf16.mxu0 0
      %1519 = vmatpush1.bf16.msra.mxu0 %v281
      %1520 = vmatprep.subr.bf16.mxu0 0
      %1521 = vmatpush1.bf16.msra.mxu0 0
      %1522 = vmatprep.subr.bf16.mxu0 0
      %1523 = vmatpush1.bf16.msra.mxu0 0
      %1524 = vmatprep.subr.bf16.mxu0 0
      %1525 = vmatpush1.bf16.msra.mxu0 0
      %1526 = vmatprep.subr.bf16.mxu0 0
      %1527 = vmatpush1.bf16.msra.mxu0 0
      %1528 = vmatprep.subr.bf16.mxu0 0
      %1529 = vmatpush1.bf16.msra.mxu0 0
      %1530 = vmatprep.subr.bf16.mxu0 0
      %1531 = vmatpush1.bf16.msra.mxu0 0
      %1532 = vmatprep.subr.bf16.mxu0 0
      %1533 = vmatpush1.bf16.msra.mxu0 0
      %1534 = vmatprep.subr.bf16.mxu0 0
      %1535 = vmatpush1.bf16.msra.mxu0 0
      %1536 = vmatprep.subr.bf16.mxu0 0
      %1537 = vmatpush1.bf16.msra.mxu0 0
      %1538 = vmatprep.subr.bf16.mxu0 0
      %1539 = vmatpush1.bf16.msra.mxu0 0
      %1540 = vmatprep.subr.bf16.mxu0 0
      %1541 = vmatpush1.bf16.msra.mxu0 0
      %1542 = vmatprep.subr.bf16.mxu0 0
      %1543 = vmatpush1.bf16.msra.mxu0 0
      %1544 = vmatprep.subr.bf16.mxu0 0
      %1545 = vmatpush1.bf16.msra.mxu0 0
      %1546 = vmatprep.subr.bf16.mxu0 0
      %1547 = vmatpush1.bf16.msra.mxu0 0
      %1548 = vmatprep.subr.bf16.mxu0 0
      %1549 = vmatpush1.bf16.msra.mxu0 0
      %1550 = vmatprep.mubr.bf16.mxu0 0
      %1551 = vmatmul.mubr.bf16.gmra.mrb[0].mxu0 %v1516
      %v1552 = vpop.f32.mrb[0].mxu0
      %v1553 = vadd.f32 0.0, %v1552
      %v1554 = vpop.f32.mrb[0].mxu0
      %v1555 = vpop.f32.mrb[0].mxu0
      %v1556 = vadd.f32 0.0, %v1555
      %v1557 = vpop.f32.mrb[0].mxu0
      %1558 = vdwg.mxu0
      %s1559 = scalar_lea.vmem %s214, 208
      %1560 = vst.msk [vmem:[%s1559] sm:$0xff] %vm324, %v1553
      %1561 = vst.msk [vmem:[%s1559 + $0x8] sm:$0xff] %vm324, %v1556
      %s1562 = scalar_lea.vmem %s199, 28
      %v1563 = vld [vmem:[%s1562] sm:$0x3]
      %v1564 = vpack.c.bf16 %v1563, %v1563
      %v1566 = vsel %vm231, %v1564, 0
      %1568 = vmatprep.subr.bf16.mxu0 0
      %1569 = vmatpush1.bf16.msra.mxu0 %v1566
      %1570 = vmatprep.subr.bf16.mxu0 0
      %1571 = vmatpush1.bf16.msra.mxu0 0
      %1572 = vmatprep.subr.bf16.mxu0 0
      %1573 = vmatpush1.bf16.msra.mxu0 0
      %1574 = vmatprep.subr.bf16.mxu0 0
      %1575 = vmatpush1.bf16.msra.mxu0 0
      %1576 = vmatprep.subr.bf16.mxu0 0
      %1577 = vmatpush1.bf16.msra.mxu0 0
      %1578 = vmatprep.subr.bf16.mxu0 0
      %1579 = vmatpush1.bf16.msra.mxu0 0
      %1580 = vmatprep.subr.bf16.mxu0 0
      %1581 = vmatpush1.bf16.msra.mxu0 0
      %1582 = vmatprep.subr.bf16.mxu0 0
      %1583 = vmatpush1.bf16.msra.mxu0 0
      %1584 = vmatprep.subr.bf16.mxu0 0
      %1585 = vmatpush1.bf16.msra.mxu0 0
      %1586 = vmatprep.subr.bf16.mxu0 0
      %1587 = vmatpush1.bf16.msra.mxu0 0
      %1588 = vmatprep.subr.bf16.mxu0 0
      %1589 = vmatpush1.bf16.msra.mxu0 0
      %1590 = vmatprep.subr.bf16.mxu0 0
      %1591 = vmatpush1.bf16.msra.mxu0 0
      %1592 = vmatprep.subr.bf16.mxu0 0
      %1593 = vmatpush1.bf16.msra.mxu0 0
      %1594 = vmatprep.subr.bf16.mxu0 0
      %1595 = vmatpush1.bf16.msra.mxu0 0
      %1596 = vmatprep.subr.bf16.mxu0 0
      %1597 = vmatpush1.bf16.msra.mxu0 0
      %1598 = vmatprep.subr.bf16.mxu0 0
      %1599 = vmatpush1.bf16.msra.mxu0 0
      %1600 = vmatprep.mubr.bf16.mxu0 0
      %1601 = vmatmul.mubr.bf16.gmra.mrb[0].mxu0 %v229
      %v1602 = vpop.f32.mrb[0].mxu0
      %v1603 = vadd.f32 0.0, %v1602
      %v1604 = vpop.f32.mrb[0].mxu0
      %v1605 = vpop.f32.mrb[0].mxu0
      %v1606 = vadd.f32 0.0, %v1605
      %v1607 = vpop.f32.mrb[0].mxu0
      %1608 = vdwg.mxu0
      %v1609 = vpack.c.bf16 %v1606, %v1603
      %v1611 = vsel %vm227, %v1609, 0
      %1613 = vmatprep.subr.bf16.mxu0 0
      %1614 = vmatpush1.bf16.msra.mxu0 %v281
      %1615 = vmatprep.subr.bf16.mxu0 0
      %1616 = vmatpush1.bf16.msra.mxu0 0
      %1617 = vmatprep.subr.bf16.mxu0 0
      %1618 = vmatpush1.bf16.msra.mxu0 0
      %1619 = vmatprep.subr.bf16.mxu0 0
      %1620 = vmatpush1.bf16.msra.mxu0 0
      %1621 = vmatprep.subr.bf16.mxu0 0
      %1622 = vmatpush1.bf16.msra.mxu0 0
      %1623 = vmatprep.subr.bf16.mxu0 0
      %1624 = vmatpush1.bf16.msra.mxu0 0
      %1625 = vmatprep.subr.bf16.mxu0 0
      %1626 = vmatpush1.bf16.msra.mxu0 0
      %1627 = vmatprep.subr.bf16.mxu0 0
      %1628 = vmatpush1.bf16.msra.mxu0 0
      %1629 = vmatprep.subr.bf16.mxu0 0
      %1630 = vmatpush1.bf16.msra.mxu0 0
      %1631 = vmatprep.subr.bf16.mxu0 0
      %1632 = vmatpush1.bf16.msra.mxu0 0
      %1633 = vmatprep.subr.bf16.mxu0 0
      %1634 = vmatpush1.bf16.msra.mxu0 0
      %1635 = vmatprep.subr.bf16.mxu0 0
      %1636 = vmatpush1.bf16.msra.mxu0 0
      %1637 = vmatprep.subr.bf16.mxu0 0
      %1638 = vmatpush1.bf16.msra.mxu0 0
      %1639 = vmatprep.subr.bf16.mxu0 0
      %1640 = vmatpush1.bf16.msra.mxu0 0
      %1641 = vmatprep.subr.bf16.mxu0 0
      %1642 = vmatpush1.bf16.msra.mxu0 0
      %1643 = vmatprep.subr.bf16.mxu0 0
      %1644 = vmatpush1.bf16.msra.mxu0 0
      %1645 = vmatprep.mubr.bf16.mxu0 0
      %1646 = vmatmul.mubr.bf16.gmra.mrb[0].mxu0 %v1611
      %v1647 = vpop.f32.mrb[0].mxu0
      %v1648 = vadd.f32 0.0, %v1647
      %v1649 = vpop.f32.mrb[0].mxu0
      %v1650 = vpop.f32.mrb[0].mxu0
      %v1651 = vadd.f32 0.0, %v1650
      %v1652 = vpop.f32.mrb[0].mxu0
      %1653 = vdwg.mxu0
      %s1654 = scalar_lea.vmem %s214, 224
      %1655 = vst.msk [vmem:[%s1654] sm:$0xff] %vm324, %v1648
      %1656 = vst.msk [vmem:[%s1654 + $0x8] sm:$0xff] %vm324, %v1651
      %s1657 = scalar_lea.vmem %s199, 30
      %v1658 = vld [vmem:[%s1657] sm:$0x3]
      %v1659 = vpack.c.bf16 %v1658, %v1658
      %v1661 = vsel %vm231, %v1659, 0
      %1663 = vmatprep.subr.bf16.mxu0 0
      %1664 = vmatpush1.bf16.msra.mxu0 %v1661
      %1665 = vmatprep.subr.bf16.mxu0 0
      %1666 = vmatpush1.bf16.msra.mxu0 0
      %1667 = vmatprep.subr.bf16.mxu0 0
      %1668 = vmatpush1.bf16.msra.mxu0 0
      %1669 = vmatprep.subr.bf16.mxu0 0
      %1670 = vmatpush1.bf16.msra.mxu0 0
      %1671 = vmatprep.subr.bf16.mxu0 0
      %1672 = vmatpush1.bf16.msra.mxu0 0
      %1673 = vmatprep.subr.bf16.mxu0 0
      %1674 = vmatpush1.bf16.msra.mxu0 0
      %1675 = vmatprep.subr.bf16.mxu0 0
      %1676 = vmatpush1.bf16.msra.mxu0 0
      %1677 = vmatprep.subr.bf16.mxu0 0
      %1678 = vmatpush1.bf16.msra.mxu0 0
      %1679 = vmatprep.subr.bf16.mxu0 0
      %1680 = vmatpush1.bf16.msra.mxu0 0
      %1681 = vmatprep.subr.bf16.mxu0 0
      %1682 = vmatpush1.bf16.msra.mxu0 0
      %1683 = vmatprep.subr.bf16.mxu0 0
      %1684 = vmatpush1.bf16.msra.mxu0 0
      %1685 = vmatprep.subr.bf16.mxu0 0
      %1686 = vmatpush1.bf16.msra.mxu0 0
      %1687 = vmatprep.subr.bf16.mxu0 0
      %1688 = vmatpush1.bf16.msra.mxu0 0
      %1689 = vmatprep.subr.bf16.mxu0 0
      %1690 = vmatpush1.bf16.msra.mxu0 0
      %1691 = vmatprep.subr.bf16.mxu0 0
      %1692 = vmatpush1.bf16.msra.mxu0 0
      %1693 = vmatprep.subr.bf16.mxu0 0
      %1694 = vmatpush1.bf16.msra.mxu0 0
      %1695 = vmatprep.mubr.bf16.mxu0 0
      %1696 = vmatmul.mubr.bf16.gmra.mrb[0].mxu0 %v229
      %v1697 = vpop.f32.mrb[0].mxu0
      %v1698 = vadd.f32 0.0, %v1697
      %v1699 = vpop.f32.mrb[0].mxu0
      %v1700 = vpop.f32.mrb[0].mxu0
      %v1701 = vadd.f32 0.0, %v1700
      %v1702 = vpop.f32.mrb[0].mxu0
      %1703 = vdwg.mxu0
      %v1704 = vpack.c.bf16 %v1701, %v1698
      %v1706 = vsel %vm227, %v1704, 0
      %1708 = vmatprep.subr.bf16.mxu0 0
      %1709 = vmatpush1.bf16.msra.mxu0 %v281
      %1710 = vmatprep.subr.bf16.mxu0 0
      %1711 = vmatpush1.bf16.msra.mxu0 0
      %1712 = vmatprep.subr.bf16.mxu0 0
      %1713 = vmatpush1.bf16.msra.mxu0 0
      %1714 = vmatprep.subr.bf16.mxu0 0
      %1715 = vmatpush1.bf16.msra.mxu0 0
      %1716 = vmatprep.subr.bf16.mxu0 0
      %1717 = vmatpush1.bf16.msra.mxu0 0
      %1718 = vmatprep.subr.bf16.mxu0 0
      %1719 = vmatpush1.bf16.msra.mxu0 0
      %1720 = vmatprep.subr.bf16.mxu0 0
      %1721 = vmatpush1.bf16.msra.mxu0 0
      %1722 = vmatprep.subr.bf16.mxu0 0
      %1723 = vmatpush1.bf16.msra.mxu0 0
      %1724 = vmatprep.subr.bf16.mxu0 0
      %1725 = vmatpush1.bf16.msra.mxu0 0
      %1726 = vmatprep.subr.bf16.mxu0 0
      %1727 = vmatpush1.bf16.msra.mxu0 0
      %1728 = vmatprep.subr.bf16.mxu0 0
      %1729 = vmatpush1.bf16.msra.mxu0 0
      %1730 = vmatprep.subr.bf16.mxu0 0
      %1731 = vmatpush1.bf16.msra.mxu0 0
      %1732 = vmatprep.subr.bf16.mxu0 0
      %1733 = vmatpush1.bf16.msra.mxu0 0
      %1734 = vmatprep.subr.bf16.mxu0 0
      %1735 = vmatpush1.bf16.msra.mxu0 0
      %1736 = vmatprep.subr.bf16.mxu0 0
      %1737 = vmatpush1.bf16.msra.mxu0 0
      %1738 = vmatprep.subr.bf16.mxu0 0
      %1739 = vmatpush1.bf16.msra.mxu0 0
      %1740 = vmatprep.mubr.bf16.mxu0 0
      %1741 = vmatmul.mubr.bf16.gmra.mrb[0].mxu0 %v1706
      %v1742 = vpop.f32.mrb[0].mxu0
      %v1743 = vadd.f32 0.0, %v1742
      %v1744 = vpop.f32.mrb[0].mxu0
      %v1745 = vpop.f32.mrb[0].mxu0
      %v1746 = vadd.f32 0.0, %v1745
      %v1747 = vpop.f32.mrb[0].mxu0
      %1748 = vdwg.mxu0
      %s1749 = scalar_lea.vmem %s214, 240
      %1750 = vst.msk [vmem:[%s1749] sm:$0xff] %vm324, %v1743
      %1751 = vst.msk [vmem:[%s1749 + $0x8] sm:$0xff] %vm324, %v1746
      %s1752 = scalar_lea.vmem %s199, 32
      %v1753 = vld [vmem:[%s1752] sm:$0x3]
      %v1754 = vpack.c.bf16 %v1753, %v1753
      %v1756 = vsel %vm231, %v1754, 0
      %1758 = vmatprep.subr.bf16.mxu0 0
      %1759 = vmatpush1.bf16.msra.mxu0 %v1756
      %1760 = vmatprep.subr.bf16.mxu0 0
      %1761 = vmatpush1.bf16.msra.mxu0 0
      %1762 = vmatprep.subr.bf16.mxu0 0
      %1763 = vmatpush1.bf16.msra.mxu0 0
      %1764 = vmatprep.subr.bf16.mxu0 0
      %1765 = vmatpush1.bf16.msra.mxu0 0
      %1766 = vmatprep.subr.bf16.mxu0 0
      %1767 = vmatpush1.bf16.msra.mxu0 0
      %1768 = vmatprep.subr.bf16.mxu0 0
      %1769 = vmatpush1.bf16.msra.mxu0 0
      %1770 = vmatprep.subr.bf16.mxu0 0
      %1771 = vmatpush1.bf16.msra.mxu0 0
      %1772 = vmatprep.subr.bf16.mxu0 0
      %1773 = vmatpush1.bf16.msra.mxu0 0
      %1774 = vmatprep.subr.bf16.mxu0 0
      %1775 = vmatpush1.bf16.msra.mxu0 0
      %1776 = vmatprep.subr.bf16.mxu0 0
      %1777 = vmatpush1.bf16.msra.mxu0 0
      %1778 = vmatprep.subr.bf16.mxu0 0
      %1779 = vmatpush1.bf16.msra.mxu0 0
      %1780 = vmatprep.subr.bf16.mxu0 0
      %1781 = vmatpush1.bf16.msra.mxu0 0
      %1782 = vmatprep.subr.bf16.mxu0 0
      %1783 = vmatpush1.bf16.msra.mxu0 0
      %1784 = vmatprep.subr.bf16.mxu0 0
      %1785 = vmatpush1.bf16.msra.mxu0 0
      %1786 = vmatprep.subr.bf16.mxu0 0
      %1787 = vmatpush1.bf16.msra.mxu0 0
      %1788 = vmatprep.subr.bf16.mxu0 0
      %1789 = vmatpush1.bf16.msra.mxu0 0
      %1790 = vmatprep.mubr.bf16.mxu0 0
      %1791 = vmatmul.mubr.bf16.gmra.mrb[0].mxu0 %v229
      %v1792 = vpop.f32.mrb[0].mxu0
      %v1793 = vadd.f32 0.0, %v1792
      %v1794 = vpop.f32.mrb[0].mxu0
      %v1795 = vpop.f32.mrb[0].mxu0
      %v1796 = vadd.f32 0.0, %v1795
      %v1797 = vpop.f32.mrb[0].mxu0
      %1798 = vdwg.mxu0
      %v1799 = vpack.c.bf16 %v1796, %v1793
      %v1801 = vsel %vm227, %v1799, 0
      %1803 = vmatprep.subr.bf16.mxu0 0
      %1804 = vmatpush1.bf16.msra.mxu0 %v281
      %1805 = vmatprep.subr.bf16.mxu0 0
      %1806 = vmatpush1.bf16.msra.mxu0 0
      %1807 = vmatprep.subr.bf16.mxu0 0
      %1808 = vmatpush1.bf16.msra.mxu0 0
      %1809 = vmatprep.subr.bf16.mxu0 0
      %1810 = vmatpush1.bf16.msra.mxu0 0
      %1811 = vmatprep.subr.bf16.mxu0 0
      %1812 = vmatpush1.bf16.msra.mxu0 0
      %1813 = vmatprep.subr.bf16.mxu0 0
      %1814 = vmatpush1.bf16.msra.mxu0 0
      %1815 = vmatprep.subr.bf16.mxu0 0
      %1816 = vmatpush1.bf16.msra.mxu0 0
      %1817 = vmatprep.subr.bf16.mxu0 0
      %1818 = vmatpush1.bf16.msra.mxu0 0
      %1819 = vmatprep.subr.bf16.mxu0 0
      %1820 = vmatpush1.bf16.msra.mxu0 0
      %1821 = vmatprep.subr.bf16.mxu0 0
      %1822 = vmatpush1.bf16.msra.mxu0 0
      %1823 = vmatprep.subr.bf16.mxu0 0
      %1824 = vmatpush1.bf16.msra.mxu0 0
      %1825 = vmatprep.subr.bf16.mxu0 0
      %1826 = vmatpush1.bf16.msra.mxu0 0
      %1827 = vmatprep.subr.bf16.mxu0 0
      %1828 = vmatpush1.bf16.msra.mxu0 0
      %1829 = vmatprep.subr.bf16.mxu0 0
      %1830 = vmatpush1.bf16.msra.mxu0 0
      %1831 = vmatprep.subr.bf16.mxu0 0
      %1832 = vmatpush1.bf16.msra.mxu0 0
      %1833 = vmatprep.subr.bf16.mxu0 0
      %1834 = vmatpush1.bf16.msra.mxu0 0
      %1835 = vmatprep.mubr.bf16.mxu0 0
      %1836 = vmatmul.mubr.bf16.gmra.mrb[0].mxu0 %v1801
      %v1837 = vpop.f32.mrb[0].mxu0
      %v1838 = vadd.f32 0.0, %v1837
      %v1839 = vpop.f32.mrb[0].mxu0
      %v1840 = vpop.f32.mrb[0].mxu0
      %v1841 = vadd.f32 0.0, %v1840
      %v1842 = vpop.f32.mrb[0].mxu0
      %1843 = vdwg.mxu0
      %s1844 = scalar_lea.vmem %s214, 256
      %1845 = vst.msk [vmem:[%s1844] sm:$0xff] %vm324, %v1838
      %1846 = vst.msk [vmem:[%s1844 + $0x8] sm:$0xff] %vm324, %v1841
      %s1847 = scalar_lea.vmem %s199, 34
      %v1848 = vld [vmem:[%s1847] sm:$0x3]
      %v1849 = vpack.c.bf16 %v1848, %v1848
      %v1851 = vsel %vm231, %v1849, 0
      %1853 = vmatprep.subr.bf16.mxu0 0
      %1854 = vmatpush1.bf16.msra.mxu0 %v1851
      %1855 = vmatprep.subr.bf16.mxu0 0
      %1856 = vmatpush1.bf16.msra.mxu0 0
      %1857 = vmatprep.subr.bf16.mxu0 0
      %1858 = vmatpush1.bf16.msra.mxu0 0
      %1859 = vmatprep.subr.bf16.mxu0 0
      %1860 = vmatpush1.bf16.msra.mxu0 0
      %1861 = vmatprep.subr.bf16.mxu0 0
      %1862 = vmatpush1.bf16.msra.mxu0 0
      %1863 = vmatprep.subr.bf16.mxu0 0
      %1864 = vmatpush1.bf16.msra.mxu0 0
      %1865 = vmatprep.subr.bf16.mxu0 0
      %1866 = vmatpush1.bf16.msra.mxu0 0
      %1867 = vmatprep.subr.bf16.mxu0 0
      %1868 = vmatpush1.bf16.msra.mxu0 0
      %1869 = vmatprep.subr.bf16.mxu0 0
      %1870 = vmatpush1.bf16.msra.mxu0 0
      %1871 = vmatprep.subr.bf16.mxu0 0
      %1872 = vmatpush1.bf16.msra.mxu0 0
      %1873 = vmatprep.subr.bf16.mxu0 0
      %1874 = vmatpush1.bf16.msra.mxu0 0
      %1875 = vmatprep.subr.bf16.mxu0 0
      %1876 = vmatpush1.bf16.msra.mxu0 0
      %1877 = vmatprep.subr.bf16.mxu0 0
      %1878 = vmatpush1.bf16.msra.mxu0 0
      %1879 = vmatprep.subr.bf16.mxu0 0
      %1880 = vmatpush1.bf16.msra.mxu0 0
      %1881 = vmatprep.subr.bf16.mxu0 0
      %1882 = vmatpush1.bf16.msra.mxu0 0
      %1883 = vmatprep.subr.bf16.mxu0 0
      %1884 = vmatpush1.bf16.msra.mxu0 0
      %1885 = vmatprep.mubr.bf16.mxu0 0
      %1886 = vmatmul.mubr.bf16.gmra.mrb[0].mxu0 %v229
      %v1887 = vpop.f32.mrb[0].mxu0
      %v1888 = vadd.f32 0.0, %v1887
      %v1889 = vpop.f32.mrb[0].mxu0
      %v1890 = vpop.f32.mrb[0].mxu0
      %v1891 = vadd.f32 0.0, %v1890
      %v1892 = vpop.f32.mrb[0].mxu0
      %1893 = vdwg.mxu0
      %v1894 = vpack.c.bf16 %v1891, %v1888
      %v1896 = vsel %vm227, %v1894, 0
      %1898 = vmatprep.subr.bf16.mxu0 0
      %1899 = vmatpush1.bf16.msra.mxu0 %v281
      %1900 = vmatprep.subr.bf16.mxu0 0
      %1901 = vmatpush1.bf16.msra.mxu0 0
      %1902 = vmatprep.subr.bf16.mxu0 0
      %1903 = vmatpush1.bf16.msra.mxu0 0
      %1904 = vmatprep.subr.bf16.mxu0 0
      %1905 = vmatpush1.bf16.msra.mxu0 0
      %1906 = vmatprep.subr.bf16.mxu0 0
      %1907 = vmatpush1.bf16.msra.mxu0 0
      %1908 = vmatprep.subr.bf16.mxu0 0
      %1909 = vmatpush1.bf16.msra.mxu0 0
      %1910 = vmatprep.subr.bf16.mxu0 0
      %1911 = vmatpush1.bf16.msra.mxu0 0
      %1912 = vmatprep.subr.bf16.mxu0 0
      %1913 = vmatpush1.bf16.msra.mxu0 0
      %1914 = vmatprep.subr.bf16.mxu0 0
      %1915 = vmatpush1.bf16.msra.mxu0 0
      %1916 = vmatprep.subr.bf16.mxu0 0
      %1917 = vmatpush1.bf16.msra.mxu0 0
      %1918 = vmatprep.subr.bf16.mxu0 0
      %1919 = vmatpush1.bf16.msra.mxu0 0
      %1920 = vmatprep.subr.bf16.mxu0 0
      %1921 = vmatpush1.bf16.msra.mxu0 0
      %1922 = vmatprep.subr.bf16.mxu0 0
      %1923 = vmatpush1.bf16.msra.mxu0 0
      %1924 = vmatprep.subr.bf16.mxu0 0
      %1925 = vmatpush1.bf16.msra.mxu0 0
      %1926 = vmatprep.subr.bf16.mxu0 0
      %1927 = vmatpush1.bf16.msra.mxu0 0
      %1928 = vmatprep.subr.bf16.mxu0 0
      %1929 = vmatpush1.bf16.msra.mxu0 0
      %1930 = vmatprep.mubr.bf16.mxu0 0
      %1931 = vmatmul.mubr.bf16.gmra.mrb[0].mxu0 %v1896
      %v1932 = vpop.f32.mrb[0].mxu0
      %v1933 = vadd.f32 0.0, %v1932
      %v1934 = vpop.f32.mrb[0].mxu0
      %v1935 = vpop.f32.mrb[0].mxu0
      %v1936 = vadd.f32 0.0, %v1935
      %v1937 = vpop.f32.mrb[0].mxu0
      %1938 = vdwg.mxu0
      %s1939 = scalar_lea.vmem %s214, 272
      %1940 = vst.msk [vmem:[%s1939] sm:$0xff] %vm324, %v1933
      %1941 = vst.msk [vmem:[%s1939 + $0x8] sm:$0xff] %vm324, %v1936
      %s1942 = scalar_lea.vmem %s199, 36
      %v1943 = vld [vmem:[%s1942] sm:$0x3]
      %v1944 = vpack.c.bf16 %v1943, %v1943
      %v1946 = vsel %vm231, %v1944, 0
      %1948 = vmatprep.subr.bf16.mxu0 0
      %1949 = vmatpush1.bf16.msra.mxu0 %v1946
      %1950 = vmatprep.subr.bf16.mxu0 0
      %1951 = vmatpush1.bf16.msra.mxu0 0
      %1952 = vmatprep.subr.bf16.mxu0 0
      %1953 = vmatpush1.bf16.msra.mxu0 0
      %1954 = vmatprep.subr.bf16.mxu0 0
      %1955 = vmatpush1.bf16.msra.mxu0 0
      %1956 = vmatprep.subr.bf16.mxu0 0
      %1957 = vmatpush1.bf16.msra.mxu0 0
      %1958 = vmatprep.subr.bf16.mxu0 0
      %1959 = vmatpush1.bf16.msra.mxu0 0
      %1960 = vmatprep.subr.bf16.mxu0 0
      %1961 = vmatpush1.bf16.msra.mxu0 0
      %1962 = vmatprep.subr.bf16.mxu0 0
      %1963 = vmatpush1.bf16.msra.mxu0 0
      %1964 = vmatprep.subr.bf16.mxu0 0
      %1965 = vmatpush1.bf16.msra.mxu0 0
      %1966 = vmatprep.subr.bf16.mxu0 0
      %1967 = vmatpush1.bf16.msra.mxu0 0
      %1968 = vmatprep.subr.bf16.mxu0 0
      %1969 = vmatpush1.bf16.msra.mxu0 0
      %1970 = vmatprep.subr.bf16.mxu0 0
      %1971 = vmatpush1.bf16.msra.mxu0 0
      %1972 = vmatprep.subr.bf16.mxu0 0
      %1973 = vmatpush1.bf16.msra.mxu0 0
      %1974 = vmatprep.subr.bf16.mxu0 0
      %1975 = vmatpush1.bf16.msra.mxu0 0
      %1976 = vmatprep.subr.bf16.mxu0 0
      %1977 = vmatpush1.bf16.msra.mxu0 0
      %1978 = vmatprep.subr.bf16.mxu0 0
      %1979 = vmatpush1.bf16.msra.mxu0 0
      %1980 = vmatprep.mubr.bf16.mxu0 0
      %1981 = vmatmul.mubr.bf16.gmra.mrb[0].mxu0 %v229
      %v1982 = vpop.f32.mrb[0].mxu0
      %v1983 = vadd.f32 0.0, %v1982
      %v1984 = vpop.f32.mrb[0].mxu0
      %v1985 = vpop.f32.mrb[0].mxu0
      %v1986 = vadd.f32 0.0, %v1985
      %v1987 = vpop.f32.mrb[0].mxu0
      %1988 = vdwg.mxu0
      %v1989 = vpack.c.bf16 %v1986, %v1983
      %v1991 = vsel %vm227, %v1989, 0
      %1993 = vmatprep.subr.bf16.mxu0 0
      %1994 = vmatpush1.bf16.msra.mxu0 %v281
      %1995 = vmatprep.subr.bf16.mxu0 0
      %1996 = vmatpush1.bf16.msra.mxu0 0
      %1997 = vmatprep.subr.bf16.mxu0 0
      %1998 = vmatpush1.bf16.msra.mxu0 0
      %1999 = vmatprep.subr.bf16.mxu0 0
      %2000 = vmatpush1.bf16.msra.mxu0 0
      %2001 = vmatprep.subr.bf16.mxu0 0
      %2002 = vmatpush1.bf16.msra.mxu0 0
      %2003 = vmatprep.subr.bf16.mxu0 0
      %2004 = vmatpush1.bf16.msra.mxu0 0
      %2005 = vmatprep.subr.bf16.mxu0 0
      %2006 = vmatpush1.bf16.msra.mxu0 0
      %2007 = vmatprep.subr.bf16.mxu0 0
      %2008 = vmatpush1.bf16.msra.mxu0 0
      %2009 = vmatprep.subr.bf16.mxu0 0
      %2010 = vmatpush1.bf16.msra.mxu0 0
      %2011 = vmatprep.subr.bf16.mxu0 0
      %2012 = vmatpush1.bf16.msra.mxu0 0
      %2013 = vmatprep.subr.bf16.mxu0 0
      %2014 = vmatpush1.bf16.msra.mxu0 0
      %2015 = vmatprep.subr.bf16.mxu0 0
      %2016 = vmatpush1.bf16.msra.mxu0 0
      %2017 = vmatprep.subr.bf16.mxu0 0
      %2018 = vmatpush1.bf16.msra.mxu0 0
      %2019 = vmatprep.subr.bf16.mxu0 0
      %2020 = vmatpush1.bf16.msra.mxu0 0
      %2021 = vmatprep.subr.bf16.mxu0 0
      %2022 = vmatpush1.bf16.msra.mxu0 0
      %2023 = vmatprep.subr.bf16.mxu0 0
      %2024 = vmatpush1.bf16.msra.mxu0 0
      %2025 = vmatprep.mubr.bf16.mxu0 0
      %2026 = vmatmul.mubr.bf16.gmra.mrb[0].mxu0 %v1991
      %v2027 = vpop.f32.mrb[0].mxu0
      %v2028 = vadd.f32 0.0, %v2027
      %v2029 = vpop.f32.mrb[0].mxu0
      %v2030 = vpop.f32.mrb[0].mxu0
      %v2031 = vadd.f32 0.0, %v2030
      %v2032 = vpop.f32.mrb[0].mxu0
      %2033 = vdwg.mxu0
      %s2034 = scalar_lea.vmem %s214, 288
      %2035 = vst.msk [vmem:[%s2034] sm:$0xff] %vm324, %v2028
      %2036 = vst.msk [vmem:[%s2034 + $0x8] sm:$0xff] %vm324, %v2031
      %s2037 = scalar_lea.vmem %s199, 38
      %v2038 = vld [vmem:[%s2037] sm:$0x3]
      %v2039 = vpack.c.bf16 %v2038, %v2038
      %v2041 = vsel %vm231, %v2039, 0
      %2043 = vmatprep.subr.bf16.mxu0 0
      %2044 = vmatpush1.bf16.msra.mxu0 %v2041
      %2045 = vmatprep.subr.bf16.mxu0 0
      %2046 = vmatpush1.bf16.msra.mxu0 0
      %2047 = vmatprep.subr.bf16.mxu0 0
      %2048 = vmatpush1.bf16.msra.mxu0 0
      %2049 = vmatprep.subr.bf16.mxu0 0
      %2050 = vmatpush1.bf16.msra.mxu0 0
      %2051 = vmatprep.subr.bf16.mxu0 0
      %2052 = vmatpush1.bf16.msra.mxu0 0
      %2053 = vmatprep.subr.bf16.mxu0 0
      %2054 = vmatpush1.bf16.msra.mxu0 0
      %2055 = vmatprep.subr.bf16.mxu0 0
      %2056 = vmatpush1.bf16.msra.mxu0 0
      %2057 = vmatprep.subr.bf16.mxu0 0
      %2058 = vmatpush1.bf16.msra.mxu0 0
      %2059 = vmatprep.subr.bf16.mxu0 0
      %2060 = vmatpush1.bf16.msra.mxu0 0
      %2061 = vmatprep.subr.bf16.mxu0 0
      %2062 = vmatpush1.bf16.msra.mxu0 0
      %2063 = vmatprep.subr.bf16.mxu0 0
      %2064 = vmatpush1.bf16.msra.mxu0 0
      %2065 = vmatprep.subr.bf16.mxu0 0
      %2066 = vmatpush1.bf16.msra.mxu0 0
      %2067 = vmatprep.subr.bf16.mxu0 0
      %2068 = vmatpush1.bf16.msra.mxu0 0
      %2069 = vmatprep.subr.bf16.mxu0 0
      %2070 = vmatpush1.bf16.msra.mxu0 0
      %2071 = vmatprep.subr.bf16.mxu0 0
      %2072 = vmatpush1.bf16.msra.mxu0 0
      %2073 = vmatprep.subr.bf16.mxu0 0
      %2074 = vmatpush1.bf16.msra.mxu0 0
      %2075 = vmatprep.mubr.bf16.mxu0 0
      %2076 = vmatmul.mubr.bf16.gmra.mrb[0].mxu0 %v229
      %v2077 = vpop.f32.mrb[0].mxu0
      %v2078 = vadd.f32 0.0, %v2077
      %v2079 = vpop.f32.mrb[0].mxu0
      %v2080 = vpop.f32.mrb[0].mxu0
      %v2081 = vadd.f32 0.0, %v2080
      %v2082 = vpop.f32.mrb[0].mxu0
      %2083 = vdwg.mxu0
      %v2084 = vpack.c.bf16 %v2081, %v2078
      %v2086 = vsel %vm227, %v2084, 0
      %2088 = vmatprep.subr.bf16.mxu0 0
      %2089 = vmatpush1.bf16.msra.mxu0 %v281
      %2090 = vmatprep.subr.bf16.mxu0 0
      %2091 = vmatpush1.bf16.msra.mxu0 0
      %2092 = vmatprep.subr.bf16.mxu0 0
      %2093 = vmatpush1.bf16.msra.mxu0 0
      %2094 = vmatprep.subr.bf16.mxu0 0
      %2095 = vmatpush1.bf16.msra.mxu0 0
      %2096 = vmatprep.subr.bf16.mxu0 0
      %2097 = vmatpush1.bf16.msra.mxu0 0
      %2098 = vmatprep.subr.bf16.mxu0 0
      %2099 = vmatpush1.bf16.msra.mxu0 0
      %2100 = vmatprep.subr.bf16.mxu0 0
      %2101 = vmatpush1.bf16.msra.mxu0 0
      %2102 = vmatprep.subr.bf16.mxu0 0
      %2103 = vmatpush1.bf16.msra.mxu0 0
      %2104 = vmatprep.subr.bf16.mxu0 0
      %2105 = vmatpush1.bf16.msra.mxu0 0
      %2106 = vmatprep.subr.bf16.mxu0 0
      %2107 = vmatpush1.bf16.msra.mxu0 0
      %2108 = vmatprep.subr.bf16.mxu0 0
      %2109 = vmatpush1.bf16.msra.mxu0 0
      %2110 = vmatprep.subr.bf16.mxu0 0
      %2111 = vmatpush1.bf16.msra.mxu0 0
      %2112 = vmatprep.subr.bf16.mxu0 0
      %2113 = vmatpush1.bf16.msra.mxu0 0
      %2114 = vmatprep.subr.bf16.mxu0 0
      %2115 = vmatpush1.bf16.msra.mxu0 0
      %2116 = vmatprep.subr.bf16.mxu0 0
      %2117 = vmatpush1.bf16.msra.mxu0 0
      %2118 = vmatprep.subr.bf16.mxu0 0
      %2119 = vmatpush1.bf16.msra.mxu0 0
      %2120 = vmatprep.mubr.bf16.mxu0 0
      %2121 = vmatmul.mubr.bf16.gmra.mrb[0].mxu0 %v2086
      %v2122 = vpop.f32.mrb[0].mxu0
      %v2123 = vadd.f32 0.0, %v2122
      %v2124 = vpop.f32.mrb[0].mxu0
      %v2125 = vpop.f32.mrb[0].mxu0
      %v2126 = vadd.f32 0.0, %v2125
      %v2127 = vpop.f32.mrb[0].mxu0
      %2128 = vdwg.mxu0
      %s2129 = scalar_lea.vmem %s214, 304
      %2130 = vst.msk [vmem:[%s2129] sm:$0xff] %vm324, %v2123
      %2131 = vst.msk [vmem:[%s2129 + $0x8] sm:$0xff] %vm324, %v2126
      %s2132 = scalar_lea.vmem %s199, 40
      %v2133 = vld [vmem:[%s2132] sm:$0x3]
      %v2134 = vpack.c.bf16 %v2133, %v2133
      %v2136 = vsel %vm231, %v2134, 0
      %2138 = vmatprep.subr.bf16.mxu0 0
      %2139 = vmatpush1.bf16.msra.mxu0 %v2136
      %2140 = vmatprep.subr.bf16.mxu0 0
      %2141 = vmatpush1.bf16.msra.mxu0 0
      %2142 = vmatprep.subr.bf16.mxu0 0
      %2143 = vmatpush1.bf16.msra.mxu0 0
      %2144 = vmatprep.subr.bf16.mxu0 0
      %2145 = vmatpush1.bf16.msra.mxu0 0
      %2146 = vmatprep.subr.bf16.mxu0 0
      %2147 = vmatpush1.bf16.msra.mxu0 0
      %2148 = vmatprep.subr.bf16.mxu0 0
      %2149 = vmatpush1.bf16.msra.mxu0 0
      %2150 = vmatprep.subr.bf16.mxu0 0
      %2151 = vmatpush1.bf16.msra.mxu0 0
      %2152 = vmatprep.subr.bf16.mxu0 0
      %2153 = vmatpush1.bf16.msra.mxu0 0
      %2154 = vmatprep.subr.bf16.mxu0 0
      %2155 = vmatpush1.bf16.msra.mxu0 0
      %2156 = vmatprep.subr.bf16.mxu0 0
      %2157 = vmatpush1.bf16.msra.mxu0 0
      %2158 = vmatprep.subr.bf16.mxu0 0
      %2159 = vmatpush1.bf16.msra.mxu0 0
      %2160 = vmatprep.subr.bf16.mxu0 0
      %2161 = vmatpush1.bf16.msra.mxu0 0
      %2162 = vmatprep.subr.bf16.mxu0 0
      %2163 = vmatpush1.bf16.msra.mxu0 0
      %2164 = vmatprep.subr.bf16.mxu0 0
      %2165 = vmatpush1.bf16.msra.mxu0 0
      %2166 = vmatprep.subr.bf16.mxu0 0
      %2167 = vmatpush1.bf16.msra.mxu0 0
      %2168 = vmatprep.subr.bf16.mxu0 0
      %2169 = vmatpush1.bf16.msra.mxu0 0
      %2170 = vmatprep.mubr.bf16.mxu0 0
      %2171 = vmatmul.mubr.bf16.gmra.mrb[0].mxu0 %v229
      %v2172 = vpop.f32.mrb[0].mxu0
      %v2173 = vadd.f32 0.0, %v2172
      %v2174 = vpop.f32.mrb[0].mxu0
      %v2175 = vpop.f32.mrb[0].mxu0
      %v2176 = vadd.f32 0.0, %v2175
      %v2177 = vpop.f32.mrb[0].mxu0
      %2178 = vdwg.mxu0
      %v2179 = vpack.c.bf16 %v2176, %v2173
      %v2181 = vsel %vm227, %v2179, 0
      %2183 = vmatprep.subr.bf16.mxu0 0
      %2184 = vmatpush1.bf16.msra.mxu0 %v281
      %2185 = vmatprep.subr.bf16.mxu0 0
      %2186 = vmatpush1.bf16.msra.mxu0 0
      %2187 = vmatprep.subr.bf16.mxu0 0
      %2188 = vmatpush1.bf16.msra.mxu0 0
      %2189 = vmatprep.subr.bf16.mxu0 0
      %2190 = vmatpush1.bf16.msra.mxu0 0
      %2191 = vmatprep.subr.bf16.mxu0 0
      %2192 = vmatpush1.bf16.msra.mxu0 0
      %2193 = vmatprep.subr.bf16.mxu0 0
      %2194 = vmatpush1.bf16.msra.mxu0 0
      %2195 = vmatprep.subr.bf16.mxu0 0
      %2196 = vmatpush1.bf16.msra.mxu0 0
      %2197 = vmatprep.subr.bf16.mxu0 0
      %2198 = vmatpush1.bf16.msra.mxu0 0
      %2199 = vmatprep.subr.bf16.mxu0 0
      %2200 = vmatpush1.bf16.msra.mxu0 0
      %2201 = vmatprep.subr.bf16.mxu0 0
      %2202 = vmatpush1.bf16.msra.mxu0 0
      %2203 = vmatprep.subr.bf16.mxu0 0
      %2204 = vmatpush1.bf16.msra.mxu0 0
      %2205 = vmatprep.subr.bf16.mxu0 0
      %2206 = vmatpush1.bf16.msra.mxu0 0
      %2207 = vmatprep.subr.bf16.mxu0 0
      %2208 = vmatpush1.bf16.msra.mxu0 0
      %2209 = vmatprep.subr.bf16.mxu0 0
      %2210 = vmatpush1.bf16.msra.mxu0 0
      %2211 = vmatprep.subr.bf16.mxu0 0
      %2212 = vmatpush1.bf16.msra.mxu0 0
      %2213 = vmatprep.subr.bf16.mxu0 0
      %2214 = vmatpush1.bf16.msra.mxu0 0
      %2215 = vmatprep.mubr.bf16.mxu0 0
      %2216 = vmatmul.mubr.bf16.gmra.mrb[0].mxu0 %v2181
      %v2217 = vpop.f32.mrb[0].mxu0
      %v2218 = vadd.f32 0.0, %v2217
      %v2219 = vpop.f32.mrb[0].mxu0
      %v2220 = vpop.f32.mrb[0].mxu0
      %v2221 = vadd.f32 0.0, %v2220
      %v2222 = vpop.f32.mrb[0].mxu0
      %2223 = vdwg.mxu0
      %s2224 = scalar_lea.vmem %s214, 320
      %2225 = vst.msk [vmem:[%s2224] sm:$0xff] %vm324, %v2218
      %2226 = vst.msk [vmem:[%s2224 + $0x8] sm:$0xff] %vm324, %v2221
      %s2227 = smul.u32 2, %s19
      %p2228 = scmp.lt.s32.totalorder %s18, 1
      %s2229 = scalar_select %p2228, %s18, 1
      %p2230 = scmp.lt.s32.totalorder %s2227, 1
      %s2231 = scalar_select %p2230, %s2227, 1
      %s2232 = smul.addr %s2229, 42
      %s2233 = sadd.s32 %s2231, %s2232
      %s2234 = smul.addr %s2233, 8
      %s2235 = scalar_lea.vmem %s3, %s2234
      // Predicated region
      $region33: #{segmentation_simsiam_forward.21} parent=31 // pred_check
        %p2236 = pneg %p119
      $region34: #{segmentation_simsiam_forward.21} parent=31 // pred_check_branch
        %2238 = sbr.rel (%p2236) target = $region36
      $region35: #{segmentation_simsiam_forward.21} parent=31 // pred_region
        %s2239 = smul.u32 2, %s19
      $region36: #{segmentation_simsiam_forward.21} parent=31 // pred_fallthru
        _
    $region32: #{segmentation_simsiam_forward.21} parent=5 // pred_fallthru
      _
    %p2240 = scmp.le.s32.totalorder 2, %s9
    // Predicated region
    $region37: #{segmentation_simsiam_forward.21} parent=5 // pred_check
      %p2241 = pneg %p2240
    $region38: #{segmentation_simsiam_forward.21} parent=5 // pred_check_branch
      %2243 = sbr.rel (%p2241) target = $region40
    $region39: #{segmentation_simsiam_forward.21} parent=5 // pred_region
      %s2244 = ssub.s32 %s9, 2
      // Predicated region
      $region41: #{segmentation_simsiam_forward.21} parent=39 // pred_check
        %p2245 = pneg %p125
      $region42: #{segmentation_simsiam_forward.21} parent=39 // pred_check_branch
        %2247 = sbr.rel (%p2245) target = $region44
      $region43: #{segmentation_simsiam_forward.21} parent=39 // pred_region
        %s2248 = smul.u32 2, %s21
        %p2249 = scmp.lt.s32.totalorder %s20, 1
        %s2250 = scalar_select %p2249, %s20, 1
        %p2251 = scmp.lt.s32.totalorder %s2248, 1
        %s2252 = scalar_select %p2251, %s2248, 1
        %s2253 = smul.addr %s2250, 42
        %s2254 = sadd.s32 %s2252, %s2253
        %s2255 = smul.addr %s2254, 8
        %s2256 = scalar_lea.vmem %s3, %s2255
      $region44: #{segmentation_simsiam_forward.21} parent=39 // pred_fallthru
        _
    $region40: #{segmentation_simsiam_forward.21} parent=5 // pred_fallthru
      _
  $region6: #{segmentation_simsiam_forward.21} parent=0 // loop_footer
    %s13 = sadd.s32 1, %s9
  $region7: #{segmentation_simsiam_forward.21} parent=0 // loop_footer_branch
    %8 = sbr.rel target = $region3
  $region8: #{segmentation_simsiam_forward.21} parent=0 // loop_exit
    _

</llo_original>
